<compile_context>
chip_gen: v7x
topology: tpu7x:2x2x1
jax: 0.10.0
libtpu: 0.0.40
codegen_flags: <defaults>
</compile_context>

<pallas_src>
import functools

import jax
import jax.numpy as jnp
from jax import lax
from jax.experimental import pallas as pl
from jax.experimental.pallas import tpu as pltpu

IGNORE_INDEX = -100  # nn.CrossEntropyLoss default


# ----------------------------------------------------------------------------
# Pallas kernels
# ----------------------------------------------------------------------------
def _conv_bn_kernel(*refs, taps, cin, wo, relu, has_residual):
    """Fused conv (+ folded-BN affine) (+ residual) (+ ReLU) for one image.

    x_ref:        (1, Hp, Wp*Cin)       padded input, lane axis = W*C
    w_ref:        (T, Wo*Cin, Wo*Cout)  per-tap block-diagonal weights (bf16)
    scale/shift:  (1, Wo*Cout)          folded BN affine, tiled over Wo
    res_ref:      (1, Ho, Wo*Cout)      optional residual (added before ReLU)
    o_ref:        (1, Ho, Wo*Cout)
    """
    if has_residual:
        x_ref, w_ref, scale_ref, shift_ref, res_ref, o_ref = refs
    else:
        x_ref, w_ref, scale_ref, shift_ref, o_ref = refs
        res_ref = None
    ho, n = o_ref.shape[1], o_ref.shape[2]
    x = x_ref[0].astype(jnp.float32)
    acc = jnp.zeros((ho, n), jnp.float32)
    for t, (di, dj) in enumerate(taps):          # static, unrolled tap loop
        slab = x[di:di + ho, dj * cin:dj * cin + wo * cin].astype(jnp.bfloat16)
        acc = acc + jnp.dot(slab, w_ref[t], preferred_element_type=jnp.float32)
    y = acc * scale_ref[...] + shift_ref[...]
    if has_residual:
        y = y + res_ref[0].astype(jnp.float32)
    if relu:
        y = jnp.maximum(y, 0.0)
    o_ref[0] = y.astype(o_ref.dtype)


def _head_cls_up_kernel(x_ref, w_ref, scale_ref, shift_ref, wcls_ref, bcls_ref,
                        ah_ref, mw_ref, o_ref, *, taps, cin, wo, hc):
    """FCN head: 3x3 conv + BN + ReLU, fused 1x1 classifier (+bias) and fused
    bilinear (align_corners=False) upsample as two interpolation matmuls.
    Writes full-resolution packed logits (1, H, W*nc)."""
    n_mid = w_ref.shape[2]                       # Wo * head_channels
    x = x_ref[0].astype(jnp.float32)
    acc = jnp.zeros((hc, n_mid), jnp.float32)
    for t, (di, dj) in enumerate(taps):
        slab = x[di:di + hc, dj * cin:dj * cin + wo * cin].astype(jnp.bfloat16)
        acc = acc + jnp.dot(slab, w_ref[t], preferred_element_type=jnp.float32)
    y = jnp.maximum(acc * scale_ref[...] + shift_ref[...], 0.0)
    logits = jnp.dot(y.astype(jnp.bfloat16), wcls_ref[...],
                     preferred_element_type=jnp.float32) + bcls_ref[...]
    rows = jnp.dot(ah_ref[...], logits, preferred_element_type=jnp.float32)
    up = jnp.dot(rows, mw_ref[...], preferred_element_type=jnp.float32)
    o_ref[0] = up.astype(o_ref.dtype)


def _cross_entropy_kernel(logits_ref, labels_ref, loss_ref, sum_ref, cnt_ref):
    """Row-tiled softmax CE with ignore_index; mean over valid pixels (P3)."""
    i = pl.program_id(0)

    @pl.when(i == 0)
    def _():
        sum_ref[...] = jnp.zeros_like(sum_ref)
        cnt_ref[...] = jnp.zeros_like(cnt_ref)

    logits = logits_ref[...]                     # (tile, C) f32
    labels = labels_ref[...]                     # (tile, 1) i32
    m = jnp.max(logits, axis=-1, keepdims=True)
    shifted = logits - m
    lse = jnp.log(jnp.sum(jnp.exp(shifted), axis=-1, keepdims=True))
    cls_idx = lax.broadcasted_iota(jnp.int32, logits.shape, 1)
    picked = jnp.sum(jnp.where(cls_idx == labels, shifted, 0.0),
                     axis=-1, keepdims=True)
    valid = (labels != IGNORE_INDEX).astype(jnp.float32)
    sum_ref[...] += jnp.sum((lse - picked) * valid, axis=(0, 1), keepdims=True)
    cnt_ref[...] += jnp.sum(valid, axis=(0, 1), keepdims=True)

    @pl.when(i == pl.num_programs(0) - 1)
    def _():
        loss_ref[...] = sum_ref[...] / cnt_ref[...]


# ----------------------------------------------------------------------------
# pallas_call wrappers
# ----------------------------------------------------------------------------
def conv_bn_act(x_packed, w_bd, scale, shift, *, taps, cin, wo, ho,
                relu, residual=None, out_dtype=jnp.bfloat16):
    B = x_packed.shape[0]
    n = w_bd.shape[2]                            # Wo * Cout (lane-packed width)
    scale_t = jnp.tile(scale, wo).reshape(1, n).astype(jnp.float32)
    shift_t = jnp.tile(shift, wo).reshape(1, n).astype(jnp.float32)
    kern = functools.partial(_conv_bn_kernel, taps=tuple(taps), cin=cin, wo=wo,
                             relu=relu, has_residual=residual is not None)
    in_specs = [
        pl.BlockSpec((1,) + x_packed.shape[1:], lambda b: (b, 0, 0)),
        pl.BlockSpec(w_bd.shape, lambda b: (0, 0, 0)),   # resident weights
        pl.BlockSpec((1, n), lambda b: (0, 0)),
        pl.BlockSpec((1, n), lambda b: (0, 0)),
    ]
    args = [x_packed, w_bd, scale_t, shift_t]
    if residual is not None:
        in_specs.append(pl.BlockSpec((1, ho, n), lambda b: (b, 0, 0)))
        args.append(residual)
    flops = 2 * B * ho * n * len(taps) * wo * cin
    bytes_accessed = (x_packed.size * x_packed.dtype.itemsize
                      + w_bd.size * 2 + B * ho * n * 2)
    return pl.pallas_call(
        kern,
        out_shape=jax.ShapeDtypeStruct((B, ho, n), out_dtype),
        grid=(B,),
        in_specs=in_specs,
        out_specs=pl.BlockSpec((1, ho, n), lambda b: (b, 0, 0)),
        compiler_params=pltpu.CompilerParams(
            dimension_semantics=("parallel",),
            vmem_limit_bytes=32 * 1024 * 1024),
        cost_estimate=pl.CostEstimate(flops=flops, transcendentals=0,
                                      bytes_accessed=bytes_accessed),
    )(*args)


def head_cls_upsample(x_packed, w_bd, scale, shift, w_cls_bd, b_cls, a_h, m_w,
                      *, taps, cin, wo, hc, out_h, out_w, nc):
    B = x_packed.shape[0]
    n_mid = w_bd.shape[2]
    scale_t = jnp.tile(scale, wo).reshape(1, n_mid).astype(jnp.float32)
    shift_t = jnp.tile(shift, wo).reshape(1, n_mid).astype(jnp.float32)
    b_cls_t = jnp.tile(b_cls, wo).reshape(1, wo * nc).astype(jnp.float32)
    kern = functools.partial(_head_cls_up_kernel, taps=tuple(taps), cin=cin,
                             wo=wo, hc=hc)
    return pl.pallas_call(
        kern,
        out_shape=jax.ShapeDtypeStruct((B, out_h, out_w * nc), jnp.float32),
        grid=(B,),
        in_specs=[
            pl.BlockSpec((1,) + x_packed.shape[1:], lambda b: (b, 0, 0)),
            pl.BlockSpec(w_bd.shape, lambda b: (0, 0, 0)),
            pl.BlockSpec((1, n_mid), lambda b: (0, 0)),
            pl.BlockSpec((1, n_mid), lambda b: (0, 0)),
            pl.BlockSpec(w_cls_bd.shape, lambda b: (0, 0)),
            pl.BlockSpec((1, wo * nc), lambda b: (0, 0)),
            pl.BlockSpec(a_h.shape, lambda b: (0, 0)),
            pl.BlockSpec(m_w.shape, lambda b: (0, 0)),
        ],
        out_specs=pl.BlockSpec((1, out_h, out_w * nc), lambda b: (b, 0, 0)),
        compiler_params=pltpu.CompilerParams(
            dimension_semantics=("parallel",),
            vmem_limit_bytes=32 * 1024 * 1024),
    )(x_packed, w_bd, scale_t, shift_t, w_cls_bd, b_cls_t, a_h, m_w)


def cross_entropy(logits_2d, labels_1d, *, tile=256):
    P, C = logits_2d.shape
    n_tiles = pl.cdiv(P, tile)
    Pp = n_tiles * tile
    logits_p = jnp.pad(logits_2d, ((0, Pp - P), (0, 0)))
    labels_p = jnp.pad(labels_1d.astype(jnp.int32).reshape(P, 1),
                       ((0, Pp - P), (0, 0)), constant_values=IGNORE_INDEX)
    loss = pl.pallas_call(
        _cross_entropy_kernel,
        out_shape=jax.ShapeDtypeStruct((1, 1), jnp.float32),
        grid=(n_tiles,),
        in_specs=[pl.BlockSpec((tile, C), lambda i: (i, 0)),
                  pl.BlockSpec((tile, 1), lambda i: (i, 0))],
        out_specs=pl.BlockSpec((1, 1), lambda i: (0, 0)),
        scratch_shapes=[pltpu.VMEM((1, 1), jnp.float32),
                        pltpu.VMEM((1, 1), jnp.float32)],
        compiler_params=pltpu.CompilerParams(
            dimension_semantics=("arbitrary",),
            vmem_limit_bytes=32 * 1024 * 1024),
    )(logits_p, labels_p)
    return loss[0, 0]


# ----------------------------------------------------------------------------
# Host-side weight / interpolation-matrix packing (tiny XLA glue)
# ----------------------------------------------------------------------------
def _blockdiag_taps(wt, wo):
    # wt: (T, Cin, Cout) -> (T, Wo*Cin, Wo*Cout) block-diagonal per tap.
    t, cin, cout = wt.shape
    eye = jnp.eye(wo, dtype=wt.dtype)
    bd = jnp.einsum('ij,tkl->tikjl', eye, wt)
    return bd.reshape(t, wo * cin, wo * cout)


def pack_conv_weight(w, wo):
    """Torch conv weight (Cout, Cin, kh, kw) -> (kh*kw, Wo*Cin, Wo*Cout) bf16."""
    cout, cin, kh, kw = w.shape
    wt = jnp.transpose(w, (2, 3, 1, 0)).reshape(kh * kw, cin, cout)
    return _blockdiag_taps(wt, wo).astype(jnp.bfloat16)


def pack_stem_weight(w, wo):
    """7x7/stride-2 weight -> space-to-depth 4x4 stride-1 taps,
    (16, Wo*4*Cin, Wo*Cout) block-diagonal bf16."""
    cout, cin, kh, kw = w.shape
    assert kh == 7 and kw == 7
    w8 = jnp.pad(w, ((0, 0), (0, 0), (0, 1), (0, 1)))      # zero taps at i,j == 7
    w8 = w8.reshape(cout, cin, 4, 2, 4, 2)                 # (co, c, a, r, b, s)
    w8 = jnp.transpose(w8, (2, 4, 3, 5, 1, 0))             # (a, b, r, s, c, co)
    wt = w8.reshape(16, 4 * cin, cout)
    return _blockdiag_taps(wt, wo).astype(jnp.bfloat16)


def bilinear_matrix(out_size, in_size):
    """Interpolation matrix matching F.interpolate(bilinear, align_corners=False)."""
    d = jnp.arange(out_size, dtype=jnp.float32)
    s = jnp.clip((d + 0.5) * (in_size / out_size) - 0.5, 0.0, in_size - 1.0)
    lo = jnp.floor(s)
    t = s - lo
    lo_i = lo.astype(jnp.int32)
    hi_i = jnp.minimum(lo_i + 1, in_size - 1)
    rows = jnp.arange(out_size)
    m = jnp.zeros((out_size, in_size), jnp.float32)
    m = m.at[rows, lo_i].add(1.0 - t)
    m = m.at[rows, hi_i].add(t)
    return m


# ----------------------------------------------------------------------------
# Deterministic parameter init (shapes from a scaled-down fcn_resnet50)
# ----------------------------------------------------------------------------
def init_params(num_classes, key):
    keys = iter(jax.random.split(key, 32))

    def conv_w(cout, cin, kh, kw):
        return 0.1 * jax.random.normal(next(keys), (cout, cin, kh, kw), jnp.float32)

    def bn(c):
        # folded inference BN: scale = gamma/sqrt(var+eps), shift = beta - mean*scale
        scale = 1.0 + 0.05 * jax.random.normal(next(keys), (c,), jnp.float32)
        shift = 0.05 * jax.random.normal(next(keys), (c,), jnp.float32)
        return scale, shift

    p = {}
    p['stem_w'] = conv_w(16, 3, 7, 7);   p['stem_bn'] = bn(16)
    p['b1_w'] = conv_w(8, 16, 1, 1);     p['b1_bn'] = bn(8)
    p['b2_w'] = conv_w(8, 8, 3, 3);      p['b2_bn'] = bn(8)
    p['b3_w'] = conv_w(32, 8, 1, 1);     p['b3_bn'] = bn(32)
    p['ds_w'] = conv_w(32, 16, 1, 1);    p['ds_bn'] = bn(32)
    p['head_w'] = conv_w(16, 32, 3, 3);  p['head_bn'] = bn(16)
    p['cls_w'] = conv_w(num_classes, 16, 1, 1)
    p['cls_b'] = 0.05 * jax.random.normal(next(keys), (num_classes,), jnp.float32)
    return p


# ----------------------------------------------------------------------------
# SegmentationModel.forward equivalent
# ----------------------------------------------------------------------------
def segmentation_forward(params, image_nchw, mask=None):
    x = jnp.transpose(image_nchw, (0, 2, 3, 1)).astype(jnp.float32)  # NCHW->NHWC
    B, H, W, Cin = x.shape
    nc = params['cls_w'].shape[0]

    # ---- stem: 7x7/s2/p3 conv + BN + ReLU via space-to-depth (stride-1 taps)
    xp = jnp.pad(x, ((0, 0), (3, 3), (3, 3), (0, 0)))
    if xp.shape[1] % 2:
        xp = jnp.pad(xp, ((0, 0), (0, 1), (0, 0), (0, 0)))
    if xp.shape[2] % 2:
        xp = jnp.pad(xp, ((0, 0), (0, 0), (0, 1), (0, 0)))
    Hs, Ws = xp.shape[1] // 2, xp.shape[2] // 2
    xs = xp.reshape(B, Hs, 2, Ws, 2, Cin).transpose(0, 1, 3, 2, 4, 5)
    xs = xs.reshape(B, Hs, Ws * 4 * Cin)                         # (B, 11, 132)
    Ho1 = (H + 2 * 3 - 7) // 2 + 1
    Wo1 = (W + 2 * 3 - 7) // 2 + 1
    c_stem = params['stem_w'].shape[0]
    stem_taps = [(a, b) for a in range(4) for b in range(4)]
    stem = conv_bn_act(xs, pack_stem_weight(params['stem_w'], Wo1),
                       *params['stem_bn'], taps=stem_taps, cin=4 * Cin,
                       wo=Wo1, ho=Ho1, relu=True)                # (B, 8, 128) bf16

    # ---- 3x3/s2/p1 max-pool
    # TODO(synk): max-pool stays as lax.reduce_window glue (no Pallas kernel).
    sm = stem.reshape(B, Ho1, Wo1, c_stem)
    xm = lax.reduce_window(sm, jnp.array(-jnp.inf, sm.dtype), lax.max,
                           (1, 3, 3, 1), (1, 2, 2, 1),
                           ((0, 0), (1, 1), (1, 1), (0, 0)))
    Hc, Wc = xm.shape[1], xm.shape[2]
    xm_p = xm.reshape(B, Hc, Wc * c_stem)                        # (B, 4, 64)

    # ---- bottleneck (1x1 -> 3x3 -> 1x1) + projection shortcut, fused conv+BN
    t1 = [(0, 0)]
    t3 = [(i, j) for i in range(3) for j in range(3)]
    identity = conv_bn_act(xm_p, pack_conv_weight(params['ds_w'], Wc),
                           *params['ds_bn'], taps=t1, cin=c_stem, wo=Wc, ho=Hc,
                           relu=False)                           # (B, 4, 128)
    y = conv_bn_act(xm_p, pack_conv_weight(params['b1_w'], Wc),
                    *params['b1_bn'], taps=t1, cin=c_stem, wo=Wc, ho=Hc,
                    relu=True)                                   # (B, 4, 32)
    c_b = params['b1_w'].shape[0]
    yp = jnp.pad(y.reshape(B, Hc, Wc, c_b),
                 ((0, 0), (1, 1), (1, 1), (0, 0))).reshape(B, Hc + 2, (Wc + 2) * c_b)
    y = conv_bn_act(yp, pack_conv_weight(params['b2_w'], Wc),
                    *params['b2_bn'], taps=t3, cin=c_b, wo=Wc, ho=Hc,
                    relu=True)                                   # (B, 4, 32)
    # b3 conv with fused residual add + ReLU (no separate add_relu kernel).
    y = conv_bn_act(y, pack_conv_weight(params['b3_w'], Wc),
                    *params['b3_bn'], taps=t1, cin=c_b, wo=Wc, ho=Hc,
                    relu=True, residual=identity)                # (B, 4, 128)
    c_out = params['b3_w'].shape[0]

    # ---- FCN head (3x3 conv+BN+ReLU) fused with 1x1 classifier + bias and the
    #      bilinear upsample -> full-resolution packed logits (B, H, W*nc).
    yh = jnp.pad(y.reshape(B, Hc, Wc, c_out),
                 ((0, 0), (1, 1), (1, 1), (0, 0))).reshape(B, Hc + 2, (Wc + 2) * c_out)
    cls_bd = _blockdiag_taps(params['cls_w'][:, :, 0, 0].T[None], Wc)[0]
    cls_bd = cls_bd.astype(jnp.bfloat16)
    a_h = bilinear_matrix(H, Hc)                                 # (H, Hc)
    bw = bilinear_matrix(W, Wc)                                  # (W, Wc)
    m_w = jnp.einsum('ow,cd->wcod', bw,
                     jnp.eye(nc, dtype=jnp.float32)).reshape(Wc * nc, W * nc)
    logits = head_cls_upsample(yh, pack_conv_weight(params['head_w'], Wc),
                               *params['head_bn'], cls_bd, params['cls_b'],
                               a_h, m_w, taps=t3, cin=c_out, wo=Wc, hc=Hc,
                               out_h=H, out_w=W, nc=nc)          # (B, H, W*nc)

    out = jnp.transpose(logits.reshape(B, H, W, nc), (0, 3, 1, 2))   # NCHW
    outputs = {'out': out}
    if mask is not None:
        # CE on the packed NHWC logits (no transpose round trip); mean over
        # valid pixels with ignore_index=-100 like nn.CrossEntropyLoss.
        outputs['loss'] = cross_entropy(logits.reshape(B * H * W, nc),
                                        mask.reshape(B * H * W))
    return outputs


if __name__ == "__main__":
    num_classes = 4
    key = jax.random.PRNGKey(0)
    k_img, k_mask, k_param = jax.random.split(key, 3)

    image = jax.random.normal(k_img, (2, 3, 16, 16), jnp.float32)      # NCHW
    mask = jax.random.randint(k_mask, (2, 16, 16), 0, num_classes)     # class ids
    params = init_params(num_classes, k_param)

    fwd = jax.jit(segmentation_forward)
    outputs = fwd(params, image, mask)
    jax.block_until_ready(outputs['out'])
    jax.block_until_ready(outputs['loss'])

    assert outputs['out'].shape == (2, num_classes, 16, 16)
    assert outputs['loss'].shape == ()
    print("KERNEL_OK")
</pallas_src>

<mosaic_0001>
module attributes {stable_mosaic.version = 11 : i64} {
  func.func private @main(%arg0: i32) attributes {dimension_semantics = [#tpu.dimension_semantics<core_parallel>], iteration_bounds = array<i64: 2>, tpu.core_type = #tpu.core_type<sc_scalar_subcore>, window_params = []} {
    return
  }
}

module attributes {stable_mosaic.version = 11 : i64} {
  func.func private @main(%arg0: i32) attributes {dimension_semantics = [#tpu.dimension_semantics<core_parallel>], iteration_bounds = array<i64: 2>, tpu.core_type = #tpu.core_type<sc_scalar_subcore>, window_params = []} {
    return
  }
}

module attributes {stable_mosaic.version = 11 : i64} {
  func.func @_conv_bn_kernel(%arg0: i32, %arg1: memref<1x11x132xf32, #tpu.memory_space<vmem>>, %arg2: memref<16x96x128xbf16, #tpu.memory_space<vmem>>, %arg3: memref<1x128xf32, #tpu.memory_space<vmem>>, %arg4: memref<1x128xf32, #tpu.memory_space<vmem>>, %arg5: memref<1x8x128xbf16, #tpu.memory_space<vmem>>) attributes {dimension_semantics = [#tpu.dimension_semantics<parallel>], iteration_bounds = array<i64: 2>, scalar_prefetch = 0 : i64, scratch_operands = 0 : i64, tpu.core_type = #tpu.core_type<tc>, window_params = [{transform_indices = @transform_0, window_bounds = array<i64: 1, 11, 132>}, {pipeline_mode = #tpu.pipeline_mode<synchronous>, transform_indices = @transform_1, window_bounds = array<i64: 16, 96, 128>}, {pipeline_mode = #tpu.pipeline_mode<synchronous>, transform_indices = @transform_2, window_bounds = array<i64: 1, 128>}, {pipeline_mode = #tpu.pipeline_mode<synchronous>, transform_indices = @transform_3, window_bounds = array<i64: 1, 128>}, {transform_indices = @transform_4, window_bounds = array<i64: 1, 8, 128>}]} {
    %c0 = arith.constant 0 : index
    %c0_0 = arith.constant 0 : index
    %c0_1 = arith.constant 0 : index
    %0 = vector.load %arg1[%c0, %c0_0, %c0_1] : memref<1x11x132xf32, #tpu.memory_space<vmem>>, vector<1x11x132xf32>
    %1 = vector.shape_cast %0 : vector<1x11x132xf32> to vector<11x132xf32>
    %cst = arith.constant 0.000000e+00 : f32
    %2 = vector.broadcast %cst : f32 to vector<8x128xf32>
    %3 = vector.extract_strided_slice %1 {offsets = [0, 0], sizes = [8, 96], strides = [1, 1]} : vector<11x132xf32> to vector<8x96xf32>
    %4 = arith.truncf %3 : vector<8x96xf32> to vector<8x96xbf16>
    %c0_2 = arith.constant 0 : index
    %c0_3 = arith.constant 0 : index
    %c0_4 = arith.constant 0 : index
    %5 = vector.load %arg2[%c0_2, %c0_3, %c0_4] : memref<16x96x128xbf16, #tpu.memory_space<vmem>>, vector<1x96x128xbf16>
    %6 = vector.shape_cast %5 : vector<1x96x128xbf16> to vector<96x128xbf16>
    %cst_5 = arith.constant dense<0.000000e+00> : vector<8x128xf32>
    %7 = tpu.matmul %4, %6, %cst_5 {dimension_numbers = #tpu.dot_dimension_numbers<[1], [0], [0], [1], [0, 0, 1, 1], [], []>} : vector<8x96xbf16>, vector<96x128xbf16>, vector<8x128xf32> -> vector<8x128xf32>
    %8 = arith.addf %2, %7 : vector<8x128xf32>
    %9 = vector.extract_strided_slice %1 {offsets = [0, 12], sizes = [8, 96], strides = [1, 1]} : vector<11x132xf32> to vector<8x96xf32>
    %10 = arith.truncf %9 : vector<8x96xf32> to vector<8x96xbf16>
    %c1 = arith.constant 1 : index
    %c0_6 = arith.constant 0 : index
    %c0_7 = arith.constant 0 : index
    %11 = vector.load %arg2[%c1, %c0_6, %c0_7] : memref<16x96x128xbf16, #tpu.memory_space<vmem>>, vector<1x96x128xbf16>
    %12 = vector.shape_cast %11 : vector<1x96x128xbf16> to vector<96x128xbf16>
    %cst_8 = arith.constant dense<0.000000e+00> : vector<8x128xf32>
    %13 = tpu.matmul %10, %12, %cst_8 {dimension_numbers = #tpu.dot_dimension_numbers<[1], [0], [0], [1], [0, 0, 1, 1], [], []>} : vector<8x96xbf16>, vector<96x128xbf16>, vector<8x128xf32> -> vector<8x128xf32>
    %14 = arith.addf %8, %13 : vector<8x128xf32>
    %15 = vector.extract_strided_slice %1 {offsets = [0, 24], sizes = [8, 96], strides = [1, 1]} : vector<11x132xf32> to vector<8x96xf32>
    %16 = arith.truncf %15 : vector<8x96xf32> to vector<8x96xbf16>
    %c2 = arith.constant 2 : index
    %c0_9 = arith.constant 0 : index
    %c0_10 = arith.constant 0 : index
    %17 = vector.load %arg2[%c2, %c0_9, %c0_10] : memref<16x96x128xbf16, #tpu.memory_space<vmem>>, vector<1x96x128xbf16>
    %18 = vector.shape_cast %17 : vector<1x96x128xbf16> to vector<96x128xbf16>
    %cst_11 = arith.constant dense<0.000000e+00> : vector<8x128xf32>
    %19 = tpu.matmul %16, %18, %cst_11 {dimension_numbers = #tpu.dot_dimension_numbers<[1], [0], [0], [1], [0, 0, 1, 1], [], []>} : vector<8x96xbf16>, vector<96x128xbf16>, vector<8x128xf32> -> vector<8x128xf32>
    %20 = arith.addf %14, %19 : vector<8x128xf32>
    %21 = vector.extract_strided_slice %1 {offsets = [0, 36], sizes = [8, 96], strides = [1, 1]} : vector<11x132xf32> to vector<8x96xf32>
    %22 = arith.truncf %21 : vector<8x96xf32> to vector<8x96xbf16>
    %c3 = arith.constant 3 : index
    %c0_12 = arith.constant 0 : index
    %c0_13 = arith.constant 0 : index
    %23 = vector.load %arg2[%c3, %c0_12, %c0_13] : memref<16x96x128xbf16, #tpu.memory_space<vmem>>, vector<1x96x128xbf16>
    %24 = vector.shape_cast %23 : vector<1x96x128xbf16> to vector<96x128xbf16>
    %cst_14 = arith.constant dense<0.000000e+00> : vector<8x128xf32>
    %25 = tpu.matmul %22, %24, %cst_14 {dimension_numbers = #tpu.dot_dimension_numbers<[1], [0], [0], [1], [0, 0, 1, 1], [], []>} : vector<8x96xbf16>, vector<96x128xbf16>, vector<8x128xf32> -> vector<8x128xf32>
    %26 = arith.addf %20, %25 : vector<8x128xf32>
    %27 = vector.extract_strided_slice %1 {offsets = [1, 0], sizes = [8, 96], strides = [1, 1]} : vector<11x132xf32> to vector<8x96xf32>
    %28 = arith.truncf %27 : vector<8x96xf32> to vector<8x96xbf16>
    %c4 = arith.constant 4 : index
    %c0_15 = arith.constant 0 : index
    %c0_16 = arith.constant 0 : index
    %29 = vector.load %arg2[%c4, %c0_15, %c0_16] : memref<16x96x128xbf16, #tpu.memory_space<vmem>>, vector<1x96x128xbf16>
    %30 = vector.shape_cast %29 : vector<1x96x128xbf16> to vector<96x128xbf16>
    %cst_17 = arith.constant dense<0.000000e+00> : vector<8x128xf32>
    %31 = tpu.matmul %28, %30, %cst_17 {dimension_numbers = #tpu.dot_dimension_numbers<[1], [0], [0], [1], [0, 0, 1, 1], [], []>} : vector<8x96xbf16>, vector<96x128xbf16>, vector<8x128xf32> -> vector<8x128xf32>
    %32 = arith.addf %26, %31 : vector<8x128xf32>
    %33 = vector.extract_strided_slice %1 {offsets = [1, 12], sizes = [8, 96], strides = [1, 1]} : vector<11x132xf32> to vector<8x96xf32>
    %34 = arith.truncf %33 : vector<8x96xf32> to vector<8x96xbf16>
    %c5 = arith.constant 5 : index
    %c0_18 = arith.constant 0 : index
    %c0_19 = arith.constant 0 : index
    %35 = vector.load %arg2[%c5, %c0_18, %c0_19] : memref<16x96x128xbf16, #tpu.memory_space<vmem>>, vector<1x96x128xbf16>
    %36 = vector.shape_cast %35 : vector<1x96x128xbf16> to vector<96x128xbf16>
    %cst_20 = arith.constant dense<0.000000e+00> : vector<8x128xf32>
    %37 = tpu.matmul %34, %36, %cst_20 {dimension_numbers = #tpu.dot_dimension_numbers<[1], [0], [0], [1], [0, 0, 1, 1], [], []>} : vector<8x96xbf16>, vector<96x128xbf16>, vector<8x128xf32> -> vector<8x128xf32>
    %38 = arith.addf %32, %37 : vector<8x128xf32>
    %39 = vector.extract_strided_slice %1 {offsets = [1, 24], sizes = [8, 96], strides = [1, 1]} : vector<11x132xf32> to vector<8x96xf32>
    %40 = arith.truncf %39 : vector<8x96xf32> to vector<8x96xbf16>
    %c6 = arith.constant 6 : index
    %c0_21 = arith.constant 0 : index
    %c0_22 = arith.constant 0 : index
    %41 = vector.load %arg2[%c6, %c0_21, %c0_22] : memref<16x96x128xbf16, #tpu.memory_space<vmem>>, vector<1x96x128xbf16>
    %42 = vector.shape_cast %41 : vector<1x96x128xbf16> to vector<96x128xbf16>
    %cst_23 = arith.constant dense<0.000000e+00> : vector<8x128xf32>
    %43 = tpu.matmul %40, %42, %cst_23 {dimension_numbers = #tpu.dot_dimension_numbers<[1], [0], [0], [1], [0, 0, 1, 1], [], []>} : vector<8x96xbf16>, vector<96x128xbf16>, vector<8x128xf32> -> vector<8x128xf32>
    %44 = arith.addf %38, %43 : vector<8x128xf32>
    %45 = vector.extract_strided_slice %1 {offsets = [1, 36], sizes = [8, 96], strides = [1, 1]} : vector<11x132xf32> to vector<8x96xf32>
    %46 = arith.truncf %45 : vector<8x96xf32> to vector<8x96xbf16>
    %c7 = arith.constant 7 : index
    %c0_24 = arith.constant 0 : index
    %c0_25 = arith.constant 0 : index
    %47 = vector.load %arg2[%c7, %c0_24, %c0_25] : memref<16x96x128xbf16, #tpu.memory_space<vmem>>, vector<1x96x128xbf16>
    %48 = vector.shape_cast %47 : vector<1x96x128xbf16> to vector<96x128xbf16>
    %cst_26 = arith.constant dense<0.000000e+00> : vector<8x128xf32>
    %49 = tpu.matmul %46, %48, %cst_26 {dimension_numbers = #tpu.dot_dimension_numbers<[1], [0], [0], [1], [0, 0, 1, 1], [], []>} : vector<8x96xbf16>, vector<96x128xbf16>, vector<8x128xf32> -> vector<8x128xf32>
    %50 = arith.addf %44, %49 : vector<8x128xf32>
    %51 = vector.extract_strided_slice %1 {offsets = [2, 0], sizes = [8, 96], strides = [1, 1]} : vector<11x132xf32> to vector<8x96xf32>
    %52 = arith.truncf %51 : vector<8x96xf32> to vector<8x96xbf16>
    %c8 = arith.constant 8 : index
    %c0_27 = arith.constant 0 : index
    %c0_28 = arith.constant 0 : index
    %53 = vector.load %arg2[%c8, %c0_27, %c0_28] : memref<16x96x128xbf16, #tpu.memory_space<vmem>>, vector<1x96x128xbf16>
    %54 = vector.shape_cast %53 : vector<1x96x128xbf16> to vector<96x128xbf16>
    %cst_29 = arith.constant dense<0.000000e+00> : vector<8x128xf32>
    %55 = tpu.matmul %52, %54, %cst_29 {dimension_numbers = #tpu.dot_dimension_numbers<[1], [0], [0], [1], [0, 0, 1, 1], [], []>} : vector<8x96xbf16>, vector<96x128xbf16>, vector<8x128xf32> -> vector<8x128xf32>
    %56 = arith.addf %50, %55 : vector<8x128xf32>
    %57 = vector.extract_strided_slice %1 {offsets = [2, 12], sizes = [8, 96], strides = [1, 1]} : vector<11x132xf32> to vector<8x96xf32>
    %58 = arith.truncf %57 : vector<8x96xf32> to vector<8x96xbf16>
    %c9 = arith.constant 9 : index
    %c0_30 = arith.constant 0 : index
    %c0_31 = arith.constant 0 : index
    %59 = vector.load %arg2[%c9, %c0_30, %c0_31] : memref<16x96x128xbf16, #tpu.memory_space<vmem>>, vector<1x96x128xbf16>
    %60 = vector.shape_cast %59 : vector<1x96x128xbf16> to vector<96x128xbf16>
    %cst_32 = arith.constant dense<0.000000e+00> : vector<8x128xf32>
    %61 = tpu.matmul %58, %60, %cst_32 {dimension_numbers = #tpu.dot_dimension_numbers<[1], [0], [0], [1], [0, 0, 1, 1], [], []>} : vector<8x96xbf16>, vector<96x128xbf16>, vector<8x128xf32> -> vector<8x128xf32>
    %62 = arith.addf %56, %61 : vector<8x128xf32>
    %63 = vector.extract_strided_slice %1 {offsets = [2, 24], sizes = [8, 96], strides = [1, 1]} : vector<11x132xf32> to vector<8x96xf32>
    %64 = arith.truncf %63 : vector<8x96xf32> to vector<8x96xbf16>
    %c10 = arith.constant 10 : index
    %c0_33 = arith.constant 0 : index
    %c0_34 = arith.constant 0 : index
    %65 = vector.load %arg2[%c10, %c0_33, %c0_34] : memref<16x96x128xbf16, #tpu.memory_space<vmem>>, vector<1x96x128xbf16>
    %66 = vector.shape_cast %65 : vector<1x96x128xbf16> to vector<96x128xbf16>
    %cst_35 = arith.constant dense<0.000000e+00> : vector<8x128xf32>
    %67 = tpu.matmul %64, %66, %cst_35 {dimension_numbers = #tpu.dot_dimension_numbers<[1], [0], [0], [1], [0, 0, 1, 1], [], []>} : vector<8x96xbf16>, vector<96x128xbf16>, vector<8x128xf32> -> vector<8x128xf32>
    %68 = arith.addf %62, %67 : vector<8x128xf32>
    %69 = vector.extract_strided_slice %1 {offsets = [2, 36], sizes = [8, 96], strides = [1, 1]} : vector<11x132xf32> to vector<8x96xf32>
    %70 = arith.truncf %69 : vector<8x96xf32> to vector<8x96xbf16>
    %c11 = arith.constant 11 : index
    %c0_36 = arith.constant 0 : index
    %c0_37 = arith.constant 0 : index
    %71 = vector.load %arg2[%c11, %c0_36, %c0_37] : memref<16x96x128xbf16, #tpu.memory_space<vmem>>, vector<1x96x128xbf16>
    %72 = vector.shape_cast %71 : vector<1x96x128xbf16> to vector<96x128xbf16>
    %cst_38 = arith.constant dense<0.000000e+00> : vector<8x128xf32>
    %73 = tpu.matmul %70, %72, %cst_38 {dimension_numbers = #tpu.dot_dimension_numbers<[1], [0], [0], [1], [0, 0, 1, 1], [], []>} : vector<8x96xbf16>, vector<96x128xbf16>, vector<8x128xf32> -> vector<8x128xf32>
    %74 = arith.addf %68, %73 : vector<8x128xf32>
    %75 = vector.extract_strided_slice %1 {offsets = [3, 0], sizes = [8, 96], strides = [1, 1]} : vector<11x132xf32> to vector<8x96xf32>
    %76 = arith.truncf %75 : vector<8x96xf32> to vector<8x96xbf16>
    %c12 = arith.constant 12 : index
    %c0_39 = arith.constant 0 : index
    %c0_40 = arith.constant 0 : index
    %77 = vector.load %arg2[%c12, %c0_39, %c0_40] : memref<16x96x128xbf16, #tpu.memory_space<vmem>>, vector<1x96x128xbf16>
    %78 = vector.shape_cast %77 : vector<1x96x128xbf16> to vector<96x128xbf16>
    %cst_41 = arith.constant dense<0.000000e+00> : vector<8x128xf32>
    %79 = tpu.matmul %76, %78, %cst_41 {dimension_numbers = #tpu.dot_dimension_numbers<[1], [0], [0], [1], [0, 0, 1, 1], [], []>} : vector<8x96xbf16>, vector<96x128xbf16>, vector<8x128xf32> -> vector<8x128xf32>
    %80 = arith.addf %74, %79 : vector<8x128xf32>
    %81 = vector.extract_strided_slice %1 {offsets = [3, 12], sizes = [8, 96], strides = [1, 1]} : vector<11x132xf32> to vector<8x96xf32>
    %82 = arith.truncf %81 : vector<8x96xf32> to vector<8x96xbf16>
    %c13 = arith.constant 13 : index
    %c0_42 = arith.constant 0 : index
    %c0_43 = arith.constant 0 : index
    %83 = vector.load %arg2[%c13, %c0_42, %c0_43] : memref<16x96x128xbf16, #tpu.memory_space<vmem>>, vector<1x96x128xbf16>
    %84 = vector.shape_cast %83 : vector<1x96x128xbf16> to vector<96x128xbf16>
    %cst_44 = arith.constant dense<0.000000e+00> : vector<8x128xf32>
    %85 = tpu.matmul %82, %84, %cst_44 {dimension_numbers = #tpu.dot_dimension_numbers<[1], [0], [0], [1], [0, 0, 1, 1], [], []>} : vector<8x96xbf16>, vector<96x128xbf16>, vector<8x128xf32> -> vector<8x128xf32>
    %86 = arith.addf %80, %85 : vector<8x128xf32>
    %87 = vector.extract_strided_slice %1 {offsets = [3, 24], sizes = [8, 96], strides = [1, 1]} : vector<11x132xf32> to vector<8x96xf32>
    %88 = arith.truncf %87 : vector<8x96xf32> to vector<8x96xbf16>
    %c14 = arith.constant 14 : index
    %c0_45 = arith.constant 0 : index
    %c0_46 = arith.constant 0 : index
    %89 = vector.load %arg2[%c14, %c0_45, %c0_46] : memref<16x96x128xbf16, #tpu.memory_space<vmem>>, vector<1x96x128xbf16>
    %90 = vector.shape_cast %89 : vector<1x96x128xbf16> to vector<96x128xbf16>
    %cst_47 = arith.constant dense<0.000000e+00> : vector<8x128xf32>
    %91 = tpu.matmul %88, %90, %cst_47 {dimension_numbers = #tpu.dot_dimension_numbers<[1], [0], [0], [1], [0, 0, 1, 1], [], []>} : vector<8x96xbf16>, vector<96x128xbf16>, vector<8x128xf32> -> vector<8x128xf32>
    %92 = arith.addf %86, %91 : vector<8x128xf32>
    %93 = vector.extract_strided_slice %1 {offsets = [3, 36], sizes = [8, 96], strides = [1, 1]} : vector<11x132xf32> to vector<8x96xf32>
    %94 = arith.truncf %93 : vector<8x96xf32> to vector<8x96xbf16>
    %c15 = arith.constant 15 : index
    %c0_48 = arith.constant 0 : index
    %c0_49 = arith.constant 0 : index
    %95 = vector.load %arg2[%c15, %c0_48, %c0_49] : memref<16x96x128xbf16, #tpu.memory_space<vmem>>, vector<1x96x128xbf16>
    %96 = vector.shape_cast %95 : vector<1x96x128xbf16> to vector<96x128xbf16>
    %cst_50 = arith.constant dense<0.000000e+00> : vector<8x128xf32>
    %97 = tpu.matmul %94, %96, %cst_50 {dimension_numbers = #tpu.dot_dimension_numbers<[1], [0], [0], [1], [0, 0, 1, 1], [], []>} : vector<8x96xbf16>, vector<96x128xbf16>, vector<8x128xf32> -> vector<8x128xf32>
    %98 = arith.addf %92, %97 : vector<8x128xf32>
    %c0_51 = arith.constant 0 : index
    %c0_52 = arith.constant 0 : index
    %99 = vector.load %arg3[%c0_51, %c0_52] : memref<1x128xf32, #tpu.memory_space<vmem>>, vector<1x128xf32>
    %100 = vector.broadcast %99 : vector<1x128xf32> to vector<8x128xf32>
    %101 = arith.mulf %98, %100 : vector<8x128xf32>
    %c0_53 = arith.constant 0 : index
    %c0_54 = arith.constant 0 : index
    %102 = vector.load %arg4[%c0_53, %c0_54] : memref<1x128xf32, #tpu.memory_space<vmem>>, vector<1x128xf32>
    %103 = vector.broadcast %102 : vector<1x128xf32> to vector<8x128xf32>
    %104 = arith.addf %101, %103 : vector<8x128xf32>
    %cst_55 = arith.constant 0.000000e+00 : f32
    %105 = vector.broadcast %cst_55 : f32 to vector<8x128xf32>
    %106 = arith.maximumf %104, %105 : vector<8x128xf32>
    %107 = arith.truncf %106 : vector<8x128xf32> to vector<8x128xbf16>
    %c0_56 = arith.constant 0 : index
    %c0_57 = arith.constant 0 : index
    %c0_58 = arith.constant 0 : index
    %108 = vector.load %arg5[%c0_56, %c0_57, %c0_58] : memref<1x8x128xbf16, #tpu.memory_space<vmem>>, vector<1x8x128xbf16>
    %109 = vector.shape_cast %108 : vector<1x8x128xbf16> to vector<8x128xbf16>
    %110 = vector.shape_cast %107 : vector<8x128xbf16> to vector<1x8x128xbf16>
    tpu.vector_store %arg5[%c0_56, %c0_57, %c0_58], %110 {strides = array<i32>} : memref<1x8x128xbf16, #tpu.memory_space<vmem>>, vector<1x8x128xbf16>,
    return
  }
  func.func @transform_0(%arg0: i32) -> (i32, i32, i32) {
    %c0_i32 = arith.constant 0 : i32
    %c0_i32_0 = arith.constant 0 : i32
    %c0_i32_1 = arith.constant 0 : i32
    return %arg0, %c0_i32, %c0_i32_0 : i32, i32, i32
  }
  func.func @transform_1(%arg0: i32) -> (i32, i32, i32) {
    %c0_i32 = arith.constant 0 : i32
    %c0_i32_0 = arith.constant 0 : i32
    %c0_i32_1 = arith.constant 0 : i32
    %c0_i32_2 = arith.constant 0 : i32
    return %c0_i32, %c0_i32_0, %c0_i32_1 : i32, i32, i32
  }
  func.func @transform_2(%arg0: i32) -> (i32, i32) {
    %c0_i32 = arith.constant 0 : i32
    %c0_i32_0 = arith.constant 0 : i32
    %c0_i32_1 = arith.constant 0 : i32
    return %c0_i32, %c0_i32_0 : i32, i32
  }
  func.func @transform_3(%arg0: i32) -> (i32, i32) {
    %c0_i32 = arith.constant 0 : i32
    %c0_i32_0 = arith.constant 0 : i32
    %c0_i32_1 = arith.constant 0 : i32
    return %c0_i32, %c0_i32_0 : i32, i32
  }
  func.func @transform_4(%arg0: i32) -> (i32, i32, i32) {
    %c0_i32 = arith.constant 0 : i32
    %c0_i32_0 = arith.constant 0 : i32
    %c0_i32_1 = arith.constant 0 : i32
    return %arg0, %c0_i32, %c0_i32_0 : i32, i32, i32
  }
}

module attributes {stable_mosaic.version = 11 : i64} {
  func.func @_conv_bn_kernel(%arg0: i32, %arg1: memref<1x4x64xbf16, #tpu.memory_space<vmem>>, %arg2: memref<1x64x32xbf16, #tpu.memory_space<vmem>>, %arg3: memref<1x32xf32, #tpu.memory_space<vmem>>, %arg4: memref<1x32xf32, #tpu.memory_space<vmem>>, %arg5: memref<1x4x32xbf16, #tpu.memory_space<vmem>>) attributes {dimension_semantics = [#tpu.dimension_semantics<parallel>], iteration_bounds = array<i64: 2>, scalar_prefetch = 0 : i64, scratch_operands = 0 : i64, tpu.core_type = #tpu.core_type<tc>, window_params = [{transform_indices = @transform_0, window_bounds = array<i64: 1, 4, 64>}, {pipeline_mode = #tpu.pipeline_mode<synchronous>, transform_indices = @transform_1, window_bounds = array<i64: 1, 64, 32>}, {pipeline_mode = #tpu.pipeline_mode<synchronous>, transform_indices = @transform_2, window_bounds = array<i64: 1, 32>}, {pipeline_mode = #tpu.pipeline_mode<synchronous>, transform_indices = @transform_3, window_bounds = array<i64: 1, 32>}, {transform_indices = @transform_4, window_bounds = array<i64: 1, 4, 32>}]} {
    %c0 = arith.constant 0 : index
    %c0_0 = arith.constant 0 : index
    %c0_1 = arith.constant 0 : index
    %0 = vector.load %arg1[%c0, %c0_0, %c0_1] : memref<1x4x64xbf16, #tpu.memory_space<vmem>>, vector<1x4x64xbf16>
    %1 = vector.shape_cast %0 : vector<1x4x64xbf16> to vector<4x64xbf16>
    %2 = arith.extf %1 : vector<4x64xbf16> to vector<4x64xf32>
    %cst = arith.constant 0.000000e+00 : f32
    %3 = vector.broadcast %cst : f32 to vector<4x32xf32>
    %4 = arith.truncf %2 : vector<4x64xf32> to vector<4x64xbf16>
    %c0_2 = arith.constant 0 : index
    %c0_3 = arith.constant 0 : index
    %c0_4 = arith.constant 0 : index
    %5 = vector.load %arg2[%c0_2, %c0_3, %c0_4] : memref<1x64x32xbf16, #tpu.memory_space<vmem>>, vector<1x64x32xbf16>
    %6 = vector.shape_cast %5 : vector<1x64x32xbf16> to vector<64x32xbf16>
    %cst_5 = arith.constant dense<0.000000e+00> : vector<4x32xf32>
    %7 = tpu.matmul %4, %6, %cst_5 {dimension_numbers = #tpu.dot_dimension_numbers<[1], [0], [0], [1], [0, 0, 1, 1], [], []>} : vector<4x64xbf16>, vector<64x32xbf16>, vector<4x32xf32> -> vector<4x32xf32>
    %8 = arith.addf %3, %7 : vector<4x32xf32>
    %c0_6 = arith.constant 0 : index
    %c0_7 = arith.constant 0 : index
    %9 = vector.load %arg3[%c0_6, %c0_7] : memref<1x32xf32, #tpu.memory_space<vmem>>, vector<1x32xf32>
    %10 = vector.broadcast %9 : vector<1x32xf32> to vector<4x32xf32>
    %11 = arith.mulf %8, %10 : vector<4x32xf32>
    %c0_8 = arith.constant 0 : index
    %c0_9 = arith.constant 0 : index
    %12 = vector.load %arg4[%c0_8, %c0_9] : memref<1x32xf32, #tpu.memory_space<vmem>>, vector<1x32xf32>
    %13 = vector.broadcast %12 : vector<1x32xf32> to vector<4x32xf32>
    %14 = arith.addf %11, %13 : vector<4x32xf32>
    %cst_10 = arith.constant 0.000000e+00 : f32
    %15 = vector.broadcast %cst_10 : f32 to vector<4x32xf32>
    %16 = arith.maximumf %14, %15 : vector<4x32xf32>
    %17 = arith.truncf %16 : vector<4x32xf32> to vector<4x32xbf16>
    %c0_11 = arith.constant 0 : index
    %c0_12 = arith.constant 0 : index
    %c0_13 = arith.constant 0 : index
    %18 = vector.load %arg5[%c0_11, %c0_12, %c0_13] : memref<1x4x32xbf16, #tpu.memory_space<vmem>>, vector<1x4x32xbf16>
    %19 = vector.shape_cast %18 : vector<1x4x32xbf16> to vector<4x32xbf16>
    %20 = vector.shape_cast %17 : vector<4x32xbf16> to vector<1x4x32xbf16>
    tpu.vector_store %arg5[%c0_11, %c0_12, %c0_13], %20 {strides = array<i32>} : memref<1x4x32xbf16, #tpu.memory_space<vmem>>, vector<1x4x32xbf16>,
    return
  }
  func.func @transform_0(%arg0: i32) -> (i32, i32, i32) {
    %c0_i32 = arith.constant 0 : i32
    %c0_i32_0 = arith.constant 0 : i32
    %c0_i32_1 = arith.constant 0 : i32
    return %arg0, %c0_i32, %c0_i32_0 : i32, i32, i32
  }
  func.func @transform_1(%arg0: i32) -> (i32, i32, i32) {
    %c0_i32 = arith.constant 0 : i32
    %c0_i32_0 = arith.constant 0 : i32
    %c0_i32_1 = arith.constant 0 : i32
    %c0_i32_2 = arith.constant 0 : i32
    return %c0_i32, %c0_i32_0, %c0_i32_1 : i32, i32, i32
  }
  func.func @transform_2(%arg0: i32) -> (i32, i32) {
    %c0_i32 = arith.constant 0 : i32
    %c0_i32_0 = arith.constant 0 : i32
    %c0_i32_1 = arith.constant 0 : i32
    return %c0_i32, %c0_i32_0 : i32, i32
  }
  func.func @transform_3(%arg0: i32) -> (i32, i32) {
    %c0_i32 = arith.constant 0 : i32
    %c0_i32_0 = arith.constant 0 : i32
    %c0_i32_1 = arith.constant 0 : i32
    return %c0_i32, %c0_i32_0 : i32, i32
  }
  func.func @transform_4(%arg0: i32) -> (i32, i32, i32) {
    %c0_i32 = arith.constant 0 : i32
    %c0_i32_0 = arith.constant 0 : i32
    %c0_i32_1 = arith.constant 0 : i32
    return %arg0, %c0_i32, %c0_i32_0 : i32, i32, i32
  }
}

module attributes {stable_mosaic.version = 11 : i64} {
  func.func @_conv_bn_kernel(%arg0: i32, %arg1: memref<1x4x64xbf16, #tpu.memory_space<vmem>>, %arg2: memref<1x64x128xbf16, #tpu.memory_space<vmem>>, %arg3: memref<1x128xf32, #tpu.memory_space<vmem>>, %arg4: memref<1x128xf32, #tpu.memory_space<vmem>>, %arg5: memref<1x4x128xbf16, #tpu.memory_space<vmem>>) attributes {dimension_semantics = [#tpu.dimension_semantics<parallel>], iteration_bounds = array<i64: 2>, scalar_prefetch = 0 : i64, scratch_operands = 0 : i64, tpu.core_type = #tpu.core_type<tc>, window_params = [{transform_indices = @transform_0, window_bounds = array<i64: 1, 4, 64>}, {pipeline_mode = #tpu.pipeline_mode<synchronous>, transform_indices = @transform_1, window_bounds = array<i64: 1, 64, 128>}, {pipeline_mode = #tpu.pipeline_mode<synchronous>, transform_indices = @transform_2, window_bounds = array<i64: 1, 128>}, {pipeline_mode = #tpu.pipeline_mode<synchronous>, transform_indices = @transform_3, window_bounds = array<i64: 1, 128>}, {transform_indices = @transform_4, window_bounds = array<i64: 1, 4, 128>}]} {
    %c0 = arith.constant 0 : index
    %c0_0 = arith.constant 0 : index
    %c0_1 = arith.constant 0 : index
    %0 = vector.load %arg1[%c0, %c0_0, %c0_1] : memref<1x4x64xbf16, #tpu.memory_space<vmem>>, vector<1x4x64xbf16>
    %1 = vector.shape_cast %0 : vector<1x4x64xbf16> to vector<4x64xbf16>
    %2 = arith.extf %1 : vector<4x64xbf16> to vector<4x64xf32>
    %cst = arith.constant 0.000000e+00 : f32
    %3 = vector.broadcast %cst : f32 to vector<4x128xf32>
    %4 = arith.truncf %2 : vector<4x64xf32> to vector<4x64xbf16>
    %c0_2 = arith.constant 0 : index
    %c0_3 = arith.constant 0 : index
    %c0_4 = arith.constant 0 : index
    %5 = vector.load %arg2[%c0_2, %c0_3, %c0_4] : memref<1x64x128xbf16, #tpu.memory_space<vmem>>, vector<1x64x128xbf16>
    %6 = vector.shape_cast %5 : vector<1x64x128xbf16> to vector<64x128xbf16>
    %cst_5 = arith.constant dense<0.000000e+00> : vector<4x128xf32>
    %7 = tpu.matmul %4, %6, %cst_5 {dimension_numbers = #tpu.dot_dimension_numbers<[1], [0], [0], [1], [0, 0, 1, 1], [], []>} : vector<4x64xbf16>, vector<64x128xbf16>, vector<4x128xf32> -> vector<4x128xf32>
    %8 = arith.addf %3, %7 : vector<4x128xf32>
    %c0_6 = arith.constant 0 : index
    %c0_7 = arith.constant 0 : index
    %9 = vector.load %arg3[%c0_6, %c0_7] : memref<1x128xf32, #tpu.memory_space<vmem>>, vector<1x128xf32>
    %10 = vector.broadcast %9 : vector<1x128xf32> to vector<4x128xf32>
    %11 = arith.mulf %8, %10 : vector<4x128xf32>
    %c0_8 = arith.constant 0 : index
    %c0_9 = arith.constant 0 : index
    %12 = vector.load %arg4[%c0_8, %c0_9] : memref<1x128xf32, #tpu.memory_space<vmem>>, vector<1x128xf32>
    %13 = vector.broadcast %12 : vector<1x128xf32> to vector<4x128xf32>
    %14 = arith.addf %11, %13 : vector<4x128xf32>
    %15 = arith.truncf %14 : vector<4x128xf32> to vector<4x128xbf16>
    %c0_10 = arith.constant 0 : index
    %c0_11 = arith.constant 0 : index
    %c0_12 = arith.constant 0 : index
    %16 = vector.load %arg5[%c0_10, %c0_11, %c0_12] : memref<1x4x128xbf16, #tpu.memory_space<vmem>>, vector<1x4x128xbf16>
    %17 = vector.shape_cast %16 : vector<1x4x128xbf16> to vector<4x128xbf16>
    %18 = vector.shape_cast %15 : vector<4x128xbf16> to vector<1x4x128xbf16>
    tpu.vector_store %arg5[%c0_10, %c0_11, %c0_12], %18 {strides = array<i32>} : memref<1x4x128xbf16, #tpu.memory_space<vmem>>, vector<1x4x128xbf16>,
    return
  }
  func.func @transform_0(%arg0: i32) -> (i32, i32, i32) {
    %c0_i32 = arith.constant 0 : i32
    %c0_i32_0 = arith.constant 0 : i32
    %c0_i32_1 = arith.constant 0 : i32
    return %arg0, %c0_i32, %c0_i32_0 : i32, i32, i32
  }
  func.func @transform_1(%arg0: i32) -> (i32, i32, i32) {
    %c0_i32 = arith.constant 0 : i32
    %c0_i32_0 = arith.constant 0 : i32
    %c0_i32_1 = arith.constant 0 : i32
    %c0_i32_2 = arith.constant 0 : i32
    return %c0_i32, %c0_i32_0, %c0_i32_1 : i32, i32, i32
  }
  func.func @transform_2(%arg0: i32) -> (i32, i32) {
    %c0_i32 = arith.constant 0 : i32
    %c0_i32_0 = arith.constant 0 : i32
    %c0_i32_1 = arith.constant 0 : i32
    return %c0_i32, %c0_i32_0 : i32, i32
  }
  func.func @transform_3(%arg0: i32) -> (i32, i32) {
    %c0_i32 = arith.constant 0 : i32
    %c0_i32_0 = arith.constant 0 : i32
    %c0_i32_1 = arith.constant 0 : i32
    return %c0_i32, %c0_i32_0 : i32, i32
  }
  func.func @transform_4(%arg0: i32) -> (i32, i32, i32) {
    %c0_i32 = arith.constant 0 : i32
    %c0_i32_0 = arith.constant 0 : i32
    %c0_i32_1 = arith.constant 0 : i32
    return %arg0, %c0_i32, %c0_i32_0 : i32, i32, i32
  }
}

module attributes {stable_mosaic.version = 11 : i64} {
  func.func @_conv_bn_kernel(%arg0: i32, %arg1: memref<1x6x48xbf16, #tpu.memory_space<vmem>>, %arg2: memref<9x32x32xbf16, #tpu.memory_space<vmem>>, %arg3: memref<1x32xf32, #tpu.memory_space<vmem>>, %arg4: memref<1x32xf32, #tpu.memory_space<vmem>>, %arg5: memref<1x4x32xbf16, #tpu.memory_space<vmem>>) attributes {dimension_semantics = [#tpu.dimension_semantics<parallel>], iteration_bounds = array<i64: 2>, scalar_prefetch = 0 : i64, scratch_operands = 0 : i64, tpu.core_type = #tpu.core_type<tc>, window_params = [{transform_indices = @transform_0, window_bounds = array<i64: 1, 6, 48>}, {pipeline_mode = #tpu.pipeline_mode<synchronous>, transform_indices = @transform_1, window_bounds = array<i64: 9, 32, 32>}, {pipeline_mode = #tpu.pipeline_mode<synchronous>, transform_indices = @transform_2, window_bounds = array<i64: 1, 32>}, {pipeline_mode = #tpu.pipeline_mode<synchronous>, transform_indices = @transform_3, window_bounds = array<i64: 1, 32>}, {transform_indices = @transform_4, window_bounds = array<i64: 1, 4, 32>}]} {
    %c0 = arith.constant 0 : index
    %c0_0 = arith.constant 0 : index
    %c0_1 = arith.constant 0 : index
    %0 = vector.load %arg1[%c0, %c0_0, %c0_1] : memref<1x6x48xbf16, #tpu.memory_space<vmem>>, vector<1x6x48xbf16>
    %1 = vector.shape_cast %0 : vector<1x6x48xbf16> to vector<6x48xbf16>
    %2 = arith.extf %1 : vector<6x48xbf16> to vector<6x48xf32>
    %cst = arith.constant 0.000000e+00 : f32
    %3 = vector.broadcast %cst : f32 to vector<4x32xf32>
    %4 = vector.extract_strided_slice %2 {offsets = [0, 0], sizes = [4, 32], strides = [1, 1]} : vector<6x48xf32> to vector<4x32xf32>
    %5 = arith.truncf %4 : vector<4x32xf32> to vector<4x32xbf16>
    %c0_2 = arith.constant 0 : index
    %c0_3 = arith.constant 0 : index
    %c0_4 = arith.constant 0 : index
    %6 = vector.load %arg2[%c0_2, %c0_3, %c0_4] : memref<9x32x32xbf16, #tpu.memory_space<vmem>>, vector<1x32x32xbf16>
    %7 = vector.shape_cast %6 : vector<1x32x32xbf16> to vector<32x32xbf16>
    %cst_5 = arith.constant dense<0.000000e+00> : vector<4x32xf32>
    %8 = tpu.matmul %5, %7, %cst_5 {dimension_numbers = #tpu.dot_dimension_numbers<[1], [0], [0], [1], [0, 0, 1, 1], [], []>} : vector<4x32xbf16>, vector<32x32xbf16>, vector<4x32xf32> -> vector<4x32xf32>
    %9 = arith.addf %3, %8 : vector<4x32xf32>
    %10 = vector.extract_strided_slice %2 {offsets = [0, 8], sizes = [4, 32], strides = [1, 1]} : vector<6x48xf32> to vector<4x32xf32>
    %11 = arith.truncf %10 : vector<4x32xf32> to vector<4x32xbf16>
    %c1 = arith.constant 1 : index
    %c0_6 = arith.constant 0 : index
    %c0_7 = arith.constant 0 : index
    %12 = vector.load %arg2[%c1, %c0_6, %c0_7] : memref<9x32x32xbf16, #tpu.memory_space<vmem>>, vector<1x32x32xbf16>
    %13 = vector.shape_cast %12 : vector<1x32x32xbf16> to vector<32x32xbf16>
    %cst_8 = arith.constant dense<0.000000e+00> : vector<4x32xf32>
    %14 = tpu.matmul %11, %13, %cst_8 {dimension_numbers = #tpu.dot_dimension_numbers<[1], [0], [0], [1], [0, 0, 1, 1], [], []>} : vector<4x32xbf16>, vector<32x32xbf16>, vector<4x32xf32> -> vector<4x32xf32>
    %15 = arith.addf %9, %14 : vector<4x32xf32>
    %16 = vector.extract_strided_slice %2 {offsets = [0, 16], sizes = [4, 32], strides = [1, 1]} : vector<6x48xf32> to vector<4x32xf32>
    %17 = arith.truncf %16 : vector<4x32xf32> to vector<4x32xbf16>
    %c2 = arith.constant 2 : index
    %c0_9 = arith.constant 0 : index
    %c0_10 = arith.constant 0 : index
    %18 = vector.load %arg2[%c2, %c0_9, %c0_10] : memref<9x32x32xbf16, #tpu.memory_space<vmem>>, vector<1x32x32xbf16>
    %19 = vector.shape_cast %18 : vector<1x32x32xbf16> to vector<32x32xbf16>
    %cst_11 = arith.constant dense<0.000000e+00> : vector<4x32xf32>
    %20 = tpu.matmul %17, %19, %cst_11 {dimension_numbers = #tpu.dot_dimension_numbers<[1], [0], [0], [1], [0, 0, 1, 1], [], []>} : vector<4x32xbf16>, vector<32x32xbf16>, vector<4x32xf32> -> vector<4x32xf32>
    %21 = arith.addf %15, %20 : vector<4x32xf32>
    %22 = vector.extract_strided_slice %2 {offsets = [1, 0], sizes = [4, 32], strides = [1, 1]} : vector<6x48xf32> to vector<4x32xf32>
    %23 = arith.truncf %22 : vector<4x32xf32> to vector<4x32xbf16>
    %c3 = arith.constant 3 : index
    %c0_12 = arith.constant 0 : index
    %c0_13 = arith.constant 0 : index
    %24 = vector.load %arg2[%c3, %c0_12, %c0_13] : memref<9x32x32xbf16, #tpu.memory_space<vmem>>, vector<1x32x32xbf16>
    %25 = vector.shape_cast %24 : vector<1x32x32xbf16> to vector<32x32xbf16>
    %cst_14 = arith.constant dense<0.000000e+00> : vector<4x32xf32>
    %26 = tpu.matmul %23, %25, %cst_14 {dimension_numbers = #tpu.dot_dimension_numbers<[1], [0], [0], [1], [0, 0, 1, 1], [], []>} : vector<4x32xbf16>, vector<32x32xbf16>, vector<4x32xf32> -> vector<4x32xf32>
    %27 = arith.addf %21, %26 : vector<4x32xf32>
    %28 = vector.extract_strided_slice %2 {offsets = [1, 8], sizes = [4, 32], strides = [1, 1]} : vector<6x48xf32> to vector<4x32xf32>
    %29 = arith.truncf %28 : vector<4x32xf32> to vector<4x32xbf16>
    %c4 = arith.constant 4 : index
    %c0_15 = arith.constant 0 : index
    %c0_16 = arith.constant 0 : index
    %30 = vector.load %arg2[%c4, %c0_15, %c0_16] : memref<9x32x32xbf16, #tpu.memory_space<vmem>>, vector<1x32x32xbf16>
    %31 = vector.shape_cast %30 : vector<1x32x32xbf16> to vector<32x32xbf16>
    %cst_17 = arith.constant dense<0.000000e+00> : vector<4x32xf32>
    %32 = tpu.matmul %29, %31, %cst_17 {dimension_numbers = #tpu.dot_dimension_numbers<[1], [0], [0], [1], [0, 0, 1, 1], [], []>} : vector<4x32xbf16>, vector<32x32xbf16>, vector<4x32xf32> -> vector<4x32xf32>
    %33 = arith.addf %27, %32 : vector<4x32xf32>
    %34 = vector.extract_strided_slice %2 {offsets = [1, 16], sizes = [4, 32], strides = [1, 1]} : vector<6x48xf32> to vector<4x32xf32>
    %35 = arith.truncf %34 : vector<4x32xf32> to vector<4x32xbf16>
    %c5 = arith.constant 5 : index
    %c0_18 = arith.constant 0 : index
    %c0_19 = arith.constant 0 : index
    %36 = vector.load %arg2[%c5, %c0_18, %c0_19] : memref<9x32x32xbf16, #tpu.memory_space<vmem>>, vector<1x32x32xbf16>
    %37 = vector.shape_cast %36 : vector<1x32x32xbf16> to vector<32x32xbf16>
    %cst_20 = arith.constant dense<0.000000e+00> : vector<4x32xf32>
    %38 = tpu.matmul %35, %37, %cst_20 {dimension_numbers = #tpu.dot_dimension_numbers<[1], [0], [0], [1], [0, 0, 1, 1], [], []>} : vector<4x32xbf16>, vector<32x32xbf16>, vector<4x32xf32> -> vector<4x32xf32>
    %39 = arith.addf %33, %38 : vector<4x32xf32>
    %40 = vector.extract_strided_slice %2 {offsets = [2, 0], sizes = [4, 32], strides = [1, 1]} : vector<6x48xf32> to vector<4x32xf32>
    %41 = arith.truncf %40 : vector<4x32xf32> to vector<4x32xbf16>
    %c6 = arith.constant 6 : index
    %c0_21 = arith.constant 0 : index
    %c0_22 = arith.constant 0 : index
    %42 = vector.load %arg2[%c6, %c0_21, %c0_22] : memref<9x32x32xbf16, #tpu.memory_space<vmem>>, vector<1x32x32xbf16>
    %43 = vector.shape_cast %42 : vector<1x32x32xbf16> to vector<32x32xbf16>
    %cst_23 = arith.constant dense<0.000000e+00> : vector<4x32xf32>
    %44 = tpu.matmul %41, %43, %cst_23 {dimension_numbers = #tpu.dot_dimension_numbers<[1], [0], [0], [1], [0, 0, 1, 1], [], []>} : vector<4x32xbf16>, vector<32x32xbf16>, vector<4x32xf32> -> vector<4x32xf32>
    %45 = arith.addf %39, %44 : vector<4x32xf32>
    %46 = vector.extract_strided_slice %2 {offsets = [2, 8], sizes = [4, 32], strides = [1, 1]} : vector<6x48xf32> to vector<4x32xf32>
    %47 = arith.truncf %46 : vector<4x32xf32> to vector<4x32xbf16>
    %c7 = arith.constant 7 : index
    %c0_24 = arith.constant 0 : index
    %c0_25 = arith.constant 0 : index
    %48 = vector.load %arg2[%c7, %c0_24, %c0_25] : memref<9x32x32xbf16, #tpu.memory_space<vmem>>, vector<1x32x32xbf16>
    %49 = vector.shape_cast %48 : vector<1x32x32xbf16> to vector<32x32xbf16>
    %cst_26 = arith.constant dense<0.000000e+00> : vector<4x32xf32>
    %50 = tpu.matmul %47, %49, %cst_26 {dimension_numbers = #tpu.dot_dimension_numbers<[1], [0], [0], [1], [0, 0, 1, 1], [], []>} : vector<4x32xbf16>, vector<32x32xbf16>, vector<4x32xf32> -> vector<4x32xf32>
    %51 = arith.addf %45, %50 : vector<4x32xf32>
    %52 = vector.extract_strided_slice %2 {offsets = [2, 16], sizes = [4, 32], strides = [1, 1]} : vector<6x48xf32> to vector<4x32xf32>
    %53 = arith.truncf %52 : vector<4x32xf32> to vector<4x32xbf16>
    %c8 = arith.constant 8 : index
    %c0_27 = arith.constant 0 : index
    %c0_28 = arith.constant 0 : index
    %54 = vector.load %arg2[%c8, %c0_27, %c0_28] : memref<9x32x32xbf16, #tpu.memory_space<vmem>>, vector<1x32x32xbf16>
    %55 = vector.shape_cast %54 : vector<1x32x32xbf16> to vector<32x32xbf16>
    %cst_29 = arith.constant dense<0.000000e+00> : vector<4x32xf32>
    %56 = tpu.matmul %53, %55, %cst_29 {dimension_numbers = #tpu.dot_dimension_numbers<[1], [0], [0], [1], [0, 0, 1, 1], [], []>} : vector<4x32xbf16>, vector<32x32xbf16>, vector<4x32xf32> -> vector<4x32xf32>
    %57 = arith.addf %51, %56 : vector<4x32xf32>
    %c0_30 = arith.constant 0 : index
    %c0_31 = arith.constant 0 : index
    %58 = vector.load %arg3[%c0_30, %c0_31] : memref<1x32xf32, #tpu.memory_space<vmem>>, vector<1x32xf32>
    %59 = vector.broadcast %58 : vector<1x32xf32> to vector<4x32xf32>
    %60 = arith.mulf %57, %59 : vector<4x32xf32>
    %c0_32 = arith.constant 0 : index
    %c0_33 = arith.constant 0 : index
    %61 = vector.load %arg4[%c0_32, %c0_33] : memref<1x32xf32, #tpu.memory_space<vmem>>, vector<1x32xf32>
    %62 = vector.broadcast %61 : vector<1x32xf32> to vector<4x32xf32>
    %63 = arith.addf %60, %62 : vector<4x32xf32>
    %cst_34 = arith.constant 0.000000e+00 : f32
    %64 = vector.broadcast %cst_34 : f32 to vector<4x32xf32>
    %65 = arith.maximumf %63, %64 : vector<4x32xf32>
    %66 = arith.truncf %65 : vector<4x32xf32> to vector<4x32xbf16>
    %c0_35 = arith.constant 0 : index
    %c0_36 = arith.constant 0 : index
    %c0_37 = arith.constant 0 : index
    %67 = vector.load %arg5[%c0_35, %c0_36, %c0_37] : memref<1x4x32xbf16, #tpu.memory_space<vmem>>, vector<1x4x32xbf16>
    %68 = vector.shape_cast %67 : vector<1x4x32xbf16> to vector<4x32xbf16>
    %69 = vector.shape_cast %66 : vector<4x32xbf16> to vector<1x4x32xbf16>
    tpu.vector_store %arg5[%c0_35, %c0_36, %c0_37], %69 {strides = array<i32>} : memref<1x4x32xbf16, #tpu.memory_space<vmem>>, vector<1x4x32xbf16>,
    return
  }
  func.func @transform_0(%arg0: i32) -> (i32, i32, i32) {
    %c0_i32 = arith.constant 0 : i32
    %c0_i32_0 = arith.constant 0 : i32
    %c0_i32_1 = arith.constant 0 : i32
    return %arg0, %c0_i32, %c0_i32_0 : i32, i32, i32
  }
  func.func @transform_1(%arg0: i32) -> (i32, i32, i32) {
    %c0_i32 = arith.constant 0 : i32
    %c0_i32_0 = arith.constant 0 : i32
    %c0_i32_1 = arith.constant 0 : i32
    %c0_i32_2 = arith.constant 0 : i32
    return %c0_i32, %c0_i32_0, %c0_i32_1 : i32, i32, i32
  }
  func.func @transform_2(%arg0: i32) -> (i32, i32) {
    %c0_i32 = arith.constant 0 : i32
    %c0_i32_0 = arith.constant 0 : i32
    %c0_i32_1 = arith.constant 0 : i32
    return %c0_i32, %c0_i32_0 : i32, i32
  }
  func.func @transform_3(%arg0: i32) -> (i32, i32) {
    %c0_i32 = arith.constant 0 : i32
    %c0_i32_0 = arith.constant 0 : i32
    %c0_i32_1 = arith.constant 0 : i32
    return %c0_i32, %c0_i32_0 : i32, i32
  }
  func.func @transform_4(%arg0: i32) -> (i32, i32, i32) {
    %c0_i32 = arith.constant 0 : i32
    %c0_i32_0 = arith.constant 0 : i32
    %c0_i32_1 = arith.constant 0 : i32
    return %arg0, %c0_i32, %c0_i32_0 : i32, i32, i32
  }
}

module attributes {stable_mosaic.version = 11 : i64} {
  func.func @_conv_bn_kernel(%arg0: i32, %arg1: memref<1x4x32xbf16, #tpu.memory_space<vmem>>, %arg2: memref<1x32x128xbf16, #tpu.memory_space<vmem>>, %arg3: memref<1x128xf32, #tpu.memory_space<vmem>>, %arg4: memref<1x128xf32, #tpu.memory_space<vmem>>, %arg5: memref<1x4x128xbf16, #tpu.memory_space<vmem>>, %arg6: memref<1x4x128xbf16, #tpu.memory_space<vmem>>) attributes {dimension_semantics = [#tpu.dimension_semantics<parallel>], iteration_bounds = array<i64: 2>, scalar_prefetch = 0 : i64, scratch_operands = 0 : i64, tpu.core_type = #tpu.core_type<tc>, window_params = [{transform_indices = @transform_0, window_bounds = array<i64: 1, 4, 32>}, {pipeline_mode = #tpu.pipeline_mode<synchronous>, transform_indices = @transform_1, window_bounds = array<i64: 1, 32, 128>}, {pipeline_mode = #tpu.pipeline_mode<synchronous>, transform_indices = @transform_2, window_bounds = array<i64: 1, 128>}, {pipeline_mode = #tpu.pipeline_mode<synchronous>, transform_indices = @transform_3, window_bounds = array<i64: 1, 128>}, {transform_indices = @transform_4, window_bounds = array<i64: 1, 4, 128>}, {transform_indices = @transform_5, window_bounds = array<i64: 1, 4, 128>}]} {
    %c0 = arith.constant 0 : index
    %c0_0 = arith.constant 0 : index
    %c0_1 = arith.constant 0 : index
    %0 = vector.load %arg1[%c0, %c0_0, %c0_1] : memref<1x4x32xbf16, #tpu.memory_space<vmem>>, vector<1x4x32xbf16>
    %1 = vector.shape_cast %0 : vector<1x4x32xbf16> to vector<4x32xbf16>
    %2 = arith.extf %1 : vector<4x32xbf16> to vector<4x32xf32>
    %cst = arith.constant 0.000000e+00 : f32
    %3 = vector.broadcast %cst : f32 to vector<4x128xf32>
    %4 = arith.truncf %2 : vector<4x32xf32> to vector<4x32xbf16>
    %c0_2 = arith.constant 0 : index
    %c0_3 = arith.constant 0 : index
    %c0_4 = arith.constant 0 : index
    %5 = vector.load %arg2[%c0_2, %c0_3, %c0_4] : memref<1x32x128xbf16, #tpu.memory_space<vmem>>, vector<1x32x128xbf16>
    %6 = vector.shape_cast %5 : vector<1x32x128xbf16> to vector<32x128xbf16>
    %cst_5 = arith.constant dense<0.000000e+00> : vector<4x128xf32>
    %7 = tpu.matmul %4, %6, %cst_5 {dimension_numbers = #tpu.dot_dimension_numbers<[1], [0], [0], [1], [0, 0, 1, 1], [], []>} : vector<4x32xbf16>, vector<32x128xbf16>, vector<4x128xf32> -> vector<4x128xf32>
    %8 = arith.addf %3, %7 : vector<4x128xf32>
    %c0_6 = arith.constant 0 : index
    %c0_7 = arith.constant 0 : index
    %9 = vector.load %arg3[%c0_6, %c0_7] : memref<1x128xf32, #tpu.memory_space<vmem>>, vector<1x128xf32>
    %10 = vector.broadcast %9 : vector<1x128xf32> to vector<4x128xf32>
    %11 = arith.mulf %8, %10 : vector<4x128xf32>
    %c0_8 = arith.constant 0 : index
    %c0_9 = arith.constant 0 : index
    %12 = vector.load %arg4[%c0_8, %c0_9] : memref<1x128xf32, #tpu.memory_space<vmem>>, vector<1x128xf32>
    %13 = vector.broadcast %12 : vector<1x128xf32> to vector<4x128xf32>
    %14 = arith.addf %11, %13 : vector<4x128xf32>
    %c0_10 = arith.constant 0 : index
    %c0_11 = arith.constant 0 : index
    %c0_12 = arith.constant 0 : index
    %15 = vector.load %arg5[%c0_10, %c0_11, %c0_12] : memref<1x4x128xbf16, #tpu.memory_space<vmem>>, vector<1x4x128xbf16>
    %16 = vector.shape_cast %15 : vector<1x4x128xbf16> to vector<4x128xbf16>
    %17 = arith.extf %16 : vector<4x128xbf16> to vector<4x128xf32>
    %18 = arith.addf %14, %17 : vector<4x128xf32>
    %cst_13 = arith.constant 0.000000e+00 : f32
    %19 = vector.broadcast %cst_13 : f32 to vector<4x128xf32>
    %20 = arith.maximumf %18, %19 : vector<4x128xf32>
    %21 = arith.truncf %20 : vector<4x128xf32> to vector<4x128xbf16>
    %c0_14 = arith.constant 0 : index
    %c0_15 = arith.constant 0 : index
    %c0_16 = arith.constant 0 : index
    %22 = vector.load %arg6[%c0_14, %c0_15, %c0_16] : memref<1x4x128xbf16, #tpu.memory_space<vmem>>, vector<1x4x128xbf16>
    %23 = vector.shape_cast %22 : vector<1x4x128xbf16> to vector<4x128xbf16>
    %24 = vector.shape_cast %21 : vector<4x128xbf16> to vector<1x4x128xbf16>
    tpu.vector_store %arg6[%c0_14, %c0_15, %c0_16], %24 {strides = array<i32>} : memref<1x4x128xbf16, #tpu.memory_space<vmem>>, vector<1x4x128xbf16>,
    return
  }
  func.func @transform_0(%arg0: i32) -> (i32, i32, i32) {
    %c0_i32 = arith.constant 0 : i32
    %c0_i32_0 = arith.constant 0 : i32
    %c0_i32_1 = arith.constant 0 : i32
    return %arg0, %c0_i32, %c0_i32_0 : i32, i32, i32
  }
  func.func @transform_1(%arg0: i32) -> (i32, i32, i32) {
    %c0_i32 = arith.constant 0 : i32
    %c0_i32_0 = arith.constant 0 : i32
    %c0_i32_1 = arith.constant 0 : i32
    %c0_i32_2 = arith.constant 0 : i32
    return %c0_i32, %c0_i32_0, %c0_i32_1 : i32, i32, i32
  }
  func.func @transform_2(%arg0: i32) -> (i32, i32) {
    %c0_i32 = arith.constant 0 : i32
    %c0_i32_0 = arith.constant 0 : i32
    %c0_i32_1 = arith.constant 0 : i32
    return %c0_i32, %c0_i32_0 : i32, i32
  }
  func.func @transform_3(%arg0: i32) -> (i32, i32) {
    %c0_i32 = arith.constant 0 : i32
    %c0_i32_0 = arith.constant 0 : i32
    %c0_i32_1 = arith.constant 0 : i32
    return %c0_i32, %c0_i32_0 : i32, i32
  }
  func.func @transform_4(%arg0: i32) -> (i32, i32, i32) {
    %c0_i32 = arith.constant 0 : i32
    %c0_i32_0 = arith.constant 0 : i32
    %c0_i32_1 = arith.constant 0 : i32
    return %arg0, %c0_i32, %c0_i32_0 : i32, i32, i32
  }
  func.func @transform_5(%arg0: i32) -> (i32, i32, i32) {
    %c0_i32 = arith.constant 0 : i32
    %c0_i32_0 = arith.constant 0 : i32
    %c0_i32_1 = arith.constant 0 : i32
    return %arg0, %c0_i32, %c0_i32_0 : i32, i32, i32
  }
}

module attributes {stable_mosaic.version = 11 : i64} {
  func.func @_head_cls_up_kernel(%arg0: i32, %arg1: memref<1x6x192xbf16, #tpu.memory_space<vmem>>, %arg2: memref<9x128x64xbf16, #tpu.memory_space<vmem>>, %arg3: memref<1x64xf32, #tpu.memory_space<vmem>>, %arg4: memref<1x64xf32, #tpu.memory_space<vmem>>, %arg5: memref<64x16xbf16, #tpu.memory_space<vmem>>, %arg6: memref<1x16xf32, #tpu.memory_space<vmem>>, %arg7: memref<16x4xf32, #tpu.memory_space<vmem>>, %arg8: memref<16x64xf32, #tpu.memory_space<vmem>>, %arg9: memref<1x16x64xf32, #tpu.memory_space<vmem>>) attributes {dimension_semantics = [#tpu.dimension_semantics<parallel>], iteration_bounds = array<i64: 2>, scalar_prefetch = 0 : i64, scratch_operands = 0 : i64, tpu.core_type = #tpu.core_type<tc>, window_params = [{transform_indices = @transform_0, window_bounds = array<i64: 1, 6, 192>}, {pipeline_mode = #tpu.pipeline_mode<synchronous>, transform_indices = @transform_1, window_bounds = array<i64: 9, 128, 64>}, {pipeline_mode = #tpu.pipeline_mode<synchronous>, transform_indices = @transform_2, window_bounds = array<i64: 1, 64>}, {pipeline_mode = #tpu.pipeline_mode<synchronous>, transform_indices = @transform_3, window_bounds = array<i64: 1, 64>}, {pipeline_mode = #tpu.pipeline_mode<synchronous>, transform_indices = @transform_4, window_bounds = array<i64: 64, 16>}, {pipeline_mode = #tpu.pipeline_mode<synchronous>, transform_indices = @transform_5, window_bounds = array<i64: 1, 16>}, {pipeline_mode = #tpu.pipeline_mode<synchronous>, transform_indices = @transform_6, window_bounds = array<i64: 16, 4>}, {pipeline_mode = #tpu.pipeline_mode<synchronous>, transform_indices = @transform_7, window_bounds = array<i64: 16, 64>}, {transform_indices = @transform_8, window_bounds = array<i64: 1, 16, 64>}]} {
    %c0 = arith.constant 0 : index
    %c0_0 = arith.constant 0 : index
    %c0_1 = arith.constant 0 : index
    %0 = vector.load %arg1[%c0, %c0_0, %c0_1] : memref<1x6x192xbf16, #tpu.memory_space<vmem>>, vector<1x6x192xbf16>
    %1 = vector.shape_cast %0 : vector<1x6x192xbf16> to vector<6x192xbf16>
    %2 = arith.extf %1 : vector<6x192xbf16> to vector<6x192xf32>
    %cst = arith.constant 0.000000e+00 : f32
    %3 = vector.broadcast %cst : f32 to vector<4x64xf32>
    %4 = vector.extract_strided_slice %2 {offsets = [0, 0], sizes = [4, 128], strides = [1, 1]} : vector<6x192xf32> to vector<4x128xf32>
    %5 = arith.truncf %4 : vector<4x128xf32> to vector<4x128xbf16>
    %c0_2 = arith.constant 0 : index
    %c0_3 = arith.constant 0 : index
    %c0_4 = arith.constant 0 : index
    %6 = vector.load %arg2[%c0_2, %c0_3, %c0_4] : memref<9x128x64xbf16, #tpu.memory_space<vmem>>, vector<1x128x64xbf16>
    %7 = vector.shape_cast %6 : vector<1x128x64xbf16> to vector<128x64xbf16>
    %cst_5 = arith.constant dense<0.000000e+00> : vector<4x64xf32>
    %8 = tpu.matmul %5, %7, %cst_5 {dimension_numbers = #tpu.dot_dimension_numbers<[1], [0], [0], [1], [0, 0, 1, 1], [], []>} : vector<4x128xbf16>, vector<128x64xbf16>, vector<4x64xf32> -> vector<4x64xf32>
    %9 = arith.addf %3, %8 : vector<4x64xf32>
    %10 = vector.extract_strided_slice %2 {offsets = [0, 32], sizes = [4, 128], strides = [1, 1]} : vector<6x192xf32> to vector<4x128xf32>
    %11 = arith.truncf %10 : vector<4x128xf32> to vector<4x128xbf16>
    %c1 = arith.constant 1 : index
    %c0_6 = arith.constant 0 : index
    %c0_7 = arith.constant 0 : index
    %12 = vector.load %arg2[%c1, %c0_6, %c0_7] : memref<9x128x64xbf16, #tpu.memory_space<vmem>>, vector<1x128x64xbf16>
    %13 = vector.shape_cast %12 : vector<1x128x64xbf16> to vector<128x64xbf16>
    %cst_8 = arith.constant dense<0.000000e+00> : vector<4x64xf32>
    %14 = tpu.matmul %11, %13, %cst_8 {dimension_numbers = #tpu.dot_dimension_numbers<[1], [0], [0], [1], [0, 0, 1, 1], [], []>} : vector<4x128xbf16>, vector<128x64xbf16>, vector<4x64xf32> -> vector<4x64xf32>
    %15 = arith.addf %9, %14 : vector<4x64xf32>
    %16 = vector.extract_strided_slice %2 {offsets = [0, 64], sizes = [4, 128], strides = [1, 1]} : vector<6x192xf32> to vector<4x128xf32>
    %17 = arith.truncf %16 : vector<4x128xf32> to vector<4x128xbf16>
    %c2 = arith.constant 2 : index
    %c0_9 = arith.constant 0 : index
    %c0_10 = arith.constant 0 : index
    %18 = vector.load %arg2[%c2, %c0_9, %c0_10] : memref<9x128x64xbf16, #tpu.memory_space<vmem>>, vector<1x128x64xbf16>
    %19 = vector.shape_cast %18 : vector<1x128x64xbf16> to vector<128x64xbf16>
    %cst_11 = arith.constant dense<0.000000e+00> : vector<4x64xf32>
    %20 = tpu.matmul %17, %19, %cst_11 {dimension_numbers = #tpu.dot_dimension_numbers<[1], [0], [0], [1], [0, 0, 1, 1], [], []>} : vector<4x128xbf16>, vector<128x64xbf16>, vector<4x64xf32> -> vector<4x64xf32>
    %21 = arith.addf %15, %20 : vector<4x64xf32>
    %22 = vector.extract_strided_slice %2 {offsets = [1, 0], sizes = [4, 128], strides = [1, 1]} : vector<6x192xf32> to vector<4x128xf32>
    %23 = arith.truncf %22 : vector<4x128xf32> to vector<4x128xbf16>
    %c3 = arith.constant 3 : index
    %c0_12 = arith.constant 0 : index
    %c0_13 = arith.constant 0 : index
    %24 = vector.load %arg2[%c3, %c0_12, %c0_13] : memref<9x128x64xbf16, #tpu.memory_space<vmem>>, vector<1x128x64xbf16>
    %25 = vector.shape_cast %24 : vector<1x128x64xbf16> to vector<128x64xbf16>
    %cst_14 = arith.constant dense<0.000000e+00> : vector<4x64xf32>
    %26 = tpu.matmul %23, %25, %cst_14 {dimension_numbers = #tpu.dot_dimension_numbers<[1], [0], [0], [1], [0, 0, 1, 1], [], []>} : vector<4x128xbf16>, vector<128x64xbf16>, vector<4x64xf32> -> vector<4x64xf32>
    %27 = arith.addf %21, %26 : vector<4x64xf32>
    %28 = vector.extract_strided_slice %2 {offsets = [1, 32], sizes = [4, 128], strides = [1, 1]} : vector<6x192xf32> to vector<4x128xf32>
    %29 = arith.truncf %28 : vector<4x128xf32> to vector<4x128xbf16>
    %c4 = arith.constant 4 : index
    %c0_15 = arith.constant 0 : index
    %c0_16 = arith.constant 0 : index
    %30 = vector.load %arg2[%c4, %c0_15, %c0_16] : memref<9x128x64xbf16, #tpu.memory_space<vmem>>, vector<1x128x64xbf16>
    %31 = vector.shape_cast %30 : vector<1x128x64xbf16> to vector<128x64xbf16>
    %cst_17 = arith.constant dense<0.000000e+00> : vector<4x64xf32>
    %32 = tpu.matmul %29, %31, %cst_17 {dimension_numbers = #tpu.dot_dimension_numbers<[1], [0], [0], [1], [0, 0, 1, 1], [], []>} : vector<4x128xbf16>, vector<128x64xbf16>, vector<4x64xf32> -> vector<4x64xf32>
    %33 = arith.addf %27, %32 : vector<4x64xf32>
    %34 = vector.extract_strided_slice %2 {offsets = [1, 64], sizes = [4, 128], strides = [1, 1]} : vector<6x192xf32> to vector<4x128xf32>
    %35 = arith.truncf %34 : vector<4x128xf32> to vector<4x128xbf16>
    %c5 = arith.constant 5 : index
    %c0_18 = arith.constant 0 : index
    %c0_19 = arith.constant 0 : index
    %36 = vector.load %arg2[%c5, %c0_18, %c0_19] : memref<9x128x64xbf16, #tpu.memory_space<vmem>>, vector<1x128x64xbf16>
    %37 = vector.shape_cast %36 : vector<1x128x64xbf16> to vector<128x64xbf16>
    %cst_20 = arith.constant dense<0.000000e+00> : vector<4x64xf32>
    %38 = tpu.matmul %35, %37, %cst_20 {dimension_numbers = #tpu.dot_dimension_numbers<[1], [0], [0], [1], [0, 0, 1, 1], [], []>} : vector<4x128xbf16>, vector<128x64xbf16>, vector<4x64xf32> -> vector<4x64xf32>
    %39 = arith.addf %33, %38 : vector<4x64xf32>
    %40 = vector.extract_strided_slice %2 {offsets = [2, 0], sizes = [4, 128], strides = [1, 1]} : vector<6x192xf32> to vector<4x128xf32>
    %41 = arith.truncf %40 : vector<4x128xf32> to vector<4x128xbf16>
    %c6 = arith.constant 6 : index
    %c0_21 = arith.constant 0 : index
    %c0_22 = arith.constant 0 : index
    %42 = vector.load %arg2[%c6, %c0_21, %c0_22] : memref<9x128x64xbf16, #tpu.memory_space<vmem>>, vector<1x128x64xbf16>
    %43 = vector.shape_cast %42 : vector<1x128x64xbf16> to vector<128x64xbf16>
    %cst_23 = arith.constant dense<0.000000e+00> : vector<4x64xf32>
    %44 = tpu.matmul %41, %43, %cst_23 {dimension_numbers = #tpu.dot_dimension_numbers<[1], [0], [0], [1], [0, 0, 1, 1], [], []>} : vector<4x128xbf16>, vector<128x64xbf16>, vector<4x64xf32> -> vector<4x64xf32>
    %45 = arith.addf %39, %44 : vector<4x64xf32>
    %46 = vector.extract_strided_slice %2 {offsets = [2, 32], sizes = [4, 128], strides = [1, 1]} : vector<6x192xf32> to vector<4x128xf32>
    %47 = arith.truncf %46 : vector<4x128xf32> to vector<4x128xbf16>
    %c7 = arith.constant 7 : index
    %c0_24 = arith.constant 0 : index
    %c0_25 = arith.constant 0 : index
    %48 = vector.load %arg2[%c7, %c0_24, %c0_25] : memref<9x128x64xbf16, #tpu.memory_space<vmem>>, vector<1x128x64xbf16>
    %49 = vector.shape_cast %48 : vector<1x128x64xbf16> to vector<128x64xbf16>
    %cst_26 = arith.constant dense<0.000000e+00> : vector<4x64xf32>
    %50 = tpu.matmul %47, %49, %cst_26 {dimension_numbers = #tpu.dot_dimension_numbers<[1], [0], [0], [1], [0, 0, 1, 1], [], []>} : vector<4x128xbf16>, vector<128x64xbf16>, vector<4x64xf32> -> vector<4x64xf32>
    %51 = arith.addf %45, %50 : vector<4x64xf32>
    %52 = vector.extract_strided_slice %2 {offsets = [2, 64], sizes = [4, 128], strides = [1, 1]} : vector<6x192xf32> to vector<4x128xf32>
    %53 = arith.truncf %52 : vector<4x128xf32> to vector<4x128xbf16>
    %c8 = arith.constant 8 : index
    %c0_27 = arith.constant 0 : index
    %c0_28 = arith.constant 0 : index
    %54 = vector.load %arg2[%c8, %c0_27, %c0_28] : memref<9x128x64xbf16, #tpu.memory_space<vmem>>, vector<1x128x64xbf16>
    %55 = vector.shape_cast %54 : vector<1x128x64xbf16> to vector<128x64xbf16>
    %cst_29 = arith.constant dense<0.000000e+00> : vector<4x64xf32>
    %56 = tpu.matmul %53, %55, %cst_29 {dimension_numbers = #tpu.dot_dimension_numbers<[1], [0], [0], [1], [0, 0, 1, 1], [], []>} : vector<4x128xbf16>, vector<128x64xbf16>, vector<4x64xf32> -> vector<4x64xf32>
    %57 = arith.addf %51, %56 : vector<4x64xf32>
    %c0_30 = arith.constant 0 : index
    %c0_31 = arith.constant 0 : index
    %58 = vector.load %arg3[%c0_30, %c0_31] : memref<1x64xf32, #tpu.memory_space<vmem>>, vector<1x64xf32>
    %59 = vector.broadcast %58 : vector<1x64xf32> to vector<4x64xf32>
    %60 = arith.mulf %57, %59 : vector<4x64xf32>
    %c0_32 = arith.constant 0 : index
    %c0_33 = arith.constant 0 : index
    %61 = vector.load %arg4[%c0_32, %c0_33] : memref<1x64xf32, #tpu.memory_space<vmem>>, vector<1x64xf32>
    %62 = vector.broadcast %61 : vector<1x64xf32> to vector<4x64xf32>
    %63 = arith.addf %60, %62 : vector<4x64xf32>
    %cst_34 = arith.constant 0.000000e+00 : f32
    %64 = vector.broadcast %cst_34 : f32 to vector<4x64xf32>
    %65 = arith.maximumf %63, %64 : vector<4x64xf32>
    %66 = arith.truncf %65 : vector<4x64xf32> to vector<4x64xbf16>
    %c0_35 = arith.constant 0 : index
    %c0_36 = arith.constant 0 : index
    %67 = vector.load %arg5[%c0_35, %c0_36] : memref<64x16xbf16, #tpu.memory_space<vmem>>, vector<64x16xbf16>
    %cst_37 = arith.constant dense<0.000000e+00> : vector<4x16xf32>
    %68 = tpu.matmul %66, %67, %cst_37 {dimension_numbers = #tpu.dot_dimension_numbers<[1], [0], [0], [1], [0, 0, 1, 1], [], []>} : vector<4x64xbf16>, vector<64x16xbf16>, vector<4x16xf32> -> vector<4x16xf32>
    %c0_38 = arith.constant 0 : index
    %c0_39 = arith.constant 0 : index
    %69 = vector.load %arg6[%c0_38, %c0_39] : memref<1x16xf32, #tpu.memory_space<vmem>>, vector<1x16xf32>
    %70 = vector.broadcast %69 : vector<1x16xf32> to vector<4x16xf32>
    %71 = arith.addf %68, %70 : vector<4x16xf32>
    %c0_40 = arith.constant 0 : index
    %c0_41 = arith.constant 0 : index
    %72 = vector.load %arg7[%c0_40, %c0_41] : memref<16x4xf32, #tpu.memory_space<vmem>>, vector<16x4xf32>
    %cst_42 = arith.constant dense<0.000000e+00> : vector<16x16xf32>
    %73 = tpu.matmul %72, %71, %cst_42 {dimension_numbers = #tpu.dot_dimension_numbers<[1], [0], [0], [1], [0, 0, 1, 1], [], []>} : vector<16x4xf32>, vector<4x16xf32>, vector<16x16xf32> -> vector<16x16xf32>
    %c0_43 = arith.constant 0 : index
    %c0_44 = arith.constant 0 : index
    %74 = vector.load %arg8[%c0_43, %c0_44] : memref<16x64xf32, #tpu.memory_space<vmem>>, vector<16x64xf32>
    %cst_45 = arith.constant dense<0.000000e+00> : vector<16x64xf32>
    %75 = tpu.matmul %73, %74, %cst_45 {dimension_numbers = #tpu.dot_dimension_numbers<[1], [0], [0], [1], [0, 0, 1, 1], [], []>} : vector<16x16xf32>, vector<16x64xf32>, vector<16x64xf32> -> vector<16x64xf32>
    %c0_46 = arith.constant 0 : index
    %c0_47 = arith.constant 0 : index
    %c0_48 = arith.constant 0 : index
    %76 = vector.load %arg9[%c0_46, %c0_47, %c0_48] : memref<1x16x64xf32, #tpu.memory_space<vmem>>, vector<1x16x64xf32>
    %77 = vector.shape_cast %76 : vector<1x16x64xf32> to vector<16x64xf32>
    %78 = vector.shape_cast %75 : vector<16x64xf32> to vector<1x16x64xf32>
    tpu.vector_store %arg9[%c0_46, %c0_47, %c0_48], %78 {strides = array<i32>} : memref<1x16x64xf32, #tpu.memory_space<vmem>>, vector<1x16x64xf32>,
    return
  }
  func.func @transform_0(%arg0: i32) -> (i32, i32, i32) {
    %c0_i32 = arith.constant 0 : i32
    %c0_i32_0 = arith.constant 0 : i32
    %c0_i32_1 = arith.constant 0 : i32
    return %arg0, %c0_i32, %c0_i32_0 : i32, i32, i32
  }
  func.func @transform_1(%arg0: i32) -> (i32, i32, i32) {
    %c0_i32 = arith.constant 0 : i32
    %c0_i32_0 = arith.constant 0 : i32
    %c0_i32_1 = arith.constant 0 : i32
    %c0_i32_2 = arith.constant 0 : i32
    return %c0_i32, %c0_i32_0, %c0_i32_1 : i32, i32, i32
  }
  func.func @transform_2(%arg0: i32) -> (i32, i32) {
    %c0_i32 = arith.constant 0 : i32
    %c0_i32_0 = arith.constant 0 : i32
    %c0_i32_1 = arith.constant 0 : i32
    return %c0_i32, %c0_i32_0 : i32, i32
  }
  func.func @transform_3(%arg0: i32) -> (i32, i32) {
    %c0_i32 = arith.constant 0 : i32
    %c0_i32_0 = arith.constant 0 : i32
    %c0_i32_1 = arith.constant 0 : i32
    return %c0_i32, %c0_i32_0 : i32, i32
  }
  func.func @transform_4(%arg0: i32) -> (i32, i32) {
    %c0_i32 = arith.constant 0 : i32
    %c0_i32_0 = arith.constant 0 : i32
    %c0_i32_1 = arith.constant 0 : i32
    return %c0_i32, %c0_i32_0 : i32, i32
  }
  func.func @transform_5(%arg0: i32) -> (i32, i32) {
    %c0_i32 = arith.constant 0 : i32
    %c0_i32_0 = arith.constant 0 : i32
    %c0_i32_1 = arith.constant 0 : i32
    return %c0_i32, %c0_i32_0 : i32, i32
  }
  func.func @transform_6(%arg0: i32) -> (i32, i32) {
    %c0_i32 = arith.constant 0 : i32
    %c0_i32_0 = arith.constant 0 : i32
    %c0_i32_1 = arith.constant 0 : i32
    return %c0_i32, %c0_i32_0 : i32, i32
  }
  func.func @transform_7(%arg0: i32) -> (i32, i32) {
    %c0_i32 = arith.constant 0 : i32
    %c0_i32_0 = arith.constant 0 : i32
    %c0_i32_1 = arith.constant 0 : i32
    return %c0_i32, %c0_i32_0 : i32, i32
  }
  func.func @transform_8(%arg0: i32) -> (i32, i32, i32) {
    %c0_i32 = arith.constant 0 : i32
    %c0_i32_0 = arith.constant 0 : i32
    %c0_i32_1 = arith.constant 0 : i32
    return %arg0, %c0_i32, %c0_i32_0 : i32, i32, i32
  }
}

module attributes {stable_mosaic.version = 11 : i64} {
  func.func @_cross_entropy_kernel(%arg0: i32, %arg1: memref<256x4xf32, #tpu.memory_space<vmem>>, %arg2: memref<256x1xi32, #tpu.memory_space<vmem>>, %arg3: memref<1x1xf32, #tpu.memory_space<vmem>>, %arg4: memref<1x1xf32, #tpu.memory_space<vmem>>, %arg5: memref<1x1xf32, #tpu.memory_space<vmem>>) attributes {dimension_semantics = [#tpu.dimension_semantics<arbitrary>], iteration_bounds = array<i64: 2>, scalar_prefetch = 0 : i64, scratch_operands = 2 : i64, tpu.core_type = #tpu.core_type<tc>, window_params = [{transform_indices = @transform_0, window_bounds = array<i64: 256, 4>}, {transform_indices = @transform_1, window_bounds = array<i64: 256, 1>}, {pipeline_mode = #tpu.pipeline_mode<synchronous>, transform_indices = @transform_2, window_bounds = array<i64: 1, 1>}]} {
    %c0_i32 = arith.constant 0 : i32
    %0 = arith.cmpi eq, %arg0, %c0_i32 : i32
    %1 = arith.extui %0 : i1 to i32
    %c0_i32_0 = arith.constant 0 : i32
    %2 = arith.cmpi ne, %1, %c0_i32_0 : i32
    scf.if %2 {
      %cst_18 = arith.constant 0.000000e+00 : f32
      %45 = vector.broadcast %cst_18 : f32 to vector<1x1xf32>
      %c0_19 = arith.constant 0 : index
      %c0_20 = arith.constant 0 : index
      %46 = vector.load %arg4[%c0_19, %c0_20] : memref<1x1xf32, #tpu.memory_space<vmem>>, vector<1x1xf32>
      tpu.vector_store %arg4[%c0_19, %c0_20], %45 {strides = array<i32>} : memref<1x1xf32, #tpu.memory_space<vmem>>, vector<1x1xf32>,
      %cst_21 = arith.constant 0.000000e+00 : f32
      %47 = vector.broadcast %cst_21 : f32 to vector<1x1xf32>
      %c0_22 = arith.constant 0 : index
      %c0_23 = arith.constant 0 : index
      %48 = vector.load %arg5[%c0_22, %c0_23] : memref<1x1xf32, #tpu.memory_space<vmem>>, vector<1x1xf32>
      tpu.vector_store %arg5[%c0_22, %c0_23], %47 {strides = array<i32>} : memref<1x1xf32, #tpu.memory_space<vmem>>, vector<1x1xf32>,
    } else {
    }
    %c0 = arith.constant 0 : index
    %c0_1 = arith.constant 0 : index
    %3 = vector.load %arg1[%c0, %c0_1] : memref<256x4xf32, #tpu.memory_space<vmem>>, vector<256x4xf32>
    %c0_2 = arith.constant 0 : index
    %c0_3 = arith.constant 0 : index
    %4 = vector.load %arg2[%c0_2, %c0_3] : memref<256x1xi32, #tpu.memory_space<vmem>>, vector<256x1xi32>
    %cst = arith.constant dense<0xFF800000> : vector<256xf32>
    %5 = vector.multi_reduction <maximumf>, %3, %cst [1] : vector<256x4xf32> to vector<256xf32>
    %6 = vector.shape_cast %5 : vector<256xf32> to vector<256x1xf32>
    %7 = vector.broadcast %6 : vector<256x1xf32> to vector<256x4xf32>
    %8 = arith.subf %3, %7 : vector<256x4xf32>
    %9 = math.exp %8 : vector<256x4xf32>
    %cst_4 = arith.constant dense<0.000000e+00> : vector<256xf32>
    %10 = vector.multi_reduction <add>, %9, %cst_4 [1] : vector<256x4xf32> to vector<256xf32>
    %11 = vector.shape_cast %10 : vector<256xf32> to vector<256x1xf32>
    %12 = math.log %11 : vector<256x1xf32>
    %13 = tpu.iota {dimensions = array<i32: 1>} : vector<256x4xi32>
    %14 = vector.broadcast %4 : vector<256x1xi32> to vector<256x4xi32>
    %15 = arith.cmpi eq, %13, %14 : vector<256x4xi32>
    %cst_5 = arith.constant 0.000000e+00 : f32
    %16 = vector.broadcast %cst_5 : f32 to vector<256x4xf32>
    %17 = arith.select %15, %8, %16 : vector<256x4xi1>, vector<256x4xf32>
    %cst_6 = arith.constant dense<0.000000e+00> : vector<256xf32>
    %18 = vector.multi_reduction <add>, %17, %cst_6 [1] : vector<256x4xf32> to vector<256xf32>
    %19 = vector.shape_cast %18 : vector<256xf32> to vector<256x1xf32>
    %c-100_i32 = arith.constant -100 : i32
    %20 = vector.broadcast %c-100_i32 : i32 to vector<256x1xi32>
    %21 = arith.cmpi ne, %4, %20 : vector<256x1xi32>
    %22 = arith.extui %21 : vector<256x1xi1> to vector<256x1xi32>
    %23 = arith.sitofp %22 : vector<256x1xi32> to vector<256x1xf32>
    %c0_7 = arith.constant 0 : index
    %c0_8 = arith.constant 0 : index
    %24 = vector.load %arg4[%c0_7, %c0_8] : memref<1x1xf32, #tpu.memory_space<vmem>>, vector<1x1xf32>
    %25 = arith.subf %12, %19 : vector<256x1xf32>
    %26 = arith.mulf %25, %23 : vector<256x1xf32>
    %27 = vector.shape_cast %26 : vector<256x1xf32> to vector<1x256x1xf32>
    %cst_9 = arith.constant dense<0.000000e+00> : vector<1xf32>
    %28 = vector.multi_reduction <add>, %27, %cst_9 [1, 2] : vector<1x256x1xf32> to vector<1xf32>
    %29 = vector.shape_cast %28 : vector<1xf32> to vector<1x1x1xf32>
    %30 = vector.extract %29[0, 0, 0] : f32 from vector<1x1x1xf32>
    %31 = vector.broadcast %30 : f32 to vector<1x1xf32>
    %32 = arith.addf %24, %31 : vector<1x1xf32>
    %c0_10 = arith.constant 0 : index
    %c0_11 = arith.constant 0 : index
    %33 = vector.load %arg4[%c0_10, %c0_11] : memref<1x1xf32, #tpu.memory_space<vmem>>, vector<1x1xf32>
    tpu.vector_store %arg4[%c0_10, %c0_11], %32 {strides = array<i32>} : memref<1x1xf32, #tpu.memory_space<vmem>>, vector<1x1xf32>,
    %c0_12 = arith.constant 0 : index
    %c0_13 = arith.constant 0 : index
    %34 = vector.load %arg5[%c0_12, %c0_13] : memref<1x1xf32, #tpu.memory_space<vmem>>, vector<1x1xf32>
    %35 = vector.shape_cast %23 : vector<256x1xf32> to vector<1x256x1xf32>
    %cst_14 = arith.constant dense<0.000000e+00> : vector<1xf32>
    %36 = vector.multi_reduction <add>, %35, %cst_14 [1, 2] : vector<1x256x1xf32> to vector<1xf32>
    %37 = vector.shape_cast %36 : vector<1xf32> to vector<1x1x1xf32>
    %38 = vector.extract %37[0, 0, 0] : f32 from vector<1x1x1xf32>
    %39 = vector.broadcast %38 : f32 to vector<1x1xf32>
    %40 = arith.addf %34, %39 : vector<1x1xf32>
    %c0_15 = arith.constant 0 : index
    %c0_16 = arith.constant 0 : index
    %41 = vector.load %arg5[%c0_15, %c0_16] : memref<1x1xf32, #tpu.memory_space<vmem>>, vector<1x1xf32>
    tpu.vector_store %arg5[%c0_15, %c0_16], %40 {strides = array<i32>} : memref<1x1xf32, #tpu.memory_space<vmem>>, vector<1x1xf32>,
    %c1_i32 = arith.constant 1 : i32
    %42 = arith.cmpi eq, %arg0, %c1_i32 : i32
    %43 = arith.extui %42 : i1 to i32
    %c0_i32_17 = arith.constant 0 : i32
    %44 = arith.cmpi ne, %43, %c0_i32_17 : i32
    scf.if %44 {
      %c0_18 = arith.constant 0 : index
      %c0_19 = arith.constant 0 : index
      %45 = vector.load %arg4[%c0_18, %c0_19] : memref<1x1xf32, #tpu.memory_space<vmem>>, vector<1x1xf32>
      %c0_20 = arith.constant 0 : index
      %c0_21 = arith.constant 0 : index
      %46 = vector.load %arg5[%c0_20, %c0_21] : memref<1x1xf32, #tpu.memory_space<vmem>>, vector<1x1xf32>
      %47 = arith.divf %45, %46 : vector<1x1xf32>
      %c0_22 = arith.constant 0 : index
      %c0_23 = arith.constant 0 : index
      %48 = vector.load %arg3[%c0_22, %c0_23] : memref<1x1xf32, #tpu.memory_space<vmem>>, vector<1x1xf32>
      tpu.vector_store %arg3[%c0_22, %c0_23], %47 {strides = array<i32>} : memref<1x1xf32, #tpu.memory_space<vmem>>, vector<1x1xf32>,
    } else {
    }
    return
  }
  func.func @transform_0(%arg0: i32) -> (i32, i32) {
    %c0_i32 = arith.constant 0 : i32
    %c0_i32_0 = arith.constant 0 : i32
    return %arg0, %c0_i32 : i32, i32
  }
  func.func @transform_1(%arg0: i32) -> (i32, i32) {
    %c0_i32 = arith.constant 0 : i32
    %c0_i32_0 = arith.constant 0 : i32
    return %arg0, %c0_i32 : i32, i32
  }
  func.func @transform_2(%arg0: i32) -> (i32, i32) {
    %c0_i32 = arith.constant 0 : i32
    %c0_i32_0 = arith.constant 0 : i32
    %c0_i32_1 = arith.constant 0 : i32
    return %c0_i32, %c0_i32_0 : i32, i32
  }
}

</mosaic_0001>

<llo_original>
// kernel: tile.68
$region0: #{tile.68}
  #allocation0 [shape = 's32[1]{0}', space=sflag, size = 0x4, scoped, tag = 'scoped memory for tile.68']
  %s0 = inlined_call_operand.vmem [shape: f32[16], index: 0, kind: input, shape index: {}]
  %s1 = inlined_call_operand.vmem [shape: f32[8,16], index: 1, kind: output, shape index: {}]
  // Predicated region
  $region2: #{tile.68} parent=0 // pred_check
    _
  $region3: #{tile.68} parent=0 // pred_check_branch
    %3 = sbr.rel (0) target = $region5
  $region4: #{tile.68} parent=0 // pred_region
    _
  $region5: #{tile.68} parent=0 // pred_fallthru
    _
  %v4 = vld [vmem:[%s0] ss:$0 sm:$0xff]
  %5 = vst [vmem:[%s1] sm:$0xff] %v4

// kernel: tile.69
$region0: #{tile.69}
  %s0 = inlined_call_operand.vmem [shape: f32[8,16], index: 0, kind: input, shape index: {}]
  %s1 = inlined_call_operand.vmem [shape: f32[1,128], index: 1, kind: output, shape index: {}]
  $region1: #{tile.69} parent=0
    #allocation0 [shape = 'u8[4096]{0}', space=vmem, size = 0x1000, scoped, tag = 'scoped mem for output reshape']
    %v2 = vld [vmem:[%s0] sm:$0x1]
    %vm3 = vcmask 130048
    %4 = vst.msk [vmem:[#allocation0] sm:$0x1] %vm3, %v2
    %s5 = scalar_lea.vmem %s0, 7
    %v6 = vld [vmem:[%s5] sm:$0x1]
    %7 = vrot.lane.b32.xlu0 %v6, 112
    %v8 = vpop.permute.xlu0 %7
    %vm9 = vcmask 1048448
    %10 = vst.msk [vmem:[#allocation0] sm:$0x1] %vm9, %v8
    %s11 = scalar_lea.vmem %s0, 6
    %v12 = vld [vmem:[%s11] sm:$0x1]
    %13 = vrot.lane.b32.xlu0 %v12, 96
    %v14 = vpop.permute.xlu0 %13
    %vm15 = vcmask 917248
    %16 = vst.msk [vmem:[#allocation0] sm:$0x1] %vm15, %v14
    %s17 = scalar_lea.vmem %s0, 5
    %v18 = vld [vmem:[%s17] sm:$0x1]
    %19 = vrot.lane.b32.xlu0 %v18, 80
    %v20 = vpop.permute.xlu0 %19
    %vm21 = vcmask 786048
    %22 = vst.msk [vmem:[#allocation0] sm:$0x1] %vm21, %v20
    %s23 = scalar_lea.vmem %s0, 4
    %v24 = vld [vmem:[%s23] sm:$0x1]
    %25 = vrot.lane.b32.xlu0 %v24, 64
    %v26 = vpop.permute.xlu0 %25
    %vm27 = vcmask 654848
    %28 = vst.msk [vmem:[#allocation0] sm:$0x1] %vm27, %v26
    %s29 = scalar_lea.vmem %s0, 3
    %v30 = vld [vmem:[%s29] sm:$0x1]
    %31 = vrot.lane.b32.xlu0 %v30, 48
    %v32 = vpop.permute.xlu0 %31
    %vm33 = vcmask 523648
    %34 = vst.msk [vmem:[#allocation0] sm:$0x1] %vm33, %v32
    %s35 = scalar_lea.vmem %s0, 2
    %v36 = vld [vmem:[%s35] sm:$0x1]
    %37 = vrot.lane.b32.xlu0 %v36, 32
    %v38 = vpop.permute.xlu0 %37
    %vm39 = vcmask 392448
    %40 = vst.msk [vmem:[#allocation0] sm:$0x1] %vm39, %v38
    %s41 = scalar_lea.vmem %s0, 1
    %v42 = vld [vmem:[%s41] sm:$0x1]
    %43 = vrot.lane.b32.xlu0 %v42, 16
    %v44 = vpop.permute.xlu0 %43
    %vm45 = vcmask 261248
    %46 = vst.msk [vmem:[#allocation0] sm:$0x1] %vm45, %v44
    %s48 = sshllo.u32 0, 1
    %v50 = vld [vmem:[#allocation0] sm:%s48]
    %s51 = sshllo.u32 0, 1
    %52 = vst [vmem:[%s1] sm:%s51] %v50

// kernel: segmentation_forward.7
$region0: #{segmentation_forward.7}
  #allocation0 [shape = 'u32[]', space=smem, size = 0x4, offset = 0x4, fixed_abs, tag = 'smem constant byte address 0x4 - core index']
  #allocation1 [shape = 'u32[144,128]{1,0:T(1,128)}', space=vmem, size = 0x12000, scoped, tag = 'internal scratch']
  %s0 = inlined_call_operand.vmem [shape: f32[2,11,132], index: 0, kind: input, shape index: {}]
  %s1 = inlined_call_operand.vmem [shape: bf16[16,96,128], index: 1, kind: input, shape index: {}]
  %s2 = inlined_call_operand.vmem [shape: f32[1,128], index: 2, kind: input, shape index: {}]
  %s3 = inlined_call_operand.vmem [shape: f32[1,128], index: 3, kind: input, shape index: {}]
  %s4 = inlined_call_operand.vmem [shape: bf16[2,8,128], index: 4, kind: output, shape index: {}]
  %s5 = sld [smem:[#allocation0]]
  $region49: #{segmentation_forward.7} parent=0
    _
  %s7 = ssub.s32 1, %s5
  %s8 = scalar_select 0, %s7, %s5
  loop: start=0, step=1, limit=4
  $region2: #{segmentation_forward.7} parent=0 // loop_pre_header
    _
  $region3: #{segmentation_forward.7} parent=0 // loop_header
    %s10 = sphi 0, %s14
    %p11 = scmp.ge.s32.totalorder %s10, 4
    %s20 = sphi 0, %s22
    %s23 = sphi 0, %s20
    %s24 = sphi 0, %s23
    %s40 = sphi 0, %s24
    %s44 = sphi 0, %s44
    %s46 = sphi 0, %s44
    %s47 = sphi 0, %s46
    %s61 = sphi 0, %s47
    %s65 = sphi 0, %s65
    %s67 = sphi 0, %s65
    %s68 = sphi 0, %s67
    %s82 = sphi 0, %s68
    %s86 = sphi 0, %s86
    %s88 = sphi 0, %s86
    %s89 = sphi 0, %s88
    %s103 = sphi 0, %s89
    %s109 = sphi 0, %s111
    %s112 = sphi 0, %s109
    %s113 = sphi 0, %s112
    %s129 = sphi 0, %s113
  $region4: #{segmentation_forward.7} parent=0 // loop_header_branch
    %13 = sbr.rel (%p11) target = $region8
  $region5: #{segmentation_forward.7} parent=0 // loop_body
    %s15 = ssub.s32 %s10, 1
    %s16 = ssub.s32 %s10, 2
    %s17 = sadd.s32 %s10, 1
    %s18 = ssub.s32 %s10, %s17
    %p19 = scmp.eq.s32.totalorder %s18, 0
    %s21 = sadd.s32 %s20, 1
    %s22 = scalar_select %p19, %s20, %s21
    %p25 = pneg %p19
    %p26 = scmp.eq.s32.totalorder %s10, 1
    %p27 = por %p25, %p26
    %p28 = scmp.ne.s32.totalorder %s20, %s23
    %p29 = scmp.eq.s32.totalorder %s10, 0
    %p30 = por %p28, %p29
    %p31 = scmp.ne.s32.totalorder %s20, %s23
    %p32 = scmp.eq.s32.totalorder %s15, 1
    %p33 = por %p31, %p32
    %p34 = scmp.ne.s32.totalorder %s23, %s24
    %p35 = scmp.eq.s32.totalorder %s15, 0
    %p36 = por %p34, %p35
    %p37 = scmp.ne.s32.totalorder %s23, %s24
    %p38 = scmp.eq.s32.totalorder %s16, 1
    %p39 = por %p37, %p38
    %p41 = scmp.ne.s32.totalorder %s24, %s40
    %p42 = scmp.eq.s32.totalorder %s16, 0
    %p43 = por %p41, %p42
    %s45 = sadd.s32 %s44, 1
    %p48 = scmp.eq.s32.totalorder %s10, 1
    %p49 = scmp.ne.s32.totalorder %s44, %s46
    %p50 = scmp.eq.s32.totalorder %s10, 0
    %p51 = por %p49, %p50
    %p52 = scmp.ne.s32.totalorder %s44, %s46
    %p53 = scmp.eq.s32.totalorder %s15, 1
    %p54 = por %p52, %p53
    %p55 = scmp.ne.s32.totalorder %s46, %s47
    %p56 = scmp.eq.s32.totalorder %s15, 0
    %p57 = por %p55, %p56
    %p58 = scmp.ne.s32.totalorder %s46, %s47
    %p59 = scmp.eq.s32.totalorder %s16, 1
    %p60 = por %p58, %p59
    %p62 = scmp.ne.s32.totalorder %s47, %s61
    %p63 = scmp.eq.s32.totalorder %s16, 0
    %p64 = por %p62, %p63
    %s66 = sadd.s32 %s65, 1
    %p69 = scmp.eq.s32.totalorder %s10, 1
    %p70 = scmp.ne.s32.totalorder %s65, %s67
    %p71 = scmp.eq.s32.totalorder %s10, 0
    %p72 = por %p70, %p71
    %p73 = scmp.ne.s32.totalorder %s65, %s67
    %p74 = scmp.eq.s32.totalorder %s15, 1
    %p75 = por %p73, %p74
    %p76 = scmp.ne.s32.totalorder %s67, %s68
    %p77 = scmp.eq.s32.totalorder %s15, 0
    %p78 = por %p76, %p77
    %p79 = scmp.ne.s32.totalorder %s67, %s68
    %p80 = scmp.eq.s32.totalorder %s16, 1
    %p81 = por %p79, %p80
    %p83 = scmp.ne.s32.totalorder %s68, %s82
    %p84 = scmp.eq.s32.totalorder %s16, 0
    %p85 = por %p83, %p84
    %s87 = sadd.s32 %s86, 1
    %p90 = scmp.eq.s32.totalorder %s10, 1
    %p91 = scmp.ne.s32.totalorder %s86, %s88
    %p92 = scmp.eq.s32.totalorder %s10, 0
    %p93 = por %p91, %p92
    %p94 = scmp.ne.s32.totalorder %s86, %s88
    %p95 = scmp.eq.s32.totalorder %s15, 1
    %p96 = por %p94, %p95
    %p97 = scmp.ne.s32.totalorder %s88, %s89
    %p98 = scmp.eq.s32.totalorder %s15, 0
    %p99 = por %p97, %p98
    %p100 = scmp.ne.s32.totalorder %s88, %s89
    %p101 = scmp.eq.s32.totalorder %s16, 1
    %p102 = por %p100, %p101
    %p104 = scmp.ne.s32.totalorder %s89, %s103
    %p105 = scmp.eq.s32.totalorder %s16, 0
    %p106 = por %p104, %p105
    %s107 = ssub.s32 %s10, %s17
    %p108 = scmp.eq.s32.totalorder %s107, 0
    %s110 = sadd.s32 %s109, 1
    %s111 = scalar_select %p108, %s109, %s110
    %p114 = pneg %p108
    %p115 = scmp.eq.s32.totalorder %s10, 1
    %p116 = por %p114, %p115
    %p117 = scmp.ne.s32.totalorder %s109, %s112
    %p118 = scmp.eq.s32.totalorder %s10, 0
    %p119 = por %p117, %p118
    %p120 = scmp.ne.s32.totalorder %s109, %s112
    %p121 = scmp.eq.s32.totalorder %s15, 1
    %p122 = por %p120, %p121
    %p123 = scmp.ne.s32.totalorder %s112, %s113
    %p124 = scmp.eq.s32.totalorder %s15, 0
    %p125 = por %p123, %p124
    %p126 = scmp.ne.s32.totalorder %s112, %s113
    %p127 = scmp.eq.s32.totalorder %s16, 1
    %p128 = por %p126, %p127
    %p130 = scmp.ne.s32.totalorder %s113, %s129
    %p131 = scmp.eq.s32.totalorder %s16, 0
    %p132 = por %p130, %p131
    %p133 = scmp.le.s32.totalorder 1, %s10
    %p134 = scmp.lt.s32.totalorder %s10, 3
    %p135 = pnand %p133, %p134
    %p136 = pneg %p135
    // Predicated region
    $region9: #{segmentation_forward.7} parent=5 // pred_check
      _
    $region10: #{segmentation_forward.7} parent=5 // pred_check_branch
      %138 = sbr.rel (%p135) target = $region12
    $region11: #{segmentation_forward.7} parent=5 // pred_region
      %s139 = ssub.s32 %s10, 1
      // Predicated region
      $region13: #{segmentation_forward.7} parent=11 // pred_check
        %p140 = pneg %p57
      $region14: #{segmentation_forward.7} parent=11 // pred_check_branch
        %142 = sbr.rel (%p140) target = $region16
      $region15: #{segmentation_forward.7} parent=11 // pred_region
        _
      $region16: #{segmentation_forward.7} parent=11 // pred_fallthru
        _
      // Predicated region
      $region17: #{segmentation_forward.7} parent=11 // pred_check
        %p143 = pneg %p78
      $region18: #{segmentation_forward.7} parent=11 // pred_check_branch
        %145 = sbr.rel (%p143) target = $region20
      $region19: #{segmentation_forward.7} parent=11 // pred_region
        _
      $region20: #{segmentation_forward.7} parent=11 // pred_fallthru
        _
      // Predicated region
      $region21: #{segmentation_forward.7} parent=11 // pred_check
        %p146 = pneg %p99
      $region22: #{segmentation_forward.7} parent=11 // pred_check_branch
        %148 = sbr.rel (%p146) target = $region24
      $region23: #{segmentation_forward.7} parent=11 // pred_region
        _
      $region24: #{segmentation_forward.7} parent=11 // pred_fallthru
        _
    $region12: #{segmentation_forward.7} parent=5 // pred_fallthru
      _
    %p149 = scmp.lt.s32.totalorder %s10, 2
    // Predicated region
    $region25: #{segmentation_forward.7} parent=5 // pred_check
      %p150 = pneg %p149
    $region26: #{segmentation_forward.7} parent=5 // pred_check_branch
      %152 = sbr.rel (%p150) target = $region28
    $region27: #{segmentation_forward.7} parent=5 // pred_region
      // Predicated region
      $region29: #{segmentation_forward.7} parent=27 // pred_check
        %p153 = pneg %p30
      $region30: #{segmentation_forward.7} parent=27 // pred_check_branch
        %155 = sbr.rel (%p153) target = $region32
      $region31: #{segmentation_forward.7} parent=27 // pred_region
        %p156 = scmp.lt.s32.totalorder %s10, 1
        %s157 = scalar_select %p156, %s10, 1
        %s158 = smul.addr %s157, 4
        %s159 = smul.addr %s158, 8
        %s160 = scalar_lea.vmem %s0, %s159
      $region32: #{segmentation_forward.7} parent=27 // pred_fallthru
        _
    $region28: #{segmentation_forward.7} parent=5 // pred_fallthru
      _
    %p161 = scmp.le.s32.totalorder 1, %s10
    %p162 = scmp.lt.s32.totalorder %s10, 3
    %p163 = pnand %p161, %p162
    %p164 = pneg %p163
    // Predicated region
    $region33: #{segmentation_forward.7} parent=5 // pred_check
      _
    $region34: #{segmentation_forward.7} parent=5 // pred_check_branch
      %166 = sbr.rel (%p163) target = $region36
    $region35: #{segmentation_forward.7} parent=5 // pred_region
      %s167 = ssub.s32 %s10, 1
      %p168 = scmp.lt.s32.totalorder %s15, 1
      %s169 = scalar_select %p168, %s15, 1
      %s170 = smul.addr %s169, 4
      %s171 = smul.addr %s170, 8
      %s172 = scalar_lea.vmem %s0, %s171
      %p173 = pneg %p36
      %p174 = pneg %p33
      %p175 = pneg %p57
      %p176 = pneg %p54
      %p177 = pneg %p78
      %p178 = pneg %p75
      %p179 = pneg %p99
      %p180 = pneg %p96
      %p181 = pneg %p125
      %p182 = pneg %p122
      %p183 = scmp.lt.s32.totalorder %s15, 1
      %s184 = scalar_select %p183, %s15, 1
      %s185 = smul.addr %s184, 4
      %s186 = scalar_lea.vmem %s4, %s185
      %p187 = scmp.lt.s32.totalorder %s15, 1
      %s188 = scalar_select %p187, %s15, 1
      %s189 = smul.addr %s188, 4
      %s190 = smul.addr %s189, 8
      %s191 = scalar_lea.vmem %s0, %s190
      %p192 = scmp.lt.s32.totalorder %s15, 1
      %s193 = scalar_select %p192, %s15, 1
      %s194 = smul.addr %s193, 4
      %s195 = scalar_lea.vmem %s4, %s194
      %v197 = vld [vmem:[%s191] sm:$0xff]
      %v198 = vld [vmem:[%s191 + $0x8] sm:$0xff]
      %v199 = vld [vmem:[%s191 + $0x10] sm:$0x7]
      %v200 = vld [vmem:[%s191 + $0x18] sm:$0x7]
      %v201 = vpack.c.bf16 %v197, %v197
      %v202 = vld [vmem:[%s1] sm:$0xf]
      %v203 = vld [vmem:[%s1 + $0x4] sm:$0xf]
      %v204 = vld [vmem:[%s1 + $0x8] sm:$0xf]
      %v205 = vld [vmem:[%s1 + $0xc] sm:$0xf]
      %v206 = vld [vmem:[%s1 + $0x10] sm:$0xf]
      %v207 = vld [vmem:[%s1 + $0x14] sm:$0xf]
      %v208 = vld [vmem:[%s1 + $0x18] sm:$0xf]
      %v209 = vld [vmem:[%s1 + $0x1c] sm:$0xf]
      %v210 = vld [vmem:[%s1 + $0x20] sm:$0xf]
      %v211 = vld [vmem:[%s1 + $0x24] sm:$0xf]
      %v212 = vld [vmem:[%s1 + $0x28] sm:$0xf]
      %v213 = vld [vmem:[%s1 + $0x2c] sm:$0xf]
      %s214 = scalar_lea.vmem %s1, 48
      %v215 = vld [vmem:[%s214] sm:$0xf]
      %v216 = vld [vmem:[%s214 + $0x4] sm:$0xf]
      %v217 = vld [vmem:[%s214 + $0x8] sm:$0xf]
      %v218 = vld [vmem:[%s214 + $0xc] sm:$0xf]
      %v219 = vld [vmem:[%s214 + $0x10] sm:$0xf]
      %v220 = vld [vmem:[%s214 + $0x14] sm:$0xf]
      %v221 = vld [vmem:[%s214 + $0x18] sm:$0xf]
      %v222 = vld [vmem:[%s214 + $0x1c] sm:$0xf]
      %v223 = vld [vmem:[%s214 + $0x20] sm:$0xf]
      %v224 = vld [vmem:[%s214 + $0x24] sm:$0xf]
      %v225 = vld [vmem:[%s214 + $0x28] sm:$0xf]
      %v226 = vld [vmem:[%s214 + $0x2c] sm:$0xf]
      %228 = vrot.lane.b32.xlu0 %v201, 116
      %v229 = vpop.permute.xlu0 %228
      %v242 = vunpack.c.l.b16 %v215
      %v243 = vunpack.c.l.b16 %v216
      %v244 = vunpack.c.l.b16 %v217
      %v245 = vunpack.c.l.b16 %v218
      %v246 = vunpack.c.l.b16 %v219
      %v247 = vunpack.c.l.b16 %v220
      %v248 = vunpack.c.l.b16 %v221
      %v249 = vunpack.c.l.b16 %v222
      %v250 = vunpack.c.l.b16 %v223
      %v251 = vunpack.c.l.b16 %v224
      %v252 = vunpack.c.l.b16 %v225
      %v253 = vunpack.c.l.b16 %v226
      %v254 = vpack.c.b16 %v243, %v242
      %v255 = vpack.c.b16 %v245, %v244
      %v256 = vpack.c.b16 %v247, %v246
      %v257 = vpack.c.b16 %v249, %v248
      %v258 = vpack.c.b16 %v251, %v250
      %v259 = vpack.c.b16 %v253, %v252
      %vm266 = vcmask 785408
      %v268 = vsel %vm266, %v229, 0
      %270 = vmatprep.subr.bf16.mxu0 0
      %271 = vmatpush1.bf16.msra.mxu0 %v254
      %272 = vmatprep.subr.bf16.mxu0 0
      %273 = vmatpush1.bf16.msra.mxu0 %v255
      %274 = vmatprep.subr.bf16.mxu0 0
      %275 = vmatpush1.bf16.msra.mxu0 %v256
      %276 = vmatprep.subr.bf16.mxu0 0
      %277 = vmatpush1.bf16.msra.mxu0 %v257
      %278 = vmatprep.subr.bf16.mxu0 0
      %279 = vmatpush1.bf16.msra.mxu0 %v258
      %280 = vmatprep.subr.bf16.mxu0 0
      %281 = vmatpush1.bf16.msra.mxu0 %v259
      %282 = vmatprep.subr.bf16.mxu0 0
      %283 = vmatpush1.bf16.msra.mxu0 0
      %284 = vmatprep.subr.bf16.mxu0 0
      %285 = vmatpush1.bf16.msra.mxu0 0
      %286 = vmatprep.subr.bf16.mxu0 0
      %287 = vmatpush1.bf16.msra.mxu0 0
      %288 = vmatprep.subr.bf16.mxu0 0
      %289 = vmatpush1.bf16.msra.mxu0 0
      %290 = vmatprep.subr.bf16.mxu0 0
      %291 = vmatpush1.bf16.msra.mxu0 0
      %292 = vmatprep.subr.bf16.mxu0 0
      %293 = vmatpush1.bf16.msra.mxu0 0
      %294 = vmatprep.subr.bf16.mxu0 0
      %295 = vmatpush1.bf16.msra.mxu0 0
      %296 = vmatprep.subr.bf16.mxu0 0
      %297 = vmatpush1.bf16.msra.mxu0 0
      %298 = vmatprep.subr.bf16.mxu0 0
      %299 = vmatpush1.bf16.msra.mxu0 0
      %300 = vmatprep.subr.bf16.mxu0 0
      %301 = vmatpush1.bf16.msra.mxu0 0
      %302 = vmatprep.mubr.bf16.mxu0 0
      %303 = vmatmul.mubr.bf16.gmra.mrb[0].mxu0 %v268
      %v304 = vpop.f32.mrb[0].mxu0
      %v305 = vadd.f32 0.0, %v304
      %v306 = vpop.f32.mrb[0].mxu0
      %v307 = vpop.f32.mrb[0].mxu0
      %v308 = vpop.f32.mrb[0].mxu0
      %309 = vdwg.mxu0
      %v322 = vunpack.c.l.b16 %v202
      %v323 = vunpack.c.l.b16 %v203
      %v324 = vunpack.c.l.b16 %v204
      %v325 = vunpack.c.l.b16 %v205
      %v326 = vunpack.c.l.b16 %v206
      %v327 = vunpack.c.l.b16 %v207
      %v328 = vunpack.c.l.b16 %v208
      %v329 = vunpack.c.l.b16 %v209
      %v330 = vunpack.c.l.b16 %v210
      %v331 = vunpack.c.l.b16 %v211
      %v332 = vunpack.c.l.b16 %v212
      %v333 = vunpack.c.l.b16 %v213
      %v334 = vpack.c.b16 %v323, %v322
      %v335 = vpack.c.b16 %v325, %v324
      %v336 = vpack.c.b16 %v327, %v326
      %v337 = vpack.c.b16 %v329, %v328
      %v338 = vpack.c.b16 %v331, %v330
      %v339 = vpack.c.b16 %v333, %v332
      %v347 = vsel %vm266, %v201, 0
      %349 = vmatprep.subr.bf16.mxu0 0
      %350 = vmatpush1.bf16.msra.mxu0 %v334
      %351 = vmatprep.subr.bf16.mxu0 0
      %352 = vmatpush1.bf16.msra.mxu0 %v335
      %353 = vmatprep.subr.bf16.mxu0 0
      %354 = vmatpush1.bf16.msra.mxu0 %v336
      %355 = vmatprep.subr.bf16.mxu0 0
      %356 = vmatpush1.bf16.msra.mxu0 %v337
      %357 = vmatprep.subr.bf16.mxu0 0
      %358 = vmatpush1.bf16.msra.mxu0 %v338
      %359 = vmatprep.subr.bf16.mxu0 0
      %360 = vmatpush1.bf16.msra.mxu0 %v339
      %361 = vmatprep.subr.bf16.mxu0 0
      %362 = vmatpush1.bf16.msra.mxu0 0
      %363 = vmatprep.subr.bf16.mxu0 0
      %364 = vmatpush1.bf16.msra.mxu0 0
      %365 = vmatprep.subr.bf16.mxu0 0
      %366 = vmatpush1.bf16.msra.mxu0 0
      %367 = vmatprep.subr.bf16.mxu0 0
      %368 = vmatpush1.bf16.msra.mxu0 0
      %369 = vmatprep.subr.bf16.mxu0 0
      %370 = vmatpush1.bf16.msra.mxu0 0
      %371 = vmatprep.subr.bf16.mxu0 0
      %372 = vmatpush1.bf16.msra.mxu0 0
      %373 = vmatprep.subr.bf16.mxu0 0
      %374 = vmatpush1.bf16.msra.mxu0 0
      %375 = vmatprep.subr.bf16.mxu0 0
      %376 = vmatpush1.bf16.msra.mxu0 0
      %377 = vmatprep.subr.bf16.mxu0 0
      %378 = vmatpush1.bf16.msra.mxu0 0
      %379 = vmatprep.subr.bf16.mxu0 0
      %380 = vmatpush1.bf16.msra.mxu0 0
      %381 = vmatprep.mubr.bf16.mxu0 0
      %382 = vmatmul.mubr.bf16.gmra.mrb[0].mxu0 %v347
      %v383 = vpop.f32.mrb[0].mxu0
      %v384 = vadd.f32 %v305, %v383
      %v385 = vpop.f32.mrb[0].mxu0
      %v386 = vpop.f32.mrb[0].mxu0
      %v387 = vpop.f32.mrb[0].mxu0
      %388 = vdwg.mxu0
      %s389 = scalar_lea.vmem %s1, 96
      %v390 = vld [vmem:[%s389] sm:$0xf]
      %v391 = vld [vmem:[%s389 + $0x4] sm:$0xf]
      %v392 = vld [vmem:[%s389 + $0x8] sm:$0xf]
      %v393 = vld [vmem:[%s389 + $0xc] sm:$0xf]
      %v394 = vld [vmem:[%s389 + $0x10] sm:$0xf]
      %v395 = vld [vmem:[%s389 + $0x14] sm:$0xf]
      %v396 = vld [vmem:[%s389 + $0x18] sm:$0xf]
      %v397 = vld [vmem:[%s389 + $0x1c] sm:$0xf]
      %v398 = vld [vmem:[%s389 + $0x20] sm:$0xf]
      %v399 = vld [vmem:[%s389 + $0x24] sm:$0xf]
      %v400 = vld [vmem:[%s389 + $0x28] sm:$0xf]
      %v401 = vld [vmem:[%s389 + $0x2c] sm:$0xf]
      %402 = vrot.lane.b32.xlu0 %v201, 104
      %v403 = vpop.permute.xlu0 %402
      %v416 = vunpack.c.l.b16 %v390
      %v417 = vunpack.c.l.b16 %v391
      %v418 = vunpack.c.l.b16 %v392
      %v419 = vunpack.c.l.b16 %v393
      %v420 = vunpack.c.l.b16 %v394
      %v421 = vunpack.c.l.b16 %v395
      %v422 = vunpack.c.l.b16 %v396
      %v423 = vunpack.c.l.b16 %v397
      %v424 = vunpack.c.l.b16 %v398
      %v425 = vunpack.c.l.b16 %v399
      %v426 = vunpack.c.l.b16 %v400
      %v427 = vunpack.c.l.b16 %v401
      %v428 = vpack.c.b16 %v417, %v416
      %v429 = vpack.c.b16 %v419, %v418
      %v430 = vpack.c.b16 %v421, %v420
      %v431 = vpack.c.b16 %v423, %v422
      %v432 = vpack.c.b16 %v425, %v424
      %v433 = vpack.c.b16 %v427, %v426
      %v441 = vsel %vm266, %v403, 0
      %443 = vmatprep.subr.bf16.mxu0 0
      %444 = vmatpush1.bf16.msra.mxu0 %v428
      %445 = vmatprep.subr.bf16.mxu0 0
      %446 = vmatpush1.bf16.msra.mxu0 %v429
      %447 = vmatprep.subr.bf16.mxu0 0
      %448 = vmatpush1.bf16.msra.mxu0 %v430
      %449 = vmatprep.subr.bf16.mxu0 0
      %450 = vmatpush1.bf16.msra.mxu0 %v431
      %451 = vmatprep.subr.bf16.mxu0 0
      %452 = vmatpush1.bf16.msra.mxu0 %v432
      %453 = vmatprep.subr.bf16.mxu0 0
      %454 = vmatpush1.bf16.msra.mxu0 %v433
      %455 = vmatprep.subr.bf16.mxu0 0
      %456 = vmatpush1.bf16.msra.mxu0 0
      %457 = vmatprep.subr.bf16.mxu0 0
      %458 = vmatpush1.bf16.msra.mxu0 0
      %459 = vmatprep.subr.bf16.mxu0 0
      %460 = vmatpush1.bf16.msra.mxu0 0
      %461 = vmatprep.subr.bf16.mxu0 0
      %462 = vmatpush1.bf16.msra.mxu0 0
      %463 = vmatprep.subr.bf16.mxu0 0
      %464 = vmatpush1.bf16.msra.mxu0 0
      %465 = vmatprep.subr.bf16.mxu0 0
      %466 = vmatpush1.bf16.msra.mxu0 0
      %467 = vmatprep.subr.bf16.mxu0 0
      %468 = vmatpush1.bf16.msra.mxu0 0
      %469 = vmatprep.subr.bf16.mxu0 0
      %470 = vmatpush1.bf16.msra.mxu0 0
      %471 = vmatprep.subr.bf16.mxu0 0
      %472 = vmatpush1.bf16.msra.mxu0 0
      %473 = vmatprep.subr.bf16.mxu0 0
      %474 = vmatpush1.bf16.msra.mxu0 0
      %475 = vmatprep.mubr.bf16.mxu0 0
      %476 = vmatmul.mubr.bf16.gmra.mrb[0].mxu0 %v441
      %v477 = vpop.f32.mrb[0].mxu0
      %v478 = vadd.f32 0.0, %v477
      %v479 = vpop.f32.mrb[0].mxu0
      %v480 = vpop.f32.mrb[0].mxu0
      %v481 = vpop.f32.mrb[0].mxu0
      %482 = vdwg.mxu0
      %v483 = vadd.f32 %v384, %v478
      %v484 = vpack.c.bf16 %v198, %v198
      %s485 = scalar_lea.vmem %s1, 144
      %v486 = vld [vmem:[%s485] sm:$0xf]
      %v487 = vld [vmem:[%s485 + $0x4] sm:$0xf]
      %v488 = vld [vmem:[%s485 + $0x8] sm:$0xf]
      %v489 = vld [vmem:[%s485 + $0xc] sm:$0xf]
      %v490 = vld [vmem:[%s485 + $0x10] sm:$0xf]
      %v491 = vld [vmem:[%s485 + $0x14] sm:$0xf]
      %v492 = vld [vmem:[%s485 + $0x18] sm:$0xf]
      %v493 = vld [vmem:[%s485 + $0x1c] sm:$0xf]
      %v494 = vld [vmem:[%s485 + $0x20] sm:$0xf]
      %v495 = vld [vmem:[%s485 + $0x24] sm:$0xf]
      %v496 = vld [vmem:[%s485 + $0x28] sm:$0xf]
      %v497 = vld [vmem:[%s485 + $0x2c] sm:$0xf]
      %499 = vrot.lane.b32.xlu0 %v201, 92
      %v500 = vpop.permute.xlu0 %499
      %501 = vrot.lane.b32.xlu0 %v484, 92
      %v502 = vpop.permute.xlu0 %501
      %vm503 = vcmask 752640
      %v504 = vsel %vm503, %v500, %v502
      %v517 = vunpack.c.l.b16 %v486
      %v518 = vunpack.c.l.b16 %v487
      %v519 = vunpack.c.l.b16 %v488
      %v520 = vunpack.c.l.b16 %v489
      %v521 = vunpack.c.l.b16 %v490
      %v522 = vunpack.c.l.b16 %v491
      %v523 = vunpack.c.l.b16 %v492
      %v524 = vunpack.c.l.b16 %v493
      %v525 = vunpack.c.l.b16 %v494
      %v526 = vunpack.c.l.b16 %v495
      %v527 = vunpack.c.l.b16 %v496
      %v528 = vunpack.c.l.b16 %v497
      %v529 = vpack.c.b16 %v518, %v517
      %v530 = vpack.c.b16 %v520, %v519
      %v531 = vpack.c.b16 %v522, %v521
      %v532 = vpack.c.b16 %v524, %v523
      %v533 = vpack.c.b16 %v526, %v525
      %v534 = vpack.c.b16 %v528, %v527
      %v542 = vsel %vm266, %v504, 0
      %544 = vmatprep.subr.bf16.mxu0 0
      %545 = vmatpush1.bf16.msra.mxu0 %v529
      %546 = vmatprep.subr.bf16.mxu0 0
      %547 = vmatpush1.bf16.msra.mxu0 %v530
      %548 = vmatprep.subr.bf16.mxu0 0
      %549 = vmatpush1.bf16.msra.mxu0 %v531
      %550 = vmatprep.subr.bf16.mxu0 0
      %551 = vmatpush1.bf16.msra.mxu0 %v532
      %552 = vmatprep.subr.bf16.mxu0 0
      %553 = vmatpush1.bf16.msra.mxu0 %v533
      %554 = vmatprep.subr.bf16.mxu0 0
      %555 = vmatpush1.bf16.msra.mxu0 %v534
      %556 = vmatprep.subr.bf16.mxu0 0
      %557 = vmatpush1.bf16.msra.mxu0 0
      %558 = vmatprep.subr.bf16.mxu0 0
      %559 = vmatpush1.bf16.msra.mxu0 0
      %560 = vmatprep.subr.bf16.mxu0 0
      %561 = vmatpush1.bf16.msra.mxu0 0
      %562 = vmatprep.subr.bf16.mxu0 0
      %563 = vmatpush1.bf16.msra.mxu0 0
      %564 = vmatprep.subr.bf16.mxu0 0
      %565 = vmatpush1.bf16.msra.mxu0 0
      %566 = vmatprep.subr.bf16.mxu0 0
      %567 = vmatpush1.bf16.msra.mxu0 0
      %568 = vmatprep.subr.bf16.mxu0 0
      %569 = vmatpush1.bf16.msra.mxu0 0
      %570 = vmatprep.subr.bf16.mxu0 0
      %571 = vmatpush1.bf16.msra.mxu0 0
      %572 = vmatprep.subr.bf16.mxu0 0
      %573 = vmatpush1.bf16.msra.mxu0 0
      %574 = vmatprep.subr.bf16.mxu0 0
      %575 = vmatpush1.bf16.msra.mxu0 0
      %576 = vmatprep.mubr.bf16.mxu0 0
      %577 = vmatmul.mubr.bf16.gmra.mrb[0].mxu0 %v542
      %v578 = vpop.f32.mrb[0].mxu0
      %v579 = vadd.f32 0.0, %v578
      %v580 = vpop.f32.mrb[0].mxu0
      %v581 = vpop.f32.mrb[0].mxu0
      %v582 = vpop.f32.mrb[0].mxu0
      %583 = vdwg.mxu0
      %v584 = vadd.f32 %v483, %v579
      %v585 = vpack.c.bf16 %v199, %v197
      %s586 = scalar_lea.vmem %s1, 192
      %v587 = vld [vmem:[%s586] sm:$0xf]
      %v588 = vld [vmem:[%s586 + $0x4] sm:$0xf]
      %v589 = vld [vmem:[%s586 + $0x8] sm:$0xf]
      %v590 = vld [vmem:[%s586 + $0xc] sm:$0xf]
      %v591 = vld [vmem:[%s586 + $0x10] sm:$0xf]
      %v592 = vld [vmem:[%s586 + $0x14] sm:$0xf]
      %v593 = vld [vmem:[%s586 + $0x18] sm:$0xf]
      %v594 = vld [vmem:[%s586 + $0x1c] sm:$0xf]
      %v595 = vld [vmem:[%s586 + $0x20] sm:$0xf]
      %v596 = vld [vmem:[%s586 + $0x24] sm:$0xf]
      %v597 = vld [vmem:[%s586 + $0x28] sm:$0xf]
      %v598 = vld [vmem:[%s586 + $0x2c] sm:$0xf]
      %v600 = vshrl.u32 %v585, 16
      %v602 = vshll.u32 %v585, 16
      %v604 = vrot.slane %v602, 1
      %v605 = vor.u32 %v600, %v604
      %v618 = vunpack.c.l.b16 %v587
      %v619 = vunpack.c.l.b16 %v588
      %v620 = vunpack.c.l.b16 %v589
      %v621 = vunpack.c.l.b16 %v590
      %v622 = vunpack.c.l.b16 %v591
      %v623 = vunpack.c.l.b16 %v592
      %v624 = vunpack.c.l.b16 %v593
      %v625 = vunpack.c.l.b16 %v594
      %v626 = vunpack.c.l.b16 %v595
      %v627 = vunpack.c.l.b16 %v596
      %v628 = vunpack.c.l.b16 %v597
      %v629 = vunpack.c.l.b16 %v598
      %v630 = vpack.c.b16 %v619, %v618
      %v631 = vpack.c.b16 %v621, %v620
      %v632 = vpack.c.b16 %v623, %v622
      %v633 = vpack.c.b16 %v625, %v624
      %v634 = vpack.c.b16 %v627, %v626
      %v635 = vpack.c.b16 %v629, %v628
      %v643 = vsel %vm266, %v605, 0
      %645 = vmatprep.subr.bf16.mxu0 0
      %646 = vmatpush1.bf16.msra.mxu0 %v630
      %647 = vmatprep.subr.bf16.mxu0 0
      %648 = vmatpush1.bf16.msra.mxu0 %v631
      %649 = vmatprep.subr.bf16.mxu0 0
      %650 = vmatpush1.bf16.msra.mxu0 %v632
      %651 = vmatprep.subr.bf16.mxu0 0
      %652 = vmatpush1.bf16.msra.mxu0 %v633
      %653 = vmatprep.subr.bf16.mxu0 0
      %654 = vmatpush1.bf16.msra.mxu0 %v634
      %655 = vmatprep.subr.bf16.mxu0 0
      %656 = vmatpush1.bf16.msra.mxu0 %v635
      %657 = vmatprep.subr.bf16.mxu0 0
      %658 = vmatpush1.bf16.msra.mxu0 0
      %659 = vmatprep.subr.bf16.mxu0 0
      %660 = vmatpush1.bf16.msra.mxu0 0
      %661 = vmatprep.subr.bf16.mxu0 0
      %662 = vmatpush1.bf16.msra.mxu0 0
      %663 = vmatprep.subr.bf16.mxu0 0
      %664 = vmatpush1.bf16.msra.mxu0 0
      %665 = vmatprep.subr.bf16.mxu0 0
      %666 = vmatpush1.bf16.msra.mxu0 0
      %667 = vmatprep.subr.bf16.mxu0 0
      %668 = vmatpush1.bf16.msra.mxu0 0
      %669 = vmatprep.subr.bf16.mxu0 0
      %670 = vmatpush1.bf16.msra.mxu0 0
      %671 = vmatprep.subr.bf16.mxu0 0
      %672 = vmatpush1.bf16.msra.mxu0 0
      %673 = vmatprep.subr.bf16.mxu0 0
      %674 = vmatpush1.bf16.msra.mxu0 0
      %675 = vmatprep.subr.bf16.mxu0 0
      %676 = vmatpush1.bf16.msra.mxu0 0
      %677 = vmatprep.mubr.bf16.mxu0 0
      %678 = vmatmul.mubr.bf16.gmra.mrb[0].mxu0 %v643
      %v679 = vpop.f32.mrb[0].mxu0
      %v680 = vadd.f32 0.0, %v679
      %v681 = vpop.f32.mrb[0].mxu0
      %v682 = vpop.f32.mrb[0].mxu0
      %v683 = vpop.f32.mrb[0].mxu0
      %684 = vdwg.mxu0
      %v685 = vadd.f32 %v584, %v680
      %s686 = scalar_lea.vmem %s1, 240
      %v687 = vld [vmem:[%s686] sm:$0xf]
      %v688 = vld [vmem:[%s686 + $0x4] sm:$0xf]
      %v689 = vld [vmem:[%s686 + $0x8] sm:$0xf]
      %v690 = vld [vmem:[%s686 + $0xc] sm:$0xf]
      %v691 = vld [vmem:[%s686 + $0x10] sm:$0xf]
      %v692 = vld [vmem:[%s686 + $0x14] sm:$0xf]
      %v693 = vld [vmem:[%s686 + $0x18] sm:$0xf]
      %v694 = vld [vmem:[%s686 + $0x1c] sm:$0xf]
      %v695 = vld [vmem:[%s686 + $0x20] sm:$0xf]
      %v696 = vld [vmem:[%s686 + $0x24] sm:$0xf]
      %v697 = vld [vmem:[%s686 + $0x28] sm:$0xf]
      %v698 = vld [vmem:[%s686 + $0x2c] sm:$0xf]
      %699 = vrot.lane.b32.xlu0 %v605, 116
      %v700 = vpop.permute.xlu0 %699
      %v713 = vunpack.c.l.b16 %v687
      %v714 = vunpack.c.l.b16 %v688
      %v715 = vunpack.c.l.b16 %v689
      %v716 = vunpack.c.l.b16 %v690
      %v717 = vunpack.c.l.b16 %v691
      %v718 = vunpack.c.l.b16 %v692
      %v719 = vunpack.c.l.b16 %v693
      %v720 = vunpack.c.l.b16 %v694
      %v721 = vunpack.c.l.b16 %v695
      %v722 = vunpack.c.l.b16 %v696
      %v723 = vunpack.c.l.b16 %v697
      %v724 = vunpack.c.l.b16 %v698
      %v725 = vpack.c.b16 %v714, %v713
      %v726 = vpack.c.b16 %v716, %v715
      %v727 = vpack.c.b16 %v718, %v717
      %v728 = vpack.c.b16 %v720, %v719
      %v729 = vpack.c.b16 %v722, %v721
      %v730 = vpack.c.b16 %v724, %v723
      %v738 = vsel %vm266, %v700, 0
      %740 = vmatprep.subr.bf16.mxu0 0
      %741 = vmatpush1.bf16.msra.mxu0 %v725
      %742 = vmatprep.subr.bf16.mxu0 0
      %743 = vmatpush1.bf16.msra.mxu0 %v726
      %744 = vmatprep.subr.bf16.mxu0 0
      %745 = vmatpush1.bf16.msra.mxu0 %v727
      %746 = vmatprep.subr.bf16.mxu0 0
      %747 = vmatpush1.bf16.msra.mxu0 %v728
      %748 = vmatprep.subr.bf16.mxu0 0
      %749 = vmatpush1.bf16.msra.mxu0 %v729
      %750 = vmatprep.subr.bf16.mxu0 0
      %751 = vmatpush1.bf16.msra.mxu0 %v730
      %752 = vmatprep.subr.bf16.mxu0 0
      %753 = vmatpush1.bf16.msra.mxu0 0
      %754 = vmatprep.subr.bf16.mxu0 0
      %755 = vmatpush1.bf16.msra.mxu0 0
      %756 = vmatprep.subr.bf16.mxu0 0
      %757 = vmatpush1.bf16.msra.mxu0 0
      %758 = vmatprep.subr.bf16.mxu0 0
      %759 = vmatpush1.bf16.msra.mxu0 0
      %760 = vmatprep.subr.bf16.mxu0 0
      %761 = vmatpush1.bf16.msra.mxu0 0
      %762 = vmatprep.subr.bf16.mxu0 0
      %763 = vmatpush1.bf16.msra.mxu0 0
      %764 = vmatprep.subr.bf16.mxu0 0
      %765 = vmatpush1.bf16.msra.mxu0 0
      %766 = vmatprep.subr.bf16.mxu0 0
      %767 = vmatpush1.bf16.msra.mxu0 0
      %768 = vmatprep.subr.bf16.mxu0 0
      %769 = vmatpush1.bf16.msra.mxu0 0
      %770 = vmatprep.subr.bf16.mxu0 0
      %771 = vmatpush1.bf16.msra.mxu0 0
      %772 = vmatprep.mubr.bf16.mxu0 0
      %773 = vmatmul.mubr.bf16.gmra.mrb[0].mxu0 %v738
      %v774 = vpop.f32.mrb[0].mxu0
      %v775 = vadd.f32 0.0, %v774
      %v776 = vpop.f32.mrb[0].mxu0
      %v777 = vpop.f32.mrb[0].mxu0
      %v778 = vpop.f32.mrb[0].mxu0
      %779 = vdwg.mxu0
      %v780 = vadd.f32 %v685, %v775
      %s781 = scalar_lea.vmem %s1, 288
      %v782 = vld [vmem:[%s781] sm:$0xf]
      %v783 = vld [vmem:[%s781 + $0x4] sm:$0xf]
      %v784 = vld [vmem:[%s781 + $0x8] sm:$0xf]
      %v785 = vld [vmem:[%s781 + $0xc] sm:$0xf]
      %v786 = vld [vmem:[%s781 + $0x10] sm:$0xf]
      %v787 = vld [vmem:[%s781 + $0x14] sm:$0xf]
      %v788 = vld [vmem:[%s781 + $0x18] sm:$0xf]
      %v789 = vld [vmem:[%s781 + $0x1c] sm:$0xf]
      %v790 = vld [vmem:[%s781 + $0x20] sm:$0xf]
      %v791 = vld [vmem:[%s781 + $0x24] sm:$0xf]
      %v792 = vld [vmem:[%s781 + $0x28] sm:$0xf]
      %v793 = vld [vmem:[%s781 + $0x2c] sm:$0xf]
      %794 = vrot.lane.b32.xlu0 %v605, 104
      %v795 = vpop.permute.xlu0 %794
      %v808 = vunpack.c.l.b16 %v782
      %v809 = vunpack.c.l.b16 %v783
      %v810 = vunpack.c.l.b16 %v784
      %v811 = vunpack.c.l.b16 %v785
      %v812 = vunpack.c.l.b16 %v786
      %v813 = vunpack.c.l.b16 %v787
      %v814 = vunpack.c.l.b16 %v788
      %v815 = vunpack.c.l.b16 %v789
      %v816 = vunpack.c.l.b16 %v790
      %v817 = vunpack.c.l.b16 %v791
      %v818 = vunpack.c.l.b16 %v792
      %v819 = vunpack.c.l.b16 %v793
      %v820 = vpack.c.b16 %v809, %v808
      %v821 = vpack.c.b16 %v811, %v810
      %v822 = vpack.c.b16 %v813, %v812
      %v823 = vpack.c.b16 %v815, %v814
      %v824 = vpack.c.b16 %v817, %v816
      %v825 = vpack.c.b16 %v819, %v818
      %v833 = vsel %vm266, %v795, 0
      %835 = vmatprep.subr.bf16.mxu0 0
      %836 = vmatpush1.bf16.msra.mxu0 %v820
      %837 = vmatprep.subr.bf16.mxu0 0
      %838 = vmatpush1.bf16.msra.mxu0 %v821
      %839 = vmatprep.subr.bf16.mxu0 0
      %840 = vmatpush1.bf16.msra.mxu0 %v822
      %841 = vmatprep.subr.bf16.mxu0 0
      %842 = vmatpush1.bf16.msra.mxu0 %v823
      %843 = vmatprep.subr.bf16.mxu0 0
      %844 = vmatpush1.bf16.msra.mxu0 %v824
      %845 = vmatprep.subr.bf16.mxu0 0
      %846 = vmatpush1.bf16.msra.mxu0 %v825
      %847 = vmatprep.subr.bf16.mxu0 0
      %848 = vmatpush1.bf16.msra.mxu0 0
      %849 = vmatprep.subr.bf16.mxu0 0
      %850 = vmatpush1.bf16.msra.mxu0 0
      %851 = vmatprep.subr.bf16.mxu0 0
      %852 = vmatpush1.bf16.msra.mxu0 0
      %853 = vmatprep.subr.bf16.mxu0 0
      %854 = vmatpush1.bf16.msra.mxu0 0
      %855 = vmatprep.subr.bf16.mxu0 0
      %856 = vmatpush1.bf16.msra.mxu0 0
      %857 = vmatprep.subr.bf16.mxu0 0
      %858 = vmatpush1.bf16.msra.mxu0 0
      %859 = vmatprep.subr.bf16.mxu0 0
      %860 = vmatpush1.bf16.msra.mxu0 0
      %861 = vmatprep.subr.bf16.mxu0 0
      %862 = vmatpush1.bf16.msra.mxu0 0
      %863 = vmatprep.subr.bf16.mxu0 0
      %864 = vmatpush1.bf16.msra.mxu0 0
      %865 = vmatprep.subr.bf16.mxu0 0
      %866 = vmatpush1.bf16.msra.mxu0 0
      %867 = vmatprep.mubr.bf16.mxu0 0
      %868 = vmatmul.mubr.bf16.gmra.mrb[0].mxu0 %v833
      %v869 = vpop.f32.mrb[0].mxu0
      %v870 = vadd.f32 0.0, %v869
      %v871 = vpop.f32.mrb[0].mxu0
      %v872 = vpop.f32.mrb[0].mxu0
      %v873 = vpop.f32.mrb[0].mxu0
      %874 = vdwg.mxu0
      %v875 = vadd.f32 %v780, %v870
      %v876 = vpack.c.bf16 %v200, %v198
      %s877 = scalar_lea.vmem %s1, 336
      %v878 = vld [vmem:[%s877] sm:$0xf]
      %v879 = vld [vmem:[%s877 + $0x4] sm:$0xf]
      %v880 = vld [vmem:[%s877 + $0x8] sm:$0xf]
      %v881 = vld [vmem:[%s877 + $0xc] sm:$0xf]
      %v882 = vld [vmem:[%s877 + $0x10] sm:$0xf]
      %v883 = vld [vmem:[%s877 + $0x14] sm:$0xf]
      %v884 = vld [vmem:[%s877 + $0x18] sm:$0xf]
      %v885 = vld [vmem:[%s877 + $0x1c] sm:$0xf]
      %v886 = vld [vmem:[%s877 + $0x20] sm:$0xf]
      %v887 = vld [vmem:[%s877 + $0x24] sm:$0xf]
      %v888 = vld [vmem:[%s877 + $0x28] sm:$0xf]
      %v889 = vld [vmem:[%s877 + $0x2c] sm:$0xf]
      %v891 = vshrl.u32 %v876, 16
      %v893 = vshll.u32 %v876, 16
      %v895 = vrot.slane %v893, 1
      %v896 = vor.u32 %v891, %v895
      %897 = vrot.lane.b32.xlu0 %v605, 92
      %v898 = vpop.permute.xlu0 %897
      %899 = vrot.lane.b32.xlu0 %v896, 92
      %v900 = vpop.permute.xlu0 %899
      %v901 = vsel %vm503, %v898, %v900
      %v914 = vunpack.c.l.b16 %v878
      %v915 = vunpack.c.l.b16 %v879
      %v916 = vunpack.c.l.b16 %v880
      %v917 = vunpack.c.l.b16 %v881
      %v918 = vunpack.c.l.b16 %v882
      %v919 = vunpack.c.l.b16 %v883
      %v920 = vunpack.c.l.b16 %v884
      %v921 = vunpack.c.l.b16 %v885
      %v922 = vunpack.c.l.b16 %v886
      %v923 = vunpack.c.l.b16 %v887
      %v924 = vunpack.c.l.b16 %v888
      %v925 = vunpack.c.l.b16 %v889
      %v926 = vpack.c.b16 %v915, %v914
      %v927 = vpack.c.b16 %v917, %v916
      %v928 = vpack.c.b16 %v919, %v918
      %v929 = vpack.c.b16 %v921, %v920
      %v930 = vpack.c.b16 %v923, %v922
      %v931 = vpack.c.b16 %v925, %v924
      %v939 = vsel %vm266, %v901, 0
      %941 = vmatprep.subr.bf16.mxu0 0
      %942 = vmatpush1.bf16.msra.mxu0 %v926
      %943 = vmatprep.subr.bf16.mxu0 0
      %944 = vmatpush1.bf16.msra.mxu0 %v927
      %945 = vmatprep.subr.bf16.mxu0 0
      %946 = vmatpush1.bf16.msra.mxu0 %v928
      %947 = vmatprep.subr.bf16.mxu0 0
      %948 = vmatpush1.bf16.msra.mxu0 %v929
      %949 = vmatprep.subr.bf16.mxu0 0
      %950 = vmatpush1.bf16.msra.mxu0 %v930
      %951 = vmatprep.subr.bf16.mxu0 0
      %952 = vmatpush1.bf16.msra.mxu0 %v931
      %953 = vmatprep.subr.bf16.mxu0 0
      %954 = vmatpush1.bf16.msra.mxu0 0
      %955 = vmatprep.subr.bf16.mxu0 0
      %956 = vmatpush1.bf16.msra.mxu0 0
      %957 = vmatprep.subr.bf16.mxu0 0
      %958 = vmatpush1.bf16.msra.mxu0 0
      %959 = vmatprep.subr.bf16.mxu0 0
      %960 = vmatpush1.bf16.msra.mxu0 0
      %961 = vmatprep.subr.bf16.mxu0 0
      %962 = vmatpush1.bf16.msra.mxu0 0
      %963 = vmatprep.subr.bf16.mxu0 0
      %964 = vmatpush1.bf16.msra.mxu0 0
      %965 = vmatprep.subr.bf16.mxu0 0
      %966 = vmatpush1.bf16.msra.mxu0 0
      %967 = vmatprep.subr.bf16.mxu0 0
      %968 = vmatpush1.bf16.msra.mxu0 0
      %969 = vmatprep.subr.bf16.mxu0 0
      %970 = vmatpush1.bf16.msra.mxu0 0
      %971 = vmatprep.subr.bf16.mxu0 0
      %972 = vmatpush1.bf16.msra.mxu0 0
      %973 = vmatprep.mubr.bf16.mxu0 0
      %974 = vmatmul.mubr.bf16.gmra.mrb[0].mxu0 %v939
      %v975 = vpop.f32.mrb[0].mxu0
      %v976 = vadd.f32 0.0, %v975
      %v977 = vpop.f32.mrb[0].mxu0
      %v978 = vpop.f32.mrb[0].mxu0
      %v979 = vpop.f32.mrb[0].mxu0
      %980 = vdwg.mxu0
      %v981 = vadd.f32 %v875, %v976
      %s982 = scalar_lea.vmem %s1, 384
      %v983 = vld [vmem:[%s982] sm:$0xf]
      %v984 = vld [vmem:[%s982 + $0x4] sm:$0xf]
      %v985 = vld [vmem:[%s982 + $0x8] sm:$0xf]
      %v986 = vld [vmem:[%s982 + $0xc] sm:$0xf]
      %v987 = vld [vmem:[%s982 + $0x10] sm:$0xf]
      %v988 = vld [vmem:[%s982 + $0x14] sm:$0xf]
      %v989 = vld [vmem:[%s982 + $0x18] sm:$0xf]
      %v990 = vld [vmem:[%s982 + $0x1c] sm:$0xf]
      %v991 = vld [vmem:[%s982 + $0x20] sm:$0xf]
      %v992 = vld [vmem:[%s982 + $0x24] sm:$0xf]
      %v993 = vld [vmem:[%s982 + $0x28] sm:$0xf]
      %v994 = vld [vmem:[%s982 + $0x2c] sm:$0xf]
      %v996 = vrot.slane %v585, 1
      %v1009 = vunpack.c.l.b16 %v983
      %v1010 = vunpack.c.l.b16 %v984
      %v1011 = vunpack.c.l.b16 %v985
      %v1012 = vunpack.c.l.b16 %v986
      %v1013 = vunpack.c.l.b16 %v987
      %v1014 = vunpack.c.l.b16 %v988
      %v1015 = vunpack.c.l.b16 %v989
      %v1016 = vunpack.c.l.b16 %v990
      %v1017 = vunpack.c.l.b16 %v991
      %v1018 = vunpack.c.l.b16 %v992
      %v1019 = vunpack.c.l.b16 %v993
      %v1020 = vunpack.c.l.b16 %v994
      %v1021 = vpack.c.b16 %v1010, %v1009
      %v1022 = vpack.c.b16 %v1012, %v1011
      %v1023 = vpack.c.b16 %v1014, %v1013
      %v1024 = vpack.c.b16 %v1016, %v1015
      %v1025 = vpack.c.b16 %v1018, %v1017
      %v1026 = vpack.c.b16 %v1020, %v1019
      %v1034 = vsel %vm266, %v996, 0
      %1036 = vmatprep.subr.bf16.mxu0 0
      %1037 = vmatpush1.bf16.msra.mxu0 %v1021
      %1038 = vmatprep.subr.bf16.mxu0 0
      %1039 = vmatpush1.bf16.msra.mxu0 %v1022
      %1040 = vmatprep.subr.bf16.mxu0 0
      %1041 = vmatpush1.bf16.msra.mxu0 %v1023
      %1042 = vmatprep.subr.bf16.mxu0 0
      %1043 = vmatpush1.bf16.msra.mxu0 %v1024
      %1044 = vmatprep.subr.bf16.mxu0 0
      %1045 = vmatpush1.bf16.msra.mxu0 %v1025
      %1046 = vmatprep.subr.bf16.mxu0 0
      %1047 = vmatpush1.bf16.msra.mxu0 %v1026
      %1048 = vmatprep.subr.bf16.mxu0 0
      %1049 = vmatpush1.bf16.msra.mxu0 0
      %1050 = vmatprep.subr.bf16.mxu0 0
      %1051 = vmatpush1.bf16.msra.mxu0 0
      %1052 = vmatprep.subr.bf16.mxu0 0
      %1053 = vmatpush1.bf16.msra.mxu0 0
      %1054 = vmatprep.subr.bf16.mxu0 0
      %1055 = vmatpush1.bf16.msra.mxu0 0
      %1056 = vmatprep.subr.bf16.mxu0 0
      %1057 = vmatpush1.bf16.msra.mxu0 0
      %1058 = vmatprep.subr.bf16.mxu0 0
      %1059 = vmatpush1.bf16.msra.mxu0 0
      %1060 = vmatprep.subr.bf16.mxu0 0
      %1061 = vmatpush1.bf16.msra.mxu0 0
      %1062 = vmatprep.subr.bf16.mxu0 0
      %1063 = vmatpush1.bf16.msra.mxu0 0
      %1064 = vmatprep.subr.bf16.mxu0 0
      %1065 = vmatpush1.bf16.msra.mxu0 0
      %1066 = vmatprep.subr.bf16.mxu0 0
      %1067 = vmatpush1.bf16.msra.mxu0 0
      %1068 = vmatprep.mubr.bf16.mxu0 0
      %1069 = vmatmul.mubr.bf16.gmra.mrb[0].mxu0 %v1034
      %v1070 = vpop.f32.mrb[0].mxu0
      %v1071 = vadd.f32 0.0, %v1070
      %v1072 = vpop.f32.mrb[0].mxu0
      %v1073 = vpop.f32.mrb[0].mxu0
      %v1074 = vpop.f32.mrb[0].mxu0
      %1075 = vdwg.mxu0
      %v1076 = vadd.f32 %v981, %v1071
      %s1077 = scalar_lea.vmem %s1, 432
      %v1078 = vld [vmem:[%s1077] sm:$0xf]
      %v1079 = vld [vmem:[%s1077 + $0x4] sm:$0xf]
      %v1080 = vld [vmem:[%s1077 + $0x8] sm:$0xf]
      %v1081 = vld [vmem:[%s1077 + $0xc] sm:$0xf]
      %v1082 = vld [vmem:[%s1077 + $0x10] sm:$0xf]
      %v1083 = vld [vmem:[%s1077 + $0x14] sm:$0xf]
      %v1084 = vld [vmem:[%s1077 + $0x18] sm:$0xf]
      %v1085 = vld [vmem:[%s1077 + $0x1c] sm:$0xf]
      %v1086 = vld [vmem:[%s1077 + $0x20] sm:$0xf]
      %v1087 = vld [vmem:[%s1077 + $0x24] sm:$0xf]
      %v1088 = vld [vmem:[%s1077 + $0x28] sm:$0xf]
      %v1089 = vld [vmem:[%s1077 + $0x2c] sm:$0xf]
      %1090 = vrot.lane.b32.xlu0 %v996, 116
      %v1091 = vpop.permute.xlu0 %1090
      %v1104 = vunpack.c.l.b16 %v1078
      %v1105 = vunpack.c.l.b16 %v1079
      %v1106 = vunpack.c.l.b16 %v1080
      %v1107 = vunpack.c.l.b16 %v1081
      %v1108 = vunpack.c.l.b16 %v1082
      %v1109 = vunpack.c.l.b16 %v1083
      %v1110 = vunpack.c.l.b16 %v1084
      %v1111 = vunpack.c.l.b16 %v1085
      %v1112 = vunpack.c.l.b16 %v1086
      %v1113 = vunpack.c.l.b16 %v1087
      %v1114 = vunpack.c.l.b16 %v1088
      %v1115 = vunpack.c.l.b16 %v1089
      %v1116 = vpack.c.b16 %v1105, %v1104
      %v1117 = vpack.c.b16 %v1107, %v1106
      %v1118 = vpack.c.b16 %v1109, %v1108
      %v1119 = vpack.c.b16 %v1111, %v1110
      %v1120 = vpack.c.b16 %v1113, %v1112
      %v1121 = vpack.c.b16 %v1115, %v1114
      %v1129 = vsel %vm266, %v1091, 0
      %1131 = vmatprep.subr.bf16.mxu0 0
      %1132 = vmatpush1.bf16.msra.mxu0 %v1116
      %1133 = vmatprep.subr.bf16.mxu0 0
      %1134 = vmatpush1.bf16.msra.mxu0 %v1117
      %1135 = vmatprep.subr.bf16.mxu0 0
      %1136 = vmatpush1.bf16.msra.mxu0 %v1118
      %1137 = vmatprep.subr.bf16.mxu0 0
      %1138 = vmatpush1.bf16.msra.mxu0 %v1119
      %1139 = vmatprep.subr.bf16.mxu0 0
      %1140 = vmatpush1.bf16.msra.mxu0 %v1120
      %1141 = vmatprep.subr.bf16.mxu0 0
      %1142 = vmatpush1.bf16.msra.mxu0 %v1121
      %1143 = vmatprep.subr.bf16.mxu0 0
      %1144 = vmatpush1.bf16.msra.mxu0 0
      %1145 = vmatprep.subr.bf16.mxu0 0
      %1146 = vmatpush1.bf16.msra.mxu0 0
      %1147 = vmatprep.subr.bf16.mxu0 0
      %1148 = vmatpush1.bf16.msra.mxu0 0
      %1149 = vmatprep.subr.bf16.mxu0 0
      %1150 = vmatpush1.bf16.msra.mxu0 0
      %1151 = vmatprep.subr.bf16.mxu0 0
      %1152 = vmatpush1.bf16.msra.mxu0 0
      %1153 = vmatprep.subr.bf16.mxu0 0
      %1154 = vmatpush1.bf16.msra.mxu0 0
      %1155 = vmatprep.subr.bf16.mxu0 0
      %1156 = vmatpush1.bf16.msra.mxu0 0
      %1157 = vmatprep.subr.bf16.mxu0 0
      %1158 = vmatpush1.bf16.msra.mxu0 0
      %1159 = vmatprep.subr.bf16.mxu0 0
      %1160 = vmatpush1.bf16.msra.mxu0 0
      %1161 = vmatprep.subr.bf16.mxu0 0
      %1162 = vmatpush1.bf16.msra.mxu0 0
      %1163 = vmatprep.mubr.bf16.mxu0 0
      %1164 = vmatmul.mubr.bf16.gmra.mrb[0].mxu0 %v1129
      %v1165 = vpop.f32.mrb[0].mxu0
      %v1166 = vadd.f32 0.0, %v1165
      %v1167 = vpop.f32.mrb[0].mxu0
      %v1168 = vpop.f32.mrb[0].mxu0
      %v1169 = vpop.f32.mrb[0].mxu0
      %1170 = vdwg.mxu0
      %v1171 = vadd.f32 %v1076, %v1166
      %s1172 = scalar_lea.vmem %s1, 480
      %v1173 = vld [vmem:[%s1172] sm:$0xf]
      %v1174 = vld [vmem:[%s1172 + $0x4] sm:$0xf]
      %v1175 = vld [vmem:[%s1172 + $0x8] sm:$0xf]
      %v1176 = vld [vmem:[%s1172 + $0xc] sm:$0xf]
      %v1177 = vld [vmem:[%s1172 + $0x10] sm:$0xf]
      %v1178 = vld [vmem:[%s1172 + $0x14] sm:$0xf]
      %v1179 = vld [vmem:[%s1172 + $0x18] sm:$0xf]
      %v1180 = vld [vmem:[%s1172 + $0x1c] sm:$0xf]
      %v1181 = vld [vmem:[%s1172 + $0x20] sm:$0xf]
      %v1182 = vld [vmem:[%s1172 + $0x24] sm:$0xf]
      %v1183 = vld [vmem:[%s1172 + $0x28] sm:$0xf]
      %v1184 = vld [vmem:[%s1172 + $0x2c] sm:$0xf]
      %1185 = vrot.lane.b32.xlu0 %v996, 104
      %v1186 = vpop.permute.xlu0 %1185
      %v1199 = vunpack.c.l.b16 %v1173
      %v1200 = vunpack.c.l.b16 %v1174
      %v1201 = vunpack.c.l.b16 %v1175
      %v1202 = vunpack.c.l.b16 %v1176
      %v1203 = vunpack.c.l.b16 %v1177
      %v1204 = vunpack.c.l.b16 %v1178
      %v1205 = vunpack.c.l.b16 %v1179
      %v1206 = vunpack.c.l.b16 %v1180
      %v1207 = vunpack.c.l.b16 %v1181
      %v1208 = vunpack.c.l.b16 %v1182
      %v1209 = vunpack.c.l.b16 %v1183
      %v1210 = vunpack.c.l.b16 %v1184
      %v1211 = vpack.c.b16 %v1200, %v1199
      %v1212 = vpack.c.b16 %v1202, %v1201
      %v1213 = vpack.c.b16 %v1204, %v1203
      %v1214 = vpack.c.b16 %v1206, %v1205
      %v1215 = vpack.c.b16 %v1208, %v1207
      %v1216 = vpack.c.b16 %v1210, %v1209
      %v1224 = vsel %vm266, %v1186, 0
      %1226 = vmatprep.subr.bf16.mxu0 0
      %1227 = vmatpush1.bf16.msra.mxu0 %v1211
      %1228 = vmatprep.subr.bf16.mxu0 0
      %1229 = vmatpush1.bf16.msra.mxu0 %v1212
      %1230 = vmatprep.subr.bf16.mxu0 0
      %1231 = vmatpush1.bf16.msra.mxu0 %v1213
      %1232 = vmatprep.subr.bf16.mxu0 0
      %1233 = vmatpush1.bf16.msra.mxu0 %v1214
      %1234 = vmatprep.subr.bf16.mxu0 0
      %1235 = vmatpush1.bf16.msra.mxu0 %v1215
      %1236 = vmatprep.subr.bf16.mxu0 0
      %1237 = vmatpush1.bf16.msra.mxu0 %v1216
      %1238 = vmatprep.subr.bf16.mxu0 0
      %1239 = vmatpush1.bf16.msra.mxu0 0
      %1240 = vmatprep.subr.bf16.mxu0 0
      %1241 = vmatpush1.bf16.msra.mxu0 0
      %1242 = vmatprep.subr.bf16.mxu0 0
      %1243 = vmatpush1.bf16.msra.mxu0 0
      %1244 = vmatprep.subr.bf16.mxu0 0
      %1245 = vmatpush1.bf16.msra.mxu0 0
      %1246 = vmatprep.subr.bf16.mxu0 0
      %1247 = vmatpush1.bf16.msra.mxu0 0
      %1248 = vmatprep.subr.bf16.mxu0 0
      %1249 = vmatpush1.bf16.msra.mxu0 0
      %1250 = vmatprep.subr.bf16.mxu0 0
      %1251 = vmatpush1.bf16.msra.mxu0 0
      %1252 = vmatprep.subr.bf16.mxu0 0
      %1253 = vmatpush1.bf16.msra.mxu0 0
      %1254 = vmatprep.subr.bf16.mxu0 0
      %1255 = vmatpush1.bf16.msra.mxu0 0
      %1256 = vmatprep.subr.bf16.mxu0 0
      %1257 = vmatpush1.bf16.msra.mxu0 0
      %1258 = vmatprep.mubr.bf16.mxu0 0
      %1259 = vmatmul.mubr.bf16.gmra.mrb[0].mxu0 %v1224
      %v1260 = vpop.f32.mrb[0].mxu0
      %v1261 = vadd.f32 0.0, %v1260
      %v1262 = vpop.f32.mrb[0].mxu0
      %v1263 = vpop.f32.mrb[0].mxu0
      %v1264 = vpop.f32.mrb[0].mxu0
      %1265 = vdwg.mxu0
      %v1266 = vadd.f32 %v1171, %v1261
      %s1267 = scalar_lea.vmem %s1, 528
      %v1268 = vld [vmem:[%s1267] sm:$0xf]
      %v1269 = vld [vmem:[%s1267 + $0x4] sm:$0xf]
      %v1270 = vld [vmem:[%s1267 + $0x8] sm:$0xf]
      %v1271 = vld [vmem:[%s1267 + $0xc] sm:$0xf]
      %v1272 = vld [vmem:[%s1267 + $0x10] sm:$0xf]
      %v1273 = vld [vmem:[%s1267 + $0x14] sm:$0xf]
      %v1274 = vld [vmem:[%s1267 + $0x18] sm:$0xf]
      %v1275 = vld [vmem:[%s1267 + $0x1c] sm:$0xf]
      %v1276 = vld [vmem:[%s1267 + $0x20] sm:$0xf]
      %v1277 = vld [vmem:[%s1267 + $0x24] sm:$0xf]
      %v1278 = vld [vmem:[%s1267 + $0x28] sm:$0xf]
      %v1279 = vld [vmem:[%s1267 + $0x2c] sm:$0xf]
      %v1281 = vrot.slane %v876, 1
      %1282 = vrot.lane.b32.xlu0 %v996, 92
      %v1283 = vpop.permute.xlu0 %1282
      %1284 = vrot.lane.b32.xlu0 %v1281, 92
      %v1285 = vpop.permute.xlu0 %1284
      %v1286 = vsel %vm503, %v1283, %v1285
      %v1299 = vunpack.c.l.b16 %v1268
      %v1300 = vunpack.c.l.b16 %v1269
      %v1301 = vunpack.c.l.b16 %v1270
      %v1302 = vunpack.c.l.b16 %v1271
      %v1303 = vunpack.c.l.b16 %v1272
      %v1304 = vunpack.c.l.b16 %v1273
      %v1305 = vunpack.c.l.b16 %v1274
      %v1306 = vunpack.c.l.b16 %v1275
      %v1307 = vunpack.c.l.b16 %v1276
      %v1308 = vunpack.c.l.b16 %v1277
      %v1309 = vunpack.c.l.b16 %v1278
      %v1310 = vunpack.c.l.b16 %v1279
      %v1311 = vpack.c.b16 %v1300, %v1299
      %v1312 = vpack.c.b16 %v1302, %v1301
      %v1313 = vpack.c.b16 %v1304, %v1303
      %v1314 = vpack.c.b16 %v1306, %v1305
      %v1315 = vpack.c.b16 %v1308, %v1307
      %v1316 = vpack.c.b16 %v1310, %v1309
      %v1324 = vsel %vm266, %v1286, 0
      %1326 = vmatprep.subr.bf16.mxu0 0
      %1327 = vmatpush1.bf16.msra.mxu0 %v1311
      %1328 = vmatprep.subr.bf16.mxu0 0
      %1329 = vmatpush1.bf16.msra.mxu0 %v1312
      %1330 = vmatprep.subr.bf16.mxu0 0
      %1331 = vmatpush1.bf16.msra.mxu0 %v1313
      %1332 = vmatprep.subr.bf16.mxu0 0
      %1333 = vmatpush1.bf16.msra.mxu0 %v1314
      %1334 = vmatprep.subr.bf16.mxu0 0
      %1335 = vmatpush1.bf16.msra.mxu0 %v1315
      %1336 = vmatprep.subr.bf16.mxu0 0
      %1337 = vmatpush1.bf16.msra.mxu0 %v1316
      %1338 = vmatprep.subr.bf16.mxu0 0
      %1339 = vmatpush1.bf16.msra.mxu0 0
      %1340 = vmatprep.subr.bf16.mxu0 0
      %1341 = vmatpush1.bf16.msra.mxu0 0
      %1342 = vmatprep.subr.bf16.mxu0 0
      %1343 = vmatpush1.bf16.msra.mxu0 0
      %1344 = vmatprep.subr.bf16.mxu0 0
      %1345 = vmatpush1.bf16.msra.mxu0 0
      %1346 = vmatprep.subr.bf16.mxu0 0
      %1347 = vmatpush1.bf16.msra.mxu0 0
      %1348 = vmatprep.subr.bf16.mxu0 0
      %1349 = vmatpush1.bf16.msra.mxu0 0
      %1350 = vmatprep.subr.bf16.mxu0 0
      %1351 = vmatpush1.bf16.msra.mxu0 0
      %1352 = vmatprep.subr.bf16.mxu0 0
      %1353 = vmatpush1.bf16.msra.mxu0 0
      %1354 = vmatprep.subr.bf16.mxu0 0
      %1355 = vmatpush1.bf16.msra.mxu0 0
      %1356 = vmatprep.subr.bf16.mxu0 0
      %1357 = vmatpush1.bf16.msra.mxu0 0
      %1358 = vmatprep.mubr.bf16.mxu0 0
      %1359 = vmatmul.mubr.bf16.gmra.mrb[0].mxu0 %v1324
      %v1360 = vpop.f32.mrb[0].mxu0
      %v1361 = vadd.f32 0.0, %v1360
      %v1362 = vpop.f32.mrb[0].mxu0
      %v1363 = vpop.f32.mrb[0].mxu0
      %v1364 = vpop.f32.mrb[0].mxu0
      %1365 = vdwg.mxu0
      %v1366 = vadd.f32 %v1266, %v1361
      %s1367 = scalar_lea.vmem %s1, 576
      %v1368 = vld [vmem:[%s1367] sm:$0xf]
      %v1369 = vld [vmem:[%s1367 + $0x4] sm:$0xf]
      %v1370 = vld [vmem:[%s1367 + $0x8] sm:$0xf]
      %v1371 = vld [vmem:[%s1367 + $0xc] sm:$0xf]
      %v1372 = vld [vmem:[%s1367 + $0x10] sm:$0xf]
      %v1373 = vld [vmem:[%s1367 + $0x14] sm:$0xf]
      %v1374 = vld [vmem:[%s1367 + $0x18] sm:$0xf]
      %v1375 = vld [vmem:[%s1367 + $0x1c] sm:$0xf]
      %v1376 = vld [vmem:[%s1367 + $0x20] sm:$0xf]
      %v1377 = vld [vmem:[%s1367 + $0x24] sm:$0xf]
      %v1378 = vld [vmem:[%s1367 + $0x28] sm:$0xf]
      %v1379 = vld [vmem:[%s1367 + $0x2c] sm:$0xf]
      %v1380 = vrot.slane %v600, 1
      %v1381 = vrot.slane %v602, 2
      %v1382 = vor.u32 %v1380, %v1381
      %v1395 = vunpack.c.l.b16 %v1368
      %v1396 = vunpack.c.l.b16 %v1369
      %v1397 = vunpack.c.l.b16 %v1370
      %v1398 = vunpack.c.l.b16 %v1371
      %v1399 = vunpack.c.l.b16 %v1372
      %v1400 = vunpack.c.l.b16 %v1373
      %v1401 = vunpack.c.l.b16 %v1374
      %v1402 = vunpack.c.l.b16 %v1375
      %v1403 = vunpack.c.l.b16 %v1376
      %v1404 = vunpack.c.l.b16 %v1377
      %v1405 = vunpack.c.l.b16 %v1378
      %v1406 = vunpack.c.l.b16 %v1379
      %v1407 = vpack.c.b16 %v1396, %v1395
      %v1408 = vpack.c.b16 %v1398, %v1397
      %v1409 = vpack.c.b16 %v1400, %v1399
      %v1410 = vpack.c.b16 %v1402, %v1401
      %v1411 = vpack.c.b16 %v1404, %v1403
      %v1412 = vpack.c.b16 %v1406, %v1405
      %v1420 = vsel %vm266, %v1382, 0
      %1422 = vmatprep.subr.bf16.mxu0 0
      %1423 = vmatpush1.bf16.msra.mxu0 %v1407
      %1424 = vmatprep.subr.bf16.mxu0 0
      %1425 = vmatpush1.bf16.msra.mxu0 %v1408
      %1426 = vmatprep.subr.bf16.mxu0 0
      %1427 = vmatpush1.bf16.msra.mxu0 %v1409
      %1428 = vmatprep.subr.bf16.mxu0 0
      %1429 = vmatpush1.bf16.msra.mxu0 %v1410
      %1430 = vmatprep.subr.bf16.mxu0 0
      %1431 = vmatpush1.bf16.msra.mxu0 %v1411
      %1432 = vmatprep.subr.bf16.mxu0 0
      %1433 = vmatpush1.bf16.msra.mxu0 %v1412
      %1434 = vmatprep.subr.bf16.mxu0 0
      %1435 = vmatpush1.bf16.msra.mxu0 0
      %1436 = vmatprep.subr.bf16.mxu0 0
      %1437 = vmatpush1.bf16.msra.mxu0 0
      %1438 = vmatprep.subr.bf16.mxu0 0
      %1439 = vmatpush1.bf16.msra.mxu0 0
      %1440 = vmatprep.subr.bf16.mxu0 0
      %1441 = vmatpush1.bf16.msra.mxu0 0
      %1442 = vmatprep.subr.bf16.mxu0 0
      %1443 = vmatpush1.bf16.msra.mxu0 0
      %1444 = vmatprep.subr.bf16.mxu0 0
      %1445 = vmatpush1.bf16.msra.mxu0 0
      %1446 = vmatprep.subr.bf16.mxu0 0
      %1447 = vmatpush1.bf16.msra.mxu0 0
      %1448 = vmatprep.subr.bf16.mxu0 0
      %1449 = vmatpush1.bf16.msra.mxu0 0
      %1450 = vmatprep.subr.bf16.mxu0 0
      %1451 = vmatpush1.bf16.msra.mxu0 0
      %1452 = vmatprep.subr.bf16.mxu0 0
      %1453 = vmatpush1.bf16.msra.mxu0 0
      %1454 = vmatprep.mubr.bf16.mxu0 0
      %1455 = vmatmul.mubr.bf16.gmra.mrb[0].mxu0 %v1420
      %v1456 = vpop.f32.mrb[0].mxu0
      %v1457 = vadd.f32 0.0, %v1456
      %v1458 = vpop.f32.mrb[0].mxu0
      %v1459 = vpop.f32.mrb[0].mxu0
      %v1460 = vpop.f32.mrb[0].mxu0
      %1461 = vdwg.mxu0
      %v1462 = vadd.f32 %v1366, %v1457
      %s1463 = scalar_lea.vmem %s1, 624
      %v1464 = vld [vmem:[%s1463] sm:$0xf]
      %v1465 = vld [vmem:[%s1463 + $0x4] sm:$0xf]
      %v1466 = vld [vmem:[%s1463 + $0x8] sm:$0xf]
      %v1467 = vld [vmem:[%s1463 + $0xc] sm:$0xf]
      %v1468 = vld [vmem:[%s1463 + $0x10] sm:$0xf]
      %v1469 = vld [vmem:[%s1463 + $0x14] sm:$0xf]
      %v1470 = vld [vmem:[%s1463 + $0x18] sm:$0xf]
      %v1471 = vld [vmem:[%s1463 + $0x1c] sm:$0xf]
      %v1472 = vld [vmem:[%s1463 + $0x20] sm:$0xf]
      %v1473 = vld [vmem:[%s1463 + $0x24] sm:$0xf]
      %v1474 = vld [vmem:[%s1463 + $0x28] sm:$0xf]
      %v1475 = vld [vmem:[%s1463 + $0x2c] sm:$0xf]
      %1476 = vrot.lane.b32.xlu0 %v1382, 116
      %v1477 = vpop.permute.xlu0 %1476
      %v1490 = vunpack.c.l.b16 %v1464
      %v1491 = vunpack.c.l.b16 %v1465
      %v1492 = vunpack.c.l.b16 %v1466
      %v1493 = vunpack.c.l.b16 %v1467
      %v1494 = vunpack.c.l.b16 %v1468
      %v1495 = vunpack.c.l.b16 %v1469
      %v1496 = vunpack.c.l.b16 %v1470
      %v1497 = vunpack.c.l.b16 %v1471
      %v1498 = vunpack.c.l.b16 %v1472
      %v1499 = vunpack.c.l.b16 %v1473
      %v1500 = vunpack.c.l.b16 %v1474
      %v1501 = vunpack.c.l.b16 %v1475
      %v1502 = vpack.c.b16 %v1491, %v1490
      %v1503 = vpack.c.b16 %v1493, %v1492
      %v1504 = vpack.c.b16 %v1495, %v1494
      %v1505 = vpack.c.b16 %v1497, %v1496
      %v1506 = vpack.c.b16 %v1499, %v1498
      %v1507 = vpack.c.b16 %v1501, %v1500
      %v1515 = vsel %vm266, %v1477, 0
      %1517 = vmatprep.subr.bf16.mxu0 0
      %1518 = vmatpush1.bf16.msra.mxu0 %v1502
      %1519 = vmatprep.subr.bf16.mxu0 0
      %1520 = vmatpush1.bf16.msra.mxu0 %v1503
      %1521 = vmatprep.subr.bf16.mxu0 0
      %1522 = vmatpush1.bf16.msra.mxu0 %v1504
      %1523 = vmatprep.subr.bf16.mxu0 0
      %1524 = vmatpush1.bf16.msra.mxu0 %v1505
      %1525 = vmatprep.subr.bf16.mxu0 0
      %1526 = vmatpush1.bf16.msra.mxu0 %v1506
      %1527 = vmatprep.subr.bf16.mxu0 0
      %1528 = vmatpush1.bf16.msra.mxu0 %v1507
      %1529 = vmatprep.subr.bf16.mxu0 0
      %1530 = vmatpush1.bf16.msra.mxu0 0
      %1531 = vmatprep.subr.bf16.mxu0 0
      %1532 = vmatpush1.bf16.msra.mxu0 0
      %1533 = vmatprep.subr.bf16.mxu0 0
      %1534 = vmatpush1.bf16.msra.mxu0 0
      %1535 = vmatprep.subr.bf16.mxu0 0
      %1536 = vmatpush1.bf16.msra.mxu0 0
      %1537 = vmatprep.subr.bf16.mxu0 0
      %1538 = vmatpush1.bf16.msra.mxu0 0
      %1539 = vmatprep.subr.bf16.mxu0 0
      %1540 = vmatpush1.bf16.msra.mxu0 0
      %1541 = vmatprep.subr.bf16.mxu0 0
      %1542 = vmatpush1.bf16.msra.mxu0 0
      %1543 = vmatprep.subr.bf16.mxu0 0
      %1544 = vmatpush1.bf16.msra.mxu0 0
      %1545 = vmatprep.subr.bf16.mxu0 0
      %1546 = vmatpush1.bf16.msra.mxu0 0
      %1547 = vmatprep.subr.bf16.mxu0 0
      %1548 = vmatpush1.bf16.msra.mxu0 0
      %1549 = vmatprep.mubr.bf16.mxu0 0
      %1550 = vmatmul.mubr.bf16.gmra.mrb[0].mxu0 %v1515
      %v1551 = vpop.f32.mrb[0].mxu0
      %v1552 = vadd.f32 0.0, %v1551
      %v1553 = vpop.f32.mrb[0].mxu0
      %v1554 = vpop.f32.mrb[0].mxu0
      %v1555 = vpop.f32.mrb[0].mxu0
      %1556 = vdwg.mxu0
      %v1557 = vadd.f32 %v1462, %v1552
      %s1558 = scalar_lea.vmem %s1, 672
      %v1559 = vld [vmem:[%s1558] sm:$0xf]
      %v1560 = vld [vmem:[%s1558 + $0x4] sm:$0xf]
      %v1561 = vld [vmem:[%s1558 + $0x8] sm:$0xf]
      %v1562 = vld [vmem:[%s1558 + $0xc] sm:$0xf]
      %v1563 = vld [vmem:[%s1558 + $0x10] sm:$0xf]
      %v1564 = vld [vmem:[%s1558 + $0x14] sm:$0xf]
      %v1565 = vld [vmem:[%s1558 + $0x18] sm:$0xf]
      %v1566 = vld [vmem:[%s1558 + $0x1c] sm:$0xf]
      %v1567 = vld [vmem:[%s1558 + $0x20] sm:$0xf]
      %v1568 = vld [vmem:[%s1558 + $0x24] sm:$0xf]
      %v1569 = vld [vmem:[%s1558 + $0x28] sm:$0xf]
      %v1570 = vld [vmem:[%s1558 + $0x2c] sm:$0xf]
      %1571 = vrot.lane.b32.xlu0 %v1382, 104
      %v1572 = vpop.permute.xlu0 %1571
      %v1585 = vunpack.c.l.b16 %v1559
      %v1586 = vunpack.c.l.b16 %v1560
      %v1587 = vunpack.c.l.b16 %v1561
      %v1588 = vunpack.c.l.b16 %v1562
      %v1589 = vunpack.c.l.b16 %v1563
      %v1590 = vunpack.c.l.b16 %v1564
      %v1591 = vunpack.c.l.b16 %v1565
      %v1592 = vunpack.c.l.b16 %v1566
      %v1593 = vunpack.c.l.b16 %v1567
      %v1594 = vunpack.c.l.b16 %v1568
      %v1595 = vunpack.c.l.b16 %v1569
      %v1596 = vunpack.c.l.b16 %v1570
      %v1597 = vpack.c.b16 %v1586, %v1585
      %v1598 = vpack.c.b16 %v1588, %v1587
      %v1599 = vpack.c.b16 %v1590, %v1589
      %v1600 = vpack.c.b16 %v1592, %v1591
      %v1601 = vpack.c.b16 %v1594, %v1593
      %v1602 = vpack.c.b16 %v1596, %v1595
      %v1610 = vsel %vm266, %v1572, 0
      %1612 = vmatprep.subr.bf16.mxu0 0
      %1613 = vmatpush1.bf16.msra.mxu0 %v1597
      %1614 = vmatprep.subr.bf16.mxu0 0
      %1615 = vmatpush1.bf16.msra.mxu0 %v1598
      %1616 = vmatprep.subr.bf16.mxu0 0
      %1617 = vmatpush1.bf16.msra.mxu0 %v1599
      %1618 = vmatprep.subr.bf16.mxu0 0
      %1619 = vmatpush1.bf16.msra.mxu0 %v1600
      %1620 = vmatprep.subr.bf16.mxu0 0
      %1621 = vmatpush1.bf16.msra.mxu0 %v1601
      %1622 = vmatprep.subr.bf16.mxu0 0
      %1623 = vmatpush1.bf16.msra.mxu0 %v1602
      %1624 = vmatprep.subr.bf16.mxu0 0
      %1625 = vmatpush1.bf16.msra.mxu0 0
      %1626 = vmatprep.subr.bf16.mxu0 0
      %1627 = vmatpush1.bf16.msra.mxu0 0
      %1628 = vmatprep.subr.bf16.mxu0 0
      %1629 = vmatpush1.bf16.msra.mxu0 0
      %1630 = vmatprep.subr.bf16.mxu0 0
      %1631 = vmatpush1.bf16.msra.mxu0 0
      %1632 = vmatprep.subr.bf16.mxu0 0
      %1633 = vmatpush1.bf16.msra.mxu0 0
      %1634 = vmatprep.subr.bf16.mxu0 0
      %1635 = vmatpush1.bf16.msra.mxu0 0
      %1636 = vmatprep.subr.bf16.mxu0 0
      %1637 = vmatpush1.bf16.msra.mxu0 0
      %1638 = vmatprep.subr.bf16.mxu0 0
      %1639 = vmatpush1.bf16.msra.mxu0 0
      %1640 = vmatprep.subr.bf16.mxu0 0
      %1641 = vmatpush1.bf16.msra.mxu0 0
      %1642 = vmatprep.subr.bf16.mxu0 0
      %1643 = vmatpush1.bf16.msra.mxu0 0
      %1644 = vmatprep.mubr.bf16.mxu0 0
      %1645 = vmatmul.mubr.bf16.gmra.mrb[0].mxu0 %v1610
      %v1646 = vpop.f32.mrb[0].mxu0
      %v1647 = vadd.f32 0.0, %v1646
      %v1648 = vpop.f32.mrb[0].mxu0
      %v1649 = vpop.f32.mrb[0].mxu0
      %v1650 = vpop.f32.mrb[0].mxu0
      %1651 = vdwg.mxu0
      %v1652 = vadd.f32 %v1557, %v1647
      %s1653 = scalar_lea.vmem %s1, 720
      %v1654 = vld [vmem:[%s1653] sm:$0xf]
      %v1655 = vld [vmem:[%s1653 + $0x4] sm:$0xf]
      %v1656 = vld [vmem:[%s1653 + $0x8] sm:$0xf]
      %v1657 = vld [vmem:[%s1653 + $0xc] sm:$0xf]
      %v1658 = vld [vmem:[%s1653 + $0x10] sm:$0xf]
      %v1659 = vld [vmem:[%s1653 + $0x14] sm:$0xf]
      %v1660 = vld [vmem:[%s1653 + $0x18] sm:$0xf]
      %v1661 = vld [vmem:[%s1653 + $0x1c] sm:$0xf]
      %v1662 = vld [vmem:[%s1653 + $0x20] sm:$0xf]
      %v1663 = vld [vmem:[%s1653 + $0x24] sm:$0xf]
      %v1664 = vld [vmem:[%s1653 + $0x28] sm:$0xf]
      %v1665 = vld [vmem:[%s1653 + $0x2c] sm:$0xf]
      %v1666 = vrot.slane %v891, 1
      %v1667 = vrot.slane %v893, 2
      %v1668 = vor.u32 %v1666, %v1667
      %1669 = vrot.lane.b32.xlu0 %v1382, 92
      %v1670 = vpop.permute.xlu0 %1669
      %1671 = vrot.lane.b32.xlu0 %v1668, 92
      %v1672 = vpop.permute.xlu0 %1671
      %v1673 = vsel %vm503, %v1670, %v1672
      %v1686 = vunpack.c.l.b16 %v1654
      %v1687 = vunpack.c.l.b16 %v1655
      %v1688 = vunpack.c.l.b16 %v1656
      %v1689 = vunpack.c.l.b16 %v1657
      %v1690 = vunpack.c.l.b16 %v1658
      %v1691 = vunpack.c.l.b16 %v1659
      %v1692 = vunpack.c.l.b16 %v1660
      %v1693 = vunpack.c.l.b16 %v1661
      %v1694 = vunpack.c.l.b16 %v1662
      %v1695 = vunpack.c.l.b16 %v1663
      %v1696 = vunpack.c.l.b16 %v1664
      %v1697 = vunpack.c.l.b16 %v1665
      %v1698 = vpack.c.b16 %v1687, %v1686
      %v1699 = vpack.c.b16 %v1689, %v1688
      %v1700 = vpack.c.b16 %v1691, %v1690
      %v1701 = vpack.c.b16 %v1693, %v1692
      %v1702 = vpack.c.b16 %v1695, %v1694
      %v1703 = vpack.c.b16 %v1697, %v1696
      %v1711 = vsel %vm266, %v1673, 0
      %1713 = vmatprep.subr.bf16.mxu0 0
      %1714 = vmatpush1.bf16.msra.mxu0 %v1698
      %1715 = vmatprep.subr.bf16.mxu0 0
      %1716 = vmatpush1.bf16.msra.mxu0 %v1699
      %1717 = vmatprep.subr.bf16.mxu0 0
      %1718 = vmatpush1.bf16.msra.mxu0 %v1700
      %1719 = vmatprep.subr.bf16.mxu0 0
      %1720 = vmatpush1.bf16.msra.mxu0 %v1701
      %1721 = vmatprep.subr.bf16.mxu0 0
      %1722 = vmatpush1.bf16.msra.mxu0 %v1702
      %1723 = vmatprep.subr.bf16.mxu0 0
      %1724 = vmatpush1.bf16.msra.mxu0 %v1703
      %1725 = vmatprep.subr.bf16.mxu0 0
      %1726 = vmatpush1.bf16.msra.mxu0 0
      %1727 = vmatprep.subr.bf16.mxu0 0
      %1728 = vmatpush1.bf16.msra.mxu0 0
      %1729 = vmatprep.subr.bf16.mxu0 0
      %1730 = vmatpush1.bf16.msra.mxu0 0
      %1731 = vmatprep.subr.bf16.mxu0 0
      %1732 = vmatpush1.bf16.msra.mxu0 0
      %1733 = vmatprep.subr.bf16.mxu0 0
      %1734 = vmatpush1.bf16.msra.mxu0 0
      %1735 = vmatprep.subr.bf16.mxu0 0
      %1736 = vmatpush1.bf16.msra.mxu0 0
      %1737 = vmatprep.subr.bf16.mxu0 0
      %1738 = vmatpush1.bf16.msra.mxu0 0
      %1739 = vmatprep.subr.bf16.mxu0 0
      %1740 = vmatpush1.bf16.msra.mxu0 0
      %1741 = vmatprep.subr.bf16.mxu0 0
      %1742 = vmatpush1.bf16.msra.mxu0 0
      %1743 = vmatprep.subr.bf16.mxu0 0
      %1744 = vmatpush1.bf16.msra.mxu0 0
      %1745 = vmatprep.mubr.bf16.mxu0 0
      %1746 = vmatmul.mubr.bf16.gmra.mrb[0].mxu0 %v1711
      %v1747 = vpop.f32.mrb[0].mxu0
      %v1748 = vadd.f32 0.0, %v1747
      %v1749 = vpop.f32.mrb[0].mxu0
      %v1750 = vpop.f32.mrb[0].mxu0
      %v1751 = vpop.f32.mrb[0].mxu0
      %1752 = vdwg.mxu0
      %v1753 = vadd.f32 %v1652, %v1748
      %v1754 = vld [vmem:[%s2] sm:$0x1]
      %v1756 = vlaneseq
      %v1757 = vshrl.u32 %v1756, 7
      %v1758 = vsub.s32 0, %v1757
      %v1759 = vrot.slane %v1754, %v1758
      %v1761 = vmul.f32 %v1753, %v1759
      %v1762 = vld [vmem:[%s3] sm:$0x1]
      %v1764 = vlaneseq
      %v1765 = vshrl.u32 %v1764, 7
      %v1766 = vsub.s32 0, %v1765
      %v1767 = vrot.slane %v1762, %v1766
      %v1769 = vadd.f32 %v1761, %v1767
      %v1770 = vmax.f32 %v1769, 0.0
      %v1771 = vpack.c.bf16 %v1770, %v1770
      %1772 = vst [vmem:[%s195] sm:$0xf] %v1771
      %p1773 = scmp.lt.s32.totalorder %s15, 1
      %s1774 = scalar_select %p1773, %s15, 1
      %s1775 = smul.addr %s1774, 4
      %s1776 = scalar_lea.vmem %s4, %s1775
      // Predicated region
      $region37: #{segmentation_forward.7} parent=35 // pred_check
        %p1777 = pneg %p122
      $region38: #{segmentation_forward.7} parent=35 // pred_check_branch
        %1779 = sbr.rel (%p1777) target = $region40
      $region39: #{segmentation_forward.7} parent=35 // pred_region
        _
      $region40: #{segmentation_forward.7} parent=35 // pred_fallthru
        _
    $region36: #{segmentation_forward.7} parent=5 // pred_fallthru
      _
    %p1780 = scmp.le.s32.totalorder 2, %s10
    // Predicated region
    $region41: #{segmentation_forward.7} parent=5 // pred_check
      %p1781 = pneg %p1780
    $region42: #{segmentation_forward.7} parent=5 // pred_check_branch
      %1783 = sbr.rel (%p1781) target = $region44
    $region43: #{segmentation_forward.7} parent=5 // pred_region
      %s1784 = ssub.s32 %s10, 2
      // Predicated region
      $region45: #{segmentation_forward.7} parent=43 // pred_check
        %p1785 = pneg %p128
      $region46: #{segmentation_forward.7} parent=43 // pred_check_branch
        %1787 = sbr.rel (%p1785) target = $region48
      $region47: #{segmentation_forward.7} parent=43 // pred_region
        %p1788 = scmp.lt.s32.totalorder %s16, 1
        %s1789 = scalar_select %p1788, %s16, 1
        %s1790 = smul.addr %s1789, 4
        %s1791 = scalar_lea.vmem %s4, %s1790
      $region48: #{segmentation_forward.7} parent=43 // pred_fallthru
        _
    $region44: #{segmentation_forward.7} parent=5 // pred_fallthru
      _
  $region6: #{segmentation_forward.7} parent=0 // loop_footer
    %s14 = sadd.s32 1, %s10
  $region7: #{segmentation_forward.7} parent=0 // loop_footer_branch
    %9 = sbr.rel target = $region3
  $region8: #{segmentation_forward.7} parent=0 // loop_exit
    _

// kernel: tile.88
$region0: #{tile.88}
  #allocation0 [shape = 's32[1]{0}', space=sflag, size = 0x4, scoped, tag = 'scoped memory for tile.88']
  %s0 = inlined_call_operand.vmem [shape: f32[8], index: 0, kind: input, shape index: {}]
  %s1 = inlined_call_operand.vmem [shape: f32[4,8], index: 1, kind: output, shape index: {}]
  // Predicated region
  $region2: #{tile.88} parent=0 // pred_check
    _
  $region3: #{tile.88} parent=0 // pred_check_branch
    %3 = sbr.rel (0) target = $region5
  $region4: #{tile.88} parent=0 // pred_region
    _
  $region5: #{tile.88} parent=0 // pred_fallthru
    _
  %v4 = vld [vmem:[%s0] ss:$0 sm:$0xff]
  %5 = vst [vmem:[%s1] sm:$0xf] %v4

// kernel: tile.89
$region0: #{tile.89}
  %s0 = inlined_call_operand.vmem [shape: f32[4,8], index: 0, kind: input, shape index: {}]
  %s1 = inlined_call_operand.vmem [shape: f32[1,32], index: 1, kind: output, shape index: {}]
  $region1: #{tile.89} parent=0
    #allocation0 [shape = 'u8[4096]{0}', space=vmem, size = 0x1000, scoped, tag = 'scoped mem for output reshape']
    #allocation1 [shape = 'u8[4096]{0}', space=vmem, size = 0x1000, scoped, tag = 'scoped mem for input reshape']
    %s3 = sshllo.u32 0, 4
    %v4 = vld [vmem:[%s0] sm:%s3]
    %5 = vst [vmem:[#allocation1] sm:%s3] %v4
    %v6 = vld [vmem:[#allocation1] sm:$0x1]
    %vm7 = vcmask 64512
    %8 = vst.msk [vmem:[#allocation0] sm:$0x1] %vm7, %v6
    %s9 = scalar_lea.vmem [#allocation1], 3
    %v10 = vld [vmem:[%s9] sm:$0x1]
    %11 = vrot.lane.b32.xlu0 %v10, 24
    %v12 = vpop.permute.xlu0 %11
    %vm13 = vcmask 261312
    %14 = vst.msk [vmem:[#allocation0] sm:$0x1] %vm13, %v12
    %s15 = scalar_lea.vmem [#allocation1], 2
    %v16 = vld [vmem:[%s15] sm:$0x1]
    %17 = vrot.lane.b32.xlu0 %v16, 16
    %v18 = vpop.permute.xlu0 %17
    %vm19 = vcmask 195712
    %20 = vst.msk [vmem:[#allocation0] sm:$0x1] %vm19, %v18
    %s21 = scalar_lea.vmem [#allocation1], 1
    %v22 = vld [vmem:[%s21] sm:$0x1]
    %23 = vrot.lane.b32.xlu0 %v22, 8
    %v24 = vpop.permute.xlu0 %23
    %vm25 = vcmask 130112
    %26 = vst.msk [vmem:[#allocation0] sm:$0x1] %vm25, %v24
    %s28 = sshllo.u32 0, 1
    %v30 = vld [vmem:[#allocation0] sm:%s28]
    %s31 = sshllo.u32 0, 1
    %32 = vst [vmem:[%s1] sm:%s31] %v30

// kernel: segmentation_forward.9
$region0: #{segmentation_forward.9}
  #allocation0 [shape = 'u32[]', space=smem, size = 0x4, offset = 0x4, fixed_abs, tag = 'smem constant byte address 0x4 - core index']
  #allocation1 [shape = 'u32[144,128]{1,0:T(1,128)}', space=vmem, size = 0x12000, scoped, tag = 'internal scratch']
  %s0 = inlined_call_operand.vmem [shape: bf16[2,4,64], index: 0, kind: input, shape index: {}]
  %s1 = inlined_call_operand.vmem [shape: bf16[1,64,32], index: 1, kind: input, shape index: {}]
  %s2 = inlined_call_operand.vmem [shape: f32[1,32], index: 2, kind: input, shape index: {}]
  %s3 = inlined_call_operand.vmem [shape: f32[1,32], index: 3, kind: input, shape index: {}]
  %s4 = inlined_call_operand.vmem [shape: bf16[2,4,32], index: 4, kind: output, shape index: {}]
  %s5 = sld [smem:[#allocation0]]
  $region49: #{segmentation_forward.9} parent=0
    _
  %s7 = ssub.s32 1, %s5
  %s8 = scalar_select 0, %s7, %s5
  loop: start=0, step=1, limit=4
  $region2: #{segmentation_forward.9} parent=0 // loop_pre_header
    _
  $region3: #{segmentation_forward.9} parent=0 // loop_header
    %s10 = sphi 0, %s14
    %p11 = scmp.ge.s32.totalorder %s10, 4
    %s20 = sphi 0, %s22
    %s23 = sphi 0, %s20
    %s24 = sphi 0, %s23
    %s40 = sphi 0, %s24
    %s44 = sphi 0, %s44
    %s46 = sphi 0, %s44
    %s47 = sphi 0, %s46
    %s61 = sphi 0, %s47
    %s65 = sphi 0, %s65
    %s67 = sphi 0, %s65
    %s68 = sphi 0, %s67
    %s82 = sphi 0, %s68
    %s86 = sphi 0, %s86
    %s88 = sphi 0, %s86
    %s89 = sphi 0, %s88
    %s103 = sphi 0, %s89
    %s109 = sphi 0, %s111
    %s112 = sphi 0, %s109
    %s113 = sphi 0, %s112
    %s129 = sphi 0, %s113
  $region4: #{segmentation_forward.9} parent=0 // loop_header_branch
    %13 = sbr.rel (%p11) target = $region8
  $region5: #{segmentation_forward.9} parent=0 // loop_body
    %s15 = ssub.s32 %s10, 1
    %s16 = ssub.s32 %s10, 2
    %s17 = sadd.s32 %s10, 1
    %s18 = ssub.s32 %s10, %s17
    %p19 = scmp.eq.s32.totalorder %s18, 0
    %s21 = sadd.s32 %s20, 1
    %s22 = scalar_select %p19, %s20, %s21
    %p25 = pneg %p19
    %p26 = scmp.eq.s32.totalorder %s10, 1
    %p27 = por %p25, %p26
    %p28 = scmp.ne.s32.totalorder %s20, %s23
    %p29 = scmp.eq.s32.totalorder %s10, 0
    %p30 = por %p28, %p29
    %p31 = scmp.ne.s32.totalorder %s20, %s23
    %p32 = scmp.eq.s32.totalorder %s15, 1
    %p33 = por %p31, %p32
    %p34 = scmp.ne.s32.totalorder %s23, %s24
    %p35 = scmp.eq.s32.totalorder %s15, 0
    %p36 = por %p34, %p35
    %p37 = scmp.ne.s32.totalorder %s23, %s24
    %p38 = scmp.eq.s32.totalorder %s16, 1
    %p39 = por %p37, %p38
    %p41 = scmp.ne.s32.totalorder %s24, %s40
    %p42 = scmp.eq.s32.totalorder %s16, 0
    %p43 = por %p41, %p42
    %s45 = sadd.s32 %s44, 1
    %p48 = scmp.eq.s32.totalorder %s10, 1
    %p49 = scmp.ne.s32.totalorder %s44, %s46
    %p50 = scmp.eq.s32.totalorder %s10, 0
    %p51 = por %p49, %p50
    %p52 = scmp.ne.s32.totalorder %s44, %s46
    %p53 = scmp.eq.s32.totalorder %s15, 1
    %p54 = por %p52, %p53
    %p55 = scmp.ne.s32.totalorder %s46, %s47
    %p56 = scmp.eq.s32.totalorder %s15, 0
    %p57 = por %p55, %p56
    %p58 = scmp.ne.s32.totalorder %s46, %s47
    %p59 = scmp.eq.s32.totalorder %s16, 1
    %p60 = por %p58, %p59
    %p62 = scmp.ne.s32.totalorder %s47, %s61
    %p63 = scmp.eq.s32.totalorder %s16, 0
    %p64 = por %p62, %p63
    %s66 = sadd.s32 %s65, 1
    %p69 = scmp.eq.s32.totalorder %s10, 1
    %p70 = scmp.ne.s32.totalorder %s65, %s67
    %p71 = scmp.eq.s32.totalorder %s10, 0
    %p72 = por %p70, %p71
    %p73 = scmp.ne.s32.totalorder %s65, %s67
    %p74 = scmp.eq.s32.totalorder %s15, 1
    %p75 = por %p73, %p74
    %p76 = scmp.ne.s32.totalorder %s67, %s68
    %p77 = scmp.eq.s32.totalorder %s15, 0
    %p78 = por %p76, %p77
    %p79 = scmp.ne.s32.totalorder %s67, %s68
    %p80 = scmp.eq.s32.totalorder %s16, 1
    %p81 = por %p79, %p80
    %p83 = scmp.ne.s32.totalorder %s68, %s82
    %p84 = scmp.eq.s32.totalorder %s16, 0
    %p85 = por %p83, %p84
    %s87 = sadd.s32 %s86, 1
    %p90 = scmp.eq.s32.totalorder %s10, 1
    %p91 = scmp.ne.s32.totalorder %s86, %s88
    %p92 = scmp.eq.s32.totalorder %s10, 0
    %p93 = por %p91, %p92
    %p94 = scmp.ne.s32.totalorder %s86, %s88
    %p95 = scmp.eq.s32.totalorder %s15, 1
    %p96 = por %p94, %p95
    %p97 = scmp.ne.s32.totalorder %s88, %s89
    %p98 = scmp.eq.s32.totalorder %s15, 0
    %p99 = por %p97, %p98
    %p100 = scmp.ne.s32.totalorder %s88, %s89
    %p101 = scmp.eq.s32.totalorder %s16, 1
    %p102 = por %p100, %p101
    %p104 = scmp.ne.s32.totalorder %s89, %s103
    %p105 = scmp.eq.s32.totalorder %s16, 0
    %p106 = por %p104, %p105
    %s107 = ssub.s32 %s10, %s17
    %p108 = scmp.eq.s32.totalorder %s107, 0
    %s110 = sadd.s32 %s109, 1
    %s111 = scalar_select %p108, %s109, %s110
    %p114 = pneg %p108
    %p115 = scmp.eq.s32.totalorder %s10, 1
    %p116 = por %p114, %p115
    %p117 = scmp.ne.s32.totalorder %s109, %s112
    %p118 = scmp.eq.s32.totalorder %s10, 0
    %p119 = por %p117, %p118
    %p120 = scmp.ne.s32.totalorder %s109, %s112
    %p121 = scmp.eq.s32.totalorder %s15, 1
    %p122 = por %p120, %p121
    %p123 = scmp.ne.s32.totalorder %s112, %s113
    %p124 = scmp.eq.s32.totalorder %s15, 0
    %p125 = por %p123, %p124
    %p126 = scmp.ne.s32.totalorder %s112, %s113
    %p127 = scmp.eq.s32.totalorder %s16, 1
    %p128 = por %p126, %p127
    %p130 = scmp.ne.s32.totalorder %s113, %s129
    %p131 = scmp.eq.s32.totalorder %s16, 0
    %p132 = por %p130, %p131
    %p133 = scmp.le.s32.totalorder 1, %s10
    %p134 = scmp.lt.s32.totalorder %s10, 3
    %p135 = pnand %p133, %p134
    %p136 = pneg %p135
    // Predicated region
    $region9: #{segmentation_forward.9} parent=5 // pred_check
      _
    $region10: #{segmentation_forward.9} parent=5 // pred_check_branch
      %138 = sbr.rel (%p135) target = $region12
    $region11: #{segmentation_forward.9} parent=5 // pred_region
      %s139 = ssub.s32 %s10, 1
      // Predicated region
      $region13: #{segmentation_forward.9} parent=11 // pred_check
        %p140 = pneg %p57
      $region14: #{segmentation_forward.9} parent=11 // pred_check_branch
        %142 = sbr.rel (%p140) target = $region16
      $region15: #{segmentation_forward.9} parent=11 // pred_region
        _
      $region16: #{segmentation_forward.9} parent=11 // pred_fallthru
        _
      // Predicated region
      $region17: #{segmentation_forward.9} parent=11 // pred_check
        %p143 = pneg %p78
      $region18: #{segmentation_forward.9} parent=11 // pred_check_branch
        %145 = sbr.rel (%p143) target = $region20
      $region19: #{segmentation_forward.9} parent=11 // pred_region
        _
      $region20: #{segmentation_forward.9} parent=11 // pred_fallthru
        _
      // Predicated region
      $region21: #{segmentation_forward.9} parent=11 // pred_check
        %p146 = pneg %p99
      $region22: #{segmentation_forward.9} parent=11 // pred_check_branch
        %148 = sbr.rel (%p146) target = $region24
      $region23: #{segmentation_forward.9} parent=11 // pred_region
        _
      $region24: #{segmentation_forward.9} parent=11 // pred_fallthru
        _
    $region12: #{segmentation_forward.9} parent=5 // pred_fallthru
      _
    %p149 = scmp.lt.s32.totalorder %s10, 2
    // Predicated region
    $region25: #{segmentation_forward.9} parent=5 // pred_check
      %p150 = pneg %p149
    $region26: #{segmentation_forward.9} parent=5 // pred_check_branch
      %152 = sbr.rel (%p150) target = $region28
    $region27: #{segmentation_forward.9} parent=5 // pred_region
      // Predicated region
      $region29: #{segmentation_forward.9} parent=27 // pred_check
        %p153 = pneg %p30
      $region30: #{segmentation_forward.9} parent=27 // pred_check_branch
        %155 = sbr.rel (%p153) target = $region32
      $region31: #{segmentation_forward.9} parent=27 // pred_region
        %p156 = scmp.lt.s32.totalorder %s10, 1
        %s157 = scalar_select %p156, %s10, 1
        %s158 = smul.addr %s157, 2
        %s159 = scalar_lea.vmem %s0, %s158
      $region32: #{segmentation_forward.9} parent=27 // pred_fallthru
        _
    $region28: #{segmentation_forward.9} parent=5 // pred_fallthru
      _
    %p160 = scmp.le.s32.totalorder 1, %s10
    %p161 = scmp.lt.s32.totalorder %s10, 3
    %p162 = pnand %p160, %p161
    %p163 = pneg %p162
    // Predicated region
    $region33: #{segmentation_forward.9} parent=5 // pred_check
      _
    $region34: #{segmentation_forward.9} parent=5 // pred_check_branch
      %165 = sbr.rel (%p162) target = $region36
    $region35: #{segmentation_forward.9} parent=5 // pred_region
      %s166 = ssub.s32 %s10, 1
      %p167 = scmp.lt.s32.totalorder %s15, 1
      %s168 = scalar_select %p167, %s15, 1
      %s169 = smul.addr %s168, 2
      %s170 = scalar_lea.vmem %s0, %s169
      %p171 = pneg %p36
      %p172 = pneg %p33
      %p173 = pneg %p57
      %p174 = pneg %p54
      %p175 = pneg %p78
      %p176 = pneg %p75
      %p177 = pneg %p99
      %p178 = pneg %p96
      %p179 = pneg %p125
      %p180 = pneg %p122
      %p181 = scmp.lt.s32.totalorder %s15, 1
      %s182 = scalar_select %p181, %s15, 1
      %s183 = smul.addr %s182, 2
      %s184 = scalar_lea.vmem %s4, %s183
      %p185 = scmp.lt.s32.totalorder %s15, 1
      %s186 = scalar_select %p185, %s15, 1
      %s187 = smul.addr %s186, 2
      %s188 = scalar_lea.vmem %s0, %s187
      %p189 = scmp.lt.s32.totalorder %s15, 1
      %s190 = scalar_select %p189, %s15, 1
      %s191 = smul.addr %s190, 2
      %s192 = scalar_lea.vmem %s4, %s191
      %v194 = vld [vmem:[%s188] sm:$0x3]
      %v195 = vld [vmem:[%s1] sm:$0xf]
      %v196 = vld [vmem:[%s1 + $0x4] sm:$0xf]
      %v197 = vld [vmem:[%s1 + $0x8] sm:$0xf]
      %v198 = vld [vmem:[%s1 + $0xc] sm:$0xf]
      %v199 = vld [vmem:[%s1 + $0x10] sm:$0xf]
      %v200 = vld [vmem:[%s1 + $0x14] sm:$0xf]
      %v201 = vld [vmem:[%s1 + $0x18] sm:$0xf]
      %v202 = vld [vmem:[%s1 + $0x1c] sm:$0xf]
      %v211 = vunpack.c.l.b16 %v195
      %v212 = vunpack.c.l.b16 %v196
      %v213 = vunpack.c.l.b16 %v197
      %v214 = vunpack.c.l.b16 %v198
      %v215 = vunpack.c.l.b16 %v199
      %v216 = vunpack.c.l.b16 %v200
      %v217 = vunpack.c.l.b16 %v201
      %v218 = vunpack.c.l.b16 %v202
      %v219 = vpack.c.b16 %v212, %v211
      %v220 = vpack.c.b16 %v214, %v213
      %v221 = vpack.c.b16 %v216, %v215
      %v222 = vpack.c.b16 %v218, %v217
      %vm227 = vcmask 523264
      %v229 = vsel %vm227, %v194, 0
      %231 = vmatprep.subr.bf16.mxu0 0
      %232 = vmatpush1.bf16.msra.mxu0 %v219
      %233 = vmatprep.subr.bf16.mxu0 0
      %234 = vmatpush1.bf16.msra.mxu0 %v220
      %235 = vmatprep.subr.bf16.mxu0 0
      %236 = vmatpush1.bf16.msra.mxu0 %v221
      %237 = vmatprep.subr.bf16.mxu0 0
      %238 = vmatpush1.bf16.msra.mxu0 %v222
      %239 = vmatprep.subr.bf16.mxu0 0
      %240 = vmatpush1.bf16.msra.mxu0 0
      %241 = vmatprep.subr.bf16.mxu0 0
      %242 = vmatpush1.bf16.msra.mxu0 0
      %243 = vmatprep.subr.bf16.mxu0 0
      %244 = vmatpush1.bf16.msra.mxu0 0
      %245 = vmatprep.subr.bf16.mxu0 0
      %246 = vmatpush1.bf16.msra.mxu0 0
      %247 = vmatprep.subr.bf16.mxu0 0
      %248 = vmatpush1.bf16.msra.mxu0 0
      %249 = vmatprep.subr.bf16.mxu0 0
      %250 = vmatpush1.bf16.msra.mxu0 0
      %251 = vmatprep.subr.bf16.mxu0 0
      %252 = vmatpush1.bf16.msra.mxu0 0
      %253 = vmatprep.subr.bf16.mxu0 0
      %254 = vmatpush1.bf16.msra.mxu0 0
      %255 = vmatprep.subr.bf16.mxu0 0
      %256 = vmatpush1.bf16.msra.mxu0 0
      %257 = vmatprep.subr.bf16.mxu0 0
      %258 = vmatpush1.bf16.msra.mxu0 0
      %259 = vmatprep.subr.bf16.mxu0 0
      %260 = vmatpush1.bf16.msra.mxu0 0
      %261 = vmatprep.subr.bf16.mxu0 0
      %262 = vmatpush1.bf16.msra.mxu0 0
      %263 = vmatprep.mubr.bf16.mxu0 0
      %264 = vmatmul.mubr.bf16.gmra.mrb[0].mxu0 %v229
      %v265 = vpop.f32.mrb[0].mxu0
      %v266 = vadd.f32 0.0, %v265
      %v267 = vpop.f32.mrb[0].mxu0
      %v268 = vpop.f32.mrb[0].mxu0
      %v269 = vpop.f32.mrb[0].mxu0
      %270 = vdwg.mxu0
      %v271 = vld [vmem:[%s2] sm:$0x1]
      %v273 = vlaneseq
      %v274 = vshrl.u32 %v273, 7
      %v275 = vsub.s32 0, %v274
      %v276 = vrot.slane %v271, %v275
      %v278 = vmul.f32 %v266, %v276
      %v279 = vld [vmem:[%s3] sm:$0x1]
      %v281 = vlaneseq
      %v282 = vshrl.u32 %v281, 7
      %v283 = vsub.s32 0, %v282
      %v284 = vrot.slane %v279, %v283
      %v286 = vadd.f32 %v278, %v284
      %v287 = vmax.f32 %v286, 0.0
      %v288 = vpack.c.bf16 %v287, %v287
      %vm289 = vcmask 254976
      %290 = vst.msk [vmem:[%s192] sm:$0x3] %vm289, %v288
      %p291 = scmp.lt.s32.totalorder %s15, 1
      %s292 = scalar_select %p291, %s15, 1
      %s293 = smul.addr %s292, 2
      %s294 = scalar_lea.vmem %s4, %s293
      // Predicated region
      $region37: #{segmentation_forward.9} parent=35 // pred_check
        %p295 = pneg %p122
      $region38: #{segmentation_forward.9} parent=35 // pred_check_branch
        %297 = sbr.rel (%p295) target = $region40
      $region39: #{segmentation_forward.9} parent=35 // pred_region
        _
      $region40: #{segmentation_forward.9} parent=35 // pred_fallthru
        _
    $region36: #{segmentation_forward.9} parent=5 // pred_fallthru
      _
    %p298 = scmp.le.s32.totalorder 2, %s10
    // Predicated region
    $region41: #{segmentation_forward.9} parent=5 // pred_check
      %p299 = pneg %p298
    $region42: #{segmentation_forward.9} parent=5 // pred_check_branch
      %301 = sbr.rel (%p299) target = $region44
    $region43: #{segmentation_forward.9} parent=5 // pred_region
      %s302 = ssub.s32 %s10, 2
      // Predicated region
      $region45: #{segmentation_forward.9} parent=43 // pred_check
        %p303 = pneg %p128
      $region46: #{segmentation_forward.9} parent=43 // pred_check_branch
        %305 = sbr.rel (%p303) target = $region48
      $region47: #{segmentation_forward.9} parent=43 // pred_region
        %p306 = scmp.lt.s32.totalorder %s16, 1
        %s307 = scalar_select %p306, %s16, 1
        %s308 = smul.addr %s307, 2
        %s309 = scalar_lea.vmem %s4, %s308
      $region48: #{segmentation_forward.9} parent=43 // pred_fallthru
        _
    $region44: #{segmentation_forward.9} parent=5 // pred_fallthru
      _
  $region6: #{segmentation_forward.9} parent=0 // loop_footer
    %s14 = sadd.s32 1, %s10
  $region7: #{segmentation_forward.9} parent=0 // loop_footer_branch
    %9 = sbr.rel target = $region3
  $region8: #{segmentation_forward.9} parent=0 // loop_exit
    _

// kernel: tile.78
$region0: #{tile.78}
  #allocation0 [shape = 's32[1]{0}', space=sflag, size = 0x4, scoped, tag = 'scoped memory for tile.78']
  %s0 = inlined_call_operand.vmem [shape: f32[32], index: 0, kind: input, shape index: {}]
  %s1 = inlined_call_operand.vmem [shape: f32[4,32], index: 1, kind: output, shape index: {}]
  // Predicated region
  $region2: #{tile.78} parent=0 // pred_check
    _
  $region3: #{tile.78} parent=0 // pred_check_branch
    %3 = sbr.rel (0) target = $region5
  $region4: #{tile.78} parent=0 // pred_region
    _
  $region5: #{tile.78} parent=0 // pred_fallthru
    _
  %v4 = vld [vmem:[%s0] ss:$0 sm:$0xff]
  %5 = vst [vmem:[%s1] sm:$0xf] %v4

// kernel: tile.79
$region0: #{tile.79}
  %s0 = inlined_call_operand.vmem [shape: f32[4,32], index: 0, kind: input, shape index: {}]
  %s1 = inlined_call_operand.vmem [shape: f32[1,128], index: 1, kind: output, shape index: {}]
  $region1: #{tile.79} parent=0
    #allocation0 [shape = 'u8[4096]{0}', space=vmem, size = 0x1000, scoped, tag = 'scoped mem for output reshape']
    #allocation1 [shape = 'u8[4096]{0}', space=vmem, size = 0x1000, scoped, tag = 'scoped mem for input reshape']
    %s3 = sshllo.u32 0, 4
    %v4 = vld [vmem:[%s0] sm:%s3]
    %5 = vst [vmem:[#allocation1] sm:%s3] %v4
    %v6 = vld [vmem:[#allocation1] sm:$0x1]
    %vm7 = vcmask 261120
    %8 = vst.msk [vmem:[#allocation0] sm:$0x1] %vm7, %v6
    %s9 = scalar_lea.vmem [#allocation1], 3
    %v10 = vld [vmem:[%s9] sm:$0x1]
    %11 = vrot.lane.b32.xlu0 %v10, 96
    %v12 = vpop.permute.xlu0 %11
    %vm13 = vcmask 1048320
    %14 = vst.msk [vmem:[#allocation0] sm:$0x1] %vm13, %v12
    %s15 = scalar_lea.vmem [#allocation1], 2
    %v16 = vld [vmem:[%s15] sm:$0x1]
    %17 = vrot.lane.b32.xlu0 %v16, 64
    %v18 = vpop.permute.xlu0 %17
    %vm19 = vcmask 785920
    %20 = vst.msk [vmem:[#allocation0] sm:$0x1] %vm19, %v18
    %s21 = scalar_lea.vmem [#allocation1], 1
    %v22 = vld [vmem:[%s21] sm:$0x1]
    %23 = vrot.lane.b32.xlu0 %v22, 32
    %v24 = vpop.permute.xlu0 %23
    %vm25 = vcmask 523520
    %26 = vst.msk [vmem:[#allocation0] sm:$0x1] %vm25, %v24
    %s28 = sshllo.u32 0, 1
    %v30 = vld [vmem:[#allocation0] sm:%s28]
    %s31 = sshllo.u32 0, 1
    %32 = vst [vmem:[%s1] sm:%s31] %v30

// kernel: segmentation_forward.8
$region0: #{segmentation_forward.8}
  #allocation0 [shape = 'u32[]', space=smem, size = 0x4, offset = 0x4, fixed_abs, tag = 'smem constant byte address 0x4 - core index']
  #allocation1 [shape = 'u32[144,128]{1,0:T(1,128)}', space=vmem, size = 0x12000, scoped, tag = 'internal scratch']
  %s0 = inlined_call_operand.vmem [shape: bf16[2,4,64], index: 0, kind: input, shape index: {}]
  %s1 = inlined_call_operand.vmem [shape: bf16[1,64,128], index: 1, kind: input, shape index: {}]
  %s2 = inlined_call_operand.vmem [shape: f32[1,128], index: 2, kind: input, shape index: {}]
  %s3 = inlined_call_operand.vmem [shape: f32[1,128], index: 3, kind: input, shape index: {}]
  %s4 = inlined_call_operand.vmem [shape: bf16[2,4,128], index: 4, kind: output, shape index: {}]
  %s5 = sld [smem:[#allocation0]]
  $region49: #{segmentation_forward.8} parent=0
    _
  %s7 = ssub.s32 1, %s5
  %s8 = scalar_select 0, %s7, %s5
  loop: start=0, step=1, limit=4
  $region2: #{segmentation_forward.8} parent=0 // loop_pre_header
    _
  $region3: #{segmentation_forward.8} parent=0 // loop_header
    %s10 = sphi 0, %s14
    %p11 = scmp.ge.s32.totalorder %s10, 4
    %s20 = sphi 0, %s22
    %s23 = sphi 0, %s20
    %s24 = sphi 0, %s23
    %s40 = sphi 0, %s24
    %s44 = sphi 0, %s44
    %s46 = sphi 0, %s44
    %s47 = sphi 0, %s46
    %s61 = sphi 0, %s47
    %s65 = sphi 0, %s65
    %s67 = sphi 0, %s65
    %s68 = sphi 0, %s67
    %s82 = sphi 0, %s68
    %s86 = sphi 0, %s86
    %s88 = sphi 0, %s86
    %s89 = sphi 0, %s88
    %s103 = sphi 0, %s89
    %s109 = sphi 0, %s111
    %s112 = sphi 0, %s109
    %s113 = sphi 0, %s112
    %s129 = sphi 0, %s113
  $region4: #{segmentation_forward.8} parent=0 // loop_header_branch
    %13 = sbr.rel (%p11) target = $region8
  $region5: #{segmentation_forward.8} parent=0 // loop_body
    %s15 = ssub.s32 %s10, 1
    %s16 = ssub.s32 %s10, 2
    %s17 = sadd.s32 %s10, 1
    %s18 = ssub.s32 %s10, %s17
    %p19 = scmp.eq.s32.totalorder %s18, 0
    %s21 = sadd.s32 %s20, 1
    %s22 = scalar_select %p19, %s20, %s21
    %p25 = pneg %p19
    %p26 = scmp.eq.s32.totalorder %s10, 1
    %p27 = por %p25, %p26
    %p28 = scmp.ne.s32.totalorder %s20, %s23
    %p29 = scmp.eq.s32.totalorder %s10, 0
    %p30 = por %p28, %p29
    %p31 = scmp.ne.s32.totalorder %s20, %s23
    %p32 = scmp.eq.s32.totalorder %s15, 1
    %p33 = por %p31, %p32
    %p34 = scmp.ne.s32.totalorder %s23, %s24
    %p35 = scmp.eq.s32.totalorder %s15, 0
    %p36 = por %p34, %p35
    %p37 = scmp.ne.s32.totalorder %s23, %s24
    %p38 = scmp.eq.s32.totalorder %s16, 1
    %p39 = por %p37, %p38
    %p41 = scmp.ne.s32.totalorder %s24, %s40
    %p42 = scmp.eq.s32.totalorder %s16, 0
    %p43 = por %p41, %p42
    %s45 = sadd.s32 %s44, 1
    %p48 = scmp.eq.s32.totalorder %s10, 1
    %p49 = scmp.ne.s32.totalorder %s44, %s46
    %p50 = scmp.eq.s32.totalorder %s10, 0
    %p51 = por %p49, %p50
    %p52 = scmp.ne.s32.totalorder %s44, %s46
    %p53 = scmp.eq.s32.totalorder %s15, 1
    %p54 = por %p52, %p53
    %p55 = scmp.ne.s32.totalorder %s46, %s47
    %p56 = scmp.eq.s32.totalorder %s15, 0
    %p57 = por %p55, %p56
    %p58 = scmp.ne.s32.totalorder %s46, %s47
    %p59 = scmp.eq.s32.totalorder %s16, 1
    %p60 = por %p58, %p59
    %p62 = scmp.ne.s32.totalorder %s47, %s61
    %p63 = scmp.eq.s32.totalorder %s16, 0
    %p64 = por %p62, %p63
    %s66 = sadd.s32 %s65, 1
    %p69 = scmp.eq.s32.totalorder %s10, 1
    %p70 = scmp.ne.s32.totalorder %s65, %s67
    %p71 = scmp.eq.s32.totalorder %s10, 0
    %p72 = por %p70, %p71
    %p73 = scmp.ne.s32.totalorder %s65, %s67
    %p74 = scmp.eq.s32.totalorder %s15, 1
    %p75 = por %p73, %p74
    %p76 = scmp.ne.s32.totalorder %s67, %s68
    %p77 = scmp.eq.s32.totalorder %s15, 0
    %p78 = por %p76, %p77
    %p79 = scmp.ne.s32.totalorder %s67, %s68
    %p80 = scmp.eq.s32.totalorder %s16, 1
    %p81 = por %p79, %p80
    %p83 = scmp.ne.s32.totalorder %s68, %s82
    %p84 = scmp.eq.s32.totalorder %s16, 0
    %p85 = por %p83, %p84
    %s87 = sadd.s32 %s86, 1
    %p90 = scmp.eq.s32.totalorder %s10, 1
    %p91 = scmp.ne.s32.totalorder %s86, %s88
    %p92 = scmp.eq.s32.totalorder %s10, 0
    %p93 = por %p91, %p92
    %p94 = scmp.ne.s32.totalorder %s86, %s88
    %p95 = scmp.eq.s32.totalorder %s15, 1
    %p96 = por %p94, %p95
    %p97 = scmp.ne.s32.totalorder %s88, %s89
    %p98 = scmp.eq.s32.totalorder %s15, 0
    %p99 = por %p97, %p98
    %p100 = scmp.ne.s32.totalorder %s88, %s89
    %p101 = scmp.eq.s32.totalorder %s16, 1
    %p102 = por %p100, %p101
    %p104 = scmp.ne.s32.totalorder %s89, %s103
    %p105 = scmp.eq.s32.totalorder %s16, 0
    %p106 = por %p104, %p105
    %s107 = ssub.s32 %s10, %s17
    %p108 = scmp.eq.s32.totalorder %s107, 0
    %s110 = sadd.s32 %s109, 1
    %s111 = scalar_select %p108, %s109, %s110
    %p114 = pneg %p108
    %p115 = scmp.eq.s32.totalorder %s10, 1
    %p116 = por %p114, %p115
    %p117 = scmp.ne.s32.totalorder %s109, %s112
    %p118 = scmp.eq.s32.totalorder %s10, 0
    %p119 = por %p117, %p118
    %p120 = scmp.ne.s32.totalorder %s109, %s112
    %p121 = scmp.eq.s32.totalorder %s15, 1
    %p122 = por %p120, %p121
    %p123 = scmp.ne.s32.totalorder %s112, %s113
    %p124 = scmp.eq.s32.totalorder %s15, 0
    %p125 = por %p123, %p124
    %p126 = scmp.ne.s32.totalorder %s112, %s113
    %p127 = scmp.eq.s32.totalorder %s16, 1
    %p128 = por %p126, %p127
    %p130 = scmp.ne.s32.totalorder %s113, %s129
    %p131 = scmp.eq.s32.totalorder %s16, 0
    %p132 = por %p130, %p131
    %p133 = scmp.le.s32.totalorder 1, %s10
    %p134 = scmp.lt.s32.totalorder %s10, 3
    %p135 = pnand %p133, %p134
    %p136 = pneg %p135
    // Predicated region
    $region9: #{segmentation_forward.8} parent=5 // pred_check
      _
    $region10: #{segmentation_forward.8} parent=5 // pred_check_branch
      %138 = sbr.rel (%p135) target = $region12
    $region11: #{segmentation_forward.8} parent=5 // pred_region
      %s139 = ssub.s32 %s10, 1
      // Predicated region
      $region13: #{segmentation_forward.8} parent=11 // pred_check
        %p140 = pneg %p57
      $region14: #{segmentation_forward.8} parent=11 // pred_check_branch
        %142 = sbr.rel (%p140) target = $region16
      $region15: #{segmentation_forward.8} parent=11 // pred_region
        _
      $region16: #{segmentation_forward.8} parent=11 // pred_fallthru
        _
      // Predicated region
      $region17: #{segmentation_forward.8} parent=11 // pred_check
        %p143 = pneg %p78
      $region18: #{segmentation_forward.8} parent=11 // pred_check_branch
        %145 = sbr.rel (%p143) target = $region20
      $region19: #{segmentation_forward.8} parent=11 // pred_region
        _
      $region20: #{segmentation_forward.8} parent=11 // pred_fallthru
        _
      // Predicated region
      $region21: #{segmentation_forward.8} parent=11 // pred_check
        %p146 = pneg %p99
      $region22: #{segmentation_forward.8} parent=11 // pred_check_branch
        %148 = sbr.rel (%p146) target = $region24
      $region23: #{segmentation_forward.8} parent=11 // pred_region
        _
      $region24: #{segmentation_forward.8} parent=11 // pred_fallthru
        _
    $region12: #{segmentation_forward.8} parent=5 // pred_fallthru
      _
    %p149 = scmp.lt.s32.totalorder %s10, 2
    // Predicated region
    $region25: #{segmentation_forward.8} parent=5 // pred_check
      %p150 = pneg %p149
    $region26: #{segmentation_forward.8} parent=5 // pred_check_branch
      %152 = sbr.rel (%p150) target = $region28
    $region27: #{segmentation_forward.8} parent=5 // pred_region
      // Predicated region
      $region29: #{segmentation_forward.8} parent=27 // pred_check
        %p153 = pneg %p30
      $region30: #{segmentation_forward.8} parent=27 // pred_check_branch
        %155 = sbr.rel (%p153) target = $region32
      $region31: #{segmentation_forward.8} parent=27 // pred_region
        %p156 = scmp.lt.s32.totalorder %s10, 1
        %s157 = scalar_select %p156, %s10, 1
        %s158 = smul.addr %s157, 2
        %s159 = scalar_lea.vmem %s0, %s158
      $region32: #{segmentation_forward.8} parent=27 // pred_fallthru
        _
    $region28: #{segmentation_forward.8} parent=5 // pred_fallthru
      _
    %p160 = scmp.le.s32.totalorder 1, %s10
    %p161 = scmp.lt.s32.totalorder %s10, 3
    %p162 = pnand %p160, %p161
    %p163 = pneg %p162
    // Predicated region
    $region33: #{segmentation_forward.8} parent=5 // pred_check
      _
    $region34: #{segmentation_forward.8} parent=5 // pred_check_branch
      %165 = sbr.rel (%p162) target = $region36
    $region35: #{segmentation_forward.8} parent=5 // pred_region
      %s166 = ssub.s32 %s10, 1
      %p167 = scmp.lt.s32.totalorder %s15, 1
      %s168 = scalar_select %p167, %s15, 1
      %s169 = smul.addr %s168, 2
      %s170 = scalar_lea.vmem %s0, %s169
      %p171 = pneg %p36
      %p172 = pneg %p33
      %p173 = pneg %p57
      %p174 = pneg %p54
      %p175 = pneg %p78
      %p176 = pneg %p75
      %p177 = pneg %p99
      %p178 = pneg %p96
      %p179 = pneg %p125
      %p180 = pneg %p122
      %p181 = scmp.lt.s32.totalorder %s15, 1
      %s182 = scalar_select %p181, %s15, 1
      %s183 = smul.addr %s182, 2
      %s184 = scalar_lea.vmem %s4, %s183
      %p185 = scmp.lt.s32.totalorder %s15, 1
      %s186 = scalar_select %p185, %s15, 1
      %s187 = smul.addr %s186, 2
      %s188 = scalar_lea.vmem %s0, %s187
      %p189 = scmp.lt.s32.totalorder %s15, 1
      %s190 = scalar_select %p189, %s15, 1
      %s191 = smul.addr %s190, 2
      %s192 = scalar_lea.vmem %s4, %s191
      %v194 = vld [vmem:[%s188] sm:$0x3]
      %v195 = vld [vmem:[%s1] sm:$0xf]
      %v196 = vld [vmem:[%s1 + $0x4] sm:$0xf]
      %v197 = vld [vmem:[%s1 + $0x8] sm:$0xf]
      %v198 = vld [vmem:[%s1 + $0xc] sm:$0xf]
      %v199 = vld [vmem:[%s1 + $0x10] sm:$0xf]
      %v200 = vld [vmem:[%s1 + $0x14] sm:$0xf]
      %v201 = vld [vmem:[%s1 + $0x18] sm:$0xf]
      %v202 = vld [vmem:[%s1 + $0x1c] sm:$0xf]
      %v211 = vunpack.c.l.b16 %v195
      %v212 = vunpack.c.l.b16 %v196
      %v213 = vunpack.c.l.b16 %v197
      %v214 = vunpack.c.l.b16 %v198
      %v215 = vunpack.c.l.b16 %v199
      %v216 = vunpack.c.l.b16 %v200
      %v217 = vunpack.c.l.b16 %v201
      %v218 = vunpack.c.l.b16 %v202
      %v219 = vpack.c.b16 %v212, %v211
      %v220 = vpack.c.b16 %v214, %v213
      %v221 = vpack.c.b16 %v216, %v215
      %v222 = vpack.c.b16 %v218, %v217
      %vm227 = vcmask 523264
      %v229 = vsel %vm227, %v194, 0
      %231 = vmatprep.subr.bf16.mxu0 0
      %232 = vmatpush1.bf16.msra.mxu0 %v219
      %233 = vmatprep.subr.bf16.mxu0 0
      %234 = vmatpush1.bf16.msra.mxu0 %v220
      %235 = vmatprep.subr.bf16.mxu0 0
      %236 = vmatpush1.bf16.msra.mxu0 %v221
      %237 = vmatprep.subr.bf16.mxu0 0
      %238 = vmatpush1.bf16.msra.mxu0 %v222
      %239 = vmatprep.subr.bf16.mxu0 0
      %240 = vmatpush1.bf16.msra.mxu0 0
      %241 = vmatprep.subr.bf16.mxu0 0
      %242 = vmatpush1.bf16.msra.mxu0 0
      %243 = vmatprep.subr.bf16.mxu0 0
      %244 = vmatpush1.bf16.msra.mxu0 0
      %245 = vmatprep.subr.bf16.mxu0 0
      %246 = vmatpush1.bf16.msra.mxu0 0
      %247 = vmatprep.subr.bf16.mxu0 0
      %248 = vmatpush1.bf16.msra.mxu0 0
      %249 = vmatprep.subr.bf16.mxu0 0
      %250 = vmatpush1.bf16.msra.mxu0 0
      %251 = vmatprep.subr.bf16.mxu0 0
      %252 = vmatpush1.bf16.msra.mxu0 0
      %253 = vmatprep.subr.bf16.mxu0 0
      %254 = vmatpush1.bf16.msra.mxu0 0
      %255 = vmatprep.subr.bf16.mxu0 0
      %256 = vmatpush1.bf16.msra.mxu0 0
      %257 = vmatprep.subr.bf16.mxu0 0
      %258 = vmatpush1.bf16.msra.mxu0 0
      %259 = vmatprep.subr.bf16.mxu0 0
      %260 = vmatpush1.bf16.msra.mxu0 0
      %261 = vmatprep.subr.bf16.mxu0 0
      %262 = vmatpush1.bf16.msra.mxu0 0
      %263 = vmatprep.mubr.bf16.mxu0 0
      %264 = vmatmul.mubr.bf16.gmra.mrb[0].mxu0 %v229
      %v265 = vpop.f32.mrb[0].mxu0
      %v266 = vadd.f32 0.0, %v265
      %v267 = vpop.f32.mrb[0].mxu0
      %v268 = vpop.f32.mrb[0].mxu0
      %v269 = vpop.f32.mrb[0].mxu0
      %270 = vdwg.mxu0
      %v271 = vld [vmem:[%s2] sm:$0x1]
      %v273 = vlaneseq
      %v274 = vshrl.u32 %v273, 7
      %v275 = vsub.s32 0, %v274
      %v276 = vrot.slane %v271, %v275
      %v278 = vmul.f32 %v266, %v276
      %v279 = vld [vmem:[%s3] sm:$0x1]
      %v281 = vlaneseq
      %v282 = vshrl.u32 %v281, 7
      %v283 = vsub.s32 0, %v282
      %v284 = vrot.slane %v279, %v283
      %v286 = vadd.f32 %v278, %v284
      %v287 = vpack.c.bf16 %v286, %v286
      %288 = vst [vmem:[%s192] sm:$0x3] %v287
      %p289 = scmp.lt.s32.totalorder %s15, 1
      %s290 = scalar_select %p289, %s15, 1
      %s291 = smul.addr %s290, 2
      %s292 = scalar_lea.vmem %s4, %s291
      // Predicated region
      $region37: #{segmentation_forward.8} parent=35 // pred_check
        %p293 = pneg %p122
      $region38: #{segmentation_forward.8} parent=35 // pred_check_branch
        %295 = sbr.rel (%p293) target = $region40
      $region39: #{segmentation_forward.8} parent=35 // pred_region
        _
      $region40: #{segmentation_forward.8} parent=35 // pred_fallthru
        _
    $region36: #{segmentation_forward.8} parent=5 // pred_fallthru
      _
    %p296 = scmp.le.s32.totalorder 2, %s10
    // Predicated region
    $region41: #{segmentation_forward.8} parent=5 // pred_check
      %p297 = pneg %p296
    $region42: #{segmentation_forward.8} parent=5 // pred_check_branch
      %299 = sbr.rel (%p297) target = $region44
    $region43: #{segmentation_forward.8} parent=5 // pred_region
      %s300 = ssub.s32 %s10, 2
      // Predicated region
      $region45: #{segmentation_forward.8} parent=43 // pred_check
        %p301 = pneg %p128
      $region46: #{segmentation_forward.8} parent=43 // pred_check_branch
        %303 = sbr.rel (%p301) target = $region48
      $region47: #{segmentation_forward.8} parent=43 // pred_region
        %p304 = scmp.lt.s32.totalorder %s16, 1
        %s305 = scalar_select %p304, %s16, 1
        %s306 = smul.addr %s305, 2
        %s307 = scalar_lea.vmem %s4, %s306
      $region48: #{segmentation_forward.8} parent=43 // pred_fallthru
        _
    $region44: #{segmentation_forward.8} parent=5 // pred_fallthru
      _
  $region6: #{segmentation_forward.8} parent=0 // loop_footer
    %s14 = sadd.s32 1, %s10
  $region7: #{segmentation_forward.8} parent=0 // loop_footer_branch
    %9 = sbr.rel target = $region3
  $region8: #{segmentation_forward.8} parent=0 // loop_exit
    _

// kernel: segmentation_forward.11
$region0: #{segmentation_forward.11}
  #allocation0 [shape = 'u32[]', space=smem, size = 0x4, offset = 0x4, fixed_abs, tag = 'smem constant byte address 0x4 - core index']
  #allocation1 [shape = 'u32[144,128]{1,0:T(1,128)}', space=vmem, size = 0x12000, scoped, tag = 'internal scratch']
  %s0 = inlined_call_operand.vmem [shape: bf16[2,4,32], index: 0, kind: input, shape index: {}]
  %s1 = inlined_call_operand.vmem [shape: bf16[1,32,128], index: 1, kind: input, shape index: {}]
  %s2 = inlined_call_operand.vmem [shape: f32[1,128], index: 2, kind: input, shape index: {}]
  %s3 = inlined_call_operand.vmem [shape: f32[1,128], index: 3, kind: input, shape index: {}]
  %s4 = inlined_call_operand.vmem [shape: bf16[2,4,128], index: 4, kind: input, shape index: {}]
  %s5 = inlined_call_operand.vmem [shape: bf16[2,4,128], index: 5, kind: output, shape index: {}]
  %s6 = sld [smem:[#allocation0]]
  $region53: #{segmentation_forward.11} parent=0
    _
  %s8 = ssub.s32 1, %s6
  %s9 = scalar_select 0, %s8, %s6
  loop: start=0, step=1, limit=4
  $region2: #{segmentation_forward.11} parent=0 // loop_pre_header
    _
  $region3: #{segmentation_forward.11} parent=0 // loop_header
    %s11 = sphi 0, %s15
    %p12 = scmp.ge.s32.totalorder %s11, 4
    %s21 = sphi 0, %s23
    %s24 = sphi 0, %s21
    %s25 = sphi 0, %s24
    %s41 = sphi 0, %s25
    %s45 = sphi 0, %s45
    %s47 = sphi 0, %s45
    %s48 = sphi 0, %s47
    %s62 = sphi 0, %s48
    %s66 = sphi 0, %s66
    %s68 = sphi 0, %s66
    %s69 = sphi 0, %s68
    %s83 = sphi 0, %s69
    %s87 = sphi 0, %s87
    %s89 = sphi 0, %s87
    %s90 = sphi 0, %s89
    %s104 = sphi 0, %s90
    %s110 = sphi 0, %s112
    %s113 = sphi 0, %s110
    %s114 = sphi 0, %s113
    %s130 = sphi 0, %s114
    %s136 = sphi 0, %s138
    %s139 = sphi 0, %s136
    %s140 = sphi 0, %s139
    %s156 = sphi 0, %s140
  $region4: #{segmentation_forward.11} parent=0 // loop_header_branch
    %14 = sbr.rel (%p12) target = $region8
  $region5: #{segmentation_forward.11} parent=0 // loop_body
    %s16 = ssub.s32 %s11, 1
    %s17 = ssub.s32 %s11, 2
    %s18 = sadd.s32 %s11, 1
    %s19 = ssub.s32 %s11, %s18
    %p20 = scmp.eq.s32.totalorder %s19, 0
    %s22 = sadd.s32 %s21, 1
    %s23 = scalar_select %p20, %s21, %s22
    %p26 = pneg %p20
    %p27 = scmp.eq.s32.totalorder %s11, 1
    %p28 = por %p26, %p27
    %p29 = scmp.ne.s32.totalorder %s21, %s24
    %p30 = scmp.eq.s32.totalorder %s11, 0
    %p31 = por %p29, %p30
    %p32 = scmp.ne.s32.totalorder %s21, %s24
    %p33 = scmp.eq.s32.totalorder %s16, 1
    %p34 = por %p32, %p33
    %p35 = scmp.ne.s32.totalorder %s24, %s25
    %p36 = scmp.eq.s32.totalorder %s16, 0
    %p37 = por %p35, %p36
    %p38 = scmp.ne.s32.totalorder %s24, %s25
    %p39 = scmp.eq.s32.totalorder %s17, 1
    %p40 = por %p38, %p39
    %p42 = scmp.ne.s32.totalorder %s25, %s41
    %p43 = scmp.eq.s32.totalorder %s17, 0
    %p44 = por %p42, %p43
    %s46 = sadd.s32 %s45, 1
    %p49 = scmp.eq.s32.totalorder %s11, 1
    %p50 = scmp.ne.s32.totalorder %s45, %s47
    %p51 = scmp.eq.s32.totalorder %s11, 0
    %p52 = por %p50, %p51
    %p53 = scmp.ne.s32.totalorder %s45, %s47
    %p54 = scmp.eq.s32.totalorder %s16, 1
    %p55 = por %p53, %p54
    %p56 = scmp.ne.s32.totalorder %s47, %s48
    %p57 = scmp.eq.s32.totalorder %s16, 0
    %p58 = por %p56, %p57
    %p59 = scmp.ne.s32.totalorder %s47, %s48
    %p60 = scmp.eq.s32.totalorder %s17, 1
    %p61 = por %p59, %p60
    %p63 = scmp.ne.s32.totalorder %s48, %s62
    %p64 = scmp.eq.s32.totalorder %s17, 0
    %p65 = por %p63, %p64
    %s67 = sadd.s32 %s66, 1
    %p70 = scmp.eq.s32.totalorder %s11, 1
    %p71 = scmp.ne.s32.totalorder %s66, %s68
    %p72 = scmp.eq.s32.totalorder %s11, 0
    %p73 = por %p71, %p72
    %p74 = scmp.ne.s32.totalorder %s66, %s68
    %p75 = scmp.eq.s32.totalorder %s16, 1
    %p76 = por %p74, %p75
    %p77 = scmp.ne.s32.totalorder %s68, %s69
    %p78 = scmp.eq.s32.totalorder %s16, 0
    %p79 = por %p77, %p78
    %p80 = scmp.ne.s32.totalorder %s68, %s69
    %p81 = scmp.eq.s32.totalorder %s17, 1
    %p82 = por %p80, %p81
    %p84 = scmp.ne.s32.totalorder %s69, %s83
    %p85 = scmp.eq.s32.totalorder %s17, 0
    %p86 = por %p84, %p85
    %s88 = sadd.s32 %s87, 1
    %p91 = scmp.eq.s32.totalorder %s11, 1
    %p92 = scmp.ne.s32.totalorder %s87, %s89
    %p93 = scmp.eq.s32.totalorder %s11, 0
    %p94 = por %p92, %p93
    %p95 = scmp.ne.s32.totalorder %s87, %s89
    %p96 = scmp.eq.s32.totalorder %s16, 1
    %p97 = por %p95, %p96
    %p98 = scmp.ne.s32.totalorder %s89, %s90
    %p99 = scmp.eq.s32.totalorder %s16, 0
    %p100 = por %p98, %p99
    %p101 = scmp.ne.s32.totalorder %s89, %s90
    %p102 = scmp.eq.s32.totalorder %s17, 1
    %p103 = por %p101, %p102
    %p105 = scmp.ne.s32.totalorder %s90, %s104
    %p106 = scmp.eq.s32.totalorder %s17, 0
    %p107 = por %p105, %p106
    %s108 = ssub.s32 %s11, %s18
    %p109 = scmp.eq.s32.totalorder %s108, 0
    %s111 = sadd.s32 %s110, 1
    %s112 = scalar_select %p109, %s110, %s111
    %p115 = pneg %p109
    %p116 = scmp.eq.s32.totalorder %s11, 1
    %p117 = por %p115, %p116
    %p118 = scmp.ne.s32.totalorder %s110, %s113
    %p119 = scmp.eq.s32.totalorder %s11, 0
    %p120 = por %p118, %p119
    %p121 = scmp.ne.s32.totalorder %s110, %s113
    %p122 = scmp.eq.s32.totalorder %s16, 1
    %p123 = por %p121, %p122
    %p124 = scmp.ne.s32.totalorder %s113, %s114
    %p125 = scmp.eq.s32.totalorder %s16, 0
    %p126 = por %p124, %p125
    %p127 = scmp.ne.s32.totalorder %s113, %s114
    %p128 = scmp.eq.s32.totalorder %s17, 1
    %p129 = por %p127, %p128
    %p131 = scmp.ne.s32.totalorder %s114, %s130
    %p132 = scmp.eq.s32.totalorder %s17, 0
    %p133 = por %p131, %p132
    %s134 = ssub.s32 %s11, %s18
    %p135 = scmp.eq.s32.totalorder %s134, 0
    %s137 = sadd.s32 %s136, 1
    %s138 = scalar_select %p135, %s136, %s137
    %p141 = pneg %p135
    %p142 = scmp.eq.s32.totalorder %s11, 1
    %p143 = por %p141, %p142
    %p144 = scmp.ne.s32.totalorder %s136, %s139
    %p145 = scmp.eq.s32.totalorder %s11, 0
    %p146 = por %p144, %p145
    %p147 = scmp.ne.s32.totalorder %s136, %s139
    %p148 = scmp.eq.s32.totalorder %s16, 1
    %p149 = por %p147, %p148
    %p150 = scmp.ne.s32.totalorder %s139, %s140
    %p151 = scmp.eq.s32.totalorder %s16, 0
    %p152 = por %p150, %p151
    %p153 = scmp.ne.s32.totalorder %s139, %s140
    %p154 = scmp.eq.s32.totalorder %s17, 1
    %p155 = por %p153, %p154
    %p157 = scmp.ne.s32.totalorder %s140, %s156
    %p158 = scmp.eq.s32.totalorder %s17, 0
    %p159 = por %p157, %p158
    %p160 = scmp.le.s32.totalorder 1, %s11
    %p161 = scmp.lt.s32.totalorder %s11, 3
    %p162 = pnand %p160, %p161
    %p163 = pneg %p162
    // Predicated region
    $region9: #{segmentation_forward.11} parent=5 // pred_check
      _
    $region10: #{segmentation_forward.11} parent=5 // pred_check_branch
      %165 = sbr.rel (%p162) target = $region12
    $region11: #{segmentation_forward.11} parent=5 // pred_region
      %s166 = ssub.s32 %s11, 1
      // Predicated region
      $region13: #{segmentation_forward.11} parent=11 // pred_check
        %p167 = pneg %p58
      $region14: #{segmentation_forward.11} parent=11 // pred_check_branch
        %169 = sbr.rel (%p167) target = $region16
      $region15: #{segmentation_forward.11} parent=11 // pred_region
        _
      $region16: #{segmentation_forward.11} parent=11 // pred_fallthru
        _
      // Predicated region
      $region17: #{segmentation_forward.11} parent=11 // pred_check
        %p170 = pneg %p79
      $region18: #{segmentation_forward.11} parent=11 // pred_check_branch
        %172 = sbr.rel (%p170) target = $region20
      $region19: #{segmentation_forward.11} parent=11 // pred_region
        _
      $region20: #{segmentation_forward.11} parent=11 // pred_fallthru
        _
      // Predicated region
      $region21: #{segmentation_forward.11} parent=11 // pred_check
        %p173 = pneg %p100
      $region22: #{segmentation_forward.11} parent=11 // pred_check_branch
        %175 = sbr.rel (%p173) target = $region24
      $region23: #{segmentation_forward.11} parent=11 // pred_region
        _
      $region24: #{segmentation_forward.11} parent=11 // pred_fallthru
        _
    $region12: #{segmentation_forward.11} parent=5 // pred_fallthru
      _
    %p176 = scmp.lt.s32.totalorder %s11, 2
    // Predicated region
    $region25: #{segmentation_forward.11} parent=5 // pred_check
      %p177 = pneg %p176
    $region26: #{segmentation_forward.11} parent=5 // pred_check_branch
      %179 = sbr.rel (%p177) target = $region28
    $region27: #{segmentation_forward.11} parent=5 // pred_region
      // Predicated region
      $region29: #{segmentation_forward.11} parent=27 // pred_check
        %p180 = pneg %p31
      $region30: #{segmentation_forward.11} parent=27 // pred_check_branch
        %182 = sbr.rel (%p180) target = $region32
      $region31: #{segmentation_forward.11} parent=27 // pred_region
        %p183 = scmp.lt.s32.totalorder %s11, 1
        %s184 = scalar_select %p183, %s11, 1
        %s185 = smul.addr %s184, 2
        %s186 = scalar_lea.vmem %s0, %s185
      $region32: #{segmentation_forward.11} parent=27 // pred_fallthru
        _
      // Predicated region
      $region33: #{segmentation_forward.11} parent=27 // pred_check
        %p187 = pneg %p120
      $region34: #{segmentation_forward.11} parent=27 // pred_check_branch
        %189 = sbr.rel (%p187) target = $region36
      $region35: #{segmentation_forward.11} parent=27 // pred_region
        %p190 = scmp.lt.s32.totalorder %s11, 1
        %s191 = scalar_select %p190, %s11, 1
        %s192 = smul.addr %s191, 2
        %s193 = scalar_lea.vmem %s4, %s192
      $region36: #{segmentation_forward.11} parent=27 // pred_fallthru
        _
    $region28: #{segmentation_forward.11} parent=5 // pred_fallthru
      _
    %p194 = scmp.le.s32.totalorder 1, %s11
    %p195 = scmp.lt.s32.totalorder %s11, 3
    %p196 = pnand %p194, %p195
    %p197 = pneg %p196
    // Predicated region
    $region37: #{segmentation_forward.11} parent=5 // pred_check
      _
    $region38: #{segmentation_forward.11} parent=5 // pred_check_branch
      %199 = sbr.rel (%p196) target = $region40
    $region39: #{segmentation_forward.11} parent=5 // pred_region
      %s200 = ssub.s32 %s11, 1
      %p201 = scmp.lt.s32.totalorder %s16, 1
      %s202 = scalar_select %p201, %s16, 1
      %s203 = smul.addr %s202, 2
      %s204 = scalar_lea.vmem %s0, %s203
      %p205 = pneg %p37
      %p206 = pneg %p34
      %p207 = pneg %p58
      %p208 = pneg %p55
      %p209 = pneg %p79
      %p210 = pneg %p76
      %p211 = pneg %p100
      %p212 = pneg %p97
      %p213 = scmp.lt.s32.totalorder %s16, 1
      %s214 = scalar_select %p213, %s16, 1
      %s215 = smul.addr %s214, 2
      %s216 = scalar_lea.vmem %s4, %s215
      %p217 = pneg %p126
      %p218 = pneg %p123
      %p219 = pneg %p152
      %p220 = pneg %p149
      %p221 = scmp.lt.s32.totalorder %s16, 1
      %s222 = scalar_select %p221, %s16, 1
      %s223 = smul.addr %s222, 2
      %s224 = scalar_lea.vmem %s5, %s223
      %p225 = scmp.lt.s32.totalorder %s16, 1
      %s226 = scalar_select %p225, %s16, 1
      %s227 = smul.addr %s226, 2
      %s228 = scalar_lea.vmem %s0, %s227
      %p229 = scmp.lt.s32.totalorder %s16, 1
      %s230 = scalar_select %p229, %s16, 1
      %s231 = smul.addr %s230, 2
      %s232 = scalar_lea.vmem %s4, %s231
      %p233 = scmp.lt.s32.totalorder %s16, 1
      %s234 = scalar_select %p233, %s16, 1
      %s235 = smul.addr %s234, 2
      %s236 = scalar_lea.vmem %s5, %s235
      %v238 = vld [vmem:[%s228] sm:$0x3]
      %v239 = vld [vmem:[%s1] sm:$0xf]
      %v240 = vld [vmem:[%s1 + $0x4] sm:$0xf]
      %v241 = vld [vmem:[%s1 + $0x8] sm:$0xf]
      %v242 = vld [vmem:[%s1 + $0xc] sm:$0xf]
      %v247 = vunpack.c.l.b16 %v239
      %v248 = vunpack.c.l.b16 %v240
      %v249 = vunpack.c.l.b16 %v241
      %v250 = vunpack.c.l.b16 %v242
      %v251 = vpack.c.b16 %v248, %v247
      %v252 = vpack.c.b16 %v250, %v249
      %vm255 = vcmask 261120
      %v257 = vsel %vm255, %v238, 0
      %259 = vmatprep.subr.bf16.mxu0 0
      %260 = vmatpush1.bf16.msra.mxu0 %v251
      %261 = vmatprep.subr.bf16.mxu0 0
      %262 = vmatpush1.bf16.msra.mxu0 %v252
      %263 = vmatprep.subr.bf16.mxu0 0
      %264 = vmatpush1.bf16.msra.mxu0 0
      %265 = vmatprep.subr.bf16.mxu0 0
      %266 = vmatpush1.bf16.msra.mxu0 0
      %267 = vmatprep.subr.bf16.mxu0 0
      %268 = vmatpush1.bf16.msra.mxu0 0
      %269 = vmatprep.subr.bf16.mxu0 0
      %270 = vmatpush1.bf16.msra.mxu0 0
      %271 = vmatprep.subr.bf16.mxu0 0
      %272 = vmatpush1.bf16.msra.mxu0 0
      %273 = vmatprep.subr.bf16.mxu0 0
      %274 = vmatpush1.bf16.msra.mxu0 0
      %275 = vmatprep.subr.bf16.mxu0 0
      %276 = vmatpush1.bf16.msra.mxu0 0
      %277 = vmatprep.subr.bf16.mxu0 0
      %278 = vmatpush1.bf16.msra.mxu0 0
      %279 = vmatprep.subr.bf16.mxu0 0
      %280 = vmatpush1.bf16.msra.mxu0 0
      %281 = vmatprep.subr.bf16.mxu0 0
      %282 = vmatpush1.bf16.msra.mxu0 0
      %283 = vmatprep.subr.bf16.mxu0 0
      %284 = vmatpush1.bf16.msra.mxu0 0
      %285 = vmatprep.subr.bf16.mxu0 0
      %286 = vmatpush1.bf16.msra.mxu0 0
      %287 = vmatprep.subr.bf16.mxu0 0
      %288 = vmatpush1.bf16.msra.mxu0 0
      %289 = vmatprep.subr.bf16.mxu0 0
      %290 = vmatpush1.bf16.msra.mxu0 0
      %291 = vmatprep.mubr.bf16.mxu0 0
      %292 = vmatmul.mubr.bf16.gmra.mrb[0].mxu0 %v257
      %v293 = vpop.f32.mrb[0].mxu0
      %v294 = vadd.f32 0.0, %v293
      %v295 = vpop.f32.mrb[0].mxu0
      %v296 = vpop.f32.mrb[0].mxu0
      %v297 = vpop.f32.mrb[0].mxu0
      %298 = vdwg.mxu0
      %v299 = vld [vmem:[%s2] sm:$0x1]
      %v301 = vlaneseq
      %v302 = vshrl.u32 %v301, 7
      %v303 = vsub.s32 0, %v302
      %v304 = vrot.slane %v299, %v303
      %v306 = vmul.f32 %v294, %v304
      %v307 = vld [vmem:[%s3] sm:$0x1]
      %v309 = vlaneseq
      %v310 = vshrl.u32 %v309, 7
      %v311 = vsub.s32 0, %v310
      %v312 = vrot.slane %v307, %v311
      %v314 = vadd.f32 %v306, %v312
      %v315 = vld [vmem:[%s232] sm:$0x3]
      %v316 = vunpack.c.l.bf16 %v315
      %v317 = vadd.f32 %v314, %v316
      %v318 = vmax.f32 %v317, 0.0
      %v319 = vpack.c.bf16 %v318, %v318
      %320 = vst [vmem:[%s236] sm:$0x3] %v319
      %p321 = scmp.lt.s32.totalorder %s16, 1
      %s322 = scalar_select %p321, %s16, 1
      %s323 = smul.addr %s322, 2
      %s324 = scalar_lea.vmem %s5, %s323
      // Predicated region
      $region41: #{segmentation_forward.11} parent=39 // pred_check
        %p325 = pneg %p149
      $region42: #{segmentation_forward.11} parent=39 // pred_check_branch
        %327 = sbr.rel (%p325) target = $region44
      $region43: #{segmentation_forward.11} parent=39 // pred_region
        _
      $region44: #{segmentation_forward.11} parent=39 // pred_fallthru
        _
    $region40: #{segmentation_forward.11} parent=5 // pred_fallthru
      _
    %p328 = scmp.le.s32.totalorder 2, %s11
    // Predicated region
    $region45: #{segmentation_forward.11} parent=5 // pred_check
      %p329 = pneg %p328
    $region46: #{segmentation_forward.11} parent=5 // pred_check_branch
      %331 = sbr.rel (%p329) target = $region48
    $region47: #{segmentation_forward.11} parent=5 // pred_region
      %s332 = ssub.s32 %s11, 2
      // Predicated region
      $region49: #{segmentation_forward.11} parent=47 // pred_check
        %p333 = pneg %p155
      $region50: #{segmentation_forward.11} parent=47 // pred_check_branch
        %335 = sbr.rel (%p333) target = $region52
      $region51: #{segmentation_forward.11} parent=47 // pred_region
        %p336 = scmp.lt.s32.totalorder %s17, 1
        %s337 = scalar_select %p336, %s17, 1
        %s338 = smul.addr %s337, 2
        %s339 = scalar_lea.vmem %s5, %s338
      $region52: #{segmentation_forward.11} parent=47 // pred_fallthru
        _
    $region48: #{segmentation_forward.11} parent=5 // pred_fallthru
      _
  $region6: #{segmentation_forward.11} parent=0 // loop_footer
    %s15 = sadd.s32 1, %s11
  $region7: #{segmentation_forward.11} parent=0 // loop_footer_branch
    %10 = sbr.rel target = $region3
  $region8: #{segmentation_forward.11} parent=0 // loop_exit
    _

// kernel: segmentation_forward.10
$region0: #{segmentation_forward.10}
  #allocation0 [shape = 'u32[]', space=smem, size = 0x4, offset = 0x4, fixed_abs, tag = 'smem constant byte address 0x4 - core index']
  #allocation1 [shape = 'u32[144,128]{1,0:T(1,128)}', space=vmem, size = 0x12000, scoped, tag = 'internal scratch']
  %s0 = inlined_call_operand.vmem [shape: bf16[2,6,48], index: 0, kind: input, shape index: {}]
  %s1 = inlined_call_operand.vmem [shape: bf16[9,32,32], index: 1, kind: input, shape index: {}]
  %s2 = inlined_call_operand.vmem [shape: f32[1,32], index: 2, kind: input, shape index: {}]
  %s3 = inlined_call_operand.vmem [shape: f32[1,32], index: 3, kind: input, shape index: {}]
  %s4 = inlined_call_operand.vmem [shape: bf16[2,4,32], index: 4, kind: output, shape index: {}]
  %s5 = sld [smem:[#allocation0]]
  $region49: #{segmentation_forward.10} parent=0
    _
  %s7 = ssub.s32 1, %s5
  %s8 = scalar_select 0, %s7, %s5
  loop: start=0, step=1, limit=4
  $region2: #{segmentation_forward.10} parent=0 // loop_pre_header
    _
  $region3: #{segmentation_forward.10} parent=0 // loop_header
    %s10 = sphi 0, %s14
    %p11 = scmp.ge.s32.totalorder %s10, 4
    %s20 = sphi 0, %s22
    %s23 = sphi 0, %s20
    %s24 = sphi 0, %s23
    %s40 = sphi 0, %s24
    %s44 = sphi 0, %s44
    %s46 = sphi 0, %s44
    %s47 = sphi 0, %s46
    %s61 = sphi 0, %s47
    %s65 = sphi 0, %s65
    %s67 = sphi 0, %s65
    %s68 = sphi 0, %s67
    %s82 = sphi 0, %s68
    %s86 = sphi 0, %s86
    %s88 = sphi 0, %s86
    %s89 = sphi 0, %s88
    %s103 = sphi 0, %s89
    %s109 = sphi 0, %s111
    %s112 = sphi 0, %s109
    %s113 = sphi 0, %s112
    %s129 = sphi 0, %s113
  $region4: #{segmentation_forward.10} parent=0 // loop_header_branch
    %13 = sbr.rel (%p11) target = $region8
  $region5: #{segmentation_forward.10} parent=0 // loop_body
    %s15 = ssub.s32 %s10, 1
    %s16 = ssub.s32 %s10, 2
    %s17 = sadd.s32 %s10, 1
    %s18 = ssub.s32 %s10, %s17
    %p19 = scmp.eq.s32.totalorder %s18, 0
    %s21 = sadd.s32 %s20, 1
    %s22 = scalar_select %p19, %s20, %s21
    %p25 = pneg %p19
    %p26 = scmp.eq.s32.totalorder %s10, 1
    %p27 = por %p25, %p26
    %p28 = scmp.ne.s32.totalorder %s20, %s23
    %p29 = scmp.eq.s32.totalorder %s10, 0
    %p30 = por %p28, %p29
    %p31 = scmp.ne.s32.totalorder %s20, %s23
    %p32 = scmp.eq.s32.totalorder %s15, 1
    %p33 = por %p31, %p32
    %p34 = scmp.ne.s32.totalorder %s23, %s24
    %p35 = scmp.eq.s32.totalorder %s15, 0
    %p36 = por %p34, %p35
    %p37 = scmp.ne.s32.totalorder %s23, %s24
    %p38 = scmp.eq.s32.totalorder %s16, 1
    %p39 = por %p37, %p38
    %p41 = scmp.ne.s32.totalorder %s24, %s40
    %p42 = scmp.eq.s32.totalorder %s16, 0
    %p43 = por %p41, %p42
    %s45 = sadd.s32 %s44, 1
    %p48 = scmp.eq.s32.totalorder %s10, 1
    %p49 = scmp.ne.s32.totalorder %s44, %s46
    %p50 = scmp.eq.s32.totalorder %s10, 0
    %p51 = por %p49, %p50
    %p52 = scmp.ne.s32.totalorder %s44, %s46
    %p53 = scmp.eq.s32.totalorder %s15, 1
    %p54 = por %p52, %p53
    %p55 = scmp.ne.s32.totalorder %s46, %s47
    %p56 = scmp.eq.s32.totalorder %s15, 0
    %p57 = por %p55, %p56
    %p58 = scmp.ne.s32.totalorder %s46, %s47
    %p59 = scmp.eq.s32.totalorder %s16, 1
    %p60 = por %p58, %p59
    %p62 = scmp.ne.s32.totalorder %s47, %s61
    %p63 = scmp.eq.s32.totalorder %s16, 0
    %p64 = por %p62, %p63
    %s66 = sadd.s32 %s65, 1
    %p69 = scmp.eq.s32.totalorder %s10, 1
    %p70 = scmp.ne.s32.totalorder %s65, %s67
    %p71 = scmp.eq.s32.totalorder %s10, 0
    %p72 = por %p70, %p71
    %p73 = scmp.ne.s32.totalorder %s65, %s67
    %p74 = scmp.eq.s32.totalorder %s15, 1
    %p75 = por %p73, %p74
    %p76 = scmp.ne.s32.totalorder %s67, %s68
    %p77 = scmp.eq.s32.totalorder %s15, 0
    %p78 = por %p76, %p77
    %p79 = scmp.ne.s32.totalorder %s67, %s68
    %p80 = scmp.eq.s32.totalorder %s16, 1
    %p81 = por %p79, %p80
    %p83 = scmp.ne.s32.totalorder %s68, %s82
    %p84 = scmp.eq.s32.totalorder %s16, 0
    %p85 = por %p83, %p84
    %s87 = sadd.s32 %s86, 1
    %p90 = scmp.eq.s32.totalorder %s10, 1
    %p91 = scmp.ne.s32.totalorder %s86, %s88
    %p92 = scmp.eq.s32.totalorder %s10, 0
    %p93 = por %p91, %p92
    %p94 = scmp.ne.s32.totalorder %s86, %s88
    %p95 = scmp.eq.s32.totalorder %s15, 1
    %p96 = por %p94, %p95
    %p97 = scmp.ne.s32.totalorder %s88, %s89
    %p98 = scmp.eq.s32.totalorder %s15, 0
    %p99 = por %p97, %p98
    %p100 = scmp.ne.s32.totalorder %s88, %s89
    %p101 = scmp.eq.s32.totalorder %s16, 1
    %p102 = por %p100, %p101
    %p104 = scmp.ne.s32.totalorder %s89, %s103
    %p105 = scmp.eq.s32.totalorder %s16, 0
    %p106 = por %p104, %p105
    %s107 = ssub.s32 %s10, %s17
    %p108 = scmp.eq.s32.totalorder %s107, 0
    %s110 = sadd.s32 %s109, 1
    %s111 = scalar_select %p108, %s109, %s110
    %p114 = pneg %p108
    %p115 = scmp.eq.s32.totalorder %s10, 1
    %p116 = por %p114, %p115
    %p117 = scmp.ne.s32.totalorder %s109, %s112
    %p118 = scmp.eq.s32.totalorder %s10, 0
    %p119 = por %p117, %p118
    %p120 = scmp.ne.s32.totalorder %s109, %s112
    %p121 = scmp.eq.s32.totalorder %s15, 1
    %p122 = por %p120, %p121
    %p123 = scmp.ne.s32.totalorder %s112, %s113
    %p124 = scmp.eq.s32.totalorder %s15, 0
    %p125 = por %p123, %p124
    %p126 = scmp.ne.s32.totalorder %s112, %s113
    %p127 = scmp.eq.s32.totalorder %s16, 1
    %p128 = por %p126, %p127
    %p130 = scmp.ne.s32.totalorder %s113, %s129
    %p131 = scmp.eq.s32.totalorder %s16, 0
    %p132 = por %p130, %p131
    %p133 = scmp.le.s32.totalorder 1, %s10
    %p134 = scmp.lt.s32.totalorder %s10, 3
    %p135 = pnand %p133, %p134
    %p136 = pneg %p135
    // Predicated region
    $region9: #{segmentation_forward.10} parent=5 // pred_check
      _
    $region10: #{segmentation_forward.10} parent=5 // pred_check_branch
      %138 = sbr.rel (%p135) target = $region12
    $region11: #{segmentation_forward.10} parent=5 // pred_region
      %s139 = ssub.s32 %s10, 1
      // Predicated region
      $region13: #{segmentation_forward.10} parent=11 // pred_check
        %p140 = pneg %p57
      $region14: #{segmentation_forward.10} parent=11 // pred_check_branch
        %142 = sbr.rel (%p140) target = $region16
      $region15: #{segmentation_forward.10} parent=11 // pred_region
        _
      $region16: #{segmentation_forward.10} parent=11 // pred_fallthru
        _
      // Predicated region
      $region17: #{segmentation_forward.10} parent=11 // pred_check
        %p143 = pneg %p78
      $region18: #{segmentation_forward.10} parent=11 // pred_check_branch
        %145 = sbr.rel (%p143) target = $region20
      $region19: #{segmentation_forward.10} parent=11 // pred_region
        _
      $region20: #{segmentation_forward.10} parent=11 // pred_fallthru
        _
      // Predicated region
      $region21: #{segmentation_forward.10} parent=11 // pred_check
        %p146 = pneg %p99
      $region22: #{segmentation_forward.10} parent=11 // pred_check_branch
        %148 = sbr.rel (%p146) target = $region24
      $region23: #{segmentation_forward.10} parent=11 // pred_region
        _
      $region24: #{segmentation_forward.10} parent=11 // pred_fallthru
        _
    $region12: #{segmentation_forward.10} parent=5 // pred_fallthru
      _
    %p149 = scmp.lt.s32.totalorder %s10, 2
    // Predicated region
    $region25: #{segmentation_forward.10} parent=5 // pred_check
      %p150 = pneg %p149
    $region26: #{segmentation_forward.10} parent=5 // pred_check_branch
      %152 = sbr.rel (%p150) target = $region28
    $region27: #{segmentation_forward.10} parent=5 // pred_region
      // Predicated region
      $region29: #{segmentation_forward.10} parent=27 // pred_check
        %p153 = pneg %p30
      $region30: #{segmentation_forward.10} parent=27 // pred_check_branch
        %155 = sbr.rel (%p153) target = $region32
      $region31: #{segmentation_forward.10} parent=27 // pred_region
        %p156 = scmp.lt.s32.totalorder %s10, 1
        %s157 = scalar_select %p156, %s10, 1
        %s158 = smul.addr %s157, 4
        %s159 = scalar_lea.vmem %s0, %s158
      $region32: #{segmentation_forward.10} parent=27 // pred_fallthru
        _
    $region28: #{segmentation_forward.10} parent=5 // pred_fallthru
      _
    %p160 = scmp.le.s32.totalorder 1, %s10
    %p161 = scmp.lt.s32.totalorder %s10, 3
    %p162 = pnand %p160, %p161
    %p163 = pneg %p162
    // Predicated region
    $region33: #{segmentation_forward.10} parent=5 // pred_check
      _
    $region34: #{segmentation_forward.10} parent=5 // pred_check_branch
      %165 = sbr.rel (%p162) target = $region36
    $region35: #{segmentation_forward.10} parent=5 // pred_region
      %s166 = ssub.s32 %s10, 1
      %p167 = scmp.lt.s32.totalorder %s15, 1
      %s168 = scalar_select %p167, %s15, 1
      %s169 = smul.addr %s168, 4
      %s170 = scalar_lea.vmem %s0, %s169
      %p171 = pneg %p36
      %p172 = pneg %p33
      %p173 = pneg %p57
      %p174 = pneg %p54
      %p175 = pneg %p78
      %p176 = pneg %p75
      %p177 = pneg %p99
      %p178 = pneg %p96
      %p179 = pneg %p125
      %p180 = pneg %p122
      %p181 = scmp.lt.s32.totalorder %s15, 1
      %s182 = scalar_select %p181, %s15, 1
      %s183 = smul.addr %s182, 2
      %s184 = scalar_lea.vmem %s4, %s183
      %p185 = scmp.lt.s32.totalorder %s15, 1
      %s186 = scalar_select %p185, %s15, 1
      %s187 = smul.addr %s186, 4
      %s188 = scalar_lea.vmem %s0, %s187
      %p189 = scmp.lt.s32.totalorder %s15, 1
      %s190 = scalar_select %p189, %s15, 1
      %s191 = smul.addr %s190, 2
      %s192 = scalar_lea.vmem %s4, %s191
      %v194 = vld [vmem:[%s188] sm:$0x7]
      %v195 = vunpack.c.l.bf16 %v194
      %v196 = vpack.c.bf16 %v195, %v195
      %v197 = vld [vmem:[%s1] sm:$0xf]
      %v198 = vld [vmem:[%s1 + $0x4] sm:$0xf]
      %v199 = vld [vmem:[%s1 + $0x8] sm:$0xf]
      %v200 = vld [vmem:[%s1 + $0xc] sm:$0xf]
      %s201 = scalar_lea.vmem %s1, 16
      %v202 = vld [vmem:[%s201] sm:$0xf]
      %v203 = vld [vmem:[%s201 + $0x4] sm:$0xf]
      %v204 = vld [vmem:[%s201 + $0x8] sm:$0xf]
      %v205 = vld [vmem:[%s201 + $0xc] sm:$0xf]
      %207 = vrot.lane.b32.xlu0 %v196, 120
      %v208 = vpop.permute.xlu0 %207
      %v213 = vunpack.c.l.b16 %v202
      %v214 = vunpack.c.l.b16 %v203
      %v215 = vunpack.c.l.b16 %v204
      %v216 = vunpack.c.l.b16 %v205
      %v217 = vpack.c.b16 %v214, %v213
      %v218 = vpack.c.b16 %v216, %v215
      %vm221 = vcmask 261120
      %v223 = vsel %vm221, %v208, 0
      %225 = vmatprep.subr.bf16.mxu0 0
      %226 = vmatpush1.bf16.msra.mxu0 %v217
      %227 = vmatprep.subr.bf16.mxu0 0
      %228 = vmatpush1.bf16.msra.mxu0 %v218
      %229 = vmatprep.subr.bf16.mxu0 0
      %230 = vmatpush1.bf16.msra.mxu0 0
      %231 = vmatprep.subr.bf16.mxu0 0
      %232 = vmatpush1.bf16.msra.mxu0 0
      %233 = vmatprep.subr.bf16.mxu0 0
      %234 = vmatpush1.bf16.msra.mxu0 0
      %235 = vmatprep.subr.bf16.mxu0 0
      %236 = vmatpush1.bf16.msra.mxu0 0
      %237 = vmatprep.subr.bf16.mxu0 0
      %238 = vmatpush1.bf16.msra.mxu0 0
      %239 = vmatprep.subr.bf16.mxu0 0
      %240 = vmatpush1.bf16.msra.mxu0 0
      %241 = vmatprep.subr.bf16.mxu0 0
      %242 = vmatpush1.bf16.msra.mxu0 0
      %243 = vmatprep.subr.bf16.mxu0 0
      %244 = vmatpush1.bf16.msra.mxu0 0
      %245 = vmatprep.subr.bf16.mxu0 0
      %246 = vmatpush1.bf16.msra.mxu0 0
      %247 = vmatprep.subr.bf16.mxu0 0
      %248 = vmatpush1.bf16.msra.mxu0 0
      %249 = vmatprep.subr.bf16.mxu0 0
      %250 = vmatpush1.bf16.msra.mxu0 0
      %251 = vmatprep.subr.bf16.mxu0 0
      %252 = vmatpush1.bf16.msra.mxu0 0
      %253 = vmatprep.subr.bf16.mxu0 0
      %254 = vmatpush1.bf16.msra.mxu0 0
      %255 = vmatprep.subr.bf16.mxu0 0
      %256 = vmatpush1.bf16.msra.mxu0 0
      %257 = vmatprep.mubr.bf16.mxu0 0
      %258 = vmatmul.mubr.bf16.gmra.mrb[0].mxu0 %v223
      %v259 = vpop.f32.mrb[0].mxu0
      %v260 = vadd.f32 0.0, %v259
      %v261 = vpop.f32.mrb[0].mxu0
      %v262 = vpop.f32.mrb[0].mxu0
      %v263 = vpop.f32.mrb[0].mxu0
      %264 = vdwg.mxu0
      %v269 = vunpack.c.l.b16 %v197
      %v270 = vunpack.c.l.b16 %v198
      %v271 = vunpack.c.l.b16 %v199
      %v272 = vunpack.c.l.b16 %v200
      %v273 = vpack.c.b16 %v270, %v269
      %v274 = vpack.c.b16 %v272, %v271
      %v278 = vsel %vm221, %v196, 0
      %280 = vmatprep.subr.bf16.mxu0 0
      %281 = vmatpush1.bf16.msra.mxu0 %v273
      %282 = vmatprep.subr.bf16.mxu0 0
      %283 = vmatpush1.bf16.msra.mxu0 %v274
      %284 = vmatprep.subr.bf16.mxu0 0
      %285 = vmatpush1.bf16.msra.mxu0 0
      %286 = vmatprep.subr.bf16.mxu0 0
      %287 = vmatpush1.bf16.msra.mxu0 0
      %288 = vmatprep.subr.bf16.mxu0 0
      %289 = vmatpush1.bf16.msra.mxu0 0
      %290 = vmatprep.subr.bf16.mxu0 0
      %291 = vmatpush1.bf16.msra.mxu0 0
      %292 = vmatprep.subr.bf16.mxu0 0
      %293 = vmatpush1.bf16.msra.mxu0 0
      %294 = vmatprep.subr.bf16.mxu0 0
      %295 = vmatpush1.bf16.msra.mxu0 0
      %296 = vmatprep.subr.bf16.mxu0 0
      %297 = vmatpush1.bf16.msra.mxu0 0
      %298 = vmatprep.subr.bf16.mxu0 0
      %299 = vmatpush1.bf16.msra.mxu0 0
      %300 = vmatprep.subr.bf16.mxu0 0
      %301 = vmatpush1.bf16.msra.mxu0 0
      %302 = vmatprep.subr.bf16.mxu0 0
      %303 = vmatpush1.bf16.msra.mxu0 0
      %304 = vmatprep.subr.bf16.mxu0 0
      %305 = vmatpush1.bf16.msra.mxu0 0
      %306 = vmatprep.subr.bf16.mxu0 0
      %307 = vmatpush1.bf16.msra.mxu0 0
      %308 = vmatprep.subr.bf16.mxu0 0
      %309 = vmatpush1.bf16.msra.mxu0 0
      %310 = vmatprep.subr.bf16.mxu0 0
      %311 = vmatpush1.bf16.msra.mxu0 0
      %312 = vmatprep.mubr.bf16.mxu0 0
      %313 = vmatmul.mubr.bf16.gmra.mrb[0].mxu0 %v278
      %v314 = vpop.f32.mrb[0].mxu0
      %v315 = vadd.f32 %v260, %v314
      %v316 = vpop.f32.mrb[0].mxu0
      %v317 = vpop.f32.mrb[0].mxu0
      %v318 = vpop.f32.mrb[0].mxu0
      %319 = vdwg.mxu0
      %s320 = scalar_lea.vmem %s1, 32
      %v321 = vld [vmem:[%s320] sm:$0xf]
      %v322 = vld [vmem:[%s320 + $0x4] sm:$0xf]
      %v323 = vld [vmem:[%s320 + $0x8] sm:$0xf]
      %v324 = vld [vmem:[%s320 + $0xc] sm:$0xf]
      %325 = vrot.lane.b32.xlu0 %v196, 112
      %v326 = vpop.permute.xlu0 %325
      %v331 = vunpack.c.l.b16 %v321
      %v332 = vunpack.c.l.b16 %v322
      %v333 = vunpack.c.l.b16 %v323
      %v334 = vunpack.c.l.b16 %v324
      %v335 = vpack.c.b16 %v332, %v331
      %v336 = vpack.c.b16 %v334, %v333
      %v340 = vsel %vm221, %v326, 0
      %342 = vmatprep.subr.bf16.mxu0 0
      %343 = vmatpush1.bf16.msra.mxu0 %v335
      %344 = vmatprep.subr.bf16.mxu0 0
      %345 = vmatpush1.bf16.msra.mxu0 %v336
      %346 = vmatprep.subr.bf16.mxu0 0
      %347 = vmatpush1.bf16.msra.mxu0 0
      %348 = vmatprep.subr.bf16.mxu0 0
      %349 = vmatpush1.bf16.msra.mxu0 0
      %350 = vmatprep.subr.bf16.mxu0 0
      %351 = vmatpush1.bf16.msra.mxu0 0
      %352 = vmatprep.subr.bf16.mxu0 0
      %353 = vmatpush1.bf16.msra.mxu0 0
      %354 = vmatprep.subr.bf16.mxu0 0
      %355 = vmatpush1.bf16.msra.mxu0 0
      %356 = vmatprep.subr.bf16.mxu0 0
      %357 = vmatpush1.bf16.msra.mxu0 0
      %358 = vmatprep.subr.bf16.mxu0 0
      %359 = vmatpush1.bf16.msra.mxu0 0
      %360 = vmatprep.subr.bf16.mxu0 0
      %361 = vmatpush1.bf16.msra.mxu0 0
      %362 = vmatprep.subr.bf16.mxu0 0
      %363 = vmatpush1.bf16.msra.mxu0 0
      %364 = vmatprep.subr.bf16.mxu0 0
      %365 = vmatpush1.bf16.msra.mxu0 0
      %366 = vmatprep.subr.bf16.mxu0 0
      %367 = vmatpush1.bf16.msra.mxu0 0
      %368 = vmatprep.subr.bf16.mxu0 0
      %369 = vmatpush1.bf16.msra.mxu0 0
      %370 = vmatprep.subr.bf16.mxu0 0
      %371 = vmatpush1.bf16.msra.mxu0 0
      %372 = vmatprep.subr.bf16.mxu0 0
      %373 = vmatpush1.bf16.msra.mxu0 0
      %374 = vmatprep.mubr.bf16.mxu0 0
      %375 = vmatmul.mubr.bf16.gmra.mrb[0].mxu0 %v340
      %v376 = vpop.f32.mrb[0].mxu0
      %v377 = vadd.f32 0.0, %v376
      %v378 = vpop.f32.mrb[0].mxu0
      %v379 = vpop.f32.mrb[0].mxu0
      %v380 = vpop.f32.mrb[0].mxu0
      %381 = vdwg.mxu0
      %v382 = vadd.f32 %v315, %v377
      %s383 = scalar_lea.vmem %s1, 48
      %v384 = vld [vmem:[%s383] sm:$0xf]
      %v385 = vld [vmem:[%s383 + $0x4] sm:$0xf]
      %v386 = vld [vmem:[%s383 + $0x8] sm:$0xf]
      %v387 = vld [vmem:[%s383 + $0xc] sm:$0xf]
      %v388 = vshrl.u32 %v196, 16
      %v390 = vshll.u32 %v196, 16
      %v392 = vrot.slane %v390, 1
      %v393 = vor.u32 %v388, %v392
      %v398 = vunpack.c.l.b16 %v384
      %v399 = vunpack.c.l.b16 %v385
      %v400 = vunpack.c.l.b16 %v386
      %v401 = vunpack.c.l.b16 %v387
      %v402 = vpack.c.b16 %v399, %v398
      %v403 = vpack.c.b16 %v401, %v400
      %v407 = vsel %vm221, %v393, 0
      %409 = vmatprep.subr.bf16.mxu0 0
      %410 = vmatpush1.bf16.msra.mxu0 %v402
      %411 = vmatprep.subr.bf16.mxu0 0
      %412 = vmatpush1.bf16.msra.mxu0 %v403
      %413 = vmatprep.subr.bf16.mxu0 0
      %414 = vmatpush1.bf16.msra.mxu0 0
      %415 = vmatprep.subr.bf16.mxu0 0
      %416 = vmatpush1.bf16.msra.mxu0 0
      %417 = vmatprep.subr.bf16.mxu0 0
      %418 = vmatpush1.bf16.msra.mxu0 0
      %419 = vmatprep.subr.bf16.mxu0 0
      %420 = vmatpush1.bf16.msra.mxu0 0
      %421 = vmatprep.subr.bf16.mxu0 0
      %422 = vmatpush1.bf16.msra.mxu0 0
      %423 = vmatprep.subr.bf16.mxu0 0
      %424 = vmatpush1.bf16.msra.mxu0 0
      %425 = vmatprep.subr.bf16.mxu0 0
      %426 = vmatpush1.bf16.msra.mxu0 0
      %427 = vmatprep.subr.bf16.mxu0 0
      %428 = vmatpush1.bf16.msra.mxu0 0
      %429 = vmatprep.subr.bf16.mxu0 0
      %430 = vmatpush1.bf16.msra.mxu0 0
      %431 = vmatprep.subr.bf16.mxu0 0
      %432 = vmatpush1.bf16.msra.mxu0 0
      %433 = vmatprep.subr.bf16.mxu0 0
      %434 = vmatpush1.bf16.msra.mxu0 0
      %435 = vmatprep.subr.bf16.mxu0 0
      %436 = vmatpush1.bf16.msra.mxu0 0
      %437 = vmatprep.subr.bf16.mxu0 0
      %438 = vmatpush1.bf16.msra.mxu0 0
      %439 = vmatprep.subr.bf16.mxu0 0
      %440 = vmatpush1.bf16.msra.mxu0 0
      %441 = vmatprep.mubr.bf16.mxu0 0
      %442 = vmatmul.mubr.bf16.gmra.mrb[0].mxu0 %v407
      %v443 = vpop.f32.mrb[0].mxu0
      %v444 = vadd.f32 0.0, %v443
      %v445 = vpop.f32.mrb[0].mxu0
      %v446 = vpop.f32.mrb[0].mxu0
      %v447 = vpop.f32.mrb[0].mxu0
      %448 = vdwg.mxu0
      %v449 = vadd.f32 %v382, %v444
      %s450 = scalar_lea.vmem %s1, 64
      %v451 = vld [vmem:[%s450] sm:$0xf]
      %v452 = vld [vmem:[%s450 + $0x4] sm:$0xf]
      %v453 = vld [vmem:[%s450 + $0x8] sm:$0xf]
      %v454 = vld [vmem:[%s450 + $0xc] sm:$0xf]
      %455 = vrot.lane.b32.xlu0 %v393, 120
      %v456 = vpop.permute.xlu0 %455
      %v461 = vunpack.c.l.b16 %v451
      %v462 = vunpack.c.l.b16 %v452
      %v463 = vunpack.c.l.b16 %v453
      %v464 = vunpack.c.l.b16 %v454
      %v465 = vpack.c.b16 %v462, %v461
      %v466 = vpack.c.b16 %v464, %v463
      %v470 = vsel %vm221, %v456, 0
      %472 = vmatprep.subr.bf16.mxu0 0
      %473 = vmatpush1.bf16.msra.mxu0 %v465
      %474 = vmatprep.subr.bf16.mxu0 0
      %475 = vmatpush1.bf16.msra.mxu0 %v466
      %476 = vmatprep.subr.bf16.mxu0 0
      %477 = vmatpush1.bf16.msra.mxu0 0
      %478 = vmatprep.subr.bf16.mxu0 0
      %479 = vmatpush1.bf16.msra.mxu0 0
      %480 = vmatprep.subr.bf16.mxu0 0
      %481 = vmatpush1.bf16.msra.mxu0 0
      %482 = vmatprep.subr.bf16.mxu0 0
      %483 = vmatpush1.bf16.msra.mxu0 0
      %484 = vmatprep.subr.bf16.mxu0 0
      %485 = vmatpush1.bf16.msra.mxu0 0
      %486 = vmatprep.subr.bf16.mxu0 0
      %487 = vmatpush1.bf16.msra.mxu0 0
      %488 = vmatprep.subr.bf16.mxu0 0
      %489 = vmatpush1.bf16.msra.mxu0 0
      %490 = vmatprep.subr.bf16.mxu0 0
      %491 = vmatpush1.bf16.msra.mxu0 0
      %492 = vmatprep.subr.bf16.mxu0 0
      %493 = vmatpush1.bf16.msra.mxu0 0
      %494 = vmatprep.subr.bf16.mxu0 0
      %495 = vmatpush1.bf16.msra.mxu0 0
      %496 = vmatprep.subr.bf16.mxu0 0
      %497 = vmatpush1.bf16.msra.mxu0 0
      %498 = vmatprep.subr.bf16.mxu0 0
      %499 = vmatpush1.bf16.msra.mxu0 0
      %500 = vmatprep.subr.bf16.mxu0 0
      %501 = vmatpush1.bf16.msra.mxu0 0
      %502 = vmatprep.subr.bf16.mxu0 0
      %503 = vmatpush1.bf16.msra.mxu0 0
      %504 = vmatprep.mubr.bf16.mxu0 0
      %505 = vmatmul.mubr.bf16.gmra.mrb[0].mxu0 %v470
      %v506 = vpop.f32.mrb[0].mxu0
      %v507 = vadd.f32 0.0, %v506
      %v508 = vpop.f32.mrb[0].mxu0
      %v509 = vpop.f32.mrb[0].mxu0
      %v510 = vpop.f32.mrb[0].mxu0
      %511 = vdwg.mxu0
      %v512 = vadd.f32 %v449, %v507
      %s513 = scalar_lea.vmem %s1, 80
      %v514 = vld [vmem:[%s513] sm:$0xf]
      %v515 = vld [vmem:[%s513 + $0x4] sm:$0xf]
      %v516 = vld [vmem:[%s513 + $0x8] sm:$0xf]
      %v517 = vld [vmem:[%s513 + $0xc] sm:$0xf]
      %518 = vrot.lane.b32.xlu0 %v393, 112
      %v519 = vpop.permute.xlu0 %518
      %v524 = vunpack.c.l.b16 %v514
      %v525 = vunpack.c.l.b16 %v515
      %v526 = vunpack.c.l.b16 %v516
      %v527 = vunpack.c.l.b16 %v517
      %v528 = vpack.c.b16 %v525, %v524
      %v529 = vpack.c.b16 %v527, %v526
      %v533 = vsel %vm221, %v519, 0
      %535 = vmatprep.subr.bf16.mxu0 0
      %536 = vmatpush1.bf16.msra.mxu0 %v528
      %537 = vmatprep.subr.bf16.mxu0 0
      %538 = vmatpush1.bf16.msra.mxu0 %v529
      %539 = vmatprep.subr.bf16.mxu0 0
      %540 = vmatpush1.bf16.msra.mxu0 0
      %541 = vmatprep.subr.bf16.mxu0 0
      %542 = vmatpush1.bf16.msra.mxu0 0
      %543 = vmatprep.subr.bf16.mxu0 0
      %544 = vmatpush1.bf16.msra.mxu0 0
      %545 = vmatprep.subr.bf16.mxu0 0
      %546 = vmatpush1.bf16.msra.mxu0 0
      %547 = vmatprep.subr.bf16.mxu0 0
      %548 = vmatpush1.bf16.msra.mxu0 0
      %549 = vmatprep.subr.bf16.mxu0 0
      %550 = vmatpush1.bf16.msra.mxu0 0
      %551 = vmatprep.subr.bf16.mxu0 0
      %552 = vmatpush1.bf16.msra.mxu0 0
      %553 = vmatprep.subr.bf16.mxu0 0
      %554 = vmatpush1.bf16.msra.mxu0 0
      %555 = vmatprep.subr.bf16.mxu0 0
      %556 = vmatpush1.bf16.msra.mxu0 0
      %557 = vmatprep.subr.bf16.mxu0 0
      %558 = vmatpush1.bf16.msra.mxu0 0
      %559 = vmatprep.subr.bf16.mxu0 0
      %560 = vmatpush1.bf16.msra.mxu0 0
      %561 = vmatprep.subr.bf16.mxu0 0
      %562 = vmatpush1.bf16.msra.mxu0 0
      %563 = vmatprep.subr.bf16.mxu0 0
      %564 = vmatpush1.bf16.msra.mxu0 0
      %565 = vmatprep.subr.bf16.mxu0 0
      %566 = vmatpush1.bf16.msra.mxu0 0
      %567 = vmatprep.mubr.bf16.mxu0 0
      %568 = vmatmul.mubr.bf16.gmra.mrb[0].mxu0 %v533
      %v569 = vpop.f32.mrb[0].mxu0
      %v570 = vadd.f32 0.0, %v569
      %v571 = vpop.f32.mrb[0].mxu0
      %v572 = vpop.f32.mrb[0].mxu0
      %v573 = vpop.f32.mrb[0].mxu0
      %574 = vdwg.mxu0
      %v575 = vadd.f32 %v512, %v570
      %s576 = scalar_lea.vmem %s1, 96
      %v577 = vld [vmem:[%s576] sm:$0xf]
      %v578 = vld [vmem:[%s576 + $0x4] sm:$0xf]
      %v579 = vld [vmem:[%s576 + $0x8] sm:$0xf]
      %v580 = vld [vmem:[%s576 + $0xc] sm:$0xf]
      %v581 = vrot.slane %v196, 1
      %v586 = vunpack.c.l.b16 %v577
      %v587 = vunpack.c.l.b16 %v578
      %v588 = vunpack.c.l.b16 %v579
      %v589 = vunpack.c.l.b16 %v580
      %v590 = vpack.c.b16 %v587, %v586
      %v591 = vpack.c.b16 %v589, %v588
      %v595 = vsel %vm221, %v581, 0
      %597 = vmatprep.subr.bf16.mxu0 0
      %598 = vmatpush1.bf16.msra.mxu0 %v590
      %599 = vmatprep.subr.bf16.mxu0 0
      %600 = vmatpush1.bf16.msra.mxu0 %v591
      %601 = vmatprep.subr.bf16.mxu0 0
      %602 = vmatpush1.bf16.msra.mxu0 0
      %603 = vmatprep.subr.bf16.mxu0 0
      %604 = vmatpush1.bf16.msra.mxu0 0
      %605 = vmatprep.subr.bf16.mxu0 0
      %606 = vmatpush1.bf16.msra.mxu0 0
      %607 = vmatprep.subr.bf16.mxu0 0
      %608 = vmatpush1.bf16.msra.mxu0 0
      %609 = vmatprep.subr.bf16.mxu0 0
      %610 = vmatpush1.bf16.msra.mxu0 0
      %611 = vmatprep.subr.bf16.mxu0 0
      %612 = vmatpush1.bf16.msra.mxu0 0
      %613 = vmatprep.subr.bf16.mxu0 0
      %614 = vmatpush1.bf16.msra.mxu0 0
      %615 = vmatprep.subr.bf16.mxu0 0
      %616 = vmatpush1.bf16.msra.mxu0 0
      %617 = vmatprep.subr.bf16.mxu0 0
      %618 = vmatpush1.bf16.msra.mxu0 0
      %619 = vmatprep.subr.bf16.mxu0 0
      %620 = vmatpush1.bf16.msra.mxu0 0
      %621 = vmatprep.subr.bf16.mxu0 0
      %622 = vmatpush1.bf16.msra.mxu0 0
      %623 = vmatprep.subr.bf16.mxu0 0
      %624 = vmatpush1.bf16.msra.mxu0 0
      %625 = vmatprep.subr.bf16.mxu0 0
      %626 = vmatpush1.bf16.msra.mxu0 0
      %627 = vmatprep.subr.bf16.mxu0 0
      %628 = vmatpush1.bf16.msra.mxu0 0
      %629 = vmatprep.mubr.bf16.mxu0 0
      %630 = vmatmul.mubr.bf16.gmra.mrb[0].mxu0 %v595
      %v631 = vpop.f32.mrb[0].mxu0
      %v632 = vadd.f32 0.0, %v631
      %v633 = vpop.f32.mrb[0].mxu0
      %v634 = vpop.f32.mrb[0].mxu0
      %v635 = vpop.f32.mrb[0].mxu0
      %636 = vdwg.mxu0
      %v637 = vadd.f32 %v575, %v632
      %s638 = scalar_lea.vmem %s1, 112
      %v639 = vld [vmem:[%s638] sm:$0xf]
      %v640 = vld [vmem:[%s638 + $0x4] sm:$0xf]
      %v641 = vld [vmem:[%s638 + $0x8] sm:$0xf]
      %v642 = vld [vmem:[%s638 + $0xc] sm:$0xf]
      %643 = vrot.lane.b32.xlu0 %v581, 120
      %v644 = vpop.permute.xlu0 %643
      %v649 = vunpack.c.l.b16 %v639
      %v650 = vunpack.c.l.b16 %v640
      %v651 = vunpack.c.l.b16 %v641
      %v652 = vunpack.c.l.b16 %v642
      %v653 = vpack.c.b16 %v650, %v649
      %v654 = vpack.c.b16 %v652, %v651
      %v658 = vsel %vm221, %v644, 0
      %660 = vmatprep.subr.bf16.mxu0 0
      %661 = vmatpush1.bf16.msra.mxu0 %v653
      %662 = vmatprep.subr.bf16.mxu0 0
      %663 = vmatpush1.bf16.msra.mxu0 %v654
      %664 = vmatprep.subr.bf16.mxu0 0
      %665 = vmatpush1.bf16.msra.mxu0 0
      %666 = vmatprep.subr.bf16.mxu0 0
      %667 = vmatpush1.bf16.msra.mxu0 0
      %668 = vmatprep.subr.bf16.mxu0 0
      %669 = vmatpush1.bf16.msra.mxu0 0
      %670 = vmatprep.subr.bf16.mxu0 0
      %671 = vmatpush1.bf16.msra.mxu0 0
      %672 = vmatprep.subr.bf16.mxu0 0
      %673 = vmatpush1.bf16.msra.mxu0 0
      %674 = vmatprep.subr.bf16.mxu0 0
      %675 = vmatpush1.bf16.msra.mxu0 0
      %676 = vmatprep.subr.bf16.mxu0 0
      %677 = vmatpush1.bf16.msra.mxu0 0
      %678 = vmatprep.subr.bf16.mxu0 0
      %679 = vmatpush1.bf16.msra.mxu0 0
      %680 = vmatprep.subr.bf16.mxu0 0
      %681 = vmatpush1.bf16.msra.mxu0 0
      %682 = vmatprep.subr.bf16.mxu0 0
      %683 = vmatpush1.bf16.msra.mxu0 0
      %684 = vmatprep.subr.bf16.mxu0 0
      %685 = vmatpush1.bf16.msra.mxu0 0
      %686 = vmatprep.subr.bf16.mxu0 0
      %687 = vmatpush1.bf16.msra.mxu0 0
      %688 = vmatprep.subr.bf16.mxu0 0
      %689 = vmatpush1.bf16.msra.mxu0 0
      %690 = vmatprep.subr.bf16.mxu0 0
      %691 = vmatpush1.bf16.msra.mxu0 0
      %692 = vmatprep.mubr.bf16.mxu0 0
      %693 = vmatmul.mubr.bf16.gmra.mrb[0].mxu0 %v658
      %v694 = vpop.f32.mrb[0].mxu0
      %v695 = vadd.f32 0.0, %v694
      %v696 = vpop.f32.mrb[0].mxu0
      %v697 = vpop.f32.mrb[0].mxu0
      %v698 = vpop.f32.mrb[0].mxu0
      %699 = vdwg.mxu0
      %v700 = vadd.f32 %v637, %v695
      %s701 = scalar_lea.vmem %s1, 128
      %v702 = vld [vmem:[%s701] sm:$0xf]
      %v703 = vld [vmem:[%s701 + $0x4] sm:$0xf]
      %v704 = vld [vmem:[%s701 + $0x8] sm:$0xf]
      %v705 = vld [vmem:[%s701 + $0xc] sm:$0xf]
      %706 = vrot.lane.b32.xlu0 %v581, 112
      %v707 = vpop.permute.xlu0 %706
      %v712 = vunpack.c.l.b16 %v702
      %v713 = vunpack.c.l.b16 %v703
      %v714 = vunpack.c.l.b16 %v704
      %v715 = vunpack.c.l.b16 %v705
      %v716 = vpack.c.b16 %v713, %v712
      %v717 = vpack.c.b16 %v715, %v714
      %v721 = vsel %vm221, %v707, 0
      %723 = vmatprep.subr.bf16.mxu0 0
      %724 = vmatpush1.bf16.msra.mxu0 %v716
      %725 = vmatprep.subr.bf16.mxu0 0
      %726 = vmatpush1.bf16.msra.mxu0 %v717
      %727 = vmatprep.subr.bf16.mxu0 0
      %728 = vmatpush1.bf16.msra.mxu0 0
      %729 = vmatprep.subr.bf16.mxu0 0
      %730 = vmatpush1.bf16.msra.mxu0 0
      %731 = vmatprep.subr.bf16.mxu0 0
      %732 = vmatpush1.bf16.msra.mxu0 0
      %733 = vmatprep.subr.bf16.mxu0 0
      %734 = vmatpush1.bf16.msra.mxu0 0
      %735 = vmatprep.subr.bf16.mxu0 0
      %736 = vmatpush1.bf16.msra.mxu0 0
      %737 = vmatprep.subr.bf16.mxu0 0
      %738 = vmatpush1.bf16.msra.mxu0 0
      %739 = vmatprep.subr.bf16.mxu0 0
      %740 = vmatpush1.bf16.msra.mxu0 0
      %741 = vmatprep.subr.bf16.mxu0 0
      %742 = vmatpush1.bf16.msra.mxu0 0
      %743 = vmatprep.subr.bf16.mxu0 0
      %744 = vmatpush1.bf16.msra.mxu0 0
      %745 = vmatprep.subr.bf16.mxu0 0
      %746 = vmatpush1.bf16.msra.mxu0 0
      %747 = vmatprep.subr.bf16.mxu0 0
      %748 = vmatpush1.bf16.msra.mxu0 0
      %749 = vmatprep.subr.bf16.mxu0 0
      %750 = vmatpush1.bf16.msra.mxu0 0
      %751 = vmatprep.subr.bf16.mxu0 0
      %752 = vmatpush1.bf16.msra.mxu0 0
      %753 = vmatprep.subr.bf16.mxu0 0
      %754 = vmatpush1.bf16.msra.mxu0 0
      %755 = vmatprep.mubr.bf16.mxu0 0
      %756 = vmatmul.mubr.bf16.gmra.mrb[0].mxu0 %v721
      %v757 = vpop.f32.mrb[0].mxu0
      %v758 = vadd.f32 0.0, %v757
      %v759 = vpop.f32.mrb[0].mxu0
      %v760 = vpop.f32.mrb[0].mxu0
      %v761 = vpop.f32.mrb[0].mxu0
      %762 = vdwg.mxu0
      %v763 = vadd.f32 %v700, %v758
      %v764 = vld [vmem:[%s2] sm:$0x1]
      %v766 = vlaneseq
      %v767 = vshrl.u32 %v766, 7
      %v768 = vsub.s32 0, %v767
      %v769 = vrot.slane %v764, %v768
      %v771 = vmul.f32 %v763, %v769
      %v772 = vld [vmem:[%s3] sm:$0x1]
      %v774 = vlaneseq
      %v775 = vshrl.u32 %v774, 7
      %v776 = vsub.s32 0, %v775
      %v777 = vrot.slane %v772, %v776
      %v779 = vadd.f32 %v771, %v777
      %v780 = vmax.f32 %v779, 0.0
      %v781 = vpack.c.bf16 %v780, %v780
      %vm782 = vcmask 254976
      %783 = vst.msk [vmem:[%s192] sm:$0x3] %vm782, %v781
      %p784 = scmp.lt.s32.totalorder %s15, 1
      %s785 = scalar_select %p784, %s15, 1
      %s786 = smul.addr %s785, 2
      %s787 = scalar_lea.vmem %s4, %s786
      // Predicated region
      $region37: #{segmentation_forward.10} parent=35 // pred_check
        %p788 = pneg %p122
      $region38: #{segmentation_forward.10} parent=35 // pred_check_branch
        %790 = sbr.rel (%p788) target = $region40
      $region39: #{segmentation_forward.10} parent=35 // pred_region
        _
      $region40: #{segmentation_forward.10} parent=35 // pred_fallthru
        _
    $region36: #{segmentation_forward.10} parent=5 // pred_fallthru
      _
    %p791 = scmp.le.s32.totalorder 2, %s10
    // Predicated region
    $region41: #{segmentation_forward.10} parent=5 // pred_check
      %p792 = pneg %p791
    $region42: #{segmentation_forward.10} parent=5 // pred_check_branch
      %794 = sbr.rel (%p792) target = $region44
    $region43: #{segmentation_forward.10} parent=5 // pred_region
      %s795 = ssub.s32 %s10, 2
      // Predicated region
      $region45: #{segmentation_forward.10} parent=43 // pred_check
        %p796 = pneg %p128
      $region46: #{segmentation_forward.10} parent=43 // pred_check_branch
        %798 = sbr.rel (%p796) target = $region48
      $region47: #{segmentation_forward.10} parent=43 // pred_region
        %p799 = scmp.lt.s32.totalorder %s16, 1
        %s800 = scalar_select %p799, %s16, 1
        %s801 = smul.addr %s800, 2
        %s802 = scalar_lea.vmem %s4, %s801
      $region48: #{segmentation_forward.10} parent=43 // pred_fallthru
        _
    $region44: #{segmentation_forward.10} parent=5 // pred_fallthru
      _
  $region6: #{segmentation_forward.10} parent=0 // loop_footer
    %s14 = sadd.s32 1, %s10
  $region7: #{segmentation_forward.10} parent=0 // loop_footer_branch
    %9 = sbr.rel target = $region3
  $region8: #{segmentation_forward.10} parent=0 // loop_exit
    _

// kernel: tile.118
$region0: #{tile.118}
  #allocation0 [shape = 's32[1]{0}', space=sflag, size = 0x4, scoped, tag = 'scoped memory for tile.118']
  %s0 = inlined_call_operand.vmem [shape: f32[16], index: 0, kind: input, shape index: {}]
  %s1 = inlined_call_operand.vmem [shape: f32[4,16], index: 1, kind: output, shape index: {}]
  // Predicated region
  $region2: #{tile.118} parent=0 // pred_check
    _
  $region3: #{tile.118} parent=0 // pred_check_branch
    %3 = sbr.rel (0) target = $region5
  $region4: #{tile.118} parent=0 // pred_region
    _
  $region5: #{tile.118} parent=0 // pred_fallthru
    _
  %v4 = vld [vmem:[%s0] ss:$0 sm:$0xff]
  %5 = vst [vmem:[%s1] sm:$0xf] %v4

// kernel: tile.119
$region0: #{tile.119}
  %s0 = inlined_call_operand.vmem [shape: f32[4,16], index: 0, kind: input, shape index: {}]
  %s1 = inlined_call_operand.vmem [shape: f32[1,64], index: 1, kind: output, shape index: {}]
  $region1: #{tile.119} parent=0
    #allocation0 [shape = 'u8[4096]{0}', space=vmem, size = 0x1000, scoped, tag = 'scoped mem for output reshape']
    #allocation1 [shape = 'u8[4096]{0}', space=vmem, size = 0x1000, scoped, tag = 'scoped mem for input reshape']
    %s3 = sshllo.u32 0, 4
    %v4 = vld [vmem:[%s0] sm:%s3]
    %5 = vst [vmem:[#allocation1] sm:%s3] %v4
    %v6 = vld [vmem:[#allocation1] sm:$0x1]
    %vm7 = vcmask 130048
    %8 = vst.msk [vmem:[#allocation0] sm:$0x1] %vm7, %v6
    %s9 = scalar_lea.vmem [#allocation1], 3
    %v10 = vld [vmem:[%s9] sm:$0x1]
    %11 = vrot.lane.b32.xlu0 %v10, 48
    %v12 = vpop.permute.xlu0 %11
    %vm13 = vcmask 523648
    %14 = vst.msk [vmem:[#allocation0] sm:$0x1] %vm13, %v12
    %s15 = scalar_lea.vmem [#allocation1], 2
    %v16 = vld [vmem:[%s15] sm:$0x1]
    %17 = vrot.lane.b32.xlu0 %v16, 32
    %v18 = vpop.permute.xlu0 %17
    %vm19 = vcmask 392448
    %20 = vst.msk [vmem:[#allocation0] sm:$0x1] %vm19, %v18
    %s21 = scalar_lea.vmem [#allocation1], 1
    %v22 = vld [vmem:[%s21] sm:$0x1]
    %23 = vrot.lane.b32.xlu0 %v22, 16
    %v24 = vpop.permute.xlu0 %23
    %vm25 = vcmask 261248
    %26 = vst.msk [vmem:[#allocation0] sm:$0x1] %vm25, %v24
    %s28 = sshllo.u32 0, 1
    %v30 = vld [vmem:[#allocation0] sm:%s28]
    %s31 = sshllo.u32 0, 1
    %32 = vst [vmem:[%s1] sm:%s31] %v30

// kernel: tile.128
$region0: #{tile.128}
  #allocation0 [shape = 's32[1]{0}', space=sflag, size = 0x4, scoped, tag = 'scoped memory for tile.128']
  %s0 = inlined_call_operand.vmem [shape: f32[4], index: 0, kind: input, shape index: {}]
  %s1 = inlined_call_operand.vmem [shape: f32[4,4], index: 1, kind: output, shape index: {}]
  // Predicated region
  $region2: #{tile.128} parent=0 // pred_check
    _
  $region3: #{tile.128} parent=0 // pred_check_branch
    %3 = sbr.rel (0) target = $region5
  $region4: #{tile.128} parent=0 // pred_region
    _
  $region5: #{tile.128} parent=0 // pred_fallthru
    _
  %v4 = vld [vmem:[%s0] ss:$0 sm:$0xff]
  %5 = vst [vmem:[%s1] sm:$0xf] %v4

// kernel: tile.129
$region0: #{tile.129}
  %s0 = inlined_call_operand.vmem [shape: f32[4,4], index: 0, kind: input, shape index: {}]
  %s1 = inlined_call_operand.vmem [shape: f32[1,16], index: 1, kind: output, shape index: {}]
  $region1: #{tile.129} parent=0
    #allocation0 [shape = 'u8[4096]{0}', space=vmem, size = 0x1000, scoped, tag = 'scoped mem for output reshape']
    #allocation1 [shape = 'u8[4096]{0}', space=vmem, size = 0x1000, scoped, tag = 'scoped mem for input reshape']
    %s3 = sshllo.u32 0, 4
    %v4 = vld [vmem:[%s0] sm:%s3]
    %5 = vst [vmem:[#allocation1] sm:%s3] %v4
    %v6 = vld [vmem:[#allocation1] sm:$0x1]
    %vm7 = vcmask 31744
    %8 = vst.msk [vmem:[#allocation0] sm:$0x1] %vm7, %v6
    %s9 = scalar_lea.vmem [#allocation1], 3
    %v10 = vld [vmem:[%s9] sm:$0x1]
    %11 = vrot.lane.b32.xlu0 %v10, 12
    %v12 = vpop.permute.xlu0 %11
    %vm13 = vcmask 130144
    %14 = vst.msk [vmem:[#allocation0] sm:$0x1] %vm13, %v12
    %s15 = scalar_lea.vmem [#allocation1], 2
    %v16 = vld [vmem:[%s15] sm:$0x1]
    %17 = vrot.lane.b32.xlu0 %v16, 8
    %v18 = vpop.permute.xlu0 %17
    %vm19 = vcmask 97344
    %20 = vst.msk [vmem:[#allocation0] sm:$0x1] %vm19, %v18
    %s21 = scalar_lea.vmem [#allocation1], 1
    %v22 = vld [vmem:[%s21] sm:$0x1]
    %23 = vrot.lane.b32.xlu0 %v22, 4
    %v24 = vpop.permute.xlu0 %23
    %vm25 = vcmask 64544
    %26 = vst.msk [vmem:[#allocation0] sm:$0x1] %vm25, %v24
    %s28 = sshllo.u32 0, 1
    %v30 = vld [vmem:[#allocation0] sm:%s28]
    %s31 = sshllo.u32 0, 1
    %32 = vst [vmem:[%s1] sm:%s31] %v30

// kernel: segmentation_forward.12
$region0: #{segmentation_forward.12}
  #allocation0 [shape = 'u32[]', space=smem, size = 0x4, offset = 0x4, fixed_abs, tag = 'smem constant byte address 0x4 - core index']
  #allocation1 [shape = 'u32[144,128]{1,0:T(1,128)}', space=vmem, size = 0x12000, scoped, tag = 'internal scratch']
  %s0 = inlined_call_operand.vmem [shape: bf16[2,6,192], index: 0, kind: input, shape index: {}]
  %s1 = inlined_call_operand.vmem [shape: bf16[9,128,64], index: 1, kind: input, shape index: {}]
  %s2 = inlined_call_operand.vmem [shape: f32[1,64], index: 2, kind: input, shape index: {}]
  %s3 = inlined_call_operand.vmem [shape: f32[1,64], index: 3, kind: input, shape index: {}]
  %s4 = inlined_call_operand.vmem [shape: bf16[64,16], index: 4, kind: input, shape index: {}]
  %s5 = inlined_call_operand.vmem [shape: f32[1,16], index: 5, kind: input, shape index: {}]
  %s6 = inlined_call_operand.vmem [shape: f32[16,4], index: 6, kind: input, shape index: {}]
  %s7 = inlined_call_operand.vmem [shape: f32[16,64], index: 7, kind: input, shape index: {}]
  %s8 = inlined_call_operand.vmem [shape: f32[2,16,64], index: 8, kind: output, shape index: {}]
  %s9 = sld [smem:[#allocation0]]
  $region65: #{segmentation_forward.12} parent=0
    _
  %s11 = ssub.s32 1, %s9
  %s12 = scalar_select 0, %s11, %s9
  loop: start=0, step=1, limit=4
  $region2: #{segmentation_forward.12} parent=0 // loop_pre_header
    _
  $region3: #{segmentation_forward.12} parent=0 // loop_header
    %s14 = sphi 0, %s18
    %p15 = scmp.ge.s32.totalorder %s14, 4
    %s24 = sphi 0, %s26
    %s27 = sphi 0, %s24
    %s28 = sphi 0, %s27
    %s44 = sphi 0, %s28
    %s48 = sphi 0, %s48
    %s50 = sphi 0, %s48
    %s51 = sphi 0, %s50
    %s65 = sphi 0, %s51
    %s69 = sphi 0, %s69
    %s71 = sphi 0, %s69
    %s72 = sphi 0, %s71
    %s86 = sphi 0, %s72
    %s90 = sphi 0, %s90
    %s92 = sphi 0, %s90
    %s93 = sphi 0, %s92
    %s107 = sphi 0, %s93
    %s111 = sphi 0, %s111
    %s113 = sphi 0, %s111
    %s114 = sphi 0, %s113
    %s128 = sphi 0, %s114
    %s132 = sphi 0, %s132
    %s134 = sphi 0, %s132
    %s135 = sphi 0, %s134
    %s149 = sphi 0, %s135
    %s153 = sphi 0, %s153
    %s155 = sphi 0, %s153
    %s156 = sphi 0, %s155
    %s170 = sphi 0, %s156
    %s174 = sphi 0, %s174
    %s176 = sphi 0, %s174
    %s177 = sphi 0, %s176
    %s191 = sphi 0, %s177
    %s197 = sphi 0, %s199
    %s200 = sphi 0, %s197
    %s201 = sphi 0, %s200
    %s217 = sphi 0, %s201
  $region4: #{segmentation_forward.12} parent=0 // loop_header_branch
    %17 = sbr.rel (%p15) target = $region8
  $region5: #{segmentation_forward.12} parent=0 // loop_body
    %s19 = ssub.s32 %s14, 1
    %s20 = ssub.s32 %s14, 2
    %s21 = sadd.s32 %s14, 1
    %s22 = ssub.s32 %s14, %s21
    %p23 = scmp.eq.s32.totalorder %s22, 0
    %s25 = sadd.s32 %s24, 1
    %s26 = scalar_select %p23, %s24, %s25
    %p29 = pneg %p23
    %p30 = scmp.eq.s32.totalorder %s14, 1
    %p31 = por %p29, %p30
    %p32 = scmp.ne.s32.totalorder %s24, %s27
    %p33 = scmp.eq.s32.totalorder %s14, 0
    %p34 = por %p32, %p33
    %p35 = scmp.ne.s32.totalorder %s24, %s27
    %p36 = scmp.eq.s32.totalorder %s19, 1
    %p37 = por %p35, %p36
    %p38 = scmp.ne.s32.totalorder %s27, %s28
    %p39 = scmp.eq.s32.totalorder %s19, 0
    %p40 = por %p38, %p39
    %p41 = scmp.ne.s32.totalorder %s27, %s28
    %p42 = scmp.eq.s32.totalorder %s20, 1
    %p43 = por %p41, %p42
    %p45 = scmp.ne.s32.totalorder %s28, %s44
    %p46 = scmp.eq.s32.totalorder %s20, 0
    %p47 = por %p45, %p46
    %s49 = sadd.s32 %s48, 1
    %p52 = scmp.eq.s32.totalorder %s14, 1
    %p53 = scmp.ne.s32.totalorder %s48, %s50
    %p54 = scmp.eq.s32.totalorder %s14, 0
    %p55 = por %p53, %p54
    %p56 = scmp.ne.s32.totalorder %s48, %s50
    %p57 = scmp.eq.s32.totalorder %s19, 1
    %p58 = por %p56, %p57
    %p59 = scmp.ne.s32.totalorder %s50, %s51
    %p60 = scmp.eq.s32.totalorder %s19, 0
    %p61 = por %p59, %p60
    %p62 = scmp.ne.s32.totalorder %s50, %s51
    %p63 = scmp.eq.s32.totalorder %s20, 1
    %p64 = por %p62, %p63
    %p66 = scmp.ne.s32.totalorder %s51, %s65
    %p67 = scmp.eq.s32.totalorder %s20, 0
    %p68 = por %p66, %p67
    %s70 = sadd.s32 %s69, 1
    %p73 = scmp.eq.s32.totalorder %s14, 1
    %p74 = scmp.ne.s32.totalorder %s69, %s71
    %p75 = scmp.eq.s32.totalorder %s14, 0
    %p76 = por %p74, %p75
    %p77 = scmp.ne.s32.totalorder %s69, %s71
    %p78 = scmp.eq.s32.totalorder %s19, 1
    %p79 = por %p77, %p78
    %p80 = scmp.ne.s32.totalorder %s71, %s72
    %p81 = scmp.eq.s32.totalorder %s19, 0
    %p82 = por %p80, %p81
    %p83 = scmp.ne.s32.totalorder %s71, %s72
    %p84 = scmp.eq.s32.totalorder %s20, 1
    %p85 = por %p83, %p84
    %p87 = scmp.ne.s32.totalorder %s72, %s86
    %p88 = scmp.eq.s32.totalorder %s20, 0
    %p89 = por %p87, %p88
    %s91 = sadd.s32 %s90, 1
    %p94 = scmp.eq.s32.totalorder %s14, 1
    %p95 = scmp.ne.s32.totalorder %s90, %s92
    %p96 = scmp.eq.s32.totalorder %s14, 0
    %p97 = por %p95, %p96
    %p98 = scmp.ne.s32.totalorder %s90, %s92
    %p99 = scmp.eq.s32.totalorder %s19, 1
    %p100 = por %p98, %p99
    %p101 = scmp.ne.s32.totalorder %s92, %s93
    %p102 = scmp.eq.s32.totalorder %s19, 0
    %p103 = por %p101, %p102
    %p104 = scmp.ne.s32.totalorder %s92, %s93
    %p105 = scmp.eq.s32.totalorder %s20, 1
    %p106 = por %p104, %p105
    %p108 = scmp.ne.s32.totalorder %s93, %s107
    %p109 = scmp.eq.s32.totalorder %s20, 0
    %p110 = por %p108, %p109
    %s112 = sadd.s32 %s111, 1
    %p115 = scmp.eq.s32.totalorder %s14, 1
    %p116 = scmp.ne.s32.totalorder %s111, %s113
    %p117 = scmp.eq.s32.totalorder %s14, 0
    %p118 = por %p116, %p117
    %p119 = scmp.ne.s32.totalorder %s111, %s113
    %p120 = scmp.eq.s32.totalorder %s19, 1
    %p121 = por %p119, %p120
    %p122 = scmp.ne.s32.totalorder %s113, %s114
    %p123 = scmp.eq.s32.totalorder %s19, 0
    %p124 = por %p122, %p123
    %p125 = scmp.ne.s32.totalorder %s113, %s114
    %p126 = scmp.eq.s32.totalorder %s20, 1
    %p127 = por %p125, %p126
    %p129 = scmp.ne.s32.totalorder %s114, %s128
    %p130 = scmp.eq.s32.totalorder %s20, 0
    %p131 = por %p129, %p130
    %s133 = sadd.s32 %s132, 1
    %p136 = scmp.eq.s32.totalorder %s14, 1
    %p137 = scmp.ne.s32.totalorder %s132, %s134
    %p138 = scmp.eq.s32.totalorder %s14, 0
    %p139 = por %p137, %p138
    %p140 = scmp.ne.s32.totalorder %s132, %s134
    %p141 = scmp.eq.s32.totalorder %s19, 1
    %p142 = por %p140, %p141
    %p143 = scmp.ne.s32.totalorder %s134, %s135
    %p144 = scmp.eq.s32.totalorder %s19, 0
    %p145 = por %p143, %p144
    %p146 = scmp.ne.s32.totalorder %s134, %s135
    %p147 = scmp.eq.s32.totalorder %s20, 1
    %p148 = por %p146, %p147
    %p150 = scmp.ne.s32.totalorder %s135, %s149
    %p151 = scmp.eq.s32.totalorder %s20, 0
    %p152 = por %p150, %p151
    %s154 = sadd.s32 %s153, 1
    %p157 = scmp.eq.s32.totalorder %s14, 1
    %p158 = scmp.ne.s32.totalorder %s153, %s155
    %p159 = scmp.eq.s32.totalorder %s14, 0
    %p160 = por %p158, %p159
    %p161 = scmp.ne.s32.totalorder %s153, %s155
    %p162 = scmp.eq.s32.totalorder %s19, 1
    %p163 = por %p161, %p162
    %p164 = scmp.ne.s32.totalorder %s155, %s156
    %p165 = scmp.eq.s32.totalorder %s19, 0
    %p166 = por %p164, %p165
    %p167 = scmp.ne.s32.totalorder %s155, %s156
    %p168 = scmp.eq.s32.totalorder %s20, 1
    %p169 = por %p167, %p168
    %p171 = scmp.ne.s32.totalorder %s156, %s170
    %p172 = scmp.eq.s32.totalorder %s20, 0
    %p173 = por %p171, %p172
    %s175 = sadd.s32 %s174, 1
    %p178 = scmp.eq.s32.totalorder %s14, 1
    %p179 = scmp.ne.s32.totalorder %s174, %s176
    %p180 = scmp.eq.s32.totalorder %s14, 0
    %p181 = por %p179, %p180
    %p182 = scmp.ne.s32.totalorder %s174, %s176
    %p183 = scmp.eq.s32.totalorder %s19, 1
    %p184 = por %p182, %p183
    %p185 = scmp.ne.s32.totalorder %s176, %s177
    %p186 = scmp.eq.s32.totalorder %s19, 0
    %p187 = por %p185, %p186
    %p188 = scmp.ne.s32.totalorder %s176, %s177
    %p189 = scmp.eq.s32.totalorder %s20, 1
    %p190 = por %p188, %p189
    %p192 = scmp.ne.s32.totalorder %s177, %s191
    %p193 = scmp.eq.s32.totalorder %s20, 0
    %p194 = por %p192, %p193
    %s195 = ssub.s32 %s14, %s21
    %p196 = scmp.eq.s32.totalorder %s195, 0
    %s198 = sadd.s32 %s197, 1
    %s199 = scalar_select %p196, %s197, %s198
    %p202 = pneg %p196
    %p203 = scmp.eq.s32.totalorder %s14, 1
    %p204 = por %p202, %p203
    %p205 = scmp.ne.s32.totalorder %s197, %s200
    %p206 = scmp.eq.s32.totalorder %s14, 0
    %p207 = por %p205, %p206
    %p208 = scmp.ne.s32.totalorder %s197, %s200
    %p209 = scmp.eq.s32.totalorder %s19, 1
    %p210 = por %p208, %p209
    %p211 = scmp.ne.s32.totalorder %s200, %s201
    %p212 = scmp.eq.s32.totalorder %s19, 0
    %p213 = por %p211, %p212
    %p214 = scmp.ne.s32.totalorder %s200, %s201
    %p215 = scmp.eq.s32.totalorder %s20, 1
    %p216 = por %p214, %p215
    %p218 = scmp.ne.s32.totalorder %s201, %s217
    %p219 = scmp.eq.s32.totalorder %s20, 0
    %p220 = por %p218, %p219
    %p221 = scmp.le.s32.totalorder 1, %s14
    %p222 = scmp.lt.s32.totalorder %s14, 3
    %p223 = pnand %p221, %p222
    %p224 = pneg %p223
    // Predicated region
    $region9: #{segmentation_forward.12} parent=5 // pred_check
      _
    $region10: #{segmentation_forward.12} parent=5 // pred_check_branch
      %226 = sbr.rel (%p223) target = $region12
    $region11: #{segmentation_forward.12} parent=5 // pred_region
      %s227 = ssub.s32 %s14, 1
      // Predicated region
      $region13: #{segmentation_forward.12} parent=11 // pred_check
        %p228 = pneg %p61
      $region14: #{segmentation_forward.12} parent=11 // pred_check_branch
        %230 = sbr.rel (%p228) target = $region16
      $region15: #{segmentation_forward.12} parent=11 // pred_region
        _
      $region16: #{segmentation_forward.12} parent=11 // pred_fallthru
        _
      // Predicated region
      $region17: #{segmentation_forward.12} parent=11 // pred_check
        %p231 = pneg %p82
      $region18: #{segmentation_forward.12} parent=11 // pred_check_branch
        %233 = sbr.rel (%p231) target = $region20
      $region19: #{segmentation_forward.12} parent=11 // pred_region
        _
      $region20: #{segmentation_forward.12} parent=11 // pred_fallthru
        _
      // Predicated region
      $region21: #{segmentation_forward.12} parent=11 // pred_check
        %p234 = pneg %p103
      $region22: #{segmentation_forward.12} parent=11 // pred_check_branch
        %236 = sbr.rel (%p234) target = $region24
      $region23: #{segmentation_forward.12} parent=11 // pred_region
        _
      $region24: #{segmentation_forward.12} parent=11 // pred_fallthru
        _
      // Predicated region
      $region25: #{segmentation_forward.12} parent=11 // pred_check
        %p237 = pneg %p124
      $region26: #{segmentation_forward.12} parent=11 // pred_check_branch
        %239 = sbr.rel (%p237) target = $region28
      $region27: #{segmentation_forward.12} parent=11 // pred_region
        _
      $region28: #{segmentation_forward.12} parent=11 // pred_fallthru
        _
      // Predicated region
      $region29: #{segmentation_forward.12} parent=11 // pred_check
        %p240 = pneg %p145
      $region30: #{segmentation_forward.12} parent=11 // pred_check_branch
        %242 = sbr.rel (%p240) target = $region32
      $region31: #{segmentation_forward.12} parent=11 // pred_region
        _
      $region32: #{segmentation_forward.12} parent=11 // pred_fallthru
        _
      // Predicated region
      $region33: #{segmentation_forward.12} parent=11 // pred_check
        %p243 = pneg %p166
      $region34: #{segmentation_forward.12} parent=11 // pred_check_branch
        %245 = sbr.rel (%p243) target = $region36
      $region35: #{segmentation_forward.12} parent=11 // pred_region
        _
      $region36: #{segmentation_forward.12} parent=11 // pred_fallthru
        _
      // Predicated region
      $region37: #{segmentation_forward.12} parent=11 // pred_check
        %p246 = pneg %p187
      $region38: #{segmentation_forward.12} parent=11 // pred_check_branch
        %248 = sbr.rel (%p246) target = $region40
      $region39: #{segmentation_forward.12} parent=11 // pred_region
        _
      $region40: #{segmentation_forward.12} parent=11 // pred_fallthru
        _
    $region12: #{segmentation_forward.12} parent=5 // pred_fallthru
      _
    %p249 = scmp.lt.s32.totalorder %s14, 2
    // Predicated region
    $region41: #{segmentation_forward.12} parent=5 // pred_check
      %p250 = pneg %p249
    $region42: #{segmentation_forward.12} parent=5 // pred_check_branch
      %252 = sbr.rel (%p250) target = $region44
    $region43: #{segmentation_forward.12} parent=5 // pred_region
      // Predicated region
      $region45: #{segmentation_forward.12} parent=43 // pred_check
        %p253 = pneg %p34
      $region46: #{segmentation_forward.12} parent=43 // pred_check_branch
        %255 = sbr.rel (%p253) target = $region48
      $region47: #{segmentation_forward.12} parent=43 // pred_region
        %p256 = scmp.lt.s32.totalorder %s14, 1
        %s257 = scalar_select %p256, %s14, 1
        %s258 = smul.addr %s257, 2
        %s259 = smul.addr %s258, 4
        %s260 = scalar_lea.vmem %s0, %s259
      $region48: #{segmentation_forward.12} parent=43 // pred_fallthru
        _
    $region44: #{segmentation_forward.12} parent=5 // pred_fallthru
      _
    %p261 = scmp.le.s32.totalorder 1, %s14
    %p262 = scmp.lt.s32.totalorder %s14, 3
    %p263 = pnand %p261, %p262
    %p264 = pneg %p263
    // Predicated region
    $region49: #{segmentation_forward.12} parent=5 // pred_check
      _
    $region50: #{segmentation_forward.12} parent=5 // pred_check_branch
      %266 = sbr.rel (%p263) target = $region52
    $region51: #{segmentation_forward.12} parent=5 // pred_region
      %s267 = ssub.s32 %s14, 1
      %p268 = scmp.lt.s32.totalorder %s19, 1
      %s269 = scalar_select %p268, %s19, 1
      %s270 = smul.addr %s269, 2
      %s271 = smul.addr %s270, 4
      %s272 = scalar_lea.vmem %s0, %s271
      %p273 = pneg %p40
      %p274 = pneg %p37
      %p275 = pneg %p61
      %p276 = pneg %p58
      %p277 = pneg %p82
      %p278 = pneg %p79
      %p279 = pneg %p103
      %p280 = pneg %p100
      %p281 = pneg %p124
      %p282 = pneg %p121
      %p283 = pneg %p145
      %p284 = pneg %p142
      %p285 = pneg %p166
      %p286 = pneg %p163
      %p287 = pneg %p187
      %p288 = pneg %p184
      %p289 = pneg %p213
      %p290 = pneg %p210
      %p291 = scmp.lt.s32.totalorder %s19, 1
      %s292 = scalar_select %p291, %s19, 1
      %s293 = smul.addr %s292, 2
      %s294 = smul.addr %s293, 8
      %s295 = scalar_lea.vmem %s8, %s294
      %p296 = scmp.lt.s32.totalorder %s19, 1
      %s297 = scalar_select %p296, %s19, 1
      %s298 = smul.addr %s297, 2
      %s299 = smul.addr %s298, 4
      %s300 = scalar_lea.vmem %s0, %s299
      %p301 = scmp.lt.s32.totalorder %s19, 1
      %s302 = scalar_select %p301, %s19, 1
      %s303 = smul.addr %s302, 2
      %s304 = smul.addr %s303, 8
      %s305 = scalar_lea.vmem %s8, %s304
      %v307 = vld [vmem:[%s300] sm:$0x77]
      %v308 = vunpack.c.l.bf16 %v307
      %v309 = vunpack.c.h.bf16 %v307
      %v310 = vpack.c.bf16 %v308, %v308
      %v311 = vld [vmem:[%s1] sm:$0xf]
      %v312 = vld [vmem:[%s1 + $0x4] sm:$0xf]
      %v313 = vld [vmem:[%s1 + $0x8] sm:$0xf]
      %v314 = vld [vmem:[%s1 + $0xc] sm:$0xf]
      %v315 = vld [vmem:[%s1 + $0x10] sm:$0xf]
      %v316 = vld [vmem:[%s1 + $0x14] sm:$0xf]
      %v317 = vld [vmem:[%s1 + $0x18] sm:$0xf]
      %v318 = vld [vmem:[%s1 + $0x1c] sm:$0xf]
      %v319 = vld [vmem:[%s1 + $0x20] sm:$0xf]
      %v320 = vld [vmem:[%s1 + $0x24] sm:$0xf]
      %v321 = vld [vmem:[%s1 + $0x28] sm:$0xf]
      %v322 = vld [vmem:[%s1 + $0x2c] sm:$0xf]
      %v323 = vld [vmem:[%s1 + $0x30] sm:$0xf]
      %v324 = vld [vmem:[%s1 + $0x34] sm:$0xf]
      %v325 = vld [vmem:[%s1 + $0x38] sm:$0xf]
      %v326 = vld [vmem:[%s1 + $0x3c] sm:$0xf]
      %v327 = vpack.c.bf16 %v309, %v309
      %s328 = scalar_lea.vmem %s1, 64
      %v329 = vld [vmem:[%s328] sm:$0xf]
      %v330 = vld [vmem:[%s328 + $0x4] sm:$0xf]
      %v331 = vld [vmem:[%s328 + $0x8] sm:$0xf]
      %v332 = vld [vmem:[%s328 + $0xc] sm:$0xf]
      %v333 = vld [vmem:[%s328 + $0x10] sm:$0xf]
      %v334 = vld [vmem:[%s328 + $0x14] sm:$0xf]
      %v335 = vld [vmem:[%s328 + $0x18] sm:$0xf]
      %v336 = vld [vmem:[%s328 + $0x1c] sm:$0xf]
      %v337 = vld [vmem:[%s328 + $0x20] sm:$0xf]
      %v338 = vld [vmem:[%s328 + $0x24] sm:$0xf]
      %v339 = vld [vmem:[%s328 + $0x28] sm:$0xf]
      %v340 = vld [vmem:[%s328 + $0x2c] sm:$0xf]
      %v341 = vld [vmem:[%s328 + $0x30] sm:$0xf]
      %v342 = vld [vmem:[%s328 + $0x34] sm:$0xf]
      %v343 = vld [vmem:[%s328 + $0x38] sm:$0xf]
      %v344 = vld [vmem:[%s328 + $0x3c] sm:$0xf]
      %347 = vrot.lane.b32.xlu0 %v310, 96
      %v348 = vpop.permute.xlu0 %347
      %349 = vrot.lane.b32.xlu0 %v327, 96
      %v350 = vpop.permute.xlu0 %349
      %vm351 = vcmask 785408
      %v352 = vsel %vm351, %v348, %v350
      %v370 = vunpack.c.l.b16 %v329
      %v371 = vunpack.c.l.b16 %v330
      %v372 = vunpack.c.l.b16 %v331
      %v373 = vunpack.c.l.b16 %v332
      %v374 = vunpack.c.l.b16 %v333
      %v375 = vunpack.c.l.b16 %v334
      %v376 = vunpack.c.l.b16 %v335
      %v377 = vunpack.c.l.b16 %v336
      %v378 = vunpack.c.l.b16 %v337
      %v379 = vunpack.c.l.b16 %v338
      %v380 = vunpack.c.l.b16 %v339
      %v381 = vunpack.c.l.b16 %v340
      %v382 = vunpack.c.l.b16 %v341
      %v383 = vunpack.c.l.b16 %v342
      %v384 = vunpack.c.l.b16 %v343
      %v385 = vunpack.c.l.b16 %v344
      %v386 = vpack.c.b16 %v371, %v370
      %v387 = vpack.c.b16 %v373, %v372
      %v388 = vpack.c.b16 %v375, %v374
      %v389 = vpack.c.b16 %v377, %v376
      %v390 = vpack.c.b16 %v379, %v378
      %v391 = vpack.c.b16 %v381, %v380
      %v392 = vpack.c.b16 %v383, %v382
      %v393 = vpack.c.b16 %v385, %v384
      %402 = vmatprep.subr.bf16.mxu0 0
      %403 = vmatpush1.bf16.msra.mxu0 %v386
      %404 = vmatprep.subr.bf16.mxu0 0
      %405 = vmatpush1.bf16.msra.mxu0 %v387
      %406 = vmatprep.subr.bf16.mxu0 0
      %407 = vmatpush1.bf16.msra.mxu0 %v388
      %408 = vmatprep.subr.bf16.mxu0 0
      %409 = vmatpush1.bf16.msra.mxu0 %v389
      %410 = vmatprep.subr.bf16.mxu0 0
      %411 = vmatpush1.bf16.msra.mxu0 %v390
      %412 = vmatprep.subr.bf16.mxu0 0
      %413 = vmatpush1.bf16.msra.mxu0 %v391
      %414 = vmatprep.subr.bf16.mxu0 0
      %415 = vmatpush1.bf16.msra.mxu0 %v392
      %416 = vmatprep.subr.bf16.mxu0 0
      %417 = vmatpush1.bf16.msra.mxu0 %v393
      %418 = vmatprep.subr.bf16.mxu0 0
      %419 = vmatpush1.bf16.msra.mxu0 0
      %420 = vmatprep.subr.bf16.mxu0 0
      %421 = vmatpush1.bf16.msra.mxu0 0
      %422 = vmatprep.subr.bf16.mxu0 0
      %423 = vmatpush1.bf16.msra.mxu0 0
      %424 = vmatprep.subr.bf16.mxu0 0
      %425 = vmatpush1.bf16.msra.mxu0 0
      %426 = vmatprep.subr.bf16.mxu0 0
      %427 = vmatpush1.bf16.msra.mxu0 0
      %428 = vmatprep.subr.bf16.mxu0 0
      %429 = vmatpush1.bf16.msra.mxu0 0
      %430 = vmatprep.subr.bf16.mxu0 0
      %431 = vmatpush1.bf16.msra.mxu0 0
      %432 = vmatprep.subr.bf16.mxu0 0
      %433 = vmatpush1.bf16.msra.mxu0 0
      %434 = vmatprep.mubr.bf16.mxu0 0
      %435 = vmatmul.mubr.bf16.gmra.mrb[0].mxu0 %v352
      %v436 = vpop.f32.mrb[0].mxu0
      %v437 = vadd.f32 0.0, %v436
      %v438 = vpop.f32.mrb[0].mxu0
      %v439 = vpop.f32.mrb[0].mxu0
      %v440 = vpop.f32.mrb[0].mxu0
      %441 = vdwg.mxu0
      %v458 = vunpack.c.l.b16 %v311
      %v459 = vunpack.c.l.b16 %v312
      %v460 = vunpack.c.l.b16 %v313
      %v461 = vunpack.c.l.b16 %v314
      %v462 = vunpack.c.l.b16 %v315
      %v463 = vunpack.c.l.b16 %v316
      %v464 = vunpack.c.l.b16 %v317
      %v465 = vunpack.c.l.b16 %v318
      %v466 = vunpack.c.l.b16 %v319
      %v467 = vunpack.c.l.b16 %v320
      %v468 = vunpack.c.l.b16 %v321
      %v469 = vunpack.c.l.b16 %v322
      %v470 = vunpack.c.l.b16 %v323
      %v471 = vunpack.c.l.b16 %v324
      %v472 = vunpack.c.l.b16 %v325
      %v473 = vunpack.c.l.b16 %v326
      %v474 = vpack.c.b16 %v459, %v458
      %v475 = vpack.c.b16 %v461, %v460
      %v476 = vpack.c.b16 %v463, %v462
      %v477 = vpack.c.b16 %v465, %v464
      %v478 = vpack.c.b16 %v467, %v466
      %v479 = vpack.c.b16 %v469, %v468
      %v480 = vpack.c.b16 %v471, %v470
      %v481 = vpack.c.b16 %v473, %v472
      %490 = vmatprep.subr.bf16.mxu0 0
      %491 = vmatpush1.bf16.msra.mxu0 %v474
      %492 = vmatprep.subr.bf16.mxu0 0
      %493 = vmatpush1.bf16.msra.mxu0 %v475
      %494 = vmatprep.subr.bf16.mxu0 0
      %495 = vmatpush1.bf16.msra.mxu0 %v476
      %496 = vmatprep.subr.bf16.mxu0 0
      %497 = vmatpush1.bf16.msra.mxu0 %v477
      %498 = vmatprep.subr.bf16.mxu0 0
      %499 = vmatpush1.bf16.msra.mxu0 %v478
      %500 = vmatprep.subr.bf16.mxu0 0
      %501 = vmatpush1.bf16.msra.mxu0 %v479
      %502 = vmatprep.subr.bf16.mxu0 0
      %503 = vmatpush1.bf16.msra.mxu0 %v480
      %504 = vmatprep.subr.bf16.mxu0 0
      %505 = vmatpush1.bf16.msra.mxu0 %v481
      %506 = vmatprep.subr.bf16.mxu0 0
      %507 = vmatpush1.bf16.msra.mxu0 0
      %508 = vmatprep.subr.bf16.mxu0 0
      %509 = vmatpush1.bf16.msra.mxu0 0
      %510 = vmatprep.subr.bf16.mxu0 0
      %511 = vmatpush1.bf16.msra.mxu0 0
      %512 = vmatprep.subr.bf16.mxu0 0
      %513 = vmatpush1.bf16.msra.mxu0 0
      %514 = vmatprep.subr.bf16.mxu0 0
      %515 = vmatpush1.bf16.msra.mxu0 0
      %516 = vmatprep.subr.bf16.mxu0 0
      %517 = vmatpush1.bf16.msra.mxu0 0
      %518 = vmatprep.subr.bf16.mxu0 0
      %519 = vmatpush1.bf16.msra.mxu0 0
      %520 = vmatprep.subr.bf16.mxu0 0
      %521 = vmatpush1.bf16.msra.mxu0 0
      %522 = vmatprep.mubr.bf16.mxu0 0
      %523 = vmatmul.mubr.bf16.gmra.mrb[0].mxu0 %v310
      %v524 = vpop.f32.mrb[0].mxu0
      %v525 = vadd.f32 %v437, %v524
      %v526 = vpop.f32.mrb[0].mxu0
      %v527 = vpop.f32.mrb[0].mxu0
      %v528 = vpop.f32.mrb[0].mxu0
      %529 = vdwg.mxu0
      %s530 = scalar_lea.vmem %s1, 128
      %v531 = vld [vmem:[%s530] sm:$0xf]
      %v532 = vld [vmem:[%s530 + $0x4] sm:$0xf]
      %v533 = vld [vmem:[%s530 + $0x8] sm:$0xf]
      %v534 = vld [vmem:[%s530 + $0xc] sm:$0xf]
      %v535 = vld [vmem:[%s530 + $0x10] sm:$0xf]
      %v536 = vld [vmem:[%s530 + $0x14] sm:$0xf]
      %v537 = vld [vmem:[%s530 + $0x18] sm:$0xf]
      %v538 = vld [vmem:[%s530 + $0x1c] sm:$0xf]
      %v539 = vld [vmem:[%s530 + $0x20] sm:$0xf]
      %v540 = vld [vmem:[%s530 + $0x24] sm:$0xf]
      %v541 = vld [vmem:[%s530 + $0x28] sm:$0xf]
      %v542 = vld [vmem:[%s530 + $0x2c] sm:$0xf]
      %v543 = vld [vmem:[%s530 + $0x30] sm:$0xf]
      %v544 = vld [vmem:[%s530 + $0x34] sm:$0xf]
      %v545 = vld [vmem:[%s530 + $0x38] sm:$0xf]
      %v546 = vld [vmem:[%s530 + $0x3c] sm:$0xf]
      %547 = vrot.lane.b32.xlu0 %v310, 64
      %v548 = vpop.permute.xlu0 %547
      %549 = vrot.lane.b32.xlu0 %v327, 64
      %v550 = vpop.permute.xlu0 %549
      %vm551 = vcmask 523264
      %v552 = vsel %vm551, %v548, %v550
      %v570 = vunpack.c.l.b16 %v531
      %v571 = vunpack.c.l.b16 %v532
      %v572 = vunpack.c.l.b16 %v533
      %v573 = vunpack.c.l.b16 %v534
      %v574 = vunpack.c.l.b16 %v535
      %v575 = vunpack.c.l.b16 %v536
      %v576 = vunpack.c.l.b16 %v537
      %v577 = vunpack.c.l.b16 %v538
      %v578 = vunpack.c.l.b16 %v539
      %v579 = vunpack.c.l.b16 %v540
      %v580 = vunpack.c.l.b16 %v541
      %v581 = vunpack.c.l.b16 %v542
      %v582 = vunpack.c.l.b16 %v543
      %v583 = vunpack.c.l.b16 %v544
      %v584 = vunpack.c.l.b16 %v545
      %v585 = vunpack.c.l.b16 %v546
      %v586 = vpack.c.b16 %v571, %v570
      %v587 = vpack.c.b16 %v573, %v572
      %v588 = vpack.c.b16 %v575, %v574
      %v589 = vpack.c.b16 %v577, %v576
      %v590 = vpack.c.b16 %v579, %v578
      %v591 = vpack.c.b16 %v581, %v580
      %v592 = vpack.c.b16 %v583, %v582
      %v593 = vpack.c.b16 %v585, %v584
      %602 = vmatprep.subr.bf16.mxu0 0
      %603 = vmatpush1.bf16.msra.mxu0 %v586
      %604 = vmatprep.subr.bf16.mxu0 0
      %605 = vmatpush1.bf16.msra.mxu0 %v587
      %606 = vmatprep.subr.bf16.mxu0 0
      %607 = vmatpush1.bf16.msra.mxu0 %v588
      %608 = vmatprep.subr.bf16.mxu0 0
      %609 = vmatpush1.bf16.msra.mxu0 %v589
      %610 = vmatprep.subr.bf16.mxu0 0
      %611 = vmatpush1.bf16.msra.mxu0 %v590
      %612 = vmatprep.subr.bf16.mxu0 0
      %613 = vmatpush1.bf16.msra.mxu0 %v591
      %614 = vmatprep.subr.bf16.mxu0 0
      %615 = vmatpush1.bf16.msra.mxu0 %v592
      %616 = vmatprep.subr.bf16.mxu0 0
      %617 = vmatpush1.bf16.msra.mxu0 %v593
      %618 = vmatprep.subr.bf16.mxu0 0
      %619 = vmatpush1.bf16.msra.mxu0 0
      %620 = vmatprep.subr.bf16.mxu0 0
      %621 = vmatpush1.bf16.msra.mxu0 0
      %622 = vmatprep.subr.bf16.mxu0 0
      %623 = vmatpush1.bf16.msra.mxu0 0
      %624 = vmatprep.subr.bf16.mxu0 0
      %625 = vmatpush1.bf16.msra.mxu0 0
      %626 = vmatprep.subr.bf16.mxu0 0
      %627 = vmatpush1.bf16.msra.mxu0 0
      %628 = vmatprep.subr.bf16.mxu0 0
      %629 = vmatpush1.bf16.msra.mxu0 0
      %630 = vmatprep.subr.bf16.mxu0 0
      %631 = vmatpush1.bf16.msra.mxu0 0
      %632 = vmatprep.subr.bf16.mxu0 0
      %633 = vmatpush1.bf16.msra.mxu0 0
      %634 = vmatprep.mubr.bf16.mxu0 0
      %635 = vmatmul.mubr.bf16.gmra.mrb[0].mxu0 %v552
      %v636 = vpop.f32.mrb[0].mxu0
      %v637 = vadd.f32 0.0, %v636
      %v638 = vpop.f32.mrb[0].mxu0
      %v639 = vpop.f32.mrb[0].mxu0
      %v640 = vpop.f32.mrb[0].mxu0
      %641 = vdwg.mxu0
      %v642 = vadd.f32 %v525, %v637
      %s643 = scalar_lea.vmem %s1, 192
      %v644 = vld [vmem:[%s643] sm:$0xf]
      %v645 = vld [vmem:[%s643 + $0x4] sm:$0xf]
      %v646 = vld [vmem:[%s643 + $0x8] sm:$0xf]
      %v647 = vld [vmem:[%s643 + $0xc] sm:$0xf]
      %v648 = vld [vmem:[%s643 + $0x10] sm:$0xf]
      %v649 = vld [vmem:[%s643 + $0x14] sm:$0xf]
      %v650 = vld [vmem:[%s643 + $0x18] sm:$0xf]
      %v651 = vld [vmem:[%s643 + $0x1c] sm:$0xf]
      %v652 = vld [vmem:[%s643 + $0x20] sm:$0xf]
      %v653 = vld [vmem:[%s643 + $0x24] sm:$0xf]
      %v654 = vld [vmem:[%s643 + $0x28] sm:$0xf]
      %v655 = vld [vmem:[%s643 + $0x2c] sm:$0xf]
      %v656 = vld [vmem:[%s643 + $0x30] sm:$0xf]
      %v657 = vld [vmem:[%s643 + $0x34] sm:$0xf]
      %v658 = vld [vmem:[%s643 + $0x38] sm:$0xf]
      %v659 = vld [vmem:[%s643 + $0x3c] sm:$0xf]
      %v661 = vshrl.u32 %v310, 16
      %v663 = vshll.u32 %v310, 16
      %v665 = vrot.slane %v663, 1
      %v666 = vor.u32 %v661, %v665
      %v684 = vunpack.c.l.b16 %v644
      %v685 = vunpack.c.l.b16 %v645
      %v686 = vunpack.c.l.b16 %v646
      %v687 = vunpack.c.l.b16 %v647
      %v688 = vunpack.c.l.b16 %v648
      %v689 = vunpack.c.l.b16 %v649
      %v690 = vunpack.c.l.b16 %v650
      %v691 = vunpack.c.l.b16 %v651
      %v692 = vunpack.c.l.b16 %v652
      %v693 = vunpack.c.l.b16 %v653
      %v694 = vunpack.c.l.b16 %v654
      %v695 = vunpack.c.l.b16 %v655
      %v696 = vunpack.c.l.b16 %v656
      %v697 = vunpack.c.l.b16 %v657
      %v698 = vunpack.c.l.b16 %v658
      %v699 = vunpack.c.l.b16 %v659
      %v700 = vpack.c.b16 %v685, %v684
      %v701 = vpack.c.b16 %v687, %v686
      %v702 = vpack.c.b16 %v689, %v688
      %v703 = vpack.c.b16 %v691, %v690
      %v704 = vpack.c.b16 %v693, %v692
      %v705 = vpack.c.b16 %v695, %v694
      %v706 = vpack.c.b16 %v697, %v696
      %v707 = vpack.c.b16 %v699, %v698
      %716 = vmatprep.subr.bf16.mxu0 0
      %717 = vmatpush1.bf16.msra.mxu0 %v700
      %718 = vmatprep.subr.bf16.mxu0 0
      %719 = vmatpush1.bf16.msra.mxu0 %v701
      %720 = vmatprep.subr.bf16.mxu0 0
      %721 = vmatpush1.bf16.msra.mxu0 %v702
      %722 = vmatprep.subr.bf16.mxu0 0
      %723 = vmatpush1.bf16.msra.mxu0 %v703
      %724 = vmatprep.subr.bf16.mxu0 0
      %725 = vmatpush1.bf16.msra.mxu0 %v704
      %726 = vmatprep.subr.bf16.mxu0 0
      %727 = vmatpush1.bf16.msra.mxu0 %v705
      %728 = vmatprep.subr.bf16.mxu0 0
      %729 = vmatpush1.bf16.msra.mxu0 %v706
      %730 = vmatprep.subr.bf16.mxu0 0
      %731 = vmatpush1.bf16.msra.mxu0 %v707
      %732 = vmatprep.subr.bf16.mxu0 0
      %733 = vmatpush1.bf16.msra.mxu0 0
      %734 = vmatprep.subr.bf16.mxu0 0
      %735 = vmatpush1.bf16.msra.mxu0 0
      %736 = vmatprep.subr.bf16.mxu0 0
      %737 = vmatpush1.bf16.msra.mxu0 0
      %738 = vmatprep.subr.bf16.mxu0 0
      %739 = vmatpush1.bf16.msra.mxu0 0
      %740 = vmatprep.subr.bf16.mxu0 0
      %741 = vmatpush1.bf16.msra.mxu0 0
      %742 = vmatprep.subr.bf16.mxu0 0
      %743 = vmatpush1.bf16.msra.mxu0 0
      %744 = vmatprep.subr.bf16.mxu0 0
      %745 = vmatpush1.bf16.msra.mxu0 0
      %746 = vmatprep.subr.bf16.mxu0 0
      %747 = vmatpush1.bf16.msra.mxu0 0
      %748 = vmatprep.mubr.bf16.mxu0 0
      %749 = vmatmul.mubr.bf16.gmra.mrb[0].mxu0 %v666
      %v750 = vpop.f32.mrb[0].mxu0
      %v751 = vadd.f32 0.0, %v750
      %v752 = vpop.f32.mrb[0].mxu0
      %v753 = vpop.f32.mrb[0].mxu0
      %v754 = vpop.f32.mrb[0].mxu0
      %755 = vdwg.mxu0
      %v756 = vadd.f32 %v642, %v751
      %s757 = scalar_lea.vmem %s1, 256
      %v758 = vld [vmem:[%s757] sm:$0xf]
      %v759 = vld [vmem:[%s757 + $0x4] sm:$0xf]
      %v760 = vld [vmem:[%s757 + $0x8] sm:$0xf]
      %v761 = vld [vmem:[%s757 + $0xc] sm:$0xf]
      %v762 = vld [vmem:[%s757 + $0x10] sm:$0xf]
      %v763 = vld [vmem:[%s757 + $0x14] sm:$0xf]
      %v764 = vld [vmem:[%s757 + $0x18] sm:$0xf]
      %v765 = vld [vmem:[%s757 + $0x1c] sm:$0xf]
      %v766 = vld [vmem:[%s757 + $0x20] sm:$0xf]
      %v767 = vld [vmem:[%s757 + $0x24] sm:$0xf]
      %v768 = vld [vmem:[%s757 + $0x28] sm:$0xf]
      %v769 = vld [vmem:[%s757 + $0x2c] sm:$0xf]
      %v770 = vld [vmem:[%s757 + $0x30] sm:$0xf]
      %v771 = vld [vmem:[%s757 + $0x34] sm:$0xf]
      %v772 = vld [vmem:[%s757 + $0x38] sm:$0xf]
      %v773 = vld [vmem:[%s757 + $0x3c] sm:$0xf]
      %v775 = vshrl.u32 %v327, 16
      %v777 = vshll.u32 %v327, 16
      %v779 = vrot.slane %v777, 1
      %v780 = vor.u32 %v775, %v779
      %781 = vrot.lane.b32.xlu0 %v666, 96
      %v782 = vpop.permute.xlu0 %781
      %783 = vrot.lane.b32.xlu0 %v780, 96
      %v784 = vpop.permute.xlu0 %783
      %v785 = vsel %vm351, %v782, %v784
      %v803 = vunpack.c.l.b16 %v758
      %v804 = vunpack.c.l.b16 %v759
      %v805 = vunpack.c.l.b16 %v760
      %v806 = vunpack.c.l.b16 %v761
      %v807 = vunpack.c.l.b16 %v762
      %v808 = vunpack.c.l.b16 %v763
      %v809 = vunpack.c.l.b16 %v764
      %v810 = vunpack.c.l.b16 %v765
      %v811 = vunpack.c.l.b16 %v766
      %v812 = vunpack.c.l.b16 %v767
      %v813 = vunpack.c.l.b16 %v768
      %v814 = vunpack.c.l.b16 %v769
      %v815 = vunpack.c.l.b16 %v770
      %v816 = vunpack.c.l.b16 %v771
      %v817 = vunpack.c.l.b16 %v772
      %v818 = vunpack.c.l.b16 %v773
      %v819 = vpack.c.b16 %v804, %v803
      %v820 = vpack.c.b16 %v806, %v805
      %v821 = vpack.c.b16 %v808, %v807
      %v822 = vpack.c.b16 %v810, %v809
      %v823 = vpack.c.b16 %v812, %v811
      %v824 = vpack.c.b16 %v814, %v813
      %v825 = vpack.c.b16 %v816, %v815
      %v826 = vpack.c.b16 %v818, %v817
      %835 = vmatprep.subr.bf16.mxu0 0
      %836 = vmatpush1.bf16.msra.mxu0 %v819
      %837 = vmatprep.subr.bf16.mxu0 0
      %838 = vmatpush1.bf16.msra.mxu0 %v820
      %839 = vmatprep.subr.bf16.mxu0 0
      %840 = vmatpush1.bf16.msra.mxu0 %v821
      %841 = vmatprep.subr.bf16.mxu0 0
      %842 = vmatpush1.bf16.msra.mxu0 %v822
      %843 = vmatprep.subr.bf16.mxu0 0
      %844 = vmatpush1.bf16.msra.mxu0 %v823
      %845 = vmatprep.subr.bf16.mxu0 0
      %846 = vmatpush1.bf16.msra.mxu0 %v824
      %847 = vmatprep.subr.bf16.mxu0 0
      %848 = vmatpush1.bf16.msra.mxu0 %v825
      %849 = vmatprep.subr.bf16.mxu0 0
      %850 = vmatpush1.bf16.msra.mxu0 %v826
      %851 = vmatprep.subr.bf16.mxu0 0
      %852 = vmatpush1.bf16.msra.mxu0 0
      %853 = vmatprep.subr.bf16.mxu0 0
      %854 = vmatpush1.bf16.msra.mxu0 0
      %855 = vmatprep.subr.bf16.mxu0 0
      %856 = vmatpush1.bf16.msra.mxu0 0
      %857 = vmatprep.subr.bf16.mxu0 0
      %858 = vmatpush1.bf16.msra.mxu0 0
      %859 = vmatprep.subr.bf16.mxu0 0
      %860 = vmatpush1.bf16.msra.mxu0 0
      %861 = vmatprep.subr.bf16.mxu0 0
      %862 = vmatpush1.bf16.msra.mxu0 0
      %863 = vmatprep.subr.bf16.mxu0 0
      %864 = vmatpush1.bf16.msra.mxu0 0
      %865 = vmatprep.subr.bf16.mxu0 0
      %866 = vmatpush1.bf16.msra.mxu0 0
      %867 = vmatprep.mubr.bf16.mxu0 0
      %868 = vmatmul.mubr.bf16.gmra.mrb[0].mxu0 %v785
      %v869 = vpop.f32.mrb[0].mxu0
      %v870 = vadd.f32 0.0, %v869
      %v871 = vpop.f32.mrb[0].mxu0
      %v872 = vpop.f32.mrb[0].mxu0
      %v873 = vpop.f32.mrb[0].mxu0
      %874 = vdwg.mxu0
      %v875 = vadd.f32 %v756, %v870
      %s876 = scalar_lea.vmem %s1, 320
      %v877 = vld [vmem:[%s876] sm:$0xf]
      %v878 = vld [vmem:[%s876 + $0x4] sm:$0xf]
      %v879 = vld [vmem:[%s876 + $0x8] sm:$0xf]
      %v880 = vld [vmem:[%s876 + $0xc] sm:$0xf]
      %v881 = vld [vmem:[%s876 + $0x10] sm:$0xf]
      %v882 = vld [vmem:[%s876 + $0x14] sm:$0xf]
      %v883 = vld [vmem:[%s876 + $0x18] sm:$0xf]
      %v884 = vld [vmem:[%s876 + $0x1c] sm:$0xf]
      %v885 = vld [vmem:[%s876 + $0x20] sm:$0xf]
      %v886 = vld [vmem:[%s876 + $0x24] sm:$0xf]
      %v887 = vld [vmem:[%s876 + $0x28] sm:$0xf]
      %v888 = vld [vmem:[%s876 + $0x2c] sm:$0xf]
      %v889 = vld [vmem:[%s876 + $0x30] sm:$0xf]
      %v890 = vld [vmem:[%s876 + $0x34] sm:$0xf]
      %v891 = vld [vmem:[%s876 + $0x38] sm:$0xf]
      %v892 = vld [vmem:[%s876 + $0x3c] sm:$0xf]
      %893 = vrot.lane.b32.xlu0 %v666, 64
      %v894 = vpop.permute.xlu0 %893
      %895 = vrot.lane.b32.xlu0 %v780, 64
      %v896 = vpop.permute.xlu0 %895
      %v897 = vsel %vm551, %v894, %v896
      %v915 = vunpack.c.l.b16 %v877
      %v916 = vunpack.c.l.b16 %v878
      %v917 = vunpack.c.l.b16 %v879
      %v918 = vunpack.c.l.b16 %v880
      %v919 = vunpack.c.l.b16 %v881
      %v920 = vunpack.c.l.b16 %v882
      %v921 = vunpack.c.l.b16 %v883
      %v922 = vunpack.c.l.b16 %v884
      %v923 = vunpack.c.l.b16 %v885
      %v924 = vunpack.c.l.b16 %v886
      %v925 = vunpack.c.l.b16 %v887
      %v926 = vunpack.c.l.b16 %v888
      %v927 = vunpack.c.l.b16 %v889
      %v928 = vunpack.c.l.b16 %v890
      %v929 = vunpack.c.l.b16 %v891
      %v930 = vunpack.c.l.b16 %v892
      %v931 = vpack.c.b16 %v916, %v915
      %v932 = vpack.c.b16 %v918, %v917
      %v933 = vpack.c.b16 %v920, %v919
      %v934 = vpack.c.b16 %v922, %v921
      %v935 = vpack.c.b16 %v924, %v923
      %v936 = vpack.c.b16 %v926, %v925
      %v937 = vpack.c.b16 %v928, %v927
      %v938 = vpack.c.b16 %v930, %v929
      %947 = vmatprep.subr.bf16.mxu0 0
      %948 = vmatpush1.bf16.msra.mxu0 %v931
      %949 = vmatprep.subr.bf16.mxu0 0
      %950 = vmatpush1.bf16.msra.mxu0 %v932
      %951 = vmatprep.subr.bf16.mxu0 0
      %952 = vmatpush1.bf16.msra.mxu0 %v933
      %953 = vmatprep.subr.bf16.mxu0 0
      %954 = vmatpush1.bf16.msra.mxu0 %v934
      %955 = vmatprep.subr.bf16.mxu0 0
      %956 = vmatpush1.bf16.msra.mxu0 %v935
      %957 = vmatprep.subr.bf16.mxu0 0
      %958 = vmatpush1.bf16.msra.mxu0 %v936
      %959 = vmatprep.subr.bf16.mxu0 0
      %960 = vmatpush1.bf16.msra.mxu0 %v937
      %961 = vmatprep.subr.bf16.mxu0 0
      %962 = vmatpush1.bf16.msra.mxu0 %v938
      %963 = vmatprep.subr.bf16.mxu0 0
      %964 = vmatpush1.bf16.msra.mxu0 0
      %965 = vmatprep.subr.bf16.mxu0 0
      %966 = vmatpush1.bf16.msra.mxu0 0
      %967 = vmatprep.subr.bf16.mxu0 0
      %968 = vmatpush1.bf16.msra.mxu0 0
      %969 = vmatprep.subr.bf16.mxu0 0
      %970 = vmatpush1.bf16.msra.mxu0 0
      %971 = vmatprep.subr.bf16.mxu0 0
      %972 = vmatpush1.bf16.msra.mxu0 0
      %973 = vmatprep.subr.bf16.mxu0 0
      %974 = vmatpush1.bf16.msra.mxu0 0
      %975 = vmatprep.subr.bf16.mxu0 0
      %976 = vmatpush1.bf16.msra.mxu0 0
      %977 = vmatprep.subr.bf16.mxu0 0
      %978 = vmatpush1.bf16.msra.mxu0 0
      %979 = vmatprep.mubr.bf16.mxu0 0
      %980 = vmatmul.mubr.bf16.gmra.mrb[0].mxu0 %v897
      %v981 = vpop.f32.mrb[0].mxu0
      %v982 = vadd.f32 0.0, %v981
      %v983 = vpop.f32.mrb[0].mxu0
      %v984 = vpop.f32.mrb[0].mxu0
      %v985 = vpop.f32.mrb[0].mxu0
      %986 = vdwg.mxu0
      %v987 = vadd.f32 %v875, %v982
      %s988 = scalar_lea.vmem %s1, 384
      %v989 = vld [vmem:[%s988] sm:$0xf]
      %v990 = vld [vmem:[%s988 + $0x4] sm:$0xf]
      %v991 = vld [vmem:[%s988 + $0x8] sm:$0xf]
      %v992 = vld [vmem:[%s988 + $0xc] sm:$0xf]
      %v993 = vld [vmem:[%s988 + $0x10] sm:$0xf]
      %v994 = vld [vmem:[%s988 + $0x14] sm:$0xf]
      %v995 = vld [vmem:[%s988 + $0x18] sm:$0xf]
      %v996 = vld [vmem:[%s988 + $0x1c] sm:$0xf]
      %v997 = vld [vmem:[%s988 + $0x20] sm:$0xf]
      %v998 = vld [vmem:[%s988 + $0x24] sm:$0xf]
      %v999 = vld [vmem:[%s988 + $0x28] sm:$0xf]
      %v1000 = vld [vmem:[%s988 + $0x2c] sm:$0xf]
      %v1001 = vld [vmem:[%s988 + $0x30] sm:$0xf]
      %v1002 = vld [vmem:[%s988 + $0x34] sm:$0xf]
      %v1003 = vld [vmem:[%s988 + $0x38] sm:$0xf]
      %v1004 = vld [vmem:[%s988 + $0x3c] sm:$0xf]
      %v1005 = vrot.slane %v310, 1
      %v1023 = vunpack.c.l.b16 %v989
      %v1024 = vunpack.c.l.b16 %v990
      %v1025 = vunpack.c.l.b16 %v991
      %v1026 = vunpack.c.l.b16 %v992
      %v1027 = vunpack.c.l.b16 %v993
      %v1028 = vunpack.c.l.b16 %v994
      %v1029 = vunpack.c.l.b16 %v995
      %v1030 = vunpack.c.l.b16 %v996
      %v1031 = vunpack.c.l.b16 %v997
      %v1032 = vunpack.c.l.b16 %v998
      %v1033 = vunpack.c.l.b16 %v999
      %v1034 = vunpack.c.l.b16 %v1000
      %v1035 = vunpack.c.l.b16 %v1001
      %v1036 = vunpack.c.l.b16 %v1002
      %v1037 = vunpack.c.l.b16 %v1003
      %v1038 = vunpack.c.l.b16 %v1004
      %v1039 = vpack.c.b16 %v1024, %v1023
      %v1040 = vpack.c.b16 %v1026, %v1025
      %v1041 = vpack.c.b16 %v1028, %v1027
      %v1042 = vpack.c.b16 %v1030, %v1029
      %v1043 = vpack.c.b16 %v1032, %v1031
      %v1044 = vpack.c.b16 %v1034, %v1033
      %v1045 = vpack.c.b16 %v1036, %v1035
      %v1046 = vpack.c.b16 %v1038, %v1037
      %1055 = vmatprep.subr.bf16.mxu0 0
      %1056 = vmatpush1.bf16.msra.mxu0 %v1039
      %1057 = vmatprep.subr.bf16.mxu0 0
      %1058 = vmatpush1.bf16.msra.mxu0 %v1040
      %1059 = vmatprep.subr.bf16.mxu0 0
      %1060 = vmatpush1.bf16.msra.mxu0 %v1041
      %1061 = vmatprep.subr.bf16.mxu0 0
      %1062 = vmatpush1.bf16.msra.mxu0 %v1042
      %1063 = vmatprep.subr.bf16.mxu0 0
      %1064 = vmatpush1.bf16.msra.mxu0 %v1043
      %1065 = vmatprep.subr.bf16.mxu0 0
      %1066 = vmatpush1.bf16.msra.mxu0 %v1044
      %1067 = vmatprep.subr.bf16.mxu0 0
      %1068 = vmatpush1.bf16.msra.mxu0 %v1045
      %1069 = vmatprep.subr.bf16.mxu0 0
      %1070 = vmatpush1.bf16.msra.mxu0 %v1046
      %1071 = vmatprep.subr.bf16.mxu0 0
      %1072 = vmatpush1.bf16.msra.mxu0 0
      %1073 = vmatprep.subr.bf16.mxu0 0
      %1074 = vmatpush1.bf16.msra.mxu0 0
      %1075 = vmatprep.subr.bf16.mxu0 0
      %1076 = vmatpush1.bf16.msra.mxu0 0
      %1077 = vmatprep.subr.bf16.mxu0 0
      %1078 = vmatpush1.bf16.msra.mxu0 0
      %1079 = vmatprep.subr.bf16.mxu0 0
      %1080 = vmatpush1.bf16.msra.mxu0 0
      %1081 = vmatprep.subr.bf16.mxu0 0
      %1082 = vmatpush1.bf16.msra.mxu0 0
      %1083 = vmatprep.subr.bf16.mxu0 0
      %1084 = vmatpush1.bf16.msra.mxu0 0
      %1085 = vmatprep.subr.bf16.mxu0 0
      %1086 = vmatpush1.bf16.msra.mxu0 0
      %1087 = vmatprep.mubr.bf16.mxu0 0
      %1088 = vmatmul.mubr.bf16.gmra.mrb[0].mxu0 %v1005
      %v1089 = vpop.f32.mrb[0].mxu0
      %v1090 = vadd.f32 0.0, %v1089
      %v1091 = vpop.f32.mrb[0].mxu0
      %v1092 = vpop.f32.mrb[0].mxu0
      %v1093 = vpop.f32.mrb[0].mxu0
      %1094 = vdwg.mxu0
      %v1095 = vadd.f32 %v987, %v1090
      %s1096 = scalar_lea.vmem %s1, 448
      %v1097 = vld [vmem:[%s1096] sm:$0xf]
      %v1098 = vld [vmem:[%s1096 + $0x4] sm:$0xf]
      %v1099 = vld [vmem:[%s1096 + $0x8] sm:$0xf]
      %v1100 = vld [vmem:[%s1096 + $0xc] sm:$0xf]
      %v1101 = vld [vmem:[%s1096 + $0x10] sm:$0xf]
      %v1102 = vld [vmem:[%s1096 + $0x14] sm:$0xf]
      %v1103 = vld [vmem:[%s1096 + $0x18] sm:$0xf]
      %v1104 = vld [vmem:[%s1096 + $0x1c] sm:$0xf]
      %v1105 = vld [vmem:[%s1096 + $0x20] sm:$0xf]
      %v1106 = vld [vmem:[%s1096 + $0x24] sm:$0xf]
      %v1107 = vld [vmem:[%s1096 + $0x28] sm:$0xf]
      %v1108 = vld [vmem:[%s1096 + $0x2c] sm:$0xf]
      %v1109 = vld [vmem:[%s1096 + $0x30] sm:$0xf]
      %v1110 = vld [vmem:[%s1096 + $0x34] sm:$0xf]
      %v1111 = vld [vmem:[%s1096 + $0x38] sm:$0xf]
      %v1112 = vld [vmem:[%s1096 + $0x3c] sm:$0xf]
      %v1113 = vrot.slane %v327, 1
      %1114 = vrot.lane.b32.xlu0 %v1005, 96
      %v1115 = vpop.permute.xlu0 %1114
      %1116 = vrot.lane.b32.xlu0 %v1113, 96
      %v1117 = vpop.permute.xlu0 %1116
      %v1118 = vsel %vm351, %v1115, %v1117
      %v1136 = vunpack.c.l.b16 %v1097
      %v1137 = vunpack.c.l.b16 %v1098
      %v1138 = vunpack.c.l.b16 %v1099
      %v1139 = vunpack.c.l.b16 %v1100
      %v1140 = vunpack.c.l.b16 %v1101
      %v1141 = vunpack.c.l.b16 %v1102
      %v1142 = vunpack.c.l.b16 %v1103
      %v1143 = vunpack.c.l.b16 %v1104
      %v1144 = vunpack.c.l.b16 %v1105
      %v1145 = vunpack.c.l.b16 %v1106
      %v1146 = vunpack.c.l.b16 %v1107
      %v1147 = vunpack.c.l.b16 %v1108
      %v1148 = vunpack.c.l.b16 %v1109
      %v1149 = vunpack.c.l.b16 %v1110
      %v1150 = vunpack.c.l.b16 %v1111
      %v1151 = vunpack.c.l.b16 %v1112
      %v1152 = vpack.c.b16 %v1137, %v1136
      %v1153 = vpack.c.b16 %v1139, %v1138
      %v1154 = vpack.c.b16 %v1141, %v1140
      %v1155 = vpack.c.b16 %v1143, %v1142
      %v1156 = vpack.c.b16 %v1145, %v1144
      %v1157 = vpack.c.b16 %v1147, %v1146
      %v1158 = vpack.c.b16 %v1149, %v1148
      %v1159 = vpack.c.b16 %v1151, %v1150
      %1168 = vmatprep.subr.bf16.mxu0 0
      %1169 = vmatpush1.bf16.msra.mxu0 %v1152
      %1170 = vmatprep.subr.bf16.mxu0 0
      %1171 = vmatpush1.bf16.msra.mxu0 %v1153
      %1172 = vmatprep.subr.bf16.mxu0 0
      %1173 = vmatpush1.bf16.msra.mxu0 %v1154
      %1174 = vmatprep.subr.bf16.mxu0 0
      %1175 = vmatpush1.bf16.msra.mxu0 %v1155
      %1176 = vmatprep.subr.bf16.mxu0 0
      %1177 = vmatpush1.bf16.msra.mxu0 %v1156
      %1178 = vmatprep.subr.bf16.mxu0 0
      %1179 = vmatpush1.bf16.msra.mxu0 %v1157
      %1180 = vmatprep.subr.bf16.mxu0 0
      %1181 = vmatpush1.bf16.msra.mxu0 %v1158
      %1182 = vmatprep.subr.bf16.mxu0 0
      %1183 = vmatpush1.bf16.msra.mxu0 %v1159
      %1184 = vmatprep.subr.bf16.mxu0 0
      %1185 = vmatpush1.bf16.msra.mxu0 0
      %1186 = vmatprep.subr.bf16.mxu0 0
      %1187 = vmatpush1.bf16.msra.mxu0 0
      %1188 = vmatprep.subr.bf16.mxu0 0
      %1189 = vmatpush1.bf16.msra.mxu0 0
      %1190 = vmatprep.subr.bf16.mxu0 0
      %1191 = vmatpush1.bf16.msra.mxu0 0
      %1192 = vmatprep.subr.bf16.mxu0 0
      %1193 = vmatpush1.bf16.msra.mxu0 0
      %1194 = vmatprep.subr.bf16.mxu0 0
      %1195 = vmatpush1.bf16.msra.mxu0 0
      %1196 = vmatprep.subr.bf16.mxu0 0
      %1197 = vmatpush1.bf16.msra.mxu0 0
      %1198 = vmatprep.subr.bf16.mxu0 0
      %1199 = vmatpush1.bf16.msra.mxu0 0
      %1200 = vmatprep.mubr.bf16.mxu0 0
      %1201 = vmatmul.mubr.bf16.gmra.mrb[0].mxu0 %v1118
      %v1202 = vpop.f32.mrb[0].mxu0
      %v1203 = vadd.f32 0.0, %v1202
      %v1204 = vpop.f32.mrb[0].mxu0
      %v1205 = vpop.f32.mrb[0].mxu0
      %v1206 = vpop.f32.mrb[0].mxu0
      %1207 = vdwg.mxu0
      %v1208 = vadd.f32 %v1095, %v1203
      %s1209 = scalar_lea.vmem %s1, 512
      %v1210 = vld [vmem:[%s1209] sm:$0xf]
      %v1211 = vld [vmem:[%s1209 + $0x4] sm:$0xf]
      %v1212 = vld [vmem:[%s1209 + $0x8] sm:$0xf]
      %v1213 = vld [vmem:[%s1209 + $0xc] sm:$0xf]
      %v1214 = vld [vmem:[%s1209 + $0x10] sm:$0xf]
      %v1215 = vld [vmem:[%s1209 + $0x14] sm:$0xf]
      %v1216 = vld [vmem:[%s1209 + $0x18] sm:$0xf]
      %v1217 = vld [vmem:[%s1209 + $0x1c] sm:$0xf]
      %v1218 = vld [vmem:[%s1209 + $0x20] sm:$0xf]
      %v1219 = vld [vmem:[%s1209 + $0x24] sm:$0xf]
      %v1220 = vld [vmem:[%s1209 + $0x28] sm:$0xf]
      %v1221 = vld [vmem:[%s1209 + $0x2c] sm:$0xf]
      %v1222 = vld [vmem:[%s1209 + $0x30] sm:$0xf]
      %v1223 = vld [vmem:[%s1209 + $0x34] sm:$0xf]
      %v1224 = vld [vmem:[%s1209 + $0x38] sm:$0xf]
      %v1225 = vld [vmem:[%s1209 + $0x3c] sm:$0xf]
      %1226 = vrot.lane.b32.xlu0 %v1005, 64
      %v1227 = vpop.permute.xlu0 %1226
      %1228 = vrot.lane.b32.xlu0 %v1113, 64
      %v1229 = vpop.permute.xlu0 %1228
      %v1230 = vsel %vm551, %v1227, %v1229
      %v1248 = vunpack.c.l.b16 %v1210
      %v1249 = vunpack.c.l.b16 %v1211
      %v1250 = vunpack.c.l.b16 %v1212
      %v1251 = vunpack.c.l.b16 %v1213
      %v1252 = vunpack.c.l.b16 %v1214
      %v1253 = vunpack.c.l.b16 %v1215
      %v1254 = vunpack.c.l.b16 %v1216
      %v1255 = vunpack.c.l.b16 %v1217
      %v1256 = vunpack.c.l.b16 %v1218
      %v1257 = vunpack.c.l.b16 %v1219
      %v1258 = vunpack.c.l.b16 %v1220
      %v1259 = vunpack.c.l.b16 %v1221
      %v1260 = vunpack.c.l.b16 %v1222
      %v1261 = vunpack.c.l.b16 %v1223
      %v1262 = vunpack.c.l.b16 %v1224
      %v1263 = vunpack.c.l.b16 %v1225
      %v1264 = vpack.c.b16 %v1249, %v1248
      %v1265 = vpack.c.b16 %v1251, %v1250
      %v1266 = vpack.c.b16 %v1253, %v1252
      %v1267 = vpack.c.b16 %v1255, %v1254
      %v1268 = vpack.c.b16 %v1257, %v1256
      %v1269 = vpack.c.b16 %v1259, %v1258
      %v1270 = vpack.c.b16 %v1261, %v1260
      %v1271 = vpack.c.b16 %v1263, %v1262
      %1280 = vmatprep.subr.bf16.mxu0 0
      %1281 = vmatpush1.bf16.msra.mxu0 %v1264
      %1282 = vmatprep.subr.bf16.mxu0 0
      %1283 = vmatpush1.bf16.msra.mxu0 %v1265
      %1284 = vmatprep.subr.bf16.mxu0 0
      %1285 = vmatpush1.bf16.msra.mxu0 %v1266
      %1286 = vmatprep.subr.bf16.mxu0 0
      %1287 = vmatpush1.bf16.msra.mxu0 %v1267
      %1288 = vmatprep.subr.bf16.mxu0 0
      %1289 = vmatpush1.bf16.msra.mxu0 %v1268
      %1290 = vmatprep.subr.bf16.mxu0 0
      %1291 = vmatpush1.bf16.msra.mxu0 %v1269
      %1292 = vmatprep.subr.bf16.mxu0 0
      %1293 = vmatpush1.bf16.msra.mxu0 %v1270
      %1294 = vmatprep.subr.bf16.mxu0 0
      %1295 = vmatpush1.bf16.msra.mxu0 %v1271
      %1296 = vmatprep.subr.bf16.mxu0 0
      %1297 = vmatpush1.bf16.msra.mxu0 0
      %1298 = vmatprep.subr.bf16.mxu0 0
      %1299 = vmatpush1.bf16.msra.mxu0 0
      %1300 = vmatprep.subr.bf16.mxu0 0
      %1301 = vmatpush1.bf16.msra.mxu0 0
      %1302 = vmatprep.subr.bf16.mxu0 0
      %1303 = vmatpush1.bf16.msra.mxu0 0
      %1304 = vmatprep.subr.bf16.mxu0 0
      %1305 = vmatpush1.bf16.msra.mxu0 0
      %1306 = vmatprep.subr.bf16.mxu0 0
      %1307 = vmatpush1.bf16.msra.mxu0 0
      %1308 = vmatprep.subr.bf16.mxu0 0
      %1309 = vmatpush1.bf16.msra.mxu0 0
      %1310 = vmatprep.subr.bf16.mxu0 0
      %1311 = vmatpush1.bf16.msra.mxu0 0
      %1312 = vmatprep.mubr.bf16.mxu0 0
      %1313 = vmatmul.mubr.bf16.gmra.mrb[0].mxu0 %v1230
      %v1314 = vpop.f32.mrb[0].mxu0
      %v1315 = vadd.f32 0.0, %v1314
      %v1316 = vpop.f32.mrb[0].mxu0
      %v1317 = vpop.f32.mrb[0].mxu0
      %v1318 = vpop.f32.mrb[0].mxu0
      %1319 = vdwg.mxu0
      %v1320 = vadd.f32 %v1208, %v1315
      %v1321 = vld [vmem:[%s2] sm:$0x1]
      %v1323 = vlaneseq
      %v1324 = vshrl.u32 %v1323, 7
      %v1325 = vsub.s32 0, %v1324
      %v1326 = vrot.slane %v1321, %v1325
      %v1328 = vmul.f32 %v1320, %v1326
      %v1329 = vld [vmem:[%s3] sm:$0x1]
      %v1331 = vlaneseq
      %v1332 = vshrl.u32 %v1331, 7
      %v1333 = vsub.s32 0, %v1332
      %v1334 = vrot.slane %v1329, %v1333
      %v1336 = vadd.f32 %v1328, %v1334
      %v1337 = vmax.f32 %v1336, 0.0
      %v1338 = vpack.c.bf16 %v1337, %v1337
      %v1339 = vld [vmem:[%s4] sm:$0xf]
      %v1340 = vld [vmem:[%s4 + $0x4] sm:$0xf]
      %v1341 = vld [vmem:[%s4 + $0x8] sm:$0xf]
      %v1342 = vld [vmem:[%s4 + $0xc] sm:$0xf]
      %v1343 = vld [vmem:[%s4 + $0x10] sm:$0xf]
      %v1344 = vld [vmem:[%s4 + $0x14] sm:$0xf]
      %v1345 = vld [vmem:[%s4 + $0x18] sm:$0xf]
      %v1346 = vld [vmem:[%s4 + $0x1c] sm:$0xf]
      %v1347 = vld [vmem:[%s5] sm:$0x1]
      %v1349 = vlaneseq
      %v1350 = vshrl.u32 %v1349, 7
      %v1351 = vsub.s32 0, %v1350
      %v1352 = vrot.slane %v1347, %v1351
      %v1362 = vunpack.c.l.b16 %v1339
      %v1363 = vunpack.c.l.b16 %v1340
      %v1364 = vunpack.c.l.b16 %v1341
      %v1365 = vunpack.c.l.b16 %v1342
      %v1366 = vunpack.c.l.b16 %v1343
      %v1367 = vunpack.c.l.b16 %v1344
      %v1368 = vunpack.c.l.b16 %v1345
      %v1369 = vunpack.c.l.b16 %v1346
      %v1370 = vpack.c.b16 %v1363, %v1362
      %v1371 = vpack.c.b16 %v1365, %v1364
      %v1372 = vpack.c.b16 %v1367, %v1366
      %v1373 = vpack.c.b16 %v1369, %v1368
      %vm1378 = vcmask 523264
      %v1380 = vsel %vm1378, %v1338, 0
      %1382 = vmatprep.subr.bf16.mxu0 0
      %1383 = vmatpush1.bf16.msra.mxu0 %v1370
      %1384 = vmatprep.subr.bf16.mxu0 0
      %1385 = vmatpush1.bf16.msra.mxu0 %v1371
      %1386 = vmatprep.subr.bf16.mxu0 0
      %1387 = vmatpush1.bf16.msra.mxu0 %v1372
      %1388 = vmatprep.subr.bf16.mxu0 0
      %1389 = vmatpush1.bf16.msra.mxu0 %v1373
      %1390 = vmatprep.subr.bf16.mxu0 0
      %1391 = vmatpush1.bf16.msra.mxu0 0
      %1392 = vmatprep.subr.bf16.mxu0 0
      %1393 = vmatpush1.bf16.msra.mxu0 0
      %1394 = vmatprep.subr.bf16.mxu0 0
      %1395 = vmatpush1.bf16.msra.mxu0 0
      %1396 = vmatprep.subr.bf16.mxu0 0
      %1397 = vmatpush1.bf16.msra.mxu0 0
      %1398 = vmatprep.subr.bf16.mxu0 0
      %1399 = vmatpush1.bf16.msra.mxu0 0
      %1400 = vmatprep.subr.bf16.mxu0 0
      %1401 = vmatpush1.bf16.msra.mxu0 0
      %1402 = vmatprep.subr.bf16.mxu0 0
      %1403 = vmatpush1.bf16.msra.mxu0 0
      %1404 = vmatprep.subr.bf16.mxu0 0
      %1405 = vmatpush1.bf16.msra.mxu0 0
      %1406 = vmatprep.subr.bf16.mxu0 0
      %1407 = vmatpush1.bf16.msra.mxu0 0
      %1408 = vmatprep.subr.bf16.mxu0 0
      %1409 = vmatpush1.bf16.msra.mxu0 0
      %1410 = vmatprep.subr.bf16.mxu0 0
      %1411 = vmatpush1.bf16.msra.mxu0 0
      %1412 = vmatprep.subr.bf16.mxu0 0
      %1413 = vmatpush1.bf16.msra.mxu0 0
      %1414 = vmatprep.mubr.bf16.mxu0 0
      %1415 = vmatmul.mubr.bf16.gmra.mrb[0].mxu0 %v1380
      %v1416 = vpop.f32.mrb[0].mxu0
      %v1417 = vadd.f32 %v1352, %v1416
      %v1418 = vpop.f32.mrb[0].mxu0
      %v1419 = vpop.f32.mrb[0].mxu0
      %v1420 = vpop.f32.mrb[0].mxu0
      %1421 = vdwg.mxu0
      %v1422 = vld [vmem:[%s6] sm:$0xff]
      %v1423 = vld [vmem:[%s6 + $0x8] sm:$0xff]
      %vm1424 = vcmask 31744
      %v1426 = vsel %vm1424, %v1422, 0
      %v1429 = vsel %vm1424, %v1423, 0
      %vm1431 = vcmask 1043456
      %v1433 = vsel %vm1431, %v1417, 0
      %1435 = vmatprep.subr.mxu0 0.0
      %1436 = vmatpush1.msra.mxu0 %v1433
      %1437 = vmatprep.subr.mxu0 0.0
      %1438 = vmatpush1.msra.mxu0 0.0
      %1439 = vmatprep.subr.mxu0 0.0
      %1440 = vmatpush1.msra.mxu0 0.0
      %1441 = vmatprep.subr.mxu0 0.0
      %1442 = vmatpush1.msra.mxu0 0.0
      %1443 = vmatprep.subr.mxu0 0.0
      %1444 = vmatpush1.msra.mxu0 0.0
      %1445 = vmatprep.subr.mxu0 0.0
      %1446 = vmatpush1.msra.mxu0 0.0
      %1447 = vmatprep.subr.mxu0 0.0
      %1448 = vmatpush1.msra.mxu0 0.0
      %1449 = vmatprep.subr.mxu0 0.0
      %1450 = vmatpush1.msra.mxu0 0.0
      %1451 = vmatprep.subr.mxu0 0.0
      %1452 = vmatpush1.msra.mxu0 0.0
      %1453 = vmatprep.subr.mxu0 0.0
      %1454 = vmatpush1.msra.mxu0 0.0
      %1455 = vmatprep.subr.mxu0 0.0
      %1456 = vmatpush1.msra.mxu0 0.0
      %1457 = vmatprep.subr.mxu0 0.0
      %1458 = vmatpush1.msra.mxu0 0.0
      %1459 = vmatprep.subr.mxu0 0.0
      %1460 = vmatpush1.msra.mxu0 0.0
      %1461 = vmatprep.subr.mxu0 0.0
      %1462 = vmatpush1.msra.mxu0 0.0
      %1463 = vmatprep.subr.mxu0 0.0
      %1464 = vmatpush1.msra.mxu0 0.0
      %1465 = vmatprep.subr.mxu0 0.0
      %1466 = vmatpush1.msra.mxu0 0.0
      %1467 = vmatprep.subr.mxu0 0.0
      %1468 = vmatpush1.msra.mxu0 0.0
      %1469 = vmatprep.subr.mxu0 0.0
      %1470 = vmatpush1.msra.mxu0 0.0
      %1471 = vmatprep.subr.mxu0 0.0
      %1472 = vmatpush1.msra.mxu0 0.0
      %1473 = vmatprep.subr.mxu0 0.0
      %1474 = vmatpush1.msra.mxu0 0.0
      %1475 = vmatprep.subr.mxu0 0.0
      %1476 = vmatpush1.msra.mxu0 0.0
      %1477 = vmatprep.subr.mxu0 0.0
      %1478 = vmatpush1.msra.mxu0 0.0
      %1479 = vmatprep.subr.mxu0 0.0
      %1480 = vmatpush1.msra.mxu0 0.0
      %1481 = vmatprep.subr.mxu0 0.0
      %1482 = vmatpush1.msra.mxu0 0.0
      %1483 = vmatprep.subr.mxu0 0.0
      %1484 = vmatpush1.msra.mxu0 0.0
      %1485 = vmatprep.subr.mxu0 0.0
      %1486 = vmatpush1.msra.mxu0 0.0
      %1487 = vmatprep.subr.mxu0 0.0
      %1488 = vmatpush1.msra.mxu0 0.0
      %1489 = vmatprep.subr.mxu0 0.0
      %1490 = vmatpush1.msra.mxu0 0.0
      %1491 = vmatprep.subr.mxu0 0.0
      %1492 = vmatpush1.msra.mxu0 0.0
      %1493 = vmatprep.subr.mxu0 0.0
      %1494 = vmatpush1.msra.mxu0 0.0
      %1495 = vmatprep.subr.mxu0 0.0
      %1496 = vmatpush1.msra.mxu0 0.0
      %1497 = vmatprep.subr.mxu0 0.0
      %1498 = vmatpush1.msra.mxu0 0.0
      %1499 = vmatprep.mubr.f32.mxu0 0.0
      %1500 = vmatmul.mubr.f32.gmra.mrb[0].mxu0 %v1426
      %v1501 = vpop.f32.mrb[0].mxu0
      %v1502 = vadd.f32 0.0, %v1501
      %v1503 = vpop.f32.mrb[0].mxu0
      %1504 = vmatprep.mubr.f32.mxu0 0.0
      %1505 = vmatmul.mubr.f32.gmra.mrb[0].mxu0 %v1429
      %v1506 = vpop.f32.mrb[0].mxu0
      %v1507 = vadd.f32 0.0, %v1506
      %v1508 = vpop.f32.mrb[0].mxu0
      %1509 = vdwg.mxu0
      %v1510 = vld [vmem:[%s7] sm:$0xff]
      %v1511 = vld [vmem:[%s7 + $0x8] sm:$0xff]
      %vm1512 = vcmask 130048
      %v1514 = vsel %vm1512, %v1502, 0
      %v1517 = vsel %vm1512, %v1507, 0
      %1519 = vmatprep.subr.mxu0 0.0
      %1520 = vmatpush1.msra.mxu0 %v1510
      %1521 = vmatprep.subr.mxu0 0.0
      %1522 = vmatpush1.msra.mxu0 %v1511
      %1523 = vmatprep.subr.mxu0 0.0
      %1524 = vmatpush1.msra.mxu0 0.0
      %1525 = vmatprep.subr.mxu0 0.0
      %1526 = vmatpush1.msra.mxu0 0.0
      %1527 = vmatprep.subr.mxu0 0.0
      %1528 = vmatpush1.msra.mxu0 0.0
      %1529 = vmatprep.subr.mxu0 0.0
      %1530 = vmatpush1.msra.mxu0 0.0
      %1531 = vmatprep.subr.mxu0 0.0
      %1532 = vmatpush1.msra.mxu0 0.0
      %1533 = vmatprep.subr.mxu0 0.0
      %1534 = vmatpush1.msra.mxu0 0.0
      %1535 = vmatprep.subr.mxu0 0.0
      %1536 = vmatpush1.msra.mxu0 0.0
      %1537 = vmatprep.subr.mxu0 0.0
      %1538 = vmatpush1.msra.mxu0 0.0
      %1539 = vmatprep.subr.mxu0 0.0
      %1540 = vmatpush1.msra.mxu0 0.0
      %1541 = vmatprep.subr.mxu0 0.0
      %1542 = vmatpush1.msra.mxu0 0.0
      %1543 = vmatprep.subr.mxu0 0.0
      %1544 = vmatpush1.msra.mxu0 0.0
      %1545 = vmatprep.subr.mxu0 0.0
      %1546 = vmatpush1.msra.mxu0 0.0
      %1547 = vmatprep.subr.mxu0 0.0
      %1548 = vmatpush1.msra.mxu0 0.0
      %1549 = vmatprep.subr.mxu0 0.0
      %1550 = vmatpush1.msra.mxu0 0.0
      %1551 = vmatprep.subr.mxu0 0.0
      %1552 = vmatpush1.msra.mxu0 0.0
      %1553 = vmatprep.subr.mxu0 0.0
      %1554 = vmatpush1.msra.mxu0 0.0
      %1555 = vmatprep.subr.mxu0 0.0
      %1556 = vmatpush1.msra.mxu0 0.0
      %1557 = vmatprep.subr.mxu0 0.0
      %1558 = vmatpush1.msra.mxu0 0.0
      %1559 = vmatprep.subr.mxu0 0.0
      %1560 = vmatpush1.msra.mxu0 0.0
      %1561 = vmatprep.subr.mxu0 0.0
      %1562 = vmatpush1.msra.mxu0 0.0
      %1563 = vmatprep.subr.mxu0 0.0
      %1564 = vmatpush1.msra.mxu0 0.0
      %1565 = vmatprep.subr.mxu0 0.0
      %1566 = vmatpush1.msra.mxu0 0.0
      %1567 = vmatprep.subr.mxu0 0.0
      %1568 = vmatpush1.msra.mxu0 0.0
      %1569 = vmatprep.subr.mxu0 0.0
      %1570 = vmatpush1.msra.mxu0 0.0
      %1571 = vmatprep.subr.mxu0 0.0
      %1572 = vmatpush1.msra.mxu0 0.0
      %1573 = vmatprep.subr.mxu0 0.0
      %1574 = vmatpush1.msra.mxu0 0.0
      %1575 = vmatprep.subr.mxu0 0.0
      %1576 = vmatpush1.msra.mxu0 0.0
      %1577 = vmatprep.subr.mxu0 0.0
      %1578 = vmatpush1.msra.mxu0 0.0
      %1579 = vmatprep.subr.mxu0 0.0
      %1580 = vmatpush1.msra.mxu0 0.0
      %1581 = vmatprep.subr.mxu0 0.0
      %1582 = vmatpush1.msra.mxu0 0.0
      %1583 = vmatprep.mubr.f32.mxu0 0.0
      %1584 = vmatmul.mubr.f32.gmra.mrb[0].mxu0 %v1514
      %v1585 = vpop.f32.mrb[0].mxu0
      %v1586 = vadd.f32 0.0, %v1585
      %v1587 = vpop.f32.mrb[0].mxu0
      %1588 = vmatprep.mubr.f32.mxu0 0.0
      %1589 = vmatmul.mubr.f32.gmra.mrb[0].mxu0 %v1517
      %v1590 = vpop.f32.mrb[0].mxu0
      %v1591 = vadd.f32 0.0, %v1590
      %v1592 = vpop.f32.mrb[0].mxu0
      %1593 = vdwg.mxu0
      %1594 = vst.msk [vmem:[%s305] sm:$0xff] %vm1378, %v1586
      %1595 = vst.msk [vmem:[%s305 + $0x8] sm:$0xff] %vm1378, %v1591
      %p1596 = scmp.lt.s32.totalorder %s19, 1
      %s1597 = scalar_select %p1596, %s19, 1
      %s1598 = smul.addr %s1597, 2
      %s1599 = smul.addr %s1598, 8
      %s1600 = scalar_lea.vmem %s8, %s1599
      // Predicated region
      $region53: #{segmentation_forward.12} parent=51 // pred_check
        %p1601 = pneg %p210
      $region54: #{segmentation_forward.12} parent=51 // pred_check_branch
        %1603 = sbr.rel (%p1601) target = $region56
      $region55: #{segmentation_forward.12} parent=51 // pred_region
        _
      $region56: #{segmentation_forward.12} parent=51 // pred_fallthru
        _
    $region52: #{segmentation_forward.12} parent=5 // pred_fallthru
      _
    %p1604 = scmp.le.s32.totalorder 2, %s14
    // Predicated region
    $region57: #{segmentation_forward.12} parent=5 // pred_check
      %p1605 = pneg %p1604
    $region58: #{segmentation_forward.12} parent=5 // pred_check_branch
      %1607 = sbr.rel (%p1605) target = $region60
    $region59: #{segmentation_forward.12} parent=5 // pred_region
      %s1608 = ssub.s32 %s14, 2
      // Predicated region
      $region61: #{segmentation_forward.12} parent=59 // pred_check
        %p1609 = pneg %p216
      $region62: #{segmentation_forward.12} parent=59 // pred_check_branch
        %1611 = sbr.rel (%p1609) target = $region64
      $region63: #{segmentation_forward.12} parent=59 // pred_region
        %p1612 = scmp.lt.s32.totalorder %s20, 1
        %s1613 = scalar_select %p1612, %s20, 1
        %s1614 = smul.addr %s1613, 2
        %s1615 = smul.addr %s1614, 8
        %s1616 = scalar_lea.vmem %s8, %s1615
      $region64: #{segmentation_forward.12} parent=59 // pred_fallthru
        _
    $region60: #{segmentation_forward.12} parent=5 // pred_fallthru
      _
  $region6: #{segmentation_forward.12} parent=0 // loop_footer
    %s18 = sadd.s32 1, %s14
  $region7: #{segmentation_forward.12} parent=0 // loop_footer_branch
    %13 = sbr.rel target = $region3
  $region8: #{segmentation_forward.12} parent=0 // loop_exit
    _

// kernel: segmentation_forward.13
$region0: #{segmentation_forward.13}
  #allocation0 [shape = 'u32[]', space=smem, size = 0x4, offset = 0x4, fixed_abs, tag = 'smem constant byte address 0x4 - core index']
  #allocation1 [shape = 'u32[144,128]{1,0:T(1,128)}', space=vmem, size = 0x12000, scoped, tag = 'internal scratch']
  #allocation2 [shape = 'f32[1,1]{1,0:T(1,128)}', space=vmem, size = 0x200, scoped, tag = 'scratch operand']
  #allocation3 [shape = 'f32[1,1]{1,0:T(1,128)}', space=vmem, size = 0x200, scoped, tag = 'scratch operand']
  %s0 = inlined_call_operand.vmem [shape: f32[512,4], index: 0, kind: input, shape index: {}]
  %s1 = inlined_call_operand.vmem [shape: s32[512,1], index: 1, kind: input, shape index: {}]
  %s2 = inlined_call_operand.hbm [shape: f32[1,1], index: 2, kind: output, shape index: {}]
  %s3 = sld [smem:[#allocation0]]
  $region49: #{segmentation_forward.13} parent=0
    _
  %s5 = ssub.s32 1, %s3
  %s6 = scalar_select 0, %s5, %s3
  $region1: #{segmentation_forward.13} parent=0
    #allocation4 [shape = 'u8[512]{0}', space=vmem, size = 0x400, scoped, tag = 'output window, operand 0, single buffered']
    #allocation5 [shape = 's32[2]{0}', space=sflag, size = 0x8, scoped, tag = 'scoped memory for segmentation_forward.13']
    %7 = vsyncpa [#allocation5], 0
    loop: start=0, step=1, limit=4
    $region2: #{segmentation_forward.13} parent=1 // loop_pre_header
      _
    $region3: #{segmentation_forward.13} parent=1 // loop_header
      %s9 = sphi 0, %s13
      %p10 = scmp.ge.s32.totalorder %s9, 4
      %s19 = sphi 0, %s21
      %s22 = sphi 0, %s19
      %s23 = sphi 0, %s22
      %s39 = sphi 0, %s23
      %s45 = sphi 0, %s47
      %s48 = sphi 0, %s45
      %s49 = sphi 0, %s48
      %s65 = sphi 0, %s49
      %s69 = sphi 0, %s69
      %s71 = sphi 0, %s69
      %s72 = sphi 0, %s71
      %s86 = sphi 0, %s72
    $region4: #{segmentation_forward.13} parent=1 // loop_header_branch
      %12 = sbr.rel (%p10) target = $region8
    $region5: #{segmentation_forward.13} parent=1 // loop_body
      %s14 = ssub.s32 %s9, 1
      %s15 = ssub.s32 %s9, 2
      %s16 = sadd.s32 %s9, 1
      %s17 = ssub.s32 %s9, %s16
      %p18 = scmp.eq.s32.totalorder %s17, 0
      %s20 = sadd.s32 %s19, 1
      %s21 = scalar_select %p18, %s19, %s20
      %p24 = pneg %p18
      %p25 = scmp.eq.s32.totalorder %s9, 1
      %p26 = por %p24, %p25
      %p27 = scmp.ne.s32.totalorder %s19, %s22
      %p28 = scmp.eq.s32.totalorder %s9, 0
      %p29 = por %p27, %p28
      %p30 = scmp.ne.s32.totalorder %s19, %s22
      %p31 = scmp.eq.s32.totalorder %s14, 1
      %p32 = por %p30, %p31
      %p33 = scmp.ne.s32.totalorder %s22, %s23
      %p34 = scmp.eq.s32.totalorder %s14, 0
      %p35 = por %p33, %p34
      %p36 = scmp.ne.s32.totalorder %s22, %s23
      %p37 = scmp.eq.s32.totalorder %s15, 1
      %p38 = por %p36, %p37
      %p40 = scmp.ne.s32.totalorder %s23, %s39
      %p41 = scmp.eq.s32.totalorder %s15, 0
      %p42 = por %p40, %p41
      %s43 = ssub.s32 %s9, %s16
      %p44 = scmp.eq.s32.totalorder %s43, 0
      %s46 = sadd.s32 %s45, 1
      %s47 = scalar_select %p44, %s45, %s46
      %p50 = pneg %p44
      %p51 = scmp.eq.s32.totalorder %s9, 1
      %p52 = por %p50, %p51
      %p53 = scmp.ne.s32.totalorder %s45, %s48
      %p54 = scmp.eq.s32.totalorder %s9, 0
      %p55 = por %p53, %p54
      %p56 = scmp.ne.s32.totalorder %s45, %s48
      %p57 = scmp.eq.s32.totalorder %s14, 1
      %p58 = por %p56, %p57
      %p59 = scmp.ne.s32.totalorder %s48, %s49
      %p60 = scmp.eq.s32.totalorder %s14, 0
      %p61 = por %p59, %p60
      %p62 = scmp.ne.s32.totalorder %s48, %s49
      %p63 = scmp.eq.s32.totalorder %s15, 1
      %p64 = por %p62, %p63
      %p66 = scmp.ne.s32.totalorder %s49, %s65
      %p67 = scmp.eq.s32.totalorder %s15, 0
      %p68 = por %p66, %p67
      %s70 = sadd.s32 %s69, 1
      %p73 = scmp.eq.s32.totalorder %s9, 1
      %p74 = scmp.ne.s32.totalorder %s69, %s71
      %p75 = scmp.eq.s32.totalorder %s9, 0
      %p76 = por %p74, %p75
      %p77 = scmp.ne.s32.totalorder %s69, %s71
      %p78 = scmp.eq.s32.totalorder %s14, 1
      %p79 = por %p77, %p78
      %p80 = scmp.ne.s32.totalorder %s71, %s72
      %p81 = scmp.eq.s32.totalorder %s14, 0
      %p82 = por %p80, %p81
      %p83 = scmp.ne.s32.totalorder %s71, %s72
      %p84 = scmp.eq.s32.totalorder %s15, 1
      %p85 = por %p83, %p84
      %p87 = scmp.ne.s32.totalorder %s72, %s86
      %p88 = scmp.eq.s32.totalorder %s15, 0
      %p89 = por %p87, %p88
      %p90 = scmp.le.s32.totalorder 1, %s9
      %p91 = scmp.lt.s32.totalorder %s9, 3
      %p92 = pnand %p90, %p91
      %p93 = pneg %p92
      // Predicated region
      $region9: #{segmentation_forward.13} parent=5 // pred_check
        _
      $region10: #{segmentation_forward.13} parent=5 // pred_check_branch
        %95 = sbr.rel (%p92) target = $region12
      $region11: #{segmentation_forward.13} parent=5 // pred_region
        %s96 = ssub.s32 %s9, 1
      $region12: #{segmentation_forward.13} parent=5 // pred_fallthru
        _
      %p97 = scmp.lt.s32.totalorder %s9, 2
      // Predicated region
      $region13: #{segmentation_forward.13} parent=5 // pred_check
        %p98 = pneg %p97
      $region14: #{segmentation_forward.13} parent=5 // pred_check_branch
        %100 = sbr.rel (%p98) target = $region16
      $region15: #{segmentation_forward.13} parent=5 // pred_region
        // Predicated region
        $region17: #{segmentation_forward.13} parent=15 // pred_check
          %p101 = pneg %p29
        $region18: #{segmentation_forward.13} parent=15 // pred_check_branch
          %103 = sbr.rel (%p101) target = $region20
        $region19: #{segmentation_forward.13} parent=15 // pred_region
          %s104 = smul.u32 32, %s9
          %p105 = scmp.lt.s32.totalorder %s104, 63
          %s106 = scalar_select %p105, %s104, 63
          %s107 = smul.addr %s106, 8
          %s108 = scalar_lea.vmem %s0, %s107
          %s109 = smul.u32 32, %s9
        $region20: #{segmentation_forward.13} parent=15 // pred_fallthru
          _
        // Predicated region
        $region21: #{segmentation_forward.13} parent=15 // pred_check
          %p110 = pneg %p55
        $region22: #{segmentation_forward.13} parent=15 // pred_check_branch
          %112 = sbr.rel (%p110) target = $region24
        $region23: #{segmentation_forward.13} parent=15 // pred_region
          %s113 = smul.u32 32, %s9
          %p114 = scmp.lt.s32.totalorder %s113, 63
          %s115 = scalar_select %p114, %s113, 63
          %s116 = smul.addr %s115, 8
          %s117 = scalar_lea.vmem %s1, %s116
          %s118 = smul.u32 32, %s9
        $region24: #{segmentation_forward.13} parent=15 // pred_fallthru
          _
      $region16: #{segmentation_forward.13} parent=5 // pred_fallthru
        _
      %p119 = scmp.le.s32.totalorder 1, %s9
      %p120 = scmp.lt.s32.totalorder %s9, 3
      %p121 = pnand %p119, %p120
      %p122 = pneg %p121
      // Predicated region
      $region25: #{segmentation_forward.13} parent=5 // pred_check
        _
      $region26: #{segmentation_forward.13} parent=5 // pred_check_branch
        %124 = sbr.rel (%p121) target = $region28
      $region27: #{segmentation_forward.13} parent=5 // pred_region
        %s125 = ssub.s32 %s9, 1
        %s126 = smul.u32 32, %s14
        %p127 = scmp.lt.s32.totalorder %s126, 63
        %s128 = scalar_select %p127, %s126, 63
        %s129 = smul.addr %s128, 8
        %s130 = scalar_lea.vmem %s0, %s129
        %p131 = pneg %p35
        %p132 = pneg %p32
        %s133 = smul.u32 32, %s14
        %p134 = scmp.lt.s32.totalorder %s133, 63
        %s135 = scalar_select %p134, %s133, 63
        %s136 = smul.addr %s135, 8
        %s137 = scalar_lea.vmem %s1, %s136
        %p138 = pneg %p61
        %p139 = pneg %p58
        %p140 = pneg %p82
        %p141 = pneg %p79
        %s142 = smul.u32 32, %s14
        %p143 = scmp.lt.s32.totalorder %s142, 63
        %s144 = scalar_select %p143, %s142, 63
        %s145 = smul.addr %s144, 8
        %s146 = scalar_lea.vmem %s0, %s145
        %s147 = smul.u32 32, %s14
        %s148 = smul.u32 32, %s14
        %p149 = scmp.lt.s32.totalorder %s148, 63
        %s150 = scalar_select %p149, %s148, 63
        %s151 = smul.addr %s150, 8
        %s152 = scalar_lea.vmem %s1, %s151
        %s153 = smul.u32 32, %s14
        %p154 = scmp.eq.s32.totalorder %s14, 0
        // Predicated region
        $region29: #{segmentation_forward.13} parent=27 // pred_check
          %p155 = pneg %p154
        $region30: #{segmentation_forward.13} parent=27 // pred_check_branch
          %157 = sbr.rel (%p155) target = $region32
        $region31: #{segmentation_forward.13} parent=27 // pred_region
          %vm158 = vcmask 0
          %159 = vst.msk [vmem:[#allocation2] sm:$0x1] %vm158, 0.0
          %160 = vst.msk [vmem:[#allocation3] sm:$0x1] %vm158, 0.0
        $region32: #{segmentation_forward.13} parent=27 // pred_fallthru
          _
        %v161 = vld [vmem:[%s146] sm:$0xff]
        %v162 = vld [vmem:[%s146 + $0x8] sm:$0xff]
        %v163 = vld [vmem:[%s146 + $0x10] sm:$0xff]
        %v164 = vld [vmem:[%s146 + $0x18] sm:$0xff]
        %v165 = vld [vmem:[%s146 + $0x20] sm:$0xff]
        %v166 = vld [vmem:[%s146 + $0x28] sm:$0xff]
        %v167 = vld [vmem:[%s146 + $0x30] sm:$0xff]
        %v168 = vld [vmem:[%s146 + $0x38] sm:$0xff]
        %v169 = vld [vmem:[%s146 + $0x40] sm:$0xff]
        %v170 = vld [vmem:[%s146 + $0x48] sm:$0xff]
        %v171 = vld [vmem:[%s146 + $0x50] sm:$0xff]
        %v172 = vld [vmem:[%s146 + $0x58] sm:$0xff]
        %v173 = vld [vmem:[%s146 + $0x60] sm:$0xff]
        %v174 = vld [vmem:[%s146 + $0x68] sm:$0xff]
        %v175 = vld [vmem:[%s146 + $0x70] sm:$0xff]
        %v176 = vld [vmem:[%s146 + $0x78] sm:$0xff]
        %v177 = vld [vmem:[%s146 + $0x80] sm:$0xff]
        %v178 = vld [vmem:[%s146 + $0x88] sm:$0xff]
        %v179 = vld [vmem:[%s146 + $0x90] sm:$0xff]
        %v180 = vld [vmem:[%s146 + $0x98] sm:$0xff]
        %v181 = vld [vmem:[%s146 + $0xa0] sm:$0xff]
        %v182 = vld [vmem:[%s146 + $0xa8] sm:$0xff]
        %v183 = vld [vmem:[%s146 + $0xb0] sm:$0xff]
        %v184 = vld [vmem:[%s146 + $0xb8] sm:$0xff]
        %v185 = vld [vmem:[%s146 + $0xc0] sm:$0xff]
        %v186 = vld [vmem:[%s146 + $0xc8] sm:$0xff]
        %v187 = vld [vmem:[%s146 + $0xd0] sm:$0xff]
        %v188 = vld [vmem:[%s146 + $0xd8] sm:$0xff]
        %v189 = vld [vmem:[%s146 + $0xe0] sm:$0xff]
        %v190 = vld [vmem:[%s146 + $0xe8] sm:$0xff]
        %v191 = vld [vmem:[%s146 + $0xf0] sm:$0xff]
        %v192 = vld [vmem:[%s146 + $0xf8] sm:$0xff]
        %v193 = vld [vmem:[%s152] sm:$0xff]
        %v194 = vld [vmem:[%s152 + $0x8] sm:$0xff]
        %v195 = vld [vmem:[%s152 + $0x10] sm:$0xff]
        %v196 = vld [vmem:[%s152 + $0x18] sm:$0xff]
        %v197 = vld [vmem:[%s152 + $0x20] sm:$0xff]
        %v198 = vld [vmem:[%s152 + $0x28] sm:$0xff]
        %v199 = vld [vmem:[%s152 + $0x30] sm:$0xff]
        %v200 = vld [vmem:[%s152 + $0x38] sm:$0xff]
        %v201 = vld [vmem:[%s152 + $0x40] sm:$0xff]
        %v202 = vld [vmem:[%s152 + $0x48] sm:$0xff]
        %v203 = vld [vmem:[%s152 + $0x50] sm:$0xff]
        %v204 = vld [vmem:[%s152 + $0x58] sm:$0xff]
        %v205 = vld [vmem:[%s152 + $0x60] sm:$0xff]
        %v206 = vld [vmem:[%s152 + $0x68] sm:$0xff]
        %v207 = vld [vmem:[%s152 + $0x70] sm:$0xff]
        %v208 = vld [vmem:[%s152 + $0x78] sm:$0xff]
        %v209 = vld [vmem:[%s152 + $0x80] sm:$0xff]
        %v210 = vld [vmem:[%s152 + $0x88] sm:$0xff]
        %v211 = vld [vmem:[%s152 + $0x90] sm:$0xff]
        %v212 = vld [vmem:[%s152 + $0x98] sm:$0xff]
        %v213 = vld [vmem:[%s152 + $0xa0] sm:$0xff]
        %v214 = vld [vmem:[%s152 + $0xa8] sm:$0xff]
        %v215 = vld [vmem:[%s152 + $0xb0] sm:$0xff]
        %v216 = vld [vmem:[%s152 + $0xb8] sm:$0xff]
        %v217 = vld [vmem:[%s152 + $0xc0] sm:$0xff]
        %v218 = vld [vmem:[%s152 + $0xc8] sm:$0xff]
        %v219 = vld [vmem:[%s152 + $0xd0] sm:$0xff]
        %v220 = vld [vmem:[%s152 + $0xd8] sm:$0xff]
        %v221 = vld [vmem:[%s152 + $0xe0] sm:$0xff]
        %v222 = vld [vmem:[%s152 + $0xe8] sm:$0xff]
        %v223 = vld [vmem:[%s152 + $0xf0] sm:$0xff]
        %v224 = vld [vmem:[%s152 + $0xf8] sm:$0xff]
        %vm225 = vcmask 31744
        %v226 = vsel %vm225, %v161, -inf
        %227 = vmax.xlane.f32.xlu0 %v226
        %v228 = vpop.xlane.xlu0 %227
        %v229 = vsel %vm225, %v162, -inf
        %230 = vmax.xlane.f32.xlu0 %v229
        %v231 = vpop.xlane.xlu0 %230
        %v232 = vsel %vm225, %v163, -inf
        %233 = vmax.xlane.f32.xlu0 %v232
        %v234 = vpop.xlane.xlu0 %233
        %v235 = vsel %vm225, %v164, -inf
        %236 = vmax.xlane.f32.xlu0 %v235
        %v237 = vpop.xlane.xlu0 %236
        %v238 = vsel %vm225, %v165, -inf
        %239 = vmax.xlane.f32.xlu0 %v238
        %v240 = vpop.xlane.xlu0 %239
        %v241 = vsel %vm225, %v166, -inf
        %242 = vmax.xlane.f32.xlu0 %v241
        %v243 = vpop.xlane.xlu0 %242
        %v244 = vsel %vm225, %v167, -inf
        %245 = vmax.xlane.f32.xlu0 %v244
        %v246 = vpop.xlane.xlu0 %245
        %v247 = vsel %vm225, %v168, -inf
        %248 = vmax.xlane.f32.xlu0 %v247
        %v249 = vpop.xlane.xlu0 %248
        %v250 = vsel %vm225, %v169, -inf
        %251 = vmax.xlane.f32.xlu0 %v250
        %v252 = vpop.xlane.xlu0 %251
        %v253 = vsel %vm225, %v170, -inf
        %254 = vmax.xlane.f32.xlu0 %v253
        %v255 = vpop.xlane.xlu0 %254
        %v256 = vsel %vm225, %v171, -inf
        %257 = vmax.xlane.f32.xlu0 %v256
        %v258 = vpop.xlane.xlu0 %257
        %v259 = vsel %vm225, %v172, -inf
        %260 = vmax.xlane.f32.xlu0 %v259
        %v261 = vpop.xlane.xlu0 %260
        %v262 = vsel %vm225, %v173, -inf
        %263 = vmax.xlane.f32.xlu0 %v262
        %v264 = vpop.xlane.xlu0 %263
        %v265 = vsel %vm225, %v174, -inf
        %266 = vmax.xlane.f32.xlu0 %v265
        %v267 = vpop.xlane.xlu0 %266
        %v268 = vsel %vm225, %v175, -inf
        %269 = vmax.xlane.f32.xlu0 %v268
        %v270 = vpop.xlane.xlu0 %269
        %v271 = vsel %vm225, %v176, -inf
        %272 = vmax.xlane.f32.xlu0 %v271
        %v273 = vpop.xlane.xlu0 %272
        %v274 = vsel %vm225, %v177, -inf
        %275 = vmax.xlane.f32.xlu0 %v274
        %v276 = vpop.xlane.xlu0 %275
        %v277 = vsel %vm225, %v178, -inf
        %278 = vmax.xlane.f32.xlu0 %v277
        %v279 = vpop.xlane.xlu0 %278
        %v280 = vsel %vm225, %v179, -inf
        %281 = vmax.xlane.f32.xlu0 %v280
        %v282 = vpop.xlane.xlu0 %281
        %v283 = vsel %vm225, %v180, -inf
        %284 = vmax.xlane.f32.xlu0 %v283
        %v285 = vpop.xlane.xlu0 %284
        %v286 = vsel %vm225, %v181, -inf
        %287 = vmax.xlane.f32.xlu0 %v286
        %v288 = vpop.xlane.xlu0 %287
        %v289 = vsel %vm225, %v182, -inf
        %290 = vmax.xlane.f32.xlu0 %v289
        %v291 = vpop.xlane.xlu0 %290
        %v292 = vsel %vm225, %v183, -inf
        %293 = vmax.xlane.f32.xlu0 %v292
        %v294 = vpop.xlane.xlu0 %293
        %v295 = vsel %vm225, %v184, -inf
        %296 = vmax.xlane.f32.xlu0 %v295
        %v297 = vpop.xlane.xlu0 %296
        %v298 = vsel %vm225, %v185, -inf
        %299 = vmax.xlane.f32.xlu0 %v298
        %v300 = vpop.xlane.xlu0 %299
        %v301 = vsel %vm225, %v186, -inf
        %302 = vmax.xlane.f32.xlu0 %v301
        %v303 = vpop.xlane.xlu0 %302
        %v304 = vsel %vm225, %v187, -inf
        %305 = vmax.xlane.f32.xlu0 %v304
        %v306 = vpop.xlane.xlu0 %305
        %v307 = vsel %vm225, %v188, -inf
        %308 = vmax.xlane.f32.xlu0 %v307
        %v309 = vpop.xlane.xlu0 %308
        %v310 = vsel %vm225, %v189, -inf
        %311 = vmax.xlane.f32.xlu0 %v310
        %v312 = vpop.xlane.xlu0 %311
        %v313 = vsel %vm225, %v190, -inf
        %314 = vmax.xlane.f32.xlu0 %v313
        %v315 = vpop.xlane.xlu0 %314
        %v316 = vsel %vm225, %v191, -inf
        %317 = vmax.xlane.f32.xlu0 %v316
        %v318 = vpop.xlane.xlu0 %317
        %v319 = vsel %vm225, %v192, -inf
        %320 = vmax.xlane.f32.xlu0 %v319
        %v321 = vpop.xlane.xlu0 %320
        %v322 = vsub.f32 %v161, %v228
        %v323 = vsub.f32 %v162, %v231
        %v324 = vsub.f32 %v163, %v234
        %v325 = vsub.f32 %v164, %v237
        %v326 = vsub.f32 %v165, %v240
        %v327 = vsub.f32 %v166, %v243
        %v328 = vsub.f32 %v167, %v246
        %v329 = vsub.f32 %v168, %v249
        %v330 = vsub.f32 %v169, %v252
        %v331 = vsub.f32 %v170, %v255
        %v332 = vsub.f32 %v171, %v258
        %v333 = vsub.f32 %v172, %v261
        %v334 = vsub.f32 %v173, %v264
        %v335 = vsub.f32 %v174, %v267
        %v336 = vsub.f32 %v175, %v270
        %v337 = vsub.f32 %v176, %v273
        %v338 = vsub.f32 %v177, %v276
        %v339 = vsub.f32 %v178, %v279
        %v340 = vsub.f32 %v179, %v282
        %v341 = vsub.f32 %v180, %v285
        %v342 = vsub.f32 %v181, %v288
        %v343 = vsub.f32 %v182, %v291
        %v344 = vsub.f32 %v183, %v294
        %v345 = vsub.f32 %v184, %v297
        %v346 = vsub.f32 %v185, %v300
        %v347 = vsub.f32 %v186, %v303
        %v348 = vsub.f32 %v187, %v306
        %v349 = vsub.f32 %v188, %v309
        %v350 = vsub.f32 %v189, %v312
        %v351 = vsub.f32 %v190, %v315
        %v352 = vsub.f32 %v191, %v318
        %v353 = vsub.f32 %v192, %v321
        %v354 = vmul.f32 %v322, 1.442695
        %v355 = vpow.pop %v354
        %v356 = vmul.f32 %v323, 1.442695
        %v357 = vpow.pop %v356
        %v358 = vmul.f32 %v324, 1.442695
        %v359 = vpow.pop %v358
        %v360 = vmul.f32 %v325, 1.442695
        %v361 = vpow.pop %v360
        %v362 = vmul.f32 %v326, 1.442695
        %v363 = vpow.pop %v362
        %v364 = vmul.f32 %v327, 1.442695
        %v365 = vpow.pop %v364
        %v366 = vmul.f32 %v328, 1.442695
        %v367 = vpow.pop %v366
        %v368 = vmul.f32 %v329, 1.442695
        %v369 = vpow.pop %v368
        %v370 = vmul.f32 %v330, 1.442695
        %v371 = vpow.pop %v370
        %v372 = vmul.f32 %v331, 1.442695
        %v373 = vpow.pop %v372
        %v374 = vmul.f32 %v332, 1.442695
        %v375 = vpow.pop %v374
        %v376 = vmul.f32 %v333, 1.442695
        %v377 = vpow.pop %v376
        %v378 = vmul.f32 %v334, 1.442695
        %v379 = vpow.pop %v378
        %v380 = vmul.f32 %v335, 1.442695
        %v381 = vpow.pop %v380
        %v382 = vmul.f32 %v336, 1.442695
        %v383 = vpow.pop %v382
        %v384 = vmul.f32 %v337, 1.442695
        %v385 = vpow.pop %v384
        %v386 = vmul.f32 %v338, 1.442695
        %v387 = vpow.pop %v386
        %v388 = vmul.f32 %v339, 1.442695
        %v389 = vpow.pop %v388
        %v390 = vmul.f32 %v340, 1.442695
        %v391 = vpow.pop %v390
        %v392 = vmul.f32 %v341, 1.442695
        %v393 = vpow.pop %v392
        %v394 = vmul.f32 %v342, 1.442695
        %v395 = vpow.pop %v394
        %v396 = vmul.f32 %v343, 1.442695
        %v397 = vpow.pop %v396
        %v398 = vmul.f32 %v344, 1.442695
        %v399 = vpow.pop %v398
        %v400 = vmul.f32 %v345, 1.442695
        %v401 = vpow.pop %v400
        %v402 = vmul.f32 %v346, 1.442695
        %v403 = vpow.pop %v402
        %v404 = vmul.f32 %v347, 1.442695
        %v405 = vpow.pop %v404
        %v406 = vmul.f32 %v348, 1.442695
        %v407 = vpow.pop %v406
        %v408 = vmul.f32 %v349, 1.442695
        %v409 = vpow.pop %v408
        %v410 = vmul.f32 %v350, 1.442695
        %v411 = vpow.pop %v410
        %v412 = vmul.f32 %v351, 1.442695
        %v413 = vpow.pop %v412
        %v414 = vmul.f32 %v352, 1.442695
        %v415 = vpow.pop %v414
        %v416 = vmul.f32 %v353, 1.442695
        %v417 = vpow.pop %v416
        %v418 = vsel %vm225, %v355, 0.0
        %419 = vadd.xlane.f32.xlu0 %v418
        %v420 = vpop.xlane.xlu0 %419
        %v421 = vsel %vm225, %v357, 0.0
        %422 = vadd.xlane.f32.xlu0 %v421
        %v423 = vpop.xlane.xlu0 %422
        %v424 = vsel %vm225, %v359, 0.0
        %425 = vadd.xlane.f32.xlu0 %v424
        %v426 = vpop.xlane.xlu0 %425
        %v427 = vsel %vm225, %v361, 0.0
        %428 = vadd.xlane.f32.xlu0 %v427
        %v429 = vpop.xlane.xlu0 %428
        %v430 = vsel %vm225, %v363, 0.0
        %431 = vadd.xlane.f32.xlu0 %v430
        %v432 = vpop.xlane.xlu0 %431
        %v433 = vsel %vm225, %v365, 0.0
        %434 = vadd.xlane.f32.xlu0 %v433
        %v435 = vpop.xlane.xlu0 %434
        %v436 = vsel %vm225, %v367, 0.0
        %437 = vadd.xlane.f32.xlu0 %v436
        %v438 = vpop.xlane.xlu0 %437
        %v439 = vsel %vm225, %v369, 0.0
        %440 = vadd.xlane.f32.xlu0 %v439
        %v441 = vpop.xlane.xlu0 %440
        %v442 = vsel %vm225, %v371, 0.0
        %443 = vadd.xlane.f32.xlu0 %v442
        %v444 = vpop.xlane.xlu0 %443
        %v445 = vsel %vm225, %v373, 0.0
        %446 = vadd.xlane.f32.xlu0 %v445
        %v447 = vpop.xlane.xlu0 %446
        %v448 = vsel %vm225, %v375, 0.0
        %449 = vadd.xlane.f32.xlu0 %v448
        %v450 = vpop.xlane.xlu0 %449
        %v451 = vsel %vm225, %v377, 0.0
        %452 = vadd.xlane.f32.xlu0 %v451
        %v453 = vpop.xlane.xlu0 %452
        %v454 = vsel %vm225, %v379, 0.0
        %455 = vadd.xlane.f32.xlu0 %v454
        %v456 = vpop.xlane.xlu0 %455
        %v457 = vsel %vm225, %v381, 0.0
        %458 = vadd.xlane.f32.xlu0 %v457
        %v459 = vpop.xlane.xlu0 %458
        %v460 = vsel %vm225, %v383, 0.0
        %461 = vadd.xlane.f32.xlu0 %v460
        %v462 = vpop.xlane.xlu0 %461
        %v463 = vsel %vm225, %v385, 0.0
        %464 = vadd.xlane.f32.xlu0 %v463
        %v465 = vpop.xlane.xlu0 %464
        %v466 = vsel %vm225, %v387, 0.0
        %467 = vadd.xlane.f32.xlu0 %v466
        %v468 = vpop.xlane.xlu0 %467
        %v469 = vsel %vm225, %v389, 0.0
        %470 = vadd.xlane.f32.xlu0 %v469
        %v471 = vpop.xlane.xlu0 %470
        %v472 = vsel %vm225, %v391, 0.0
        %473 = vadd.xlane.f32.xlu0 %v472
        %v474 = vpop.xlane.xlu0 %473
        %v475 = vsel %vm225, %v393, 0.0
        %476 = vadd.xlane.f32.xlu0 %v475
        %v477 = vpop.xlane.xlu0 %476
        %v478 = vsel %vm225, %v395, 0.0
        %479 = vadd.xlane.f32.xlu0 %v478
        %v480 = vpop.xlane.xlu0 %479
        %v481 = vsel %vm225, %v397, 0.0
        %482 = vadd.xlane.f32.xlu0 %v481
        %v483 = vpop.xlane.xlu0 %482
        %v484 = vsel %vm225, %v399, 0.0
        %485 = vadd.xlane.f32.xlu0 %v484
        %v486 = vpop.xlane.xlu0 %485
        %v487 = vsel %vm225, %v401, 0.0
        %488 = vadd.xlane.f32.xlu0 %v487
        %v489 = vpop.xlane.xlu0 %488
        %v490 = vsel %vm225, %v403, 0.0
        %491 = vadd.xlane.f32.xlu0 %v490
        %v492 = vpop.xlane.xlu0 %491
        %v493 = vsel %vm225, %v405, 0.0
        %494 = vadd.xlane.f32.xlu0 %v493
        %v495 = vpop.xlane.xlu0 %494
        %v496 = vsel %vm225, %v407, 0.0
        %497 = vadd.xlane.f32.xlu0 %v496
        %v498 = vpop.xlane.xlu0 %497
        %v499 = vsel %vm225, %v409, 0.0
        %500 = vadd.xlane.f32.xlu0 %v499
        %v501 = vpop.xlane.xlu0 %500
        %v502 = vsel %vm225, %v411, 0.0
        %503 = vadd.xlane.f32.xlu0 %v502
        %v504 = vpop.xlane.xlu0 %503
        %v505 = vsel %vm225, %v413, 0.0
        %506 = vadd.xlane.f32.xlu0 %v505
        %v507 = vpop.xlane.xlu0 %506
        %v508 = vsel %vm225, %v415, 0.0
        %509 = vadd.xlane.f32.xlu0 %v508
        %v510 = vpop.xlane.xlu0 %509
        %v511 = vsel %vm225, %v417, 0.0
        %512 = vadd.xlane.f32.xlu0 %v511
        %v513 = vpop.xlane.xlu0 %512
        %v514 = vlog2.pop %v420
        %v515 = vmul.f32 %v514, 0.6931472
        %v516 = vlog2.pop %v423
        %v517 = vmul.f32 %v516, 0.6931472
        %v518 = vlog2.pop %v426
        %v519 = vmul.f32 %v518, 0.6931472
        %v520 = vlog2.pop %v429
        %v521 = vmul.f32 %v520, 0.6931472
        %v522 = vlog2.pop %v432
        %v523 = vmul.f32 %v522, 0.6931472
        %v524 = vlog2.pop %v435
        %v525 = vmul.f32 %v524, 0.6931472
        %v526 = vlog2.pop %v438
        %v527 = vmul.f32 %v526, 0.6931472
        %v528 = vlog2.pop %v441
        %v529 = vmul.f32 %v528, 0.6931472
        %v530 = vlog2.pop %v444
        %v531 = vmul.f32 %v530, 0.6931472
        %v532 = vlog2.pop %v447
        %v533 = vmul.f32 %v532, 0.6931472
        %v534 = vlog2.pop %v450
        %v535 = vmul.f32 %v534, 0.6931472
        %v536 = vlog2.pop %v453
        %v537 = vmul.f32 %v536, 0.6931472
        %v538 = vlog2.pop %v456
        %v539 = vmul.f32 %v538, 0.6931472
        %v540 = vlog2.pop %v459
        %v541 = vmul.f32 %v540, 0.6931472
        %v542 = vlog2.pop %v462
        %v543 = vmul.f32 %v542, 0.6931472
        %v544 = vlog2.pop %v465
        %v545 = vmul.f32 %v544, 0.6931472
        %v546 = vlog2.pop %v468
        %v547 = vmul.f32 %v546, 0.6931472
        %v548 = vlog2.pop %v471
        %v549 = vmul.f32 %v548, 0.6931472
        %v550 = vlog2.pop %v474
        %v551 = vmul.f32 %v550, 0.6931472
        %v552 = vlog2.pop %v477
        %v553 = vmul.f32 %v552, 0.6931472
        %v554 = vlog2.pop %v480
        %v555 = vmul.f32 %v554, 0.6931472
        %v556 = vlog2.pop %v483
        %v557 = vmul.f32 %v556, 0.6931472
        %v558 = vlog2.pop %v486
        %v559 = vmul.f32 %v558, 0.6931472
        %v560 = vlog2.pop %v489
        %v561 = vmul.f32 %v560, 0.6931472
        %v562 = vlog2.pop %v492
        %v563 = vmul.f32 %v562, 0.6931472
        %v564 = vlog2.pop %v495
        %v565 = vmul.f32 %v564, 0.6931472
        %v566 = vlog2.pop %v498
        %v567 = vmul.f32 %v566, 0.6931472
        %v568 = vlog2.pop %v501
        %v569 = vmul.f32 %v568, 0.6931472
        %v570 = vlog2.pop %v504
        %v571 = vmul.f32 %v570, 0.6931472
        %v572 = vlog2.pop %v507
        %v573 = vmul.f32 %v572, 0.6931472
        %v574 = vlog2.pop %v510
        %v575 = vmul.f32 %v574, 0.6931472
        %v576 = vlog2.pop %v513
        %v577 = vmul.f32 %v576, 0.6931472
        %v578 = vlaneseq
        %v579 = vand.u32 %v578, 127
        %580 = vset.pattern.permute.xlu0 0
        %581 = vperm.xlu0 %580, %v193
        %v582 = vpop.permute.xlu0 %581
        %583 = vset.pattern.permute.xlu0 0
        %584 = vperm.xlu0 %583, %v194
        %v585 = vpop.permute.xlu0 %584
        %586 = vset.pattern.permute.xlu0 0
        %587 = vperm.xlu0 %586, %v195
        %v588 = vpop.permute.xlu0 %587
        %589 = vset.pattern.permute.xlu0 0
        %590 = vperm.xlu0 %589, %v196
        %v591 = vpop.permute.xlu0 %590
        %592 = vset.pattern.permute.xlu0 0
        %593 = vperm.xlu0 %592, %v197
        %v594 = vpop.permute.xlu0 %593
        %595 = vset.pattern.permute.xlu0 0
        %596 = vperm.xlu0 %595, %v198
        %v597 = vpop.permute.xlu0 %596
        %598 = vset.pattern.permute.xlu0 0
        %599 = vperm.xlu0 %598, %v199
        %v600 = vpop.permute.xlu0 %599
        %601 = vset.pattern.permute.xlu0 0
        %602 = vperm.xlu0 %601, %v200
        %v603 = vpop.permute.xlu0 %602
        %604 = vset.pattern.permute.xlu0 0
        %605 = vperm.xlu0 %604, %v201
        %v606 = vpop.permute.xlu0 %605
        %607 = vset.pattern.permute.xlu0 0
        %608 = vperm.xlu0 %607, %v202
        %v609 = vpop.permute.xlu0 %608
        %610 = vset.pattern.permute.xlu0 0
        %611 = vperm.xlu0 %610, %v203
        %v612 = vpop.permute.xlu0 %611
        %613 = vset.pattern.permute.xlu0 0
        %614 = vperm.xlu0 %613, %v204
        %v615 = vpop.permute.xlu0 %614
        %616 = vset.pattern.permute.xlu0 0
        %617 = vperm.xlu0 %616, %v205
        %v618 = vpop.permute.xlu0 %617
        %619 = vset.pattern.permute.xlu0 0
        %620 = vperm.xlu0 %619, %v206
        %v621 = vpop.permute.xlu0 %620
        %622 = vset.pattern.permute.xlu0 0
        %623 = vperm.xlu0 %622, %v207
        %v624 = vpop.permute.xlu0 %623
        %625 = vset.pattern.permute.xlu0 0
        %626 = vperm.xlu0 %625, %v208
        %v627 = vpop.permute.xlu0 %626
        %628 = vset.pattern.permute.xlu0 0
        %629 = vperm.xlu0 %628, %v209
        %v630 = vpop.permute.xlu0 %629
        %631 = vset.pattern.permute.xlu0 0
        %632 = vperm.xlu0 %631, %v210
        %v633 = vpop.permute.xlu0 %632
        %634 = vset.pattern.permute.xlu0 0
        %635 = vperm.xlu0 %634, %v211
        %v636 = vpop.permute.xlu0 %635
        %637 = vset.pattern.permute.xlu0 0
        %638 = vperm.xlu0 %637, %v212
        %v639 = vpop.permute.xlu0 %638
        %640 = vset.pattern.permute.xlu0 0
        %641 = vperm.xlu0 %640, %v213
        %v642 = vpop.permute.xlu0 %641
        %643 = vset.pattern.permute.xlu0 0
        %644 = vperm.xlu0 %643, %v214
        %v645 = vpop.permute.xlu0 %644
        %646 = vset.pattern.permute.xlu0 0
        %647 = vperm.xlu0 %646, %v215
        %v648 = vpop.permute.xlu0 %647
        %649 = vset.pattern.permute.xlu0 0
        %650 = vperm.xlu0 %649, %v216
        %v651 = vpop.permute.xlu0 %650
        %652 = vset.pattern.permute.xlu0 0
        %653 = vperm.xlu0 %652, %v217
        %v654 = vpop.permute.xlu0 %653
        %655 = vset.pattern.permute.xlu0 0
        %656 = vperm.xlu0 %655, %v218
        %v657 = vpop.permute.xlu0 %656
        %658 = vset.pattern.permute.xlu0 0
        %659 = vperm.xlu0 %658, %v219
        %v660 = vpop.permute.xlu0 %659
        %661 = vset.pattern.permute.xlu0 0
        %662 = vperm.xlu0 %661, %v220
        %v663 = vpop.permute.xlu0 %662
        %664 = vset.pattern.permute.xlu0 0
        %665 = vperm.xlu0 %664, %v221
        %v666 = vpop.permute.xlu0 %665
        %667 = vset.pattern.permute.xlu0 0
        %668 = vperm.xlu0 %667, %v222
        %v669 = vpop.permute.xlu0 %668
        %670 = vset.pattern.permute.xlu0 0
        %671 = vperm.xlu0 %670, %v223
        %v672 = vpop.permute.xlu0 %671
        %673 = vset.pattern.permute.xlu0 0
        %674 = vperm.xlu0 %673, %v224
        %v675 = vpop.permute.xlu0 %674
        %vm676 = vcmp.eq.s32.totalorder %v579, %v582
        %vm677 = vcmp.eq.s32.totalorder %v579, %v585
        %vm678 = vcmp.eq.s32.totalorder %v579, %v588
        %vm679 = vcmp.eq.s32.totalorder %v579, %v591
        %vm680 = vcmp.eq.s32.totalorder %v579, %v594
        %vm681 = vcmp.eq.s32.totalorder %v579, %v597
        %vm682 = vcmp.eq.s32.totalorder %v579, %v600
        %vm683 = vcmp.eq.s32.totalorder %v579, %v603
        %vm684 = vcmp.eq.s32.totalorder %v579, %v606
        %vm685 = vcmp.eq.s32.totalorder %v579, %v609
        %vm686 = vcmp.eq.s32.totalorder %v579, %v612
        %vm687 = vcmp.eq.s32.totalorder %v579, %v615
        %vm688 = vcmp.eq.s32.totalorder %v579, %v618
        %vm689 = vcmp.eq.s32.totalorder %v579, %v621
        %vm690 = vcmp.eq.s32.totalorder %v579, %v624
        %vm691 = vcmp.eq.s32.totalorder %v579, %v627
        %vm692 = vcmp.eq.s32.totalorder %v579, %v630
        %vm693 = vcmp.eq.s32.totalorder %v579, %v633
        %vm694 = vcmp.eq.s32.totalorder %v579, %v636
        %vm695 = vcmp.eq.s32.totalorder %v579, %v639
        %vm696 = vcmp.eq.s32.totalorder %v579, %v642
        %vm697 = vcmp.eq.s32.totalorder %v579, %v645
        %vm698 = vcmp.eq.s32.totalorder %v579, %v648
        %vm699 = vcmp.eq.s32.totalorder %v579, %v651
        %vm700 = vcmp.eq.s32.totalorder %v579, %v654
        %vm701 = vcmp.eq.s32.totalorder %v579, %v657
        %vm702 = vcmp.eq.s32.totalorder %v579, %v660
        %vm703 = vcmp.eq.s32.totalorder %v579, %v663
        %vm704 = vcmp.eq.s32.totalorder %v579, %v666
        %vm705 = vcmp.eq.s32.totalorder %v579, %v669
        %vm706 = vcmp.eq.s32.totalorder %v579, %v672
        %vm707 = vcmp.eq.s32.totalorder %v579, %v675
        %v708 = vsel %vm676, %v322, 0.0
        %v709 = vsel %vm677, %v323, 0.0
        %v710 = vsel %vm678, %v324, 0.0
        %v711 = vsel %vm679, %v325, 0.0
        %v712 = vsel %vm680, %v326, 0.0
        %v713 = vsel %vm681, %v327, 0.0
        %v714 = vsel %vm682, %v328, 0.0
        %v715 = vsel %vm683, %v329, 0.0
        %v716 = vsel %vm684, %v330, 0.0
        %v717 = vsel %vm685, %v331, 0.0
        %v718 = vsel %vm686, %v332, 0.0
        %v719 = vsel %vm687, %v333, 0.0
        %v720 = vsel %vm688, %v334, 0.0
        %v721 = vsel %vm689, %v335, 0.0
        %v722 = vsel %vm690, %v336, 0.0
        %v723 = vsel %vm691, %v337, 0.0
        %v724 = vsel %vm692, %v338, 0.0
        %v725 = vsel %vm693, %v339, 0.0
        %v726 = vsel %vm694, %v340, 0.0
        %v727 = vsel %vm695, %v341, 0.0
        %v728 = vsel %vm696, %v342, 0.0
        %v729 = vsel %vm697, %v343, 0.0
        %v730 = vsel %vm698, %v344, 0.0
        %v731 = vsel %vm699, %v345, 0.0
        %v732 = vsel %vm700, %v346, 0.0
        %v733 = vsel %vm701, %v347, 0.0
        %v734 = vsel %vm702, %v348, 0.0
        %v735 = vsel %vm703, %v349, 0.0
        %v736 = vsel %vm704, %v350, 0.0
        %v737 = vsel %vm705, %v351, 0.0
        %v738 = vsel %vm706, %v352, 0.0
        %v739 = vsel %vm707, %v353, 0.0
        %v740 = vsel %vm225, %v708, 0.0
        %741 = vadd.xlane.f32.xlu0 %v740
        %v742 = vpop.xlane.xlu0 %741
        %v743 = vsel %vm225, %v709, 0.0
        %744 = vadd.xlane.f32.xlu0 %v743
        %v745 = vpop.xlane.xlu0 %744
        %v746 = vsel %vm225, %v710, 0.0
        %747 = vadd.xlane.f32.xlu0 %v746
        %v748 = vpop.xlane.xlu0 %747
        %v749 = vsel %vm225, %v711, 0.0
        %750 = vadd.xlane.f32.xlu0 %v749
        %v751 = vpop.xlane.xlu0 %750
        %v752 = vsel %vm225, %v712, 0.0
        %753 = vadd.xlane.f32.xlu0 %v752
        %v754 = vpop.xlane.xlu0 %753
        %v755 = vsel %vm225, %v713, 0.0
        %756 = vadd.xlane.f32.xlu0 %v755
        %v757 = vpop.xlane.xlu0 %756
        %v758 = vsel %vm225, %v714, 0.0
        %759 = vadd.xlane.f32.xlu0 %v758
        %v760 = vpop.xlane.xlu0 %759
        %v761 = vsel %vm225, %v715, 0.0
        %762 = vadd.xlane.f32.xlu0 %v761
        %v763 = vpop.xlane.xlu0 %762
        %v764 = vsel %vm225, %v716, 0.0
        %765 = vadd.xlane.f32.xlu0 %v764
        %v766 = vpop.xlane.xlu0 %765
        %v767 = vsel %vm225, %v717, 0.0
        %768 = vadd.xlane.f32.xlu0 %v767
        %v769 = vpop.xlane.xlu0 %768
        %v770 = vsel %vm225, %v718, 0.0
        %771 = vadd.xlane.f32.xlu0 %v770
        %v772 = vpop.xlane.xlu0 %771
        %v773 = vsel %vm225, %v719, 0.0
        %774 = vadd.xlane.f32.xlu0 %v773
        %v775 = vpop.xlane.xlu0 %774
        %v776 = vsel %vm225, %v720, 0.0
        %777 = vadd.xlane.f32.xlu0 %v776
        %v778 = vpop.xlane.xlu0 %777
        %v779 = vsel %vm225, %v721, 0.0
        %780 = vadd.xlane.f32.xlu0 %v779
        %v781 = vpop.xlane.xlu0 %780
        %v782 = vsel %vm225, %v722, 0.0
        %783 = vadd.xlane.f32.xlu0 %v782
        %v784 = vpop.xlane.xlu0 %783
        %v785 = vsel %vm225, %v723, 0.0
        %786 = vadd.xlane.f32.xlu0 %v785
        %v787 = vpop.xlane.xlu0 %786
        %v788 = vsel %vm225, %v724, 0.0
        %789 = vadd.xlane.f32.xlu0 %v788
        %v790 = vpop.xlane.xlu0 %789
        %v791 = vsel %vm225, %v725, 0.0
        %792 = vadd.xlane.f32.xlu0 %v791
        %v793 = vpop.xlane.xlu0 %792
        %v794 = vsel %vm225, %v726, 0.0
        %795 = vadd.xlane.f32.xlu0 %v794
        %v796 = vpop.xlane.xlu0 %795
        %v797 = vsel %vm225, %v727, 0.0
        %798 = vadd.xlane.f32.xlu0 %v797
        %v799 = vpop.xlane.xlu0 %798
        %v800 = vsel %vm225, %v728, 0.0
        %801 = vadd.xlane.f32.xlu0 %v800
        %v802 = vpop.xlane.xlu0 %801
        %v803 = vsel %vm225, %v729, 0.0
        %804 = vadd.xlane.f32.xlu0 %v803
        %v805 = vpop.xlane.xlu0 %804
        %v806 = vsel %vm225, %v730, 0.0
        %807 = vadd.xlane.f32.xlu0 %v806
        %v808 = vpop.xlane.xlu0 %807
        %v809 = vsel %vm225, %v731, 0.0
        %810 = vadd.xlane.f32.xlu0 %v809
        %v811 = vpop.xlane.xlu0 %810
        %v812 = vsel %vm225, %v732, 0.0
        %813 = vadd.xlane.f32.xlu0 %v812
        %v814 = vpop.xlane.xlu0 %813
        %v815 = vsel %vm225, %v733, 0.0
        %816 = vadd.xlane.f32.xlu0 %v815
        %v817 = vpop.xlane.xlu0 %816
        %v818 = vsel %vm225, %v734, 0.0
        %819 = vadd.xlane.f32.xlu0 %v818
        %v820 = vpop.xlane.xlu0 %819
        %v821 = vsel %vm225, %v735, 0.0
        %822 = vadd.xlane.f32.xlu0 %v821
        %v823 = vpop.xlane.xlu0 %822
        %v824 = vsel %vm225, %v736, 0.0
        %825 = vadd.xlane.f32.xlu0 %v824
        %v826 = vpop.xlane.xlu0 %825
        %v827 = vsel %vm225, %v737, 0.0
        %828 = vadd.xlane.f32.xlu0 %v827
        %v829 = vpop.xlane.xlu0 %828
        %v830 = vsel %vm225, %v738, 0.0
        %831 = vadd.xlane.f32.xlu0 %v830
        %v832 = vpop.xlane.xlu0 %831
        %v833 = vsel %vm225, %v739, 0.0
        %834 = vadd.xlane.f32.xlu0 %v833
        %v835 = vpop.xlane.xlu0 %834
        %vm836 = vcmp.ne.s32.totalorder %v193, 4294967196
        %vm837 = vcmp.ne.s32.totalorder %v194, 4294967196
        %vm838 = vcmp.ne.s32.totalorder %v195, 4294967196
        %vm839 = vcmp.ne.s32.totalorder %v196, 4294967196
        %vm840 = vcmp.ne.s32.totalorder %v197, 4294967196
        %vm841 = vcmp.ne.s32.totalorder %v198, 4294967196
        %vm842 = vcmp.ne.s32.totalorder %v199, 4294967196
        %vm843 = vcmp.ne.s32.totalorder %v200, 4294967196
        %vm844 = vcmp.ne.s32.totalorder %v201, 4294967196
        %vm845 = vcmp.ne.s32.totalorder %v202, 4294967196
        %vm846 = vcmp.ne.s32.totalorder %v203, 4294967196
        %vm847 = vcmp.ne.s32.totalorder %v204, 4294967196
        %vm848 = vcmp.ne.s32.totalorder %v205, 4294967196
        %vm849 = vcmp.ne.s32.totalorder %v206, 4294967196
        %vm850 = vcmp.ne.s32.totalorder %v207, 4294967196
        %vm851 = vcmp.ne.s32.totalorder %v208, 4294967196
        %vm852 = vcmp.ne.s32.totalorder %v209, 4294967196
        %vm853 = vcmp.ne.s32.totalorder %v210, 4294967196
        %vm854 = vcmp.ne.s32.totalorder %v211, 4294967196
        %vm855 = vcmp.ne.s32.totalorder %v212, 4294967196
        %vm856 = vcmp.ne.s32.totalorder %v213, 4294967196
        %vm857 = vcmp.ne.s32.totalorder %v214, 4294967196
        %vm858 = vcmp.ne.s32.totalorder %v215, 4294967196
        %vm859 = vcmp.ne.s32.totalorder %v216, 4294967196
        %vm860 = vcmp.ne.s32.totalorder %v217, 4294967196
        %vm861 = vcmp.ne.s32.totalorder %v218, 4294967196
        %vm862 = vcmp.ne.s32.totalorder %v219, 4294967196
        %vm863 = vcmp.ne.s32.totalorder %v220, 4294967196
        %vm864 = vcmp.ne.s32.totalorder %v221, 4294967196
        %vm865 = vcmp.ne.s32.totalorder %v222, 4294967196
        %vm866 = vcmp.ne.s32.totalorder %v223, 4294967196
        %vm867 = vcmp.ne.s32.totalorder %v224, 4294967196
        %v868 = vsel %vm836, 1, 0
        %v869 = vsel %vm837, 1, 0
        %v870 = vsel %vm838, 1, 0
        %v871 = vsel %vm839, 1, 0
        %v872 = vsel %vm840, 1, 0
        %v873 = vsel %vm841, 1, 0
        %v874 = vsel %vm842, 1, 0
        %v875 = vsel %vm843, 1, 0
        %v876 = vsel %vm844, 1, 0
        %v877 = vsel %vm845, 1, 0
        %v878 = vsel %vm846, 1, 0
        %v879 = vsel %vm847, 1, 0
        %v880 = vsel %vm848, 1, 0
        %v881 = vsel %vm849, 1, 0
        %v882 = vsel %vm850, 1, 0
        %v883 = vsel %vm851, 1, 0
        %v884 = vsel %vm852, 1, 0
        %v885 = vsel %vm853, 1, 0
        %v886 = vsel %vm854, 1, 0
        %v887 = vsel %vm855, 1, 0
        %v888 = vsel %vm856, 1, 0
        %v889 = vsel %vm857, 1, 0
        %v890 = vsel %vm858, 1, 0
        %v891 = vsel %vm859, 1, 0
        %v892 = vsel %vm860, 1, 0
        %v893 = vsel %vm861, 1, 0
        %v894 = vsel %vm862, 1, 0
        %v895 = vsel %vm863, 1, 0
        %v896 = vsel %vm864, 1, 0
        %v897 = vsel %vm865, 1, 0
        %v898 = vsel %vm866, 1, 0
        %v899 = vsel %vm867, 1, 0
        %v900 = vcvt.s32.f32 %v868
        %v901 = vcvt.s32.f32 %v869
        %v902 = vcvt.s32.f32 %v870
        %v903 = vcvt.s32.f32 %v871
        %v904 = vcvt.s32.f32 %v872
        %v905 = vcvt.s32.f32 %v873
        %v906 = vcvt.s32.f32 %v874
        %v907 = vcvt.s32.f32 %v875
        %v908 = vcvt.s32.f32 %v876
        %v909 = vcvt.s32.f32 %v877
        %v910 = vcvt.s32.f32 %v878
        %v911 = vcvt.s32.f32 %v879
        %v912 = vcvt.s32.f32 %v880
        %v913 = vcvt.s32.f32 %v881
        %v914 = vcvt.s32.f32 %v882
        %v915 = vcvt.s32.f32 %v883
        %v916 = vcvt.s32.f32 %v884
        %v917 = vcvt.s32.f32 %v885
        %v918 = vcvt.s32.f32 %v886
        %v919 = vcvt.s32.f32 %v887
        %v920 = vcvt.s32.f32 %v888
        %v921 = vcvt.s32.f32 %v889
        %v922 = vcvt.s32.f32 %v890
        %v923 = vcvt.s32.f32 %v891
        %v924 = vcvt.s32.f32 %v892
        %v925 = vcvt.s32.f32 %v893
        %v926 = vcvt.s32.f32 %v894
        %v927 = vcvt.s32.f32 %v895
        %v928 = vcvt.s32.f32 %v896
        %v929 = vcvt.s32.f32 %v897
        %v930 = vcvt.s32.f32 %v898
        %v931 = vcvt.s32.f32 %v899
        %v932 = vld [vmem:[#allocation2] sm:$0x1]
        %v933 = vsub.f32 %v515, %v742
        %v934 = vsub.f32 %v517, %v745
        %v935 = vsub.f32 %v519, %v748
        %v936 = vsub.f32 %v521, %v751
        %v937 = vsub.f32 %v523, %v754
        %v938 = vsub.f32 %v525, %v757
        %v939 = vsub.f32 %v527, %v760
        %v940 = vsub.f32 %v529, %v763
        %v941 = vsub.f32 %v531, %v766
        %v942 = vsub.f32 %v533, %v769
        %v943 = vsub.f32 %v535, %v772
        %v944 = vsub.f32 %v537, %v775
        %v945 = vsub.f32 %v539, %v778
        %v946 = vsub.f32 %v541, %v781
        %v947 = vsub.f32 %v543, %v784
        %v948 = vsub.f32 %v545, %v787
        %v949 = vsub.f32 %v547, %v790
        %v950 = vsub.f32 %v549, %v793
        %v951 = vsub.f32 %v551, %v796
        %v952 = vsub.f32 %v553, %v799
        %v953 = vsub.f32 %v555, %v802
        %v954 = vsub.f32 %v557, %v805
        %v955 = vsub.f32 %v559, %v808
        %v956 = vsub.f32 %v561, %v811
        %v957 = vsub.f32 %v563, %v814
        %v958 = vsub.f32 %v565, %v817
        %v959 = vsub.f32 %v567, %v820
        %v960 = vsub.f32 %v569, %v823
        %v961 = vsub.f32 %v571, %v826
        %v962 = vsub.f32 %v573, %v829
        %v963 = vsub.f32 %v575, %v832
        %v964 = vsub.f32 %v577, %v835
        %v965 = vmul.f32 %v933, %v900
        %v966 = vmul.f32 %v934, %v901
        %v967 = vmul.f32 %v935, %v902
        %v968 = vmul.f32 %v936, %v903
        %v969 = vmul.f32 %v937, %v904
        %v970 = vmul.f32 %v938, %v905
        %v971 = vmul.f32 %v939, %v906
        %v972 = vmul.f32 %v940, %v907
        %v973 = vmul.f32 %v941, %v908
        %v974 = vmul.f32 %v942, %v909
        %v975 = vmul.f32 %v943, %v910
        %v976 = vmul.f32 %v944, %v911
        %v977 = vmul.f32 %v945, %v912
        %v978 = vmul.f32 %v946, %v913
        %v979 = vmul.f32 %v947, %v914
        %v980 = vmul.f32 %v948, %v915
        %v981 = vmul.f32 %v949, %v916
        %v982 = vmul.f32 %v950, %v917
        %v983 = vmul.f32 %v951, %v918
        %v984 = vmul.f32 %v952, %v919
        %v985 = vmul.f32 %v953, %v920
        %v986 = vmul.f32 %v954, %v921
        %v987 = vmul.f32 %v955, %v922
        %v988 = vmul.f32 %v956, %v923
        %v989 = vmul.f32 %v957, %v924
        %v990 = vmul.f32 %v958, %v925
        %v991 = vmul.f32 %v959, %v926
        %v992 = vmul.f32 %v960, %v927
        %v993 = vmul.f32 %v961, %v928
        %v994 = vmul.f32 %v962, %v929
        %v995 = vmul.f32 %v963, %v930
        %v996 = vmul.f32 %v964, %v931
        %vm997 = vcmask 7168
        %v998 = vsel %vm997, %v965, 0.0
        %v999 = vsel %vm997, %v966, 0.0
        %v1000 = vadd.f32 %v998, %v999
        %v1001 = vsel %vm997, %v967, 0.0
        %v1002 = vadd.f32 %v1000, %v1001
        %v1003 = vsel %vm997, %v968, 0.0
        %v1004 = vadd.f32 %v1002, %v1003
        %v1005 = vsel %vm997, %v969, 0.0
        %v1006 = vadd.f32 %v1004, %v1005
        %v1007 = vsel %vm997, %v970, 0.0
        %v1008 = vadd.f32 %v1006, %v1007
        %v1009 = vsel %vm997, %v971, 0.0
        %v1010 = vadd.f32 %v1008, %v1009
        %v1011 = vsel %vm997, %v972, 0.0
        %v1012 = vadd.f32 %v1010, %v1011
        %v1013 = vsel %vm997, %v973, 0.0
        %v1014 = vadd.f32 %v1012, %v1013
        %v1015 = vsel %vm997, %v974, 0.0
        %v1016 = vadd.f32 %v1014, %v1015
        %v1017 = vsel %vm997, %v975, 0.0
        %v1018 = vadd.f32 %v1016, %v1017
        %v1019 = vsel %vm997, %v976, 0.0
        %v1020 = vadd.f32 %v1018, %v1019
        %v1021 = vsel %vm997, %v977, 0.0
        %v1022 = vadd.f32 %v1020, %v1021
        %v1023 = vsel %vm997, %v978, 0.0
        %v1024 = vadd.f32 %v1022, %v1023
        %v1025 = vsel %vm997, %v979, 0.0
        %v1026 = vadd.f32 %v1024, %v1025
        %v1027 = vsel %vm997, %v980, 0.0
        %v1028 = vadd.f32 %v1026, %v1027
        %v1029 = vsel %vm997, %v981, 0.0
        %v1030 = vadd.f32 %v1028, %v1029
        %v1031 = vsel %vm997, %v982, 0.0
        %v1032 = vadd.f32 %v1030, %v1031
        %v1033 = vsel %vm997, %v983, 0.0
        %v1034 = vadd.f32 %v1032, %v1033
        %v1035 = vsel %vm997, %v984, 0.0
        %v1036 = vadd.f32 %v1034, %v1035
        %v1037 = vsel %vm997, %v985, 0.0
        %v1038 = vadd.f32 %v1036, %v1037
        %v1039 = vsel %vm997, %v986, 0.0
        %v1040 = vadd.f32 %v1038, %v1039
        %v1041 = vsel %vm997, %v987, 0.0
        %v1042 = vadd.f32 %v1040, %v1041
        %v1043 = vsel %vm997, %v988, 0.0
        %v1044 = vadd.f32 %v1042, %v1043
        %v1045 = vsel %vm997, %v989, 0.0
        %v1046 = vadd.f32 %v1044, %v1045
        %v1047 = vsel %vm997, %v990, 0.0
        %v1048 = vadd.f32 %v1046, %v1047
        %v1049 = vsel %vm997, %v991, 0.0
        %v1050 = vadd.f32 %v1048, %v1049
        %v1051 = vsel %vm997, %v992, 0.0
        %v1052 = vadd.f32 %v1050, %v1051
        %v1053 = vsel %vm997, %v993, 0.0
        %v1054 = vadd.f32 %v1052, %v1053
        %v1055 = vsel %vm997, %v994, 0.0
        %v1056 = vadd.f32 %v1054, %v1055
        %v1057 = vsel %vm997, %v995, 0.0
        %v1058 = vadd.f32 %v1056, %v1057
        %v1059 = vsel %vm997, %v996, 0.0
        %v1060 = vadd.f32 %v1058, %v1059
        %1061 = vadd.xlane.f32.xlu0 %v1060
        %v1062 = vpop.xlane.xlu0 %1061
        %v1063 = vrot.slane %v1062, 4
        %v1064 = vadd.f32 %v1062, %v1063
        %v1065 = vrot.slane %v1064, 2
        %v1066 = vadd.f32 %v1064, %v1065
        %v1067 = vrot.slane %v1066, 1
        %v1068 = vadd.f32 %v1066, %v1067
        %s1069 = vtos %v1068
        %v1070 = vstv %s1069
        %v1071 = vadd.f32 %v932, %v1070
        %vm1072 = vcmask 0
        %1073 = vst.msk [vmem:[#allocation2] sm:$0x1] %vm1072, %v1071
        %v1074 = vld [vmem:[#allocation3] sm:$0x1]
        %v1075 = vsel %vm997, %v900, 0.0
        %v1076 = vsel %vm997, %v901, 0.0
        %v1077 = vadd.f32 %v1075, %v1076
        %v1078 = vsel %vm997, %v902, 0.0
        %v1079 = vadd.f32 %v1077, %v1078
        %v1080 = vsel %vm997, %v903, 0.0
        %v1081 = vadd.f32 %v1079, %v1080
        %v1082 = vsel %vm997, %v904, 0.0
        %v1083 = vadd.f32 %v1081, %v1082
        %v1084 = vsel %vm997, %v905, 0.0
        %v1085 = vadd.f32 %v1083, %v1084
        %v1086 = vsel %vm997, %v906, 0.0
        %v1087 = vadd.f32 %v1085, %v1086
        %v1088 = vsel %vm997, %v907, 0.0
        %v1089 = vadd.f32 %v1087, %v1088
        %v1090 = vsel %vm997, %v908, 0.0
        %v1091 = vadd.f32 %v1089, %v1090
        %v1092 = vsel %vm997, %v909, 0.0
        %v1093 = vadd.f32 %v1091, %v1092
        %v1094 = vsel %vm997, %v910, 0.0
        %v1095 = vadd.f32 %v1093, %v1094
        %v1096 = vsel %vm997, %v911, 0.0
        %v1097 = vadd.f32 %v1095, %v1096
        %v1098 = vsel %vm997, %v912, 0.0
        %v1099 = vadd.f32 %v1097, %v1098
        %v1100 = vsel %vm997, %v913, 0.0
        %v1101 = vadd.f32 %v1099, %v1100
        %v1102 = vsel %vm997, %v914, 0.0
        %v1103 = vadd.f32 %v1101, %v1102
        %v1104 = vsel %vm997, %v915, 0.0
        %v1105 = vadd.f32 %v1103, %v1104
        %v1106 = vsel %vm997, %v916, 0.0
        %v1107 = vadd.f32 %v1105, %v1106
        %v1108 = vsel %vm997, %v917, 0.0
        %v1109 = vadd.f32 %v1107, %v1108
        %v1110 = vsel %vm997, %v918, 0.0
        %v1111 = vadd.f32 %v1109, %v1110
        %v1112 = vsel %vm997, %v919, 0.0
        %v1113 = vadd.f32 %v1111, %v1112
        %v1114 = vsel %vm997, %v920, 0.0
        %v1115 = vadd.f32 %v1113, %v1114
        %v1116 = vsel %vm997, %v921, 0.0
        %v1117 = vadd.f32 %v1115, %v1116
        %v1118 = vsel %vm997, %v922, 0.0
        %v1119 = vadd.f32 %v1117, %v1118
        %v1120 = vsel %vm997, %v923, 0.0
        %v1121 = vadd.f32 %v1119, %v1120
        %v1122 = vsel %vm997, %v924, 0.0
        %v1123 = vadd.f32 %v1121, %v1122
        %v1124 = vsel %vm997, %v925, 0.0
        %v1125 = vadd.f32 %v1123, %v1124
        %v1126 = vsel %vm997, %v926, 0.0
        %v1127 = vadd.f32 %v1125, %v1126
        %v1128 = vsel %vm997, %v927, 0.0
        %v1129 = vadd.f32 %v1127, %v1128
        %v1130 = vsel %vm997, %v928, 0.0
        %v1131 = vadd.f32 %v1129, %v1130
        %v1132 = vsel %vm997, %v929, 0.0
        %v1133 = vadd.f32 %v1131, %v1132
        %v1134 = vsel %vm997, %v930, 0.0
        %v1135 = vadd.f32 %v1133, %v1134
        %v1136 = vsel %vm997, %v931, 0.0
        %v1137 = vadd.f32 %v1135, %v1136
        %1138 = vadd.xlane.f32.xlu0 %v1137
        %v1139 = vpop.xlane.xlu0 %1138
        %v1140 = vrot.slane %v1139, 4
        %v1141 = vadd.f32 %v1139, %v1140
        %v1142 = vrot.slane %v1141, 2
        %v1143 = vadd.f32 %v1141, %v1142
        %v1144 = vrot.slane %v1143, 1
        %v1145 = vadd.f32 %v1143, %v1144
        %s1146 = vtos %v1145
        %v1147 = vstv %s1146
        %v1148 = vadd.f32 %v1074, %v1147
        %1149 = vst.msk [vmem:[#allocation3] sm:$0x1] %vm1072, %v1148
        %p1150 = scmp.eq.s32.totalorder %s14, 1
        // Predicated region
        $region33: #{segmentation_forward.13} parent=27 // pred_check
          %p1151 = pneg %p1150
        $region34: #{segmentation_forward.13} parent=27 // pred_check_branch
          %1153 = sbr.rel (%p1151) target = $region36
        $region35: #{segmentation_forward.13} parent=27 // pred_region
          %v1154 = vld [vmem:[#allocation2] sm:$0x1]
          %v1155 = vld [vmem:[#allocation3] sm:$0x1]
          %v1156 = vrcp.pop %v1155
          %v1157 = vmul.f32 %v1154, %v1156
          %1158 = vst.msk [vmem:[#allocation4] sm:$0x1] %vm1072, %v1157
        $region36: #{segmentation_forward.13} parent=27 // pred_fallthru
          _
        // Predicated region
        $region37: #{segmentation_forward.13} parent=27 // pred_check
          %p1159 = pneg %p79
        $region38: #{segmentation_forward.13} parent=27 // pred_check_branch
          %1161 = sbr.rel (%p1159) target = $region40
        $region39: #{segmentation_forward.13} parent=27 // pred_region
          %s1163 = ssub.s32 16, 16
          %1164 = vsyncadd [#allocation5], %s1163
          %s1166 = sshll.u32 [#allocation4], 4
          %s1167 = int_to_ptr.vmem [resolvable:$true] %s1166
          %1169 = dma.vmem_to_hbm [thread:$0]  %s1167, 16, %s2, [#allocation5]
        $region40: #{segmentation_forward.13} parent=27 // pred_fallthru
          _
        // Predicated region
        $region41: #{segmentation_forward.13} parent=27 // pred_check
          %p1170 = pneg %p79
        $region42: #{segmentation_forward.13} parent=27 // pred_check_branch
          %1172 = sbr.rel (%p1170) target = $region44
        $region43: #{segmentation_forward.13} parent=27 // pred_region
          %1173 = dma.done [#allocation5], 16
        $region44: #{segmentation_forward.13} parent=27 // pred_fallthru
          _
      $region28: #{segmentation_forward.13} parent=5 // pred_fallthru
        _
      %p1174 = scmp.le.s32.totalorder 2, %s9
      // Predicated region
      $region45: #{segmentation_forward.13} parent=5 // pred_check
        %p1175 = pneg %p1174
      $region46: #{segmentation_forward.13} parent=5 // pred_check_branch
        %1177 = sbr.rel (%p1175) target = $region48
      $region47: #{segmentation_forward.13} parent=5 // pred_region
        %s1178 = ssub.s32 %s9, 2
      $region48: #{segmentation_forward.13} parent=5 // pred_fallthru
        _
    $region6: #{segmentation_forward.13} parent=1 // loop_footer
      %s13 = sadd.s32 1, %s9
    $region7: #{segmentation_forward.13} parent=1 // loop_footer_branch
      %8 = sbr.rel target = $region3
    $region8: #{segmentation_forward.13} parent=1 // loop_exit
      _
    %1179 = vsyncpa [#allocation5], 1
    %s1180 = scalar_lea.sflag [#allocation5], 1
    %1181 = vsyncpa %s1180, 1

</llo_original>
